<compile_context>
chip_gen: v7x
topology: tpu7x:2x2x1
jax: 0.10.0
libtpu: 0.0.40
codegen_flags: <defaults>
</compile_context>

<pallas_src>
import functools

import jax
import jax.numpy as jnp
from jax.experimental import pallas as pl
from jax.experimental.pallas import tpu as pltpu

SCALE = 4


def _round_up(n, m):
  return ((n + m - 1) // m) * m


# ------------------------------ fused kernel --------------------------------

def _gqn_step_kernel(
    # per-batch inputs (blocked on the parallel grid axis)
    xr_ref,        # (Mb, 16*x_dim)   image in stride-4 im2col layout
    vri_ref,       # (Mb, cin_inf)    [0 | 0 | v | r]   (host pre-padded)
    vrg_ref,       # (Mb, cin_gen)    [0 | v | r]       (host pre-padded)
    eps_ref,       # (L, Mb, z_dim)   resident per batch; indexed by step
    # resident weights (constant index map, single-buffered, bf16)
    w_down_ref,                    # (16*x_dim, cin_inf)  stride-4 downsample
    w_pg_ref, b_pg_ref,            # merged prior + generator-transform conv
    w_pos_ref, b_pos_ref,          # posterior conv  (h -> 2z)
    w_ti_ref, b_ti_ref,            # inference transform conv (h -> cin_inf)
    w_gi_ref, b_gi_ref,            # inference gates conv (cin_inf -> 4h)
    w_gg_ref, b_gg_ref,            # generator gates conv (cin_gen -> 4h)
    w_comb_ref, b_obs_ref,         # (h, OXP) = upsample∘obs merged; (1, OXP)
    # outputs (lane-padded to 128)
    out_x_ref,     # (Mb, OXP)
    out_kl_ref,    # (Mb, OKP)
    # VMEM scratch (recurrent state, persists across the L grid steps)
    hid_i, cell_i, hid_g, cell_g, h_sum, kl_acc, ext, slab,
    *, Mb, h_dim, z_dim, cin_inf, cin_gen, K, Wp, Ws, padr):
  f32 = jnp.float32
  bf16 = jnp.bfloat16
  P = K // 2
  KK = K * K
  taps = [dy * Wp + dx for dy in range(-P, P + 1) for dx in range(-P, P + 1)]

  l = pl.program_id(1)
  last = pl.num_programs(1) - 1

  # ---- step l==0 of every batch block: zero state / guard rows --------------
  @pl.when(l == 0)
  def _init():
    hid_i[...] = jnp.zeros_like(hid_i)
    cell_i[...] = jnp.zeros_like(cell_i)
    hid_g[...] = jnp.zeros_like(hid_g)
    cell_g[...] = jnp.zeros_like(cell_g)
    h_sum[...] = jnp.zeros_like(h_sum)
    kl_acc[...] = jnp.zeros_like(kl_acc)
    ext[...] = jnp.zeros_like(ext)     # zero guard rows == conv zero padding
    slab[...] = jnp.zeros_like(slab)

  # data-row mask: 1 for valid pixels (x < Ws), 0 for the inter-row padding.
  # Computed in-kernel (review #3) with f32 div/floor (exact for these ints).
  rowf = jax.lax.broadcasted_iota(jnp.int32, (Mb, 1), 0).astype(f32)
  xpos = rowf - jnp.floor(rowf / Wp) * Wp
  dmask = (xpos < Ws - 0.5).astype(f32)

  def write_map(val, c):
    # one masked store per conv-input map (pad pixels pinned to zero)
    ext[padr:padr + Mb, :c] = val * dmask

  def conv(c_in, w_ref, b_ref):
    """5x5 'same' conv of the map in ext[padr:padr+Mb, :c_in].

    im2col: the K*K spatial taps are row shifts of the padded map; they are
    packed into a lane-dense slab and contracted with ONE bf16 MXU dot
    (K = K*K*c_in) instead of 25 tiny dots (review #2 / #5).
    """
    for t, d in enumerate(taps):
      slab[:, t * c_in:(t + 1) * c_in] = ext[padr + d:padr + d + Mb, :c_in]
    acts = slab[:, :KK * c_in].astype(bf16)
    return jnp.dot(acts, w_ref[...], preferred_element_type=f32) + b_ref[...]

  def sigmoid(a):        # exact identity, single EUP tanh, output in [0, 1]
    return 0.5 * jnp.tanh(0.5 * a) + 0.5

  def softplus(a):       # numerically stable: exp(-|a|) <= 1
    return jnp.maximum(a, 0.0) + jnp.log(1.0 + jnp.exp(-jnp.abs(a)))

  def lstm(gates, c_old):
    # static lane slices (no selection matmuls, review #7); with h_dim=128
    # these are exactly vreg-aligned.
    f = sigmoid(gates[:, 0 * h_dim:1 * h_dim])
    i = sigmoid(gates[:, 1 * h_dim:2 * h_dim])
    o = sigmoid(gates[:, 2 * h_dim:3 * h_dim])
    s = jnp.tanh(gates[:, 3 * h_dim:4 * h_dim])
    c_new = f * c_old + i * s
    return o * jnp.tanh(c_new), c_new

  hid_g_old = hid_g[...]
  hid_i_old = hid_i[...]

  # ---- prior density + generator transform: one merged conv over old h_g ----
  write_map(hid_g_old, h_dim)
  pg = conv(h_dim, w_pg_ref, b_pg_ref)          # (Mb, 2*z_dim + cin_gen)
  p_mu = pg[:, :z_dim]
  p_raw = pg[:, z_dim:2 * z_dim]
  t_g = pg[:, 2 * z_dim:2 * z_dim + cin_gen]

  # ------------------------ inference ConvLSTM cell --------------------------
  write_map(hid_i_old, h_dim)
  t_i = conv(h_dim, w_ti_ref, b_ti_ref)         # transform(hidden_i)
  x_ds = jnp.dot(xr_ref[...].astype(bf16), w_down_ref[...],   # stride-4 conv
                 preferred_element_type=f32)                   # == one matmul
  # cat([h_g, x, v, r]) + transform(h_i), composed in vregs, ONE store (#9)
  hg_pad = jnp.concatenate(
      [hid_g_old, jnp.zeros((Mb, cin_inf - h_dim), f32)], axis=-1)
  write_map(t_i + x_ds + vri_ref[...] + hg_pad, cin_inf)
  gates_i = conv(cin_inf, w_gi_ref, b_gi_ref)
  hid_i_new, cell_i_new = lstm(gates_i, cell_i[...])
  hid_i[...] = hid_i_new
  cell_i[...] = cell_i_new

  # ---------------------------- posterior density ----------------------------
  write_map(hid_i_new, h_dim)
  post = conv(h_dim, w_pos_ref, b_pos_ref)      # (Mb, 2*z_dim)
  q_mu = post[:, :z_dim]
  q_raw = post[:, z_dim:2 * z_dim]

  # --------- latent: softplus std, reparameterised sample, KL(q || p) --------
  # clamp keeps log / 1/x finite even for strongly negative raw values
  q_std = jnp.maximum(softplus(q_raw), 1e-6)
  p_std = jnp.maximum(softplus(p_raw), 1e-6)
  z_s = q_mu + q_std * eps_ref[l]
  inv_2pvar = pl.reciprocal(2.0 * p_std * p_std, approx=False)
  kl_acc[...] += (jnp.log(p_std) - jnp.log(q_std)
                  + (q_std * q_std + (q_mu - p_mu) ** 2) * inv_2pvar - 0.5)

  # ------------------------ generator ConvLSTM cell --------------------------
  z_pad = jnp.concatenate(
      [z_s, jnp.zeros((Mb, cin_gen - z_dim), f32)], axis=-1)
  write_map(t_g + vrg_ref[...] + z_pad, cin_gen)   # cat([z, v, r]) + transform
  gates_g = conv(cin_gen, w_gg_ref, b_gg_ref)
  hid_g_new, cell_g_new = lstm(gates_g, cell_g[...])
  hid_g[...] = hid_g_new
  cell_g[...] = cell_g_new

  # canvas via linearity (review #1): u = sum_l upsample(h_g) -> keep sum(h_g)
  h_sum[...] += hid_g_new

  # ----- last step: obs density == dot(h_sum, w_comb) + bias, then sigmoid ---
  @pl.when(l == last)
  def _finalize():
    x_mu = jnp.dot(h_sum[...].astype(bf16), w_comb_ref[...],
                   preferred_element_type=f32) + b_obs_ref[...]
    out_x_ref[...] = sigmoid(x_mu)                       # unmasked 128-lane vst
    pad_kl = out_kl_ref.shape[-1] - z_dim
    out_kl_ref[...] = jnp.concatenate(
        [kl_acc[...], jnp.zeros((Mb, pad_kl), f32)], axis=-1)


# ------------------------------ parameters ----------------------------------

def init_params(key, x_dim, v_dim, r_dim, z_dim, h_dim):
  ks = jax.random.split(key, 16)

  def conv_w(k, K, cin, cout):
    return 0.05 * jax.random.normal(k, (K, K, cin, cout), jnp.float32)

  def vec(k, n):
    return 0.05 * jax.random.normal(k, (n,), jnp.float32)

  cin_inf = v_dim + r_dim + x_dim + h_dim
  cin_gen = v_dim + r_dim + z_dim
  KC = 5  # GeneratorNetwork uses kernel_size=5, padding=2 for all core convs
  return {
      "inference": {
          "w_trans": conv_w(ks[0], KC, h_dim, cin_inf),
          "b_trans": vec(ks[1], cin_inf),
          "w_gates": conv_w(ks[2], KC, cin_inf, 4 * h_dim),
          "b_gates": vec(ks[3], 4 * h_dim),
      },
      "generator": {
          "w_trans": conv_w(ks[4], KC, h_dim, cin_gen),
          "b_trans": vec(ks[5], cin_gen),
          "w_gates": conv_w(ks[6], KC, cin_gen, 4 * h_dim),
          "b_gates": vec(ks[7], 4 * h_dim),
      },
      "w_prior": conv_w(ks[8], KC, h_dim, 2 * z_dim),
      "b_prior": vec(ks[9], 2 * z_dim),
      "w_post": conv_w(ks[10], KC, h_dim, 2 * z_dim),
      "b_post": vec(ks[11], 2 * z_dim),
      # 1x1 observation conv
      "w_obs": 0.05 * jax.random.normal(ks[12], (h_dim, x_dim), jnp.float32),
      "b_obs": vec(ks[13], x_dim),
      # ConvTranspose2d(h, h, 4, stride=4, bias=False): col = (py*4+px)*h + co
      "w_up": 0.05 * jax.random.normal(
          ks[14], (h_dim, h_dim * SCALE * SCALE), jnp.float32),
      # Conv2d(x, x, 4, stride=4, bias=False): row = py*(4*x) + px*x + ci
      "w_down": 0.05 * jax.random.normal(
          ks[15], (SCALE * SCALE * x_dim, x_dim), jnp.float32),
  }


# ------------------------------ forward pass --------------------------------

def generator_forward(params, x, v, r, key, *, z_dim, h_dim, L):
  """GeneratorNetwork.forward. x:(B,H,W,x_dim) NHWC, v:(B,v_dim), r:(B,1,1,r_dim)."""
  B, H, W, x_dim = x.shape
  Hs, Ws = H // SCALE, W // SCALE
  v_dim = v.shape[-1]
  r_dim = r.shape[-1]
  vr_dim = v_dim + r_dim
  cin_inf = h_dim + x_dim + vr_dim
  cin_gen = z_dim + vr_dim
  c_max = max(cin_inf, cin_gen)
  K = params["inference"]["w_gates"].shape[0]
  P = K // 2
  KK = K * K
  f32, bf16 = jnp.float32, jnp.bfloat16

  # padded-row layout: Wp-Ws zero pixels after each image row act as the conv
  # zero padding (no per-tap masks) and make dy row-shifts 8-sublane aligned.
  Wp = _round_up(Ws + P, 8)
  Mb = Hs * Wp                       # rows per batch block (multiple of 8)
  M = B * Mb
  reach = P * Wp + P                 # largest |row shift| of a conv tap
  padr = _round_up(reach, 8)         # zero guard rows above/below the map
  ext_rows = padr + Mb + padr

  xcols = SCALE * SCALE * x_dim
  OXP = _round_up(xcols, 128)        # lane-dense output widths (review #12)
  OKP = _round_up(z_dim, 128)

  # ---- host-side layout plumbing (runs once, outside the recurrent loop) ----
  def pad_rows(a):                   # (B, Hs, Ws, C) -> (B*Hs*Wp, C)
    a = jnp.pad(a, ((0, 0), (0, 0), (0, Wp - Ws), (0, 0)))
    return a.reshape(B * Hs * Wp, a.shape[-1])

  x4 = x.reshape(B, Hs, SCALE, Ws, SCALE, x_dim)
  x4 = x4.transpose(0, 1, 3, 2, 4, 5).reshape(B, Hs, Ws, xcols)
  xr = pad_rows(x4)                                           # (M, 16*x_dim)

  v_map = jnp.broadcast_to(v.reshape(B, 1, 1, v_dim), (B, Hs, Ws, v_dim))
  r_map = r if (r.shape[1] == Hs and r.shape[2] == Ws) else jnp.broadcast_to(
      r, (B, Hs, Ws, r_dim))
  vr = pad_rows(jnp.concatenate([v_map, r_map], axis=-1))     # (M, vr_dim)
  vr_inf = jnp.pad(vr, ((0, 0), (h_dim + x_dim, 0)))          # (M, cin_inf)
  vr_gen = jnp.pad(vr, ((0, 0), (z_dim, 0)))                  # (M, cin_gen)

  eps = jax.random.normal(key, (L, M, z_dim), f32)

  def pack(w, b):      # (K,K,cin,cout) -> (K*K*cin, cout) bf16, bias (1,cout)
    k0, k1, cin, cout = w.shape
    return w.reshape(k0 * k1 * cin, cout).astype(bf16), b.reshape(1, -1)

  # prior density and generator-transform both convolve hidden_g: merge them
  w_pg, b_pg = pack(
      jnp.concatenate([params["w_prior"], params["generator"]["w_trans"]], -1),
      jnp.concatenate([params["b_prior"], params["generator"]["b_trans"]], -1))
  w_pos, b_pos = pack(params["w_post"], params["b_post"])
  w_ti, b_ti = pack(params["inference"]["w_trans"],
                    params["inference"]["b_trans"])
  w_gi, b_gi = pack(params["inference"]["w_gates"],
                    params["inference"]["b_gates"])
  w_gg, b_gg = pack(params["generator"]["w_gates"],
                    params["generator"]["b_gates"])

  # downsample conv as a matmul whose output lands in columns [h, h+x)
  w_down = jnp.pad(params["w_down"],
                   ((0, 0), (h_dim, cin_inf - h_dim - x_dim))).astype(bf16)

  # canvas linearity: observation(upsample(sum_l h_g)) == dot(sum_l h_g, w_comb)
  w_comb = jnp.einsum("hpc,cx->hpx",
                      params["w_up"].reshape(h_dim, SCALE * SCALE, h_dim),
                      params["w_obs"]).reshape(h_dim, xcols)
  w_comb = jnp.pad(w_comb, ((0, 0), (0, OXP - xcols))).astype(bf16)
  b_obs = jnp.pad(jnp.tile(params["b_obs"], SCALE * SCALE),
                  (0, OXP - xcols)).reshape(1, OXP)

  inputs = (xr, vr_inf, vr_gen, eps,
            w_down, w_pg, b_pg, w_pos, b_pos, w_ti, b_ti,
            w_gi, b_gi, w_gg, b_gg, w_comb, b_obs)

  def bspec(a):        # per-batch blocks, default double-buffering
    return pl.BlockSpec((Mb, a.shape[-1]), lambda b, l: (b, 0))

  def wspec(a):        # resident constants, single-buffered (review #4)
    return pl.BlockSpec(a.shape, lambda b, l: (0, 0),
                        pipeline_mode=pl.Buffered(1))

  in_specs = [bspec(xr), bspec(vr_inf), bspec(vr_gen),
              pl.BlockSpec((L, Mb, z_dim), lambda b, l: (0, b, 0))]
  in_specs += [wspec(a) for a in inputs[4:]]

  out_specs = (pl.BlockSpec((Mb, OXP), lambda b, l: (b, 0)),
               pl.BlockSpec((Mb, OKP), lambda b, l: (b, 0)))

  scratch_shapes = [
      pltpu.VMEM((Mb, h_dim), f32),            # hidden_i
      pltpu.VMEM((Mb, h_dim), f32),            # cell_i
      pltpu.VMEM((Mb, h_dim), f32),            # hidden_g
      pltpu.VMEM((Mb, h_dim), f32),            # cell_g
      pltpu.VMEM((Mb, h_dim), f32),            # running sum of hidden_g
      pltpu.VMEM((Mb, z_dim), f32),            # kl accumulator
      pltpu.VMEM((ext_rows, c_max), f32),      # padded conv-input map
      pltpu.VMEM((Mb, KK * c_max), f32),       # im2col slab
  ]

  # explicit scoped-VMEM budget: actual resident footprint + headroom
  operand_bytes = sum(int(a.size) * a.dtype.itemsize for a in inputs)
  out_bytes = M * (OXP + OKP) * 4
  scratch_bytes = ((5 * Mb * h_dim + Mb * z_dim + ext_rows * c_max
                    + Mb * KK * c_max) * 4)
  vmem_limit = min(96 * 1024 * 1024,
                   2 * (operand_bytes + out_bytes) + scratch_bytes
                   + 8 * 1024 * 1024)

  kernel = functools.partial(
      _gqn_step_kernel, Mb=Mb, h_dim=h_dim, z_dim=z_dim,
      cin_inf=cin_inf, cin_gen=cin_gen, K=K, Wp=Wp, Ws=Ws, padr=padr)

  out_x_flat, out_kl_flat = pl.pallas_call(
      kernel,
      out_shape=(jax.ShapeDtypeStruct((M, OXP), f32),
                 jax.ShapeDtypeStruct((M, OKP), f32)),
      grid=(B, L),
      in_specs=in_specs,
      out_specs=out_specs,
      scratch_shapes=scratch_shapes,
      compiler_params=pltpu.CompilerParams(
          dimension_semantics=("parallel", "arbitrary"),  # batch x recurrence
          vmem_limit_bytes=int(vmem_limit)),
  )(*inputs)

  # strip the output lane padding and the inter-row pad pixels
  x_rec = out_x_flat[:, :xcols].reshape(B, Hs, Wp, SCALE, SCALE, x_dim)
  x_rec = x_rec[:, :, :Ws].transpose(0, 1, 3, 2, 4, 5).reshape(B, H, W, x_dim)
  kl = out_kl_flat[:, :z_dim].reshape(B, Hs, Wp, z_dim)[:, :, :Ws]
  return x_rec, kl


# --------------------------------- main --------------------------------------

if __name__ == "__main__":
  x_dim, v_dim, r_dim = 3, 7, 6
  z_dim, h_dim, L = 4, 16, 3
  B, H, W = 2, 16, 16

  root = jax.random.PRNGKey(0)
  k_par, k_x, k_v, k_r, k_noise = jax.random.split(root, 5)

  params = init_params(k_par, x_dim, v_dim, r_dim, z_dim, h_dim)
  x = jax.random.normal(k_x, (B, H, W, x_dim), jnp.float32)   # NHWC
  v = jax.random.normal(k_v, (B, v_dim), jnp.float32)
  r = jax.random.normal(k_r, (B, 1, 1, r_dim), jnp.float32)   # broadcast branch

  fwd = jax.jit(functools.partial(generator_forward,
                                  z_dim=z_dim, h_dim=h_dim, L=L))
  x_rec, kl = fwd(params, x, v, r, k_noise)
  jax.block_until_ready((x_rec, kl))

  assert x_rec.shape == (B, H, W, x_dim)
  assert kl.shape == (B, H // SCALE, W // SCALE, z_dim)
  assert bool(jnp.all(jnp.isfinite(x_rec))) and bool(jnp.all(jnp.isfinite(kl)))
  print("KERNEL_OK")
</pallas_src>

<mosaic_0001>
module attributes {stable_mosaic.version = 11 : i64} {
  func.func @_gqn_step_kernel(%arg0: i32, %arg1: i32, %arg2: memref<32x48xf32, #tpu.memory_space<vmem>>, %arg3: memref<32x32xf32, #tpu.memory_space<vmem>>, %arg4: memref<32x17xf32, #tpu.memory_space<vmem>>, %arg5: memref<3x32x4xf32, #tpu.memory_space<vmem>>, %arg6: memref<48x32xbf16, #tpu.memory_space<vmem>>, %arg7: memref<400x25xbf16, #tpu.memory_space<vmem>>, %arg8: memref<1x25xf32, #tpu.memory_space<vmem>>, %arg9: memref<400x8xbf16, #tpu.memory_space<vmem>>, %arg10: memref<1x8xf32, #tpu.memory_space<vmem>>, %arg11: memref<400x32xbf16, #tpu.memory_space<vmem>>, %arg12: memref<1x32xf32, #tpu.memory_space<vmem>>, %arg13: memref<800x64xbf16, #tpu.memory_space<vmem>>, %arg14: memref<1x64xf32, #tpu.memory_space<vmem>>, %arg15: memref<425x64xbf16, #tpu.memory_space<vmem>>, %arg16: memref<1x64xf32, #tpu.memory_space<vmem>>, %arg17: memref<16x128xbf16, #tpu.memory_space<vmem>>, %arg18: memref<1x128xf32, #tpu.memory_space<vmem>>, %arg19: memref<32x128xf32, #tpu.memory_space<vmem>>, %arg20: memref<32x128xf32, #tpu.memory_space<vmem>>, %arg21: memref<32x16xf32, #tpu.memory_space<vmem>>, %arg22: memref<32x16xf32, #tpu.memory_space<vmem>>, %arg23: memref<32x16xf32, #tpu.memory_space<vmem>>, %arg24: memref<32x16xf32, #tpu.memory_space<vmem>>, %arg25: memref<32x16xf32, #tpu.memory_space<vmem>>, %arg26: memref<32x4xf32, #tpu.memory_space<vmem>>, %arg27: memref<80x32xf32, #tpu.memory_space<vmem>>, %arg28: memref<32x800xf32, #tpu.memory_space<vmem>>) attributes {dimension_semantics = [#tpu.dimension_semantics<parallel>, #tpu.dimension_semantics<arbitrary>], iteration_bounds = array<i64: 2, 3>, scalar_prefetch = 0 : i64, scratch_operands = 8 : i64, tpu.core_type = #tpu.core_type<tc>, window_params = [{transform_indices = @transform_0, window_bounds = array<i64: 32, 48>}, {transform_indices = @transform_1, window_bounds = array<i64: 32, 32>}, {transform_indices = @transform_2, window_bounds = array<i64: 32, 17>}, {transform_indices = @transform_3, window_bounds = array<i64: 3, 32, 4>}, {pipeline_mode = #tpu.pipeline_mode<synchronous>, transform_indices = @transform_4, window_bounds = array<i64: 48, 32>}, {pipeline_mode = #tpu.pipeline_mode<synchronous>, transform_indices = @transform_5, window_bounds = array<i64: 400, 25>}, {pipeline_mode = #tpu.pipeline_mode<synchronous>, transform_indices = @transform_6, window_bounds = array<i64: 1, 25>}, {pipeline_mode = #tpu.pipeline_mode<synchronous>, transform_indices = @transform_7, window_bounds = array<i64: 400, 8>}, {pipeline_mode = #tpu.pipeline_mode<synchronous>, transform_indices = @transform_8, window_bounds = array<i64: 1, 8>}, {pipeline_mode = #tpu.pipeline_mode<synchronous>, transform_indices = @transform_9, window_bounds = array<i64: 400, 32>}, {pipeline_mode = #tpu.pipeline_mode<synchronous>, transform_indices = @transform_10, window_bounds = array<i64: 1, 32>}, {pipeline_mode = #tpu.pipeline_mode<synchronous>, transform_indices = @transform_11, window_bounds = array<i64: 800, 64>}, {pipeline_mode = #tpu.pipeline_mode<synchronous>, transform_indices = @transform_12, window_bounds = array<i64: 1, 64>}, {pipeline_mode = #tpu.pipeline_mode<synchronous>, transform_indices = @transform_13, window_bounds = array<i64: 425, 64>}, {pipeline_mode = #tpu.pipeline_mode<synchronous>, transform_indices = @transform_14, window_bounds = array<i64: 1, 64>}, {pipeline_mode = #tpu.pipeline_mode<synchronous>, transform_indices = @transform_15, window_bounds = array<i64: 16, 128>}, {pipeline_mode = #tpu.pipeline_mode<synchronous>, transform_indices = @transform_16, window_bounds = array<i64: 1, 128>}, {transform_indices = @transform_17, window_bounds = array<i64: 32, 128>}, {transform_indices = @transform_18, window_bounds = array<i64: 32, 128>}]} {
    %c0_i32 = arith.constant 0 : i32
    %0 = arith.cmpi eq, %arg1, %c0_i32 : i32
    %1 = arith.extui %0 : i1 to i32
    %c0_i32_0 = arith.constant 0 : i32
    %2 = arith.cmpi ne, %1, %c0_i32_0 : i32
    scf.if %2 {
      %cst_533 = arith.constant 0.000000e+00 : f32
      %458 = vector.broadcast %cst_533 : f32 to vector<32x16xf32>
      %c0_534 = arith.constant 0 : index
      %c0_535 = arith.constant 0 : index
      %459 = vector.load %arg21[%c0_534, %c0_535] : memref<32x16xf32, #tpu.memory_space<vmem>>, vector<32x16xf32>
      tpu.vector_store %arg21[%c0_534, %c0_535], %458 {strides = array<i32>} : memref<32x16xf32, #tpu.memory_space<vmem>>, vector<32x16xf32>,
      %cst_536 = arith.constant 0.000000e+00 : f32
      %460 = vector.broadcast %cst_536 : f32 to vector<32x16xf32>
      %c0_537 = arith.constant 0 : index
      %c0_538 = arith.constant 0 : index
      %461 = vector.load %arg22[%c0_537, %c0_538] : memref<32x16xf32, #tpu.memory_space<vmem>>, vector<32x16xf32>
      tpu.vector_store %arg22[%c0_537, %c0_538], %460 {strides = array<i32>} : memref<32x16xf32, #tpu.memory_space<vmem>>, vector<32x16xf32>,
      %cst_539 = arith.constant 0.000000e+00 : f32
      %462 = vector.broadcast %cst_539 : f32 to vector<32x16xf32>
      %c0_540 = arith.constant 0 : index
      %c0_541 = arith.constant 0 : index
      %463 = vector.load %arg23[%c0_540, %c0_541] : memref<32x16xf32, #tpu.memory_space<vmem>>, vector<32x16xf32>
      tpu.vector_store %arg23[%c0_540, %c0_541], %462 {strides = array<i32>} : memref<32x16xf32, #tpu.memory_space<vmem>>, vector<32x16xf32>,
      %cst_542 = arith.constant 0.000000e+00 : f32
      %464 = vector.broadcast %cst_542 : f32 to vector<32x16xf32>
      %c0_543 = arith.constant 0 : index
      %c0_544 = arith.constant 0 : index
      %465 = vector.load %arg24[%c0_543, %c0_544] : memref<32x16xf32, #tpu.memory_space<vmem>>, vector<32x16xf32>
      tpu.vector_store %arg24[%c0_543, %c0_544], %464 {strides = array<i32>} : memref<32x16xf32, #tpu.memory_space<vmem>>, vector<32x16xf32>,
      %cst_545 = arith.constant 0.000000e+00 : f32
      %466 = vector.broadcast %cst_545 : f32 to vector<32x16xf32>
      %c0_546 = arith.constant 0 : index
      %c0_547 = arith.constant 0 : index
      %467 = vector.load %arg25[%c0_546, %c0_547] : memref<32x16xf32, #tpu.memory_space<vmem>>, vector<32x16xf32>
      tpu.vector_store %arg25[%c0_546, %c0_547], %466 {strides = array<i32>} : memref<32x16xf32, #tpu.memory_space<vmem>>, vector<32x16xf32>,
      %cst_548 = arith.constant 0.000000e+00 : f32
      %468 = vector.broadcast %cst_548 : f32 to vector<32x4xf32>
      %c0_549 = arith.constant 0 : index
      %c0_550 = arith.constant 0 : index
      %469 = vector.load %arg26[%c0_549, %c0_550] : memref<32x4xf32, #tpu.memory_space<vmem>>, vector<32x4xf32>
      tpu.vector_store %arg26[%c0_549, %c0_550], %468 {strides = array<i32>} : memref<32x4xf32, #tpu.memory_space<vmem>>, vector<32x4xf32>,
      %cst_551 = arith.constant 0.000000e+00 : f32
      %470 = vector.broadcast %cst_551 : f32 to vector<80x32xf32>
      %c0_552 = arith.constant 0 : index
      %c0_553 = arith.constant 0 : index
      %471 = vector.load %arg27[%c0_552, %c0_553] : memref<80x32xf32, #tpu.memory_space<vmem>>, vector<80x32xf32>
      tpu.vector_store %arg27[%c0_552, %c0_553], %470 {strides = array<i32>} : memref<80x32xf32, #tpu.memory_space<vmem>>, vector<80x32xf32>,
      %cst_554 = arith.constant 0.000000e+00 : f32
      %472 = vector.broadcast %cst_554 : f32 to vector<32x800xf32>
      %c0_555 = arith.constant 0 : index
      %c0_556 = arith.constant 0 : index
      %473 = vector.load %arg28[%c0_555, %c0_556] : memref<32x800xf32, #tpu.memory_space<vmem>>, vector<32x800xf32>
      tpu.vector_store %arg28[%c0_555, %c0_556], %472 {strides = array<i32>} : memref<32x800xf32, #tpu.memory_space<vmem>>, vector<32x800xf32>,
    } else {
    }
    %3 = tpu.iota {dimensions = array<i32: 0>} : vector<32x1xi32>
    %4 = arith.sitofp %3 : vector<32x1xi32> to vector<32x1xf32>
    %cst = arith.constant 8.000000e+00 : f32
    %5 = vector.broadcast %cst : f32 to vector<32x1xf32>
    %6 = arith.divf %4, %5 : vector<32x1xf32>
    %7 = math.floor %6 : vector<32x1xf32>
    %cst_1 = arith.constant 8.000000e+00 : f32
    %8 = vector.broadcast %cst_1 : f32 to vector<32x1xf32>
    %9 = arith.mulf %7, %8 : vector<32x1xf32>
    %10 = arith.subf %4, %9 : vector<32x1xf32>
    %cst_2 = arith.constant 3.500000e+00 : f32
    %11 = vector.broadcast %cst_2 : f32 to vector<32x1xf32>
    %12 = arith.cmpf olt, %10, %11 : vector<32x1xf32>
    %13 = arith.extui %12 : vector<32x1xi1> to vector<32x1xi32>
    %14 = arith.sitofp %13 : vector<32x1xi32> to vector<32x1xf32>
    %c0 = arith.constant 0 : index
    %c0_3 = arith.constant 0 : index
    %15 = vector.load %arg23[%c0, %c0_3] : memref<32x16xf32, #tpu.memory_space<vmem>>, vector<32x16xf32>
    %c0_4 = arith.constant 0 : index
    %c0_5 = arith.constant 0 : index
    %16 = vector.load %arg21[%c0_4, %c0_5] : memref<32x16xf32, #tpu.memory_space<vmem>>, vector<32x16xf32>
    %17 = vector.broadcast %14 : vector<32x1xf32> to vector<32x16xf32>
    %18 = arith.mulf %15, %17 : vector<32x16xf32>
    %c24 = arith.constant 24 : index
    %c0_6 = arith.constant 0 : index
    %19 = vector.load %arg27[%c24, %c0_6] : memref<80x32xf32, #tpu.memory_space<vmem>>, vector<32x16xf32>
    tpu.vector_store %arg27[%c24, %c0_6], %18 {strides = array<i32>} : memref<80x32xf32, #tpu.memory_space<vmem>>, vector<32x16xf32>,
    %c6 = arith.constant 6 : index
    %c0_7 = arith.constant 0 : index
    %20 = vector.load %arg27[%c6, %c0_7] : memref<80x32xf32, #tpu.memory_space<vmem>>, vector<32x16xf32>
    %c0_8 = arith.constant 0 : index
    %c0_9 = arith.constant 0 : index
    %21 = vector.load %arg28[%c0_8, %c0_9] : memref<32x800xf32, #tpu.memory_space<vmem>>, vector<32x16xf32>
    tpu.vector_store %arg28[%c0_8, %c0_9], %20 {strides = array<i32>} : memref<32x800xf32, #tpu.memory_space<vmem>>, vector<32x16xf32>,
    %c7 = arith.constant 7 : index
    %c0_10 = arith.constant 0 : index
    %22 = vector.load %arg27[%c7, %c0_10] : memref<80x32xf32, #tpu.memory_space<vmem>>, vector<32x16xf32>
    %c0_11 = arith.constant 0 : index
    %c16 = arith.constant 16 : index
    %23 = vector.load %arg28[%c0_11, %c16] : memref<32x800xf32, #tpu.memory_space<vmem>>, vector<32x16xf32>
    tpu.vector_store %arg28[%c0_11, %c16], %22 {strides = array<i32>} : memref<32x800xf32, #tpu.memory_space<vmem>>, vector<32x16xf32>,
    %c8 = arith.constant 8 : index
    %c0_12 = arith.constant 0 : index
    %24 = vector.load %arg27[%c8, %c0_12] : memref<80x32xf32, #tpu.memory_space<vmem>>, vector<32x16xf32>
    %c0_13 = arith.constant 0 : index
    %c32 = arith.constant 32 : index
    %25 = vector.load %arg28[%c0_13, %c32] : memref<32x800xf32, #tpu.memory_space<vmem>>, vector<32x16xf32>
    tpu.vector_store %arg28[%c0_13, %c32], %24 {strides = array<i32>} : memref<32x800xf32, #tpu.memory_space<vmem>>, vector<32x16xf32>,
    %c9 = arith.constant 9 : index
    %c0_14 = arith.constant 0 : index
    %26 = vector.load %arg27[%c9, %c0_14] : memref<80x32xf32, #tpu.memory_space<vmem>>, vector<32x16xf32>
    %c0_15 = arith.constant 0 : index
    %c48 = arith.constant 48 : index
    %27 = vector.load %arg28[%c0_15, %c48] : memref<32x800xf32, #tpu.memory_space<vmem>>, vector<32x16xf32>
    tpu.vector_store %arg28[%c0_15, %c48], %26 {strides = array<i32>} : memref<32x800xf32, #tpu.memory_space<vmem>>, vector<32x16xf32>,
    %c10 = arith.constant 10 : index
    %c0_16 = arith.constant 0 : index
    %28 = vector.load %arg27[%c10, %c0_16] : memref<80x32xf32, #tpu.memory_space<vmem>>, vector<32x16xf32>
    %c0_17 = arith.constant 0 : index
    %c64 = arith.constant 64 : index
    %29 = vector.load %arg28[%c0_17, %c64] : memref<32x800xf32, #tpu.memory_space<vmem>>, vector<32x16xf32>
    tpu.vector_store %arg28[%c0_17, %c64], %28 {strides = array<i32>} : memref<32x800xf32, #tpu.memory_space<vmem>>, vector<32x16xf32>,
    %c14 = arith.constant 14 : index
    %c0_18 = arith.constant 0 : index
    %30 = vector.load %arg27[%c14, %c0_18] : memref<80x32xf32, #tpu.memory_space<vmem>>, vector<32x16xf32>
    %c0_19 = arith.constant 0 : index
    %c80 = arith.constant 80 : index
    %31 = vector.load %arg28[%c0_19, %c80] : memref<32x800xf32, #tpu.memory_space<vmem>>, vector<32x16xf32>
    tpu.vector_store %arg28[%c0_19, %c80], %30 {strides = array<i32>} : memref<32x800xf32, #tpu.memory_space<vmem>>, vector<32x16xf32>,
    %c15 = arith.constant 15 : index
    %c0_20 = arith.constant 0 : index
    %32 = vector.load %arg27[%c15, %c0_20] : memref<80x32xf32, #tpu.memory_space<vmem>>, vector<32x16xf32>
    %c0_21 = arith.constant 0 : index
    %c96 = arith.constant 96 : index
    %33 = vector.load %arg28[%c0_21, %c96] : memref<32x800xf32, #tpu.memory_space<vmem>>, vector<32x16xf32>
    tpu.vector_store %arg28[%c0_21, %c96], %32 {strides = array<i32>} : memref<32x800xf32, #tpu.memory_space<vmem>>, vector<32x16xf32>,
    %c16_22 = arith.constant 16 : index
    %c0_23 = arith.constant 0 : index
    %34 = vector.load %arg27[%c16_22, %c0_23] : memref<80x32xf32, #tpu.memory_space<vmem>>, vector<32x16xf32>
    %c0_24 = arith.constant 0 : index
    %c112 = arith.constant 112 : index
    %35 = vector.load %arg28[%c0_24, %c112] : memref<32x800xf32, #tpu.memory_space<vmem>>, vector<32x16xf32>
    tpu.vector_store %arg28[%c0_24, %c112], %34 {strides = array<i32>} : memref<32x800xf32, #tpu.memory_space<vmem>>, vector<32x16xf32>,
    %c17 = arith.constant 17 : index
    %c0_25 = arith.constant 0 : index
    %36 = vector.load %arg27[%c17, %c0_25] : memref<80x32xf32, #tpu.memory_space<vmem>>, vector<32x16xf32>
    %c0_26 = arith.constant 0 : index
    %c128 = arith.constant 128 : index
    %37 = vector.load %arg28[%c0_26, %c128] : memref<32x800xf32, #tpu.memory_space<vmem>>, vector<32x16xf32>
    tpu.vector_store %arg28[%c0_26, %c128], %36 {strides = array<i32>} : memref<32x800xf32, #tpu.memory_space<vmem>>, vector<32x16xf32>,
    %c18 = arith.constant 18 : index
    %c0_27 = arith.constant 0 : index
    %38 = vector.load %arg27[%c18, %c0_27] : memref<80x32xf32, #tpu.memory_space<vmem>>, vector<32x16xf32>
    %c0_28 = arith.constant 0 : index
    %c144 = arith.constant 144 : index
    %39 = vector.load %arg28[%c0_28, %c144] : memref<32x800xf32, #tpu.memory_space<vmem>>, vector<32x16xf32>
    tpu.vector_store %arg28[%c0_28, %c144], %38 {strides = array<i32>} : memref<32x800xf32, #tpu.memory_space<vmem>>, vector<32x16xf32>,
    %c22 = arith.constant 22 : index
    %c0_29 = arith.constant 0 : index
    %40 = vector.load %arg27[%c22, %c0_29] : memref<80x32xf32, #tpu.memory_space<vmem>>, vector<32x16xf32>
    %c0_30 = arith.constant 0 : index
    %c160 = arith.constant 160 : index
    %41 = vector.load %arg28[%c0_30, %c160] : memref<32x800xf32, #tpu.memory_space<vmem>>, vector<32x16xf32>
    tpu.vector_store %arg28[%c0_30, %c160], %40 {strides = array<i32>} : memref<32x800xf32, #tpu.memory_space<vmem>>, vector<32x16xf32>,
    %c23 = arith.constant 23 : index
    %c0_31 = arith.constant 0 : index
    %42 = vector.load %arg27[%c23, %c0_31] : memref<80x32xf32, #tpu.memory_space<vmem>>, vector<32x16xf32>
    %c0_32 = arith.constant 0 : index
    %c176 = arith.constant 176 : index
    %43 = vector.load %arg28[%c0_32, %c176] : memref<32x800xf32, #tpu.memory_space<vmem>>, vector<32x16xf32>
    tpu.vector_store %arg28[%c0_32, %c176], %42 {strides = array<i32>} : memref<32x800xf32, #tpu.memory_space<vmem>>, vector<32x16xf32>,
    %c24_33 = arith.constant 24 : index
    %c0_34 = arith.constant 0 : index
    %44 = vector.load %arg27[%c24_33, %c0_34] : memref<80x32xf32, #tpu.memory_space<vmem>>, vector<32x16xf32>
    %c0_35 = arith.constant 0 : index
    %c192 = arith.constant 192 : index
    %45 = vector.load %arg28[%c0_35, %c192] : memref<32x800xf32, #tpu.memory_space<vmem>>, vector<32x16xf32>
    tpu.vector_store %arg28[%c0_35, %c192], %44 {strides = array<i32>} : memref<32x800xf32, #tpu.memory_space<vmem>>, vector<32x16xf32>,
    %c25 = arith.constant 25 : index
    %c0_36 = arith.constant 0 : index
    %46 = vector.load %arg27[%c25, %c0_36] : memref<80x32xf32, #tpu.memory_space<vmem>>, vector<32x16xf32>
    %c0_37 = arith.constant 0 : index
    %c208 = arith.constant 208 : index
    %47 = vector.load %arg28[%c0_37, %c208] : memref<32x800xf32, #tpu.memory_space<vmem>>, vector<32x16xf32>
    tpu.vector_store %arg28[%c0_37, %c208], %46 {strides = array<i32>} : memref<32x800xf32, #tpu.memory_space<vmem>>, vector<32x16xf32>,
    %c26 = arith.constant 26 : index
    %c0_38 = arith.constant 0 : index
    %48 = vector.load %arg27[%c26, %c0_38] : memref<80x32xf32, #tpu.memory_space<vmem>>, vector<32x16xf32>
    %c0_39 = arith.constant 0 : index
    %c224 = arith.constant 224 : index
    %49 = vector.load %arg28[%c0_39, %c224] : memref<32x800xf32, #tpu.memory_space<vmem>>, vector<32x16xf32>
    tpu.vector_store %arg28[%c0_39, %c224], %48 {strides = array<i32>} : memref<32x800xf32, #tpu.memory_space<vmem>>, vector<32x16xf32>,
    %c30 = arith.constant 30 : index
    %c0_40 = arith.constant 0 : index
    %50 = vector.load %arg27[%c30, %c0_40] : memref<80x32xf32, #tpu.memory_space<vmem>>, vector<32x16xf32>
    %c0_41 = arith.constant 0 : index
    %c240 = arith.constant 240 : index
    %51 = vector.load %arg28[%c0_41, %c240] : memref<32x800xf32, #tpu.memory_space<vmem>>, vector<32x16xf32>
    tpu.vector_store %arg28[%c0_41, %c240], %50 {strides = array<i32>} : memref<32x800xf32, #tpu.memory_space<vmem>>, vector<32x16xf32>,
    %c31 = arith.constant 31 : index
    %c0_42 = arith.constant 0 : index
    %52 = vector.load %arg27[%c31, %c0_42] : memref<80x32xf32, #tpu.memory_space<vmem>>, vector<32x16xf32>
    %c0_43 = arith.constant 0 : index
    %c256 = arith.constant 256 : index
    %53 = vector.load %arg28[%c0_43, %c256] : memref<32x800xf32, #tpu.memory_space<vmem>>, vector<32x16xf32>
    tpu.vector_store %arg28[%c0_43, %c256], %52 {strides = array<i32>} : memref<32x800xf32, #tpu.memory_space<vmem>>, vector<32x16xf32>,
    %c32_44 = arith.constant 32 : index
    %c0_45 = arith.constant 0 : index
    %54 = vector.load %arg27[%c32_44, %c0_45] : memref<80x32xf32, #tpu.memory_space<vmem>>, vector<32x16xf32>
    %c0_46 = arith.constant 0 : index
    %c272 = arith.constant 272 : index
    %55 = vector.load %arg28[%c0_46, %c272] : memref<32x800xf32, #tpu.memory_space<vmem>>, vector<32x16xf32>
    tpu.vector_store %arg28[%c0_46, %c272], %54 {strides = array<i32>} : memref<32x800xf32, #tpu.memory_space<vmem>>, vector<32x16xf32>,
    %c33 = arith.constant 33 : index
    %c0_47 = arith.constant 0 : index
    %56 = vector.load %arg27[%c33, %c0_47] : memref<80x32xf32, #tpu.memory_space<vmem>>, vector<32x16xf32>
    %c0_48 = arith.constant 0 : index
    %c288 = arith.constant 288 : index
    %57 = vector.load %arg28[%c0_48, %c288] : memref<32x800xf32, #tpu.memory_space<vmem>>, vector<32x16xf32>
    tpu.vector_store %arg28[%c0_48, %c288], %56 {strides = array<i32>} : memref<32x800xf32, #tpu.memory_space<vmem>>, vector<32x16xf32>,
    %c34 = arith.constant 34 : index
    %c0_49 = arith.constant 0 : index
    %58 = vector.load %arg27[%c34, %c0_49] : memref<80x32xf32, #tpu.memory_space<vmem>>, vector<32x16xf32>
    %c0_50 = arith.constant 0 : index
    %c304 = arith.constant 304 : index
    %59 = vector.load %arg28[%c0_50, %c304] : memref<32x800xf32, #tpu.memory_space<vmem>>, vector<32x16xf32>
    tpu.vector_store %arg28[%c0_50, %c304], %58 {strides = array<i32>} : memref<32x800xf32, #tpu.memory_space<vmem>>, vector<32x16xf32>,
    %c38 = arith.constant 38 : index
    %c0_51 = arith.constant 0 : index
    %60 = vector.load %arg27[%c38, %c0_51] : memref<80x32xf32, #tpu.memory_space<vmem>>, vector<32x16xf32>
    %c0_52 = arith.constant 0 : index
    %c320 = arith.constant 320 : index
    %61 = vector.load %arg28[%c0_52, %c320] : memref<32x800xf32, #tpu.memory_space<vmem>>, vector<32x16xf32>
    tpu.vector_store %arg28[%c0_52, %c320], %60 {strides = array<i32>} : memref<32x800xf32, #tpu.memory_space<vmem>>, vector<32x16xf32>,
    %c39 = arith.constant 39 : index
    %c0_53 = arith.constant 0 : index
    %62 = vector.load %arg27[%c39, %c0_53] : memref<80x32xf32, #tpu.memory_space<vmem>>, vector<32x16xf32>
    %c0_54 = arith.constant 0 : index
    %c336 = arith.constant 336 : index
    %63 = vector.load %arg28[%c0_54, %c336] : memref<32x800xf32, #tpu.memory_space<vmem>>, vector<32x16xf32>
    tpu.vector_store %arg28[%c0_54, %c336], %62 {strides = array<i32>} : memref<32x800xf32, #tpu.memory_space<vmem>>, vector<32x16xf32>,
    %c40 = arith.constant 40 : index
    %c0_55 = arith.constant 0 : index
    %64 = vector.load %arg27[%c40, %c0_55] : memref<80x32xf32, #tpu.memory_space<vmem>>, vector<32x16xf32>
    %c0_56 = arith.constant 0 : index
    %c352 = arith.constant 352 : index
    %65 = vector.load %arg28[%c0_56, %c352] : memref<32x800xf32, #tpu.memory_space<vmem>>, vector<32x16xf32>
    tpu.vector_store %arg28[%c0_56, %c352], %64 {strides = array<i32>} : memref<32x800xf32, #tpu.memory_space<vmem>>, vector<32x16xf32>,
    %c41 = arith.constant 41 : index
    %c0_57 = arith.constant 0 : index
    %66 = vector.load %arg27[%c41, %c0_57] : memref<80x32xf32, #tpu.memory_space<vmem>>, vector<32x16xf32>
    %c0_58 = arith.constant 0 : index
    %c368 = arith.constant 368 : index
    %67 = vector.load %arg28[%c0_58, %c368] : memref<32x800xf32, #tpu.memory_space<vmem>>, vector<32x16xf32>
    tpu.vector_store %arg28[%c0_58, %c368], %66 {strides = array<i32>} : memref<32x800xf32, #tpu.memory_space<vmem>>, vector<32x16xf32>,
    %c42 = arith.constant 42 : index
    %c0_59 = arith.constant 0 : index
    %68 = vector.load %arg27[%c42, %c0_59] : memref<80x32xf32, #tpu.memory_space<vmem>>, vector<32x16xf32>
    %c0_60 = arith.constant 0 : index
    %c384 = arith.constant 384 : index
    %69 = vector.load %arg28[%c0_60, %c384] : memref<32x800xf32, #tpu.memory_space<vmem>>, vector<32x16xf32>
    tpu.vector_store %arg28[%c0_60, %c384], %68 {strides = array<i32>} : memref<32x800xf32, #tpu.memory_space<vmem>>, vector<32x16xf32>,
    %c0_61 = arith.constant 0 : index
    %c0_62 = arith.constant 0 : index
    %70 = vector.load %arg28[%c0_61, %c0_62] : memref<32x800xf32, #tpu.memory_space<vmem>>, vector<32x400xf32>
    %71 = arith.truncf %70 : vector<32x400xf32> to vector<32x400xbf16>
    %c0_63 = arith.constant 0 : index
    %c0_64 = arith.constant 0 : index
    %72 = vector.load %arg7[%c0_63, %c0_64] : memref<400x25xbf16, #tpu.memory_space<vmem>>, vector<400x25xbf16>
    %cst_65 = arith.constant dense<0.000000e+00> : vector<32x25xf32>
    %73 = tpu.matmul %71, %72, %cst_65 {dimension_numbers = #tpu.dot_dimension_numbers<[1], [0], [0], [1], [0, 0, 1, 1], [], []>} : vector<32x400xbf16>, vector<400x25xbf16>, vector<32x25xf32> -> vector<32x25xf32>
    %c0_66 = arith.constant 0 : index
    %c0_67 = arith.constant 0 : index
    %74 = vector.load %arg8[%c0_66, %c0_67] : memref<1x25xf32, #tpu.memory_space<vmem>>, vector<1x25xf32>
    %75 = vector.broadcast %74 : vector<1x25xf32> to vector<32x25xf32>
    %76 = arith.addf %73, %75 : vector<32x25xf32>
    %77 = vector.extract_strided_slice %76 {offsets = [0, 0], sizes = [32, 4], strides = [1, 1]} : vector<32x25xf32> to vector<32x4xf32>
    %78 = vector.extract_strided_slice %76 {offsets = [0, 4], sizes = [32, 4], strides = [1, 1]} : vector<32x25xf32> to vector<32x4xf32>
    %79 = vector.extract_strided_slice %76 {offsets = [0, 8], sizes = [32, 17], strides = [1, 1]} : vector<32x25xf32> to vector<32x17xf32>
    %80 = vector.broadcast %14 : vector<32x1xf32> to vector<32x16xf32>
    %81 = arith.mulf %16, %80 : vector<32x16xf32>
    %c24_68 = arith.constant 24 : index
    %c0_69 = arith.constant 0 : index
    %82 = vector.load %arg27[%c24_68, %c0_69] : memref<80x32xf32, #tpu.memory_space<vmem>>, vector<32x16xf32>
    tpu.vector_store %arg27[%c24_68, %c0_69], %81 {strides = array<i32>} : memref<80x32xf32, #tpu.memory_space<vmem>>, vector<32x16xf32>,
    %c6_70 = arith.constant 6 : index
    %c0_71 = arith.constant 0 : index
    %83 = vector.load %arg27[%c6_70, %c0_71] : memref<80x32xf32, #tpu.memory_space<vmem>>, vector<32x16xf32>
    %c0_72 = arith.constant 0 : index
    %c0_73 = arith.constant 0 : index
    %84 = vector.load %arg28[%c0_72, %c0_73] : memref<32x800xf32, #tpu.memory_space<vmem>>, vector<32x16xf32>
    tpu.vector_store %arg28[%c0_72, %c0_73], %83 {strides = array<i32>} : memref<32x800xf32, #tpu.memory_space<vmem>>, vector<32x16xf32>,
    %c7_74 = arith.constant 7 : index
    %c0_75 = arith.constant 0 : index
    %85 = vector.load %arg27[%c7_74, %c0_75] : memref<80x32xf32, #tpu.memory_space<vmem>>, vector<32x16xf32>
    %c0_76 = arith.constant 0 : index
    %c16_77 = arith.constant 16 : index
    %86 = vector.load %arg28[%c0_76, %c16_77] : memref<32x800xf32, #tpu.memory_space<vmem>>, vector<32x16xf32>
    tpu.vector_store %arg28[%c0_76, %c16_77], %85 {strides = array<i32>} : memref<32x800xf32, #tpu.memory_space<vmem>>, vector<32x16xf32>,
    %c8_78 = arith.constant 8 : index
    %c0_79 = arith.constant 0 : index
    %87 = vector.load %arg27[%c8_78, %c0_79] : memref<80x32xf32, #tpu.memory_space<vmem>>, vector<32x16xf32>
    %c0_80 = arith.constant 0 : index
    %c32_81 = arith.constant 32 : index
    %88 = vector.load %arg28[%c0_80, %c32_81] : memref<32x800xf32, #tpu.memory_space<vmem>>, vector<32x16xf32>
    tpu.vector_store %arg28[%c0_80, %c32_81], %87 {strides = array<i32>} : memref<32x800xf32, #tpu.memory_space<vmem>>, vector<32x16xf32>,
    %c9_82 = arith.constant 9 : index
    %c0_83 = arith.constant 0 : index
    %89 = vector.load %arg27[%c9_82, %c0_83] : memref<80x32xf32, #tpu.memory_space<vmem>>, vector<32x16xf32>
    %c0_84 = arith.constant 0 : index
    %c48_85 = arith.constant 48 : index
    %90 = vector.load %arg28[%c0_84, %c48_85] : memref<32x800xf32, #tpu.memory_space<vmem>>, vector<32x16xf32>
    tpu.vector_store %arg28[%c0_84, %c48_85], %89 {strides = array<i32>} : memref<32x800xf32, #tpu.memory_space<vmem>>, vector<32x16xf32>,
    %c10_86 = arith.constant 10 : index
    %c0_87 = arith.constant 0 : index
    %91 = vector.load %arg27[%c10_86, %c0_87] : memref<80x32xf32, #tpu.memory_space<vmem>>, vector<32x16xf32>
    %c0_88 = arith.constant 0 : index
    %c64_89 = arith.constant 64 : index
    %92 = vector.load %arg28[%c0_88, %c64_89] : memref<32x800xf32, #tpu.memory_space<vmem>>, vector<32x16xf32>
    tpu.vector_store %arg28[%c0_88, %c64_89], %91 {strides = array<i32>} : memref<32x800xf32, #tpu.memory_space<vmem>>, vector<32x16xf32>,
    %c14_90 = arith.constant 14 : index
    %c0_91 = arith.constant 0 : index
    %93 = vector.load %arg27[%c14_90, %c0_91] : memref<80x32xf32, #tpu.memory_space<vmem>>, vector<32x16xf32>
    %c0_92 = arith.constant 0 : index
    %c80_93 = arith.constant 80 : index
    %94 = vector.load %arg28[%c0_92, %c80_93] : memref<32x800xf32, #tpu.memory_space<vmem>>, vector<32x16xf32>
    tpu.vector_store %arg28[%c0_92, %c80_93], %93 {strides = array<i32>} : memref<32x800xf32, #tpu.memory_space<vmem>>, vector<32x16xf32>,
    %c15_94 = arith.constant 15 : index
    %c0_95 = arith.constant 0 : index
    %95 = vector.load %arg27[%c15_94, %c0_95] : memref<80x32xf32, #tpu.memory_space<vmem>>, vector<32x16xf32>
    %c0_96 = arith.constant 0 : index
    %c96_97 = arith.constant 96 : index
    %96 = vector.load %arg28[%c0_96, %c96_97] : memref<32x800xf32, #tpu.memory_space<vmem>>, vector<32x16xf32>
    tpu.vector_store %arg28[%c0_96, %c96_97], %95 {strides = array<i32>} : memref<32x800xf32, #tpu.memory_space<vmem>>, vector<32x16xf32>,
    %c16_98 = arith.constant 16 : index
    %c0_99 = arith.constant 0 : index
    %97 = vector.load %arg27[%c16_98, %c0_99] : memref<80x32xf32, #tpu.memory_space<vmem>>, vector<32x16xf32>
    %c0_100 = arith.constant 0 : index
    %c112_101 = arith.constant 112 : index
    %98 = vector.load %arg28[%c0_100, %c112_101] : memref<32x800xf32, #tpu.memory_space<vmem>>, vector<32x16xf32>
    tpu.vector_store %arg28[%c0_100, %c112_101], %97 {strides = array<i32>} : memref<32x800xf32, #tpu.memory_space<vmem>>, vector<32x16xf32>,
    %c17_102 = arith.constant 17 : index
    %c0_103 = arith.constant 0 : index
    %99 = vector.load %arg27[%c17_102, %c0_103] : memref<80x32xf32, #tpu.memory_space<vmem>>, vector<32x16xf32>
    %c0_104 = arith.constant 0 : index
    %c128_105 = arith.constant 128 : index
    %100 = vector.load %arg28[%c0_104, %c128_105] : memref<32x800xf32, #tpu.memory_space<vmem>>, vector<32x16xf32>
    tpu.vector_store %arg28[%c0_104, %c128_105], %99 {strides = array<i32>} : memref<32x800xf32, #tpu.memory_space<vmem>>, vector<32x16xf32>,
    %c18_106 = arith.constant 18 : index
    %c0_107 = arith.constant 0 : index
    %101 = vector.load %arg27[%c18_106, %c0_107] : memref<80x32xf32, #tpu.memory_space<vmem>>, vector<32x16xf32>
    %c0_108 = arith.constant 0 : index
    %c144_109 = arith.constant 144 : index
    %102 = vector.load %arg28[%c0_108, %c144_109] : memref<32x800xf32, #tpu.memory_space<vmem>>, vector<32x16xf32>
    tpu.vector_store %arg28[%c0_108, %c144_109], %101 {strides = array<i32>} : memref<32x800xf32, #tpu.memory_space<vmem>>, vector<32x16xf32>,
    %c22_110 = arith.constant 22 : index
    %c0_111 = arith.constant 0 : index
    %103 = vector.load %arg27[%c22_110, %c0_111] : memref<80x32xf32, #tpu.memory_space<vmem>>, vector<32x16xf32>
    %c0_112 = arith.constant 0 : index
    %c160_113 = arith.constant 160 : index
    %104 = vector.load %arg28[%c0_112, %c160_113] : memref<32x800xf32, #tpu.memory_space<vmem>>, vector<32x16xf32>
    tpu.vector_store %arg28[%c0_112, %c160_113], %103 {strides = array<i32>} : memref<32x800xf32, #tpu.memory_space<vmem>>, vector<32x16xf32>,
    %c23_114 = arith.constant 23 : index
    %c0_115 = arith.constant 0 : index
    %105 = vector.load %arg27[%c23_114, %c0_115] : memref<80x32xf32, #tpu.memory_space<vmem>>, vector<32x16xf32>
    %c0_116 = arith.constant 0 : index
    %c176_117 = arith.constant 176 : index
    %106 = vector.load %arg28[%c0_116, %c176_117] : memref<32x800xf32, #tpu.memory_space<vmem>>, vector<32x16xf32>
    tpu.vector_store %arg28[%c0_116, %c176_117], %105 {strides = array<i32>} : memref<32x800xf32, #tpu.memory_space<vmem>>, vector<32x16xf32>,
    %c24_118 = arith.constant 24 : index
    %c0_119 = arith.constant 0 : index
    %107 = vector.load %arg27[%c24_118, %c0_119] : memref<80x32xf32, #tpu.memory_space<vmem>>, vector<32x16xf32>
    %c0_120 = arith.constant 0 : index
    %c192_121 = arith.constant 192 : index
    %108 = vector.load %arg28[%c0_120, %c192_121] : memref<32x800xf32, #tpu.memory_space<vmem>>, vector<32x16xf32>
    tpu.vector_store %arg28[%c0_120, %c192_121], %107 {strides = array<i32>} : memref<32x800xf32, #tpu.memory_space<vmem>>, vector<32x16xf32>,
    %c25_122 = arith.constant 25 : index
    %c0_123 = arith.constant 0 : index
    %109 = vector.load %arg27[%c25_122, %c0_123] : memref<80x32xf32, #tpu.memory_space<vmem>>, vector<32x16xf32>
    %c0_124 = arith.constant 0 : index
    %c208_125 = arith.constant 208 : index
    %110 = vector.load %arg28[%c0_124, %c208_125] : memref<32x800xf32, #tpu.memory_space<vmem>>, vector<32x16xf32>
    tpu.vector_store %arg28[%c0_124, %c208_125], %109 {strides = array<i32>} : memref<32x800xf32, #tpu.memory_space<vmem>>, vector<32x16xf32>,
    %c26_126 = arith.constant 26 : index
    %c0_127 = arith.constant 0 : index
    %111 = vector.load %arg27[%c26_126, %c0_127] : memref<80x32xf32, #tpu.memory_space<vmem>>, vector<32x16xf32>
    %c0_128 = arith.constant 0 : index
    %c224_129 = arith.constant 224 : index
    %112 = vector.load %arg28[%c0_128, %c224_129] : memref<32x800xf32, #tpu.memory_space<vmem>>, vector<32x16xf32>
    tpu.vector_store %arg28[%c0_128, %c224_129], %111 {strides = array<i32>} : memref<32x800xf32, #tpu.memory_space<vmem>>, vector<32x16xf32>,
    %c30_130 = arith.constant 30 : index
    %c0_131 = arith.constant 0 : index
    %113 = vector.load %arg27[%c30_130, %c0_131] : memref<80x32xf32, #tpu.memory_space<vmem>>, vector<32x16xf32>
    %c0_132 = arith.constant 0 : index
    %c240_133 = arith.constant 240 : index
    %114 = vector.load %arg28[%c0_132, %c240_133] : memref<32x800xf32, #tpu.memory_space<vmem>>, vector<32x16xf32>
    tpu.vector_store %arg28[%c0_132, %c240_133], %113 {strides = array<i32>} : memref<32x800xf32, #tpu.memory_space<vmem>>, vector<32x16xf32>,
    %c31_134 = arith.constant 31 : index
    %c0_135 = arith.constant 0 : index
    %115 = vector.load %arg27[%c31_134, %c0_135] : memref<80x32xf32, #tpu.memory_space<vmem>>, vector<32x16xf32>
    %c0_136 = arith.constant 0 : index
    %c256_137 = arith.constant 256 : index
    %116 = vector.load %arg28[%c0_136, %c256_137] : memref<32x800xf32, #tpu.memory_space<vmem>>, vector<32x16xf32>
    tpu.vector_store %arg28[%c0_136, %c256_137], %115 {strides = array<i32>} : memref<32x800xf32, #tpu.memory_space<vmem>>, vector<32x16xf32>,
    %c32_138 = arith.constant 32 : index
    %c0_139 = arith.constant 0 : index
    %117 = vector.load %arg27[%c32_138, %c0_139] : memref<80x32xf32, #tpu.memory_space<vmem>>, vector<32x16xf32>
    %c0_140 = arith.constant 0 : index
    %c272_141 = arith.constant 272 : index
    %118 = vector.load %arg28[%c0_140, %c272_141] : memref<32x800xf32, #tpu.memory_space<vmem>>, vector<32x16xf32>
    tpu.vector_store %arg28[%c0_140, %c272_141], %117 {strides = array<i32>} : memref<32x800xf32, #tpu.memory_space<vmem>>, vector<32x16xf32>,
    %c33_142 = arith.constant 33 : index
    %c0_143 = arith.constant 0 : index
    %119 = vector.load %arg27[%c33_142, %c0_143] : memref<80x32xf32, #tpu.memory_space<vmem>>, vector<32x16xf32>
    %c0_144 = arith.constant 0 : index
    %c288_145 = arith.constant 288 : index
    %120 = vector.load %arg28[%c0_144, %c288_145] : memref<32x800xf32, #tpu.memory_space<vmem>>, vector<32x16xf32>
    tpu.vector_store %arg28[%c0_144, %c288_145], %119 {strides = array<i32>} : memref<32x800xf32, #tpu.memory_space<vmem>>, vector<32x16xf32>,
    %c34_146 = arith.constant 34 : index
    %c0_147 = arith.constant 0 : index
    %121 = vector.load %arg27[%c34_146, %c0_147] : memref<80x32xf32, #tpu.memory_space<vmem>>, vector<32x16xf32>
    %c0_148 = arith.constant 0 : index
    %c304_149 = arith.constant 304 : index
    %122 = vector.load %arg28[%c0_148, %c304_149] : memref<32x800xf32, #tpu.memory_space<vmem>>, vector<32x16xf32>
    tpu.vector_store %arg28[%c0_148, %c304_149], %121 {strides = array<i32>} : memref<32x800xf32, #tpu.memory_space<vmem>>, vector<32x16xf32>,
    %c38_150 = arith.constant 38 : index
    %c0_151 = arith.constant 0 : index
    %123 = vector.load %arg27[%c38_150, %c0_151] : memref<80x32xf32, #tpu.memory_space<vmem>>, vector<32x16xf32>
    %c0_152 = arith.constant 0 : index
    %c320_153 = arith.constant 320 : index
    %124 = vector.load %arg28[%c0_152, %c320_153] : memref<32x800xf32, #tpu.memory_space<vmem>>, vector<32x16xf32>
    tpu.vector_store %arg28[%c0_152, %c320_153], %123 {strides = array<i32>} : memref<32x800xf32, #tpu.memory_space<vmem>>, vector<32x16xf32>,
    %c39_154 = arith.constant 39 : index
    %c0_155 = arith.constant 0 : index
    %125 = vector.load %arg27[%c39_154, %c0_155] : memref<80x32xf32, #tpu.memory_space<vmem>>, vector<32x16xf32>
    %c0_156 = arith.constant 0 : index
    %c336_157 = arith.constant 336 : index
    %126 = vector.load %arg28[%c0_156, %c336_157] : memref<32x800xf32, #tpu.memory_space<vmem>>, vector<32x16xf32>
    tpu.vector_store %arg28[%c0_156, %c336_157], %125 {strides = array<i32>} : memref<32x800xf32, #tpu.memory_space<vmem>>, vector<32x16xf32>,
    %c40_158 = arith.constant 40 : index
    %c0_159 = arith.constant 0 : index
    %127 = vector.load %arg27[%c40_158, %c0_159] : memref<80x32xf32, #tpu.memory_space<vmem>>, vector<32x16xf32>
    %c0_160 = arith.constant 0 : index
    %c352_161 = arith.constant 352 : index
    %128 = vector.load %arg28[%c0_160, %c352_161] : memref<32x800xf32, #tpu.memory_space<vmem>>, vector<32x16xf32>
    tpu.vector_store %arg28[%c0_160, %c352_161], %127 {strides = array<i32>} : memref<32x800xf32, #tpu.memory_space<vmem>>, vector<32x16xf32>,
    %c41_162 = arith.constant 41 : index
    %c0_163 = arith.constant 0 : index
    %129 = vector.load %arg27[%c41_162, %c0_163] : memref<80x32xf32, #tpu.memory_space<vmem>>, vector<32x16xf32>
    %c0_164 = arith.constant 0 : index
    %c368_165 = arith.constant 368 : index
    %130 = vector.load %arg28[%c0_164, %c368_165] : memref<32x800xf32, #tpu.memory_space<vmem>>, vector<32x16xf32>
    tpu.vector_store %arg28[%c0_164, %c368_165], %129 {strides = array<i32>} : memref<32x800xf32, #tpu.memory_space<vmem>>, vector<32x16xf32>,
    %c42_166 = arith.constant 42 : index
    %c0_167 = arith.constant 0 : index
    %131 = vector.load %arg27[%c42_166, %c0_167] : memref<80x32xf32, #tpu.memory_space<vmem>>, vector<32x16xf32>
    %c0_168 = arith.constant 0 : index
    %c384_169 = arith.constant 384 : index
    %132 = vector.load %arg28[%c0_168, %c384_169] : memref<32x800xf32, #tpu.memory_space<vmem>>, vector<32x16xf32>
    tpu.vector_store %arg28[%c0_168, %c384_169], %131 {strides = array<i32>} : memref<32x800xf32, #tpu.memory_space<vmem>>, vector<32x16xf32>,
    %c0_170 = arith.constant 0 : index
    %c0_171 = arith.constant 0 : index
    %133 = vector.load %arg28[%c0_170, %c0_171] : memref<32x800xf32, #tpu.memory_space<vmem>>, vector<32x400xf32>
    %134 = arith.truncf %133 : vector<32x400xf32> to vector<32x400xbf16>
    %c0_172 = arith.constant 0 : index
    %c0_173 = arith.constant 0 : index
    %135 = vector.load %arg11[%c0_172, %c0_173] : memref<400x32xbf16, #tpu.memory_space<vmem>>, vector<400x32xbf16>
    %cst_174 = arith.constant dense<0.000000e+00> : vector<32x32xf32>
    %136 = tpu.matmul %134, %135, %cst_174 {dimension_numbers = #tpu.dot_dimension_numbers<[1], [0], [0], [1], [0, 0, 1, 1], [], []>} : vector<32x400xbf16>, vector<400x32xbf16>, vector<32x32xf32> -> vector<32x32xf32>
    %c0_175 = arith.constant 0 : index
    %c0_176 = arith.constant 0 : index
    %137 = vector.load %arg12[%c0_175, %c0_176] : memref<1x32xf32, #tpu.memory_space<vmem>>, vector<1x32xf32>
    %138 = vector.broadcast %137 : vector<1x32xf32> to vector<32x32xf32>
    %139 = arith.addf %136, %138 : vector<32x32xf32>
    %c0_177 = arith.constant 0 : index
    %c0_178 = arith.constant 0 : index
    %140 = vector.load %arg2[%c0_177, %c0_178] : memref<32x48xf32, #tpu.memory_space<vmem>>, vector<32x48xf32>
    %141 = arith.truncf %140 : vector<32x48xf32> to vector<32x48xbf16>
    %c0_179 = arith.constant 0 : index
    %c0_180 = arith.constant 0 : index
    %142 = vector.load %arg6[%c0_179, %c0_180] : memref<48x32xbf16, #tpu.memory_space<vmem>>, vector<48x32xbf16>
    %cst_181 = arith.constant dense<0.000000e+00> : vector<32x32xf32>
    %143 = tpu.matmul %141, %142, %cst_181 {dimension_numbers = #tpu.dot_dimension_numbers<[1], [0], [0], [1], [0, 0, 1, 1], [], []>} : vector<32x48xbf16>, vector<48x32xbf16>, vector<32x32xf32> -> vector<32x32xf32>
    %cst_182 = arith.constant 0.000000e+00 : f32
    %144 = vector.broadcast %cst_182 : f32 to vector<32x16xf32>
    %145 = tpu.concatenate %15, %144 in 1 : vector<32x16xf32>, vector<32x16xf32> -> vector<32x32xf32>
    %146 = arith.addf %139, %143 : vector<32x32xf32>
    %c0_183 = arith.constant 0 : index
    %c0_184 = arith.constant 0 : index
    %147 = vector.load %arg3[%c0_183, %c0_184] : memref<32x32xf32, #tpu.memory_space<vmem>>, vector<32x32xf32>
    %148 = arith.addf %146, %147 : vector<32x32xf32>
    %149 = arith.addf %148, %145 : vector<32x32xf32>
    %150 = vector.broadcast %14 : vector<32x1xf32> to vector<32x32xf32>
    %151 = arith.mulf %149, %150 : vector<32x32xf32>
    %c24_185 = arith.constant 24 : index
    %c0_186 = arith.constant 0 : index
    %152 = vector.load %arg27[%c24_185, %c0_186] : memref<80x32xf32, #tpu.memory_space<vmem>>, vector<32x32xf32>
    tpu.vector_store %arg27[%c24_185, %c0_186], %151 {strides = array<i32>} : memref<80x32xf32, #tpu.memory_space<vmem>>, vector<32x32xf32>,
    %c6_187 = arith.constant 6 : index
    %c0_188 = arith.constant 0 : index
    %153 = vector.load %arg27[%c6_187, %c0_188] : memref<80x32xf32, #tpu.memory_space<vmem>>, vector<32x32xf32>
    %c0_189 = arith.constant 0 : index
    %c0_190 = arith.constant 0 : index
    %154 = vector.load %arg28[%c0_189, %c0_190] : memref<32x800xf32, #tpu.memory_space<vmem>>, vector<32x32xf32>
    tpu.vector_store %arg28[%c0_189, %c0_190], %153 {strides = array<i32>} : memref<32x800xf32, #tpu.memory_space<vmem>>, vector<32x32xf32>,
    %c7_191 = arith.constant 7 : index
    %c0_192 = arith.constant 0 : index
    %155 = vector.load %arg27[%c7_191, %c0_192] : memref<80x32xf32, #tpu.memory_space<vmem>>, vector<32x32xf32>
    %c0_193 = arith.constant 0 : index
    %c32_194 = arith.constant 32 : index
    %156 = vector.load %arg28[%c0_193, %c32_194] : memref<32x800xf32, #tpu.memory_space<vmem>>, vector<32x32xf32>
    tpu.vector_store %arg28[%c0_193, %c32_194], %155 {strides = array<i32>} : memref<32x800xf32, #tpu.memory_space<vmem>>, vector<32x32xf32>,
    %c8_195 = arith.constant 8 : index
    %c0_196 = arith.constant 0 : index
    %157 = vector.load %arg27[%c8_195, %c0_196] : memref<80x32xf32, #tpu.memory_space<vmem>>, vector<32x32xf32>
    %c0_197 = arith.constant 0 : index
    %c64_198 = arith.constant 64 : index
    %158 = vector.load %arg28[%c0_197, %c64_198] : memref<32x800xf32, #tpu.memory_space<vmem>>, vector<32x32xf32>
    tpu.vector_store %arg28[%c0_197, %c64_198], %157 {strides = array<i32>} : memref<32x800xf32, #tpu.memory_space<vmem>>, vector<32x32xf32>,
    %c9_199 = arith.constant 9 : index
    %c0_200 = arith.constant 0 : index
    %159 = vector.load %arg27[%c9_199, %c0_200] : memref<80x32xf32, #tpu.memory_space<vmem>>, vector<32x32xf32>
    %c0_201 = arith.constant 0 : index
    %c96_202 = arith.constant 96 : index
    %160 = vector.load %arg28[%c0_201, %c96_202] : memref<32x800xf32, #tpu.memory_space<vmem>>, vector<32x32xf32>
    tpu.vector_store %arg28[%c0_201, %c96_202], %159 {strides = array<i32>} : memref<32x800xf32, #tpu.memory_space<vmem>>, vector<32x32xf32>,
    %c10_203 = arith.constant 10 : index
    %c0_204 = arith.constant 0 : index
    %161 = vector.load %arg27[%c10_203, %c0_204] : memref<80x32xf32, #tpu.memory_space<vmem>>, vector<32x32xf32>
    %c0_205 = arith.constant 0 : index
    %c128_206 = arith.constant 128 : index
    %162 = vector.load %arg28[%c0_205, %c128_206] : memref<32x800xf32, #tpu.memory_space<vmem>>, vector<32x32xf32>
    tpu.vector_store %arg28[%c0_205, %c128_206], %161 {strides = array<i32>} : memref<32x800xf32, #tpu.memory_space<vmem>>, vector<32x32xf32>,
    %c14_207 = arith.constant 14 : index
    %c0_208 = arith.constant 0 : index
    %163 = vector.load %arg27[%c14_207, %c0_208] : memref<80x32xf32, #tpu.memory_space<vmem>>, vector<32x32xf32>
    %c0_209 = arith.constant 0 : index
    %c160_210 = arith.constant 160 : index
    %164 = vector.load %arg28[%c0_209, %c160_210] : memref<32x800xf32, #tpu.memory_space<vmem>>, vector<32x32xf32>
    tpu.vector_store %arg28[%c0_209, %c160_210], %163 {strides = array<i32>} : memref<32x800xf32, #tpu.memory_space<vmem>>, vector<32x32xf32>,
    %c15_211 = arith.constant 15 : index
    %c0_212 = arith.constant 0 : index
    %165 = vector.load %arg27[%c15_211, %c0_212] : memref<80x32xf32, #tpu.memory_space<vmem>>, vector<32x32xf32>
    %c0_213 = arith.constant 0 : index
    %c192_214 = arith.constant 192 : index
    %166 = vector.load %arg28[%c0_213, %c192_214] : memref<32x800xf32, #tpu.memory_space<vmem>>, vector<32x32xf32>
    tpu.vector_store %arg28[%c0_213, %c192_214], %165 {strides = array<i32>} : memref<32x800xf32, #tpu.memory_space<vmem>>, vector<32x32xf32>,
    %c16_215 = arith.constant 16 : index
    %c0_216 = arith.constant 0 : index
    %167 = vector.load %arg27[%c16_215, %c0_216] : memref<80x32xf32, #tpu.memory_space<vmem>>, vector<32x32xf32>
    %c0_217 = arith.constant 0 : index
    %c224_218 = arith.constant 224 : index
    %168 = vector.load %arg28[%c0_217, %c224_218] : memref<32x800xf32, #tpu.memory_space<vmem>>, vector<32x32xf32>
    tpu.vector_store %arg28[%c0_217, %c224_218], %167 {strides = array<i32>} : memref<32x800xf32, #tpu.memory_space<vmem>>, vector<32x32xf32>,
    %c17_219 = arith.constant 17 : index
    %c0_220 = arith.constant 0 : index
    %169 = vector.load %arg27[%c17_219, %c0_220] : memref<80x32xf32, #tpu.memory_space<vmem>>, vector<32x32xf32>
    %c0_221 = arith.constant 0 : index
    %c256_222 = arith.constant 256 : index
    %170 = vector.load %arg28[%c0_221, %c256_222] : memref<32x800xf32, #tpu.memory_space<vmem>>, vector<32x32xf32>
    tpu.vector_store %arg28[%c0_221, %c256_222], %169 {strides = array<i32>} : memref<32x800xf32, #tpu.memory_space<vmem>>, vector<32x32xf32>,
    %c18_223 = arith.constant 18 : index
    %c0_224 = arith.constant 0 : index
    %171 = vector.load %arg27[%c18_223, %c0_224] : memref<80x32xf32, #tpu.memory_space<vmem>>, vector<32x32xf32>
    %c0_225 = arith.constant 0 : index
    %c288_226 = arith.constant 288 : index
    %172 = vector.load %arg28[%c0_225, %c288_226] : memref<32x800xf32, #tpu.memory_space<vmem>>, vector<32x32xf32>
    tpu.vector_store %arg28[%c0_225, %c288_226], %171 {strides = array<i32>} : memref<32x800xf32, #tpu.memory_space<vmem>>, vector<32x32xf32>,
    %c22_227 = arith.constant 22 : index
    %c0_228 = arith.constant 0 : index
    %173 = vector.load %arg27[%c22_227, %c0_228] : memref<80x32xf32, #tpu.memory_space<vmem>>, vector<32x32xf32>
    %c0_229 = arith.constant 0 : index
    %c320_230 = arith.constant 320 : index
    %174 = vector.load %arg28[%c0_229, %c320_230] : memref<32x800xf32, #tpu.memory_space<vmem>>, vector<32x32xf32>
    tpu.vector_store %arg28[%c0_229, %c320_230], %173 {strides = array<i32>} : memref<32x800xf32, #tpu.memory_space<vmem>>, vector<32x32xf32>,
    %c23_231 = arith.constant 23 : index
    %c0_232 = arith.constant 0 : index
    %175 = vector.load %arg27[%c23_231, %c0_232] : memref<80x32xf32, #tpu.memory_space<vmem>>, vector<32x32xf32>
    %c0_233 = arith.constant 0 : index
    %c352_234 = arith.constant 352 : index
    %176 = vector.load %arg28[%c0_233, %c352_234] : memref<32x800xf32, #tpu.memory_space<vmem>>, vector<32x32xf32>
    tpu.vector_store %arg28[%c0_233, %c352_234], %175 {strides = array<i32>} : memref<32x800xf32, #tpu.memory_space<vmem>>, vector<32x32xf32>,
    %c24_235 = arith.constant 24 : index
    %c0_236 = arith.constant 0 : index
    %177 = vector.load %arg27[%c24_235, %c0_236] : memref<80x32xf32, #tpu.memory_space<vmem>>, vector<32x32xf32>
    %c0_237 = arith.constant 0 : index
    %c384_238 = arith.constant 384 : index
    %178 = vector.load %arg28[%c0_237, %c384_238] : memref<32x800xf32, #tpu.memory_space<vmem>>, vector<32x32xf32>
    tpu.vector_store %arg28[%c0_237, %c384_238], %177 {strides = array<i32>} : memref<32x800xf32, #tpu.memory_space<vmem>>, vector<32x32xf32>,
    %c25_239 = arith.constant 25 : index
    %c0_240 = arith.constant 0 : index
    %179 = vector.load %arg27[%c25_239, %c0_240] : memref<80x32xf32, #tpu.memory_space<vmem>>, vector<32x32xf32>
    %c0_241 = arith.constant 0 : index
    %c416 = arith.constant 416 : index
    %180 = vector.load %arg28[%c0_241, %c416] : memref<32x800xf32, #tpu.memory_space<vmem>>, vector<32x32xf32>
    tpu.vector_store %arg28[%c0_241, %c416], %179 {strides = array<i32>} : memref<32x800xf32, #tpu.memory_space<vmem>>, vector<32x32xf32>,
    %c26_242 = arith.constant 26 : index
    %c0_243 = arith.constant 0 : index
    %181 = vector.load %arg27[%c26_242, %c0_243] : memref<80x32xf32, #tpu.memory_space<vmem>>, vector<32x32xf32>
    %c0_244 = arith.constant 0 : index
    %c448 = arith.constant 448 : index
    %182 = vector.load %arg28[%c0_244, %c448] : memref<32x800xf32, #tpu.memory_space<vmem>>, vector<32x32xf32>
    tpu.vector_store %arg28[%c0_244, %c448], %181 {strides = array<i32>} : memref<32x800xf32, #tpu.memory_space<vmem>>, vector<32x32xf32>,
    %c30_245 = arith.constant 30 : index
    %c0_246 = arith.constant 0 : index
    %183 = vector.load %arg27[%c30_245, %c0_246] : memref<80x32xf32, #tpu.memory_space<vmem>>, vector<32x32xf32>
    %c0_247 = arith.constant 0 : index
    %c480 = arith.constant 480 : index
    %184 = vector.load %arg28[%c0_247, %c480] : memref<32x800xf32, #tpu.memory_space<vmem>>, vector<32x32xf32>
    tpu.vector_store %arg28[%c0_247, %c480], %183 {strides = array<i32>} : memref<32x800xf32, #tpu.memory_space<vmem>>, vector<32x32xf32>,
    %c31_248 = arith.constant 31 : index
    %c0_249 = arith.constant 0 : index
    %185 = vector.load %arg27[%c31_248, %c0_249] : memref<80x32xf32, #tpu.memory_space<vmem>>, vector<32x32xf32>
    %c0_250 = arith.constant 0 : index
    %c512 = arith.constant 512 : index
    %186 = vector.load %arg28[%c0_250, %c512] : memref<32x800xf32, #tpu.memory_space<vmem>>, vector<32x32xf32>
    tpu.vector_store %arg28[%c0_250, %c512], %185 {strides = array<i32>} : memref<32x800xf32, #tpu.memory_space<vmem>>, vector<32x32xf32>,
    %c32_251 = arith.constant 32 : index
    %c0_252 = arith.constant 0 : index
    %187 = vector.load %arg27[%c32_251, %c0_252] : memref<80x32xf32, #tpu.memory_space<vmem>>, vector<32x32xf32>
    %c0_253 = arith.constant 0 : index
    %c544 = arith.constant 544 : index
    %188 = vector.load %arg28[%c0_253, %c544] : memref<32x800xf32, #tpu.memory_space<vmem>>, vector<32x32xf32>
    tpu.vector_store %arg28[%c0_253, %c544], %187 {strides = array<i32>} : memref<32x800xf32, #tpu.memory_space<vmem>>, vector<32x32xf32>,
    %c33_254 = arith.constant 33 : index
    %c0_255 = arith.constant 0 : index
    %189 = vector.load %arg27[%c33_254, %c0_255] : memref<80x32xf32, #tpu.memory_space<vmem>>, vector<32x32xf32>
    %c0_256 = arith.constant 0 : index
    %c576 = arith.constant 576 : index
    %190 = vector.load %arg28[%c0_256, %c576] : memref<32x800xf32, #tpu.memory_space<vmem>>, vector<32x32xf32>
    tpu.vector_store %arg28[%c0_256, %c576], %189 {strides = array<i32>} : memref<32x800xf32, #tpu.memory_space<vmem>>, vector<32x32xf32>,
    %c34_257 = arith.constant 34 : index
    %c0_258 = arith.constant 0 : index
    %191 = vector.load %arg27[%c34_257, %c0_258] : memref<80x32xf32, #tpu.memory_space<vmem>>, vector<32x32xf32>
    %c0_259 = arith.constant 0 : index
    %c608 = arith.constant 608 : index
    %192 = vector.load %arg28[%c0_259, %c608] : memref<32x800xf32, #tpu.memory_space<vmem>>, vector<32x32xf32>
    tpu.vector_store %arg28[%c0_259, %c608], %191 {strides = array<i32>} : memref<32x800xf32, #tpu.memory_space<vmem>>, vector<32x32xf32>,
    %c38_260 = arith.constant 38 : index
    %c0_261 = arith.constant 0 : index
    %193 = vector.load %arg27[%c38_260, %c0_261] : memref<80x32xf32, #tpu.memory_space<vmem>>, vector<32x32xf32>
    %c0_262 = arith.constant 0 : index
    %c640 = arith.constant 640 : index
    %194 = vector.load %arg28[%c0_262, %c640] : memref<32x800xf32, #tpu.memory_space<vmem>>, vector<32x32xf32>
    tpu.vector_store %arg28[%c0_262, %c640], %193 {strides = array<i32>} : memref<32x800xf32, #tpu.memory_space<vmem>>, vector<32x32xf32>,
    %c39_263 = arith.constant 39 : index
    %c0_264 = arith.constant 0 : index
    %195 = vector.load %arg27[%c39_263, %c0_264] : memref<80x32xf32, #tpu.memory_space<vmem>>, vector<32x32xf32>
    %c0_265 = arith.constant 0 : index
    %c672 = arith.constant 672 : index
    %196 = vector.load %arg28[%c0_265, %c672] : memref<32x800xf32, #tpu.memory_space<vmem>>, vector<32x32xf32>
    tpu.vector_store %arg28[%c0_265, %c672], %195 {strides = array<i32>} : memref<32x800xf32, #tpu.memory_space<vmem>>, vector<32x32xf32>,
    %c40_266 = arith.constant 40 : index
    %c0_267 = arith.constant 0 : index
    %197 = vector.load %arg27[%c40_266, %c0_267] : memref<80x32xf32, #tpu.memory_space<vmem>>, vector<32x32xf32>
    %c0_268 = arith.constant 0 : index
    %c704 = arith.constant 704 : index
    %198 = vector.load %arg28[%c0_268, %c704] : memref<32x800xf32, #tpu.memory_space<vmem>>, vector<32x32xf32>
    tpu.vector_store %arg28[%c0_268, %c704], %197 {strides = array<i32>} : memref<32x800xf32, #tpu.memory_space<vmem>>, vector<32x32xf32>,
    %c41_269 = arith.constant 41 : index
    %c0_270 = arith.constant 0 : index
    %199 = vector.load %arg27[%c41_269, %c0_270] : memref<80x32xf32, #tpu.memory_space<vmem>>, vector<32x32xf32>
    %c0_271 = arith.constant 0 : index
    %c736 = arith.constant 736 : index
    %200 = vector.load %arg28[%c0_271, %c736] : memref<32x800xf32, #tpu.memory_space<vmem>>, vector<32x32xf32>
    tpu.vector_store %arg28[%c0_271, %c736], %199 {strides = array<i32>} : memref<32x800xf32, #tpu.memory_space<vmem>>, vector<32x32xf32>,
    %c42_272 = arith.constant 42 : index
    %c0_273 = arith.constant 0 : index
    %201 = vector.load %arg27[%c42_272, %c0_273] : memref<80x32xf32, #tpu.memory_space<vmem>>, vector<32x32xf32>
    %c0_274 = arith.constant 0 : index
    %c768 = arith.constant 768 : index
    %202 = vector.load %arg28[%c0_274, %c768] : memref<32x800xf32, #tpu.memory_space<vmem>>, vector<32x32xf32>
    tpu.vector_store %arg28[%c0_274, %c768], %201 {strides = array<i32>} : memref<32x800xf32, #tpu.memory_space<vmem>>, vector<32x32xf32>,
    %c0_275 = arith.constant 0 : index
    %c0_276 = arith.constant 0 : index
    %203 = vector.load %arg28[%c0_275, %c0_276] : memref<32x800xf32, #tpu.memory_space<vmem>>, vector<32x800xf32>
    %204 = arith.truncf %203 : vector<32x800xf32> to vector<32x800xbf16>
    %c0_277 = arith.constant 0 : index
    %c0_278 = arith.constant 0 : index
    %205 = vector.load %arg13[%c0_277, %c0_278] : memref<800x64xbf16, #tpu.memory_space<vmem>>, vector<800x64xbf16>
    %cst_279 = arith.constant dense<0.000000e+00> : vector<32x64xf32>
    %206 = tpu.matmul %204, %205, %cst_279 {dimension_numbers = #tpu.dot_dimension_numbers<[1], [0], [0], [1], [0, 0, 1, 1], [], []>} : vector<32x800xbf16>, vector<800x64xbf16>, vector<32x64xf32> -> vector<32x64xf32>
    %c0_280 = arith.constant 0 : index
    %c0_281 = arith.constant 0 : index
    %207 = vector.load %arg14[%c0_280, %c0_281] : memref<1x64xf32, #tpu.memory_space<vmem>>, vector<1x64xf32>
    %208 = vector.broadcast %207 : vector<1x64xf32> to vector<32x64xf32>
    %209 = arith.addf %206, %208 : vector<32x64xf32>
    %c0_282 = arith.constant 0 : index
    %c0_283 = arith.constant 0 : index
    %210 = vector.load %arg22[%c0_282, %c0_283] : memref<32x16xf32, #tpu.memory_space<vmem>>, vector<32x16xf32>
    %211 = vector.extract_strided_slice %209 {offsets = [0, 0], sizes = [32, 16], strides = [1, 1]} : vector<32x64xf32> to vector<32x16xf32>
    %cst_284 = arith.constant 5.000000e-01 : f32
    %212 = vector.broadcast %cst_284 : f32 to vector<32x16xf32>
    %213 = arith.mulf %212, %211 : vector<32x16xf32>
    %214 = math.tanh %213 : vector<32x16xf32>
    %cst_285 = arith.constant 5.000000e-01 : f32
    %215 = vector.broadcast %cst_285 : f32 to vector<32x16xf32>
    %216 = arith.mulf %215, %214 : vector<32x16xf32>
    %cst_286 = arith.constant 5.000000e-01 : f32
    %217 = vector.broadcast %cst_286 : f32 to vector<32x16xf32>
    %218 = arith.addf %216, %217 : vector<32x16xf32>
    %219 = vector.extract_strided_slice %209 {offsets = [0, 16], sizes = [32, 16], strides = [1, 1]} : vector<32x64xf32> to vector<32x16xf32>
    %cst_287 = arith.constant 5.000000e-01 : f32
    %220 = vector.broadcast %cst_287 : f32 to vector<32x16xf32>
    %221 = arith.mulf %220, %219 : vector<32x16xf32>
    %222 = math.tanh %221 : vector<32x16xf32>
    %cst_288 = arith.constant 5.000000e-01 : f32
    %223 = vector.broadcast %cst_288 : f32 to vector<32x16xf32>
    %224 = arith.mulf %223, %222 : vector<32x16xf32>
    %cst_289 = arith.constant 5.000000e-01 : f32
    %225 = vector.broadcast %cst_289 : f32 to vector<32x16xf32>
    %226 = arith.addf %224, %225 : vector<32x16xf32>
    %227 = vector.extract_strided_slice %209 {offsets = [0, 32], sizes = [32, 16], strides = [1, 1]} : vector<32x64xf32> to vector<32x16xf32>
    %cst_290 = arith.constant 5.000000e-01 : f32
    %228 = vector.broadcast %cst_290 : f32 to vector<32x16xf32>
    %229 = arith.mulf %228, %227 : vector<32x16xf32>
    %230 = math.tanh %229 : vector<32x16xf32>
    %cst_291 = arith.constant 5.000000e-01 : f32
    %231 = vector.broadcast %cst_291 : f32 to vector<32x16xf32>
    %232 = arith.mulf %231, %230 : vector<32x16xf32>
    %cst_292 = arith.constant 5.000000e-01 : f32
    %233 = vector.broadcast %cst_292 : f32 to vector<32x16xf32>
    %234 = arith.addf %232, %233 : vector<32x16xf32>
    %235 = vector.extract_strided_slice %209 {offsets = [0, 48], sizes = [32, 16], strides = [1, 1]} : vector<32x64xf32> to vector<32x16xf32>
    %236 = math.tanh %235 : vector<32x16xf32>
    %237 = arith.mulf %218, %210 : vector<32x16xf32>
    %238 = arith.mulf %226, %236 : vector<32x16xf32>
    %239 = arith.addf %237, %238 : vector<32x16xf32>
    %240 = math.tanh %239 : vector<32x16xf32>
    %241 = arith.mulf %234, %240 : vector<32x16xf32>
    %c0_293 = arith.constant 0 : index
    %c0_294 = arith.constant 0 : index
    %242 = vector.load %arg21[%c0_293, %c0_294] : memref<32x16xf32, #tpu.memory_space<vmem>>, vector<32x16xf32>
    tpu.vector_store %arg21[%c0_293, %c0_294], %241 {strides = array<i32>} : memref<32x16xf32, #tpu.memory_space<vmem>>, vector<32x16xf32>,
    %c0_295 = arith.constant 0 : index
    %c0_296 = arith.constant 0 : index
    %243 = vector.load %arg22[%c0_295, %c0_296] : memref<32x16xf32, #tpu.memory_space<vmem>>, vector<32x16xf32>
    tpu.vector_store %arg22[%c0_295, %c0_296], %239 {strides = array<i32>} : memref<32x16xf32, #tpu.memory_space<vmem>>, vector<32x16xf32>,
    %244 = vector.broadcast %14 : vector<32x1xf32> to vector<32x16xf32>
    %245 = arith.mulf %241, %244 : vector<32x16xf32>
    %c24_297 = arith.constant 24 : index
    %c0_298 = arith.constant 0 : index
    %246 = vector.load %arg27[%c24_297, %c0_298] : memref<80x32xf32, #tpu.memory_space<vmem>>, vector<32x16xf32>
    tpu.vector_store %arg27[%c24_297, %c0_298], %245 {strides = array<i32>} : memref<80x32xf32, #tpu.memory_space<vmem>>, vector<32x16xf32>,
    %c6_299 = arith.constant 6 : index
    %c0_300 = arith.constant 0 : index
    %247 = vector.load %arg27[%c6_299, %c0_300] : memref<80x32xf32, #tpu.memory_space<vmem>>, vector<32x16xf32>
    %c0_301 = arith.constant 0 : index
    %c0_302 = arith.constant 0 : index
    %248 = vector.load %arg28[%c0_301, %c0_302] : memref<32x800xf32, #tpu.memory_space<vmem>>, vector<32x16xf32>
    tpu.vector_store %arg28[%c0_301, %c0_302], %247 {strides = array<i32>} : memref<32x800xf32, #tpu.memory_space<vmem>>, vector<32x16xf32>,
    %c7_303 = arith.constant 7 : index
    %c0_304 = arith.constant 0 : index
    %249 = vector.load %arg27[%c7_303, %c0_304] : memref<80x32xf32, #tpu.memory_space<vmem>>, vector<32x16xf32>
    %c0_305 = arith.constant 0 : index
    %c16_306 = arith.constant 16 : index
    %250 = vector.load %arg28[%c0_305, %c16_306] : memref<32x800xf32, #tpu.memory_space<vmem>>, vector<32x16xf32>
    tpu.vector_store %arg28[%c0_305, %c16_306], %249 {strides = array<i32>} : memref<32x800xf32, #tpu.memory_space<vmem>>, vector<32x16xf32>,
    %c8_307 = arith.constant 8 : index
    %c0_308 = arith.constant 0 : index
    %251 = vector.load %arg27[%c8_307, %c0_308] : memref<80x32xf32, #tpu.memory_space<vmem>>, vector<32x16xf32>
    %c0_309 = arith.constant 0 : index
    %c32_310 = arith.constant 32 : index
    %252 = vector.load %arg28[%c0_309, %c32_310] : memref<32x800xf32, #tpu.memory_space<vmem>>, vector<32x16xf32>
    tpu.vector_store %arg28[%c0_309, %c32_310], %251 {strides = array<i32>} : memref<32x800xf32, #tpu.memory_space<vmem>>, vector<32x16xf32>,
    %c9_311 = arith.constant 9 : index
    %c0_312 = arith.constant 0 : index
    %253 = vector.load %arg27[%c9_311, %c0_312] : memref<80x32xf32, #tpu.memory_space<vmem>>, vector<32x16xf32>
    %c0_313 = arith.constant 0 : index
    %c48_314 = arith.constant 48 : index
    %254 = vector.load %arg28[%c0_313, %c48_314] : memref<32x800xf32, #tpu.memory_space<vmem>>, vector<32x16xf32>
    tpu.vector_store %arg28[%c0_313, %c48_314], %253 {strides = array<i32>} : memref<32x800xf32, #tpu.memory_space<vmem>>, vector<32x16xf32>,
    %c10_315 = arith.constant 10 : index
    %c0_316 = arith.constant 0 : index
    %255 = vector.load %arg27[%c10_315, %c0_316] : memref<80x32xf32, #tpu.memory_space<vmem>>, vector<32x16xf32>
    %c0_317 = arith.constant 0 : index
    %c64_318 = arith.constant 64 : index
    %256 = vector.load %arg28[%c0_317, %c64_318] : memref<32x800xf32, #tpu.memory_space<vmem>>, vector<32x16xf32>
    tpu.vector_store %arg28[%c0_317, %c64_318], %255 {strides = array<i32>} : memref<32x800xf32, #tpu.memory_space<vmem>>, vector<32x16xf32>,
    %c14_319 = arith.constant 14 : index
    %c0_320 = arith.constant 0 : index
    %257 = vector.load %arg27[%c14_319, %c0_320] : memref<80x32xf32, #tpu.memory_space<vmem>>, vector<32x16xf32>
    %c0_321 = arith.constant 0 : index
    %c80_322 = arith.constant 80 : index
    %258 = vector.load %arg28[%c0_321, %c80_322] : memref<32x800xf32, #tpu.memory_space<vmem>>, vector<32x16xf32>
    tpu.vector_store %arg28[%c0_321, %c80_322], %257 {strides = array<i32>} : memref<32x800xf32, #tpu.memory_space<vmem>>, vector<32x16xf32>,
    %c15_323 = arith.constant 15 : index
    %c0_324 = arith.constant 0 : index
    %259 = vector.load %arg27[%c15_323, %c0_324] : memref<80x32xf32, #tpu.memory_space<vmem>>, vector<32x16xf32>
    %c0_325 = arith.constant 0 : index
    %c96_326 = arith.constant 96 : index
    %260 = vector.load %arg28[%c0_325, %c96_326] : memref<32x800xf32, #tpu.memory_space<vmem>>, vector<32x16xf32>
    tpu.vector_store %arg28[%c0_325, %c96_326], %259 {strides = array<i32>} : memref<32x800xf32, #tpu.memory_space<vmem>>, vector<32x16xf32>,
    %c16_327 = arith.constant 16 : index
    %c0_328 = arith.constant 0 : index
    %261 = vector.load %arg27[%c16_327, %c0_328] : memref<80x32xf32, #tpu.memory_space<vmem>>, vector<32x16xf32>
    %c0_329 = arith.constant 0 : index
    %c112_330 = arith.constant 112 : index
    %262 = vector.load %arg28[%c0_329, %c112_330] : memref<32x800xf32, #tpu.memory_space<vmem>>, vector<32x16xf32>
    tpu.vector_store %arg28[%c0_329, %c112_330], %261 {strides = array<i32>} : memref<32x800xf32, #tpu.memory_space<vmem>>, vector<32x16xf32>,
    %c17_331 = arith.constant 17 : index
    %c0_332 = arith.constant 0 : index
    %263 = vector.load %arg27[%c17_331, %c0_332] : memref<80x32xf32, #tpu.memory_space<vmem>>, vector<32x16xf32>
    %c0_333 = arith.constant 0 : index
    %c128_334 = arith.constant 128 : index
    %264 = vector.load %arg28[%c0_333, %c128_334] : memref<32x800xf32, #tpu.memory_space<vmem>>, vector<32x16xf32>
    tpu.vector_store %arg28[%c0_333, %c128_334], %263 {strides = array<i32>} : memref<32x800xf32, #tpu.memory_space<vmem>>, vector<32x16xf32>,
    %c18_335 = arith.constant 18 : index
    %c0_336 = arith.constant 0 : index
    %265 = vector.load %arg27[%c18_335, %c0_336] : memref<80x32xf32, #tpu.memory_space<vmem>>, vector<32x16xf32>
    %c0_337 = arith.constant 0 : index
    %c144_338 = arith.constant 144 : index
    %266 = vector.load %arg28[%c0_337, %c144_338] : memref<32x800xf32, #tpu.memory_space<vmem>>, vector<32x16xf32>
    tpu.vector_store %arg28[%c0_337, %c144_338], %265 {strides = array<i32>} : memref<32x800xf32, #tpu.memory_space<vmem>>, vector<32x16xf32>,
    %c22_339 = arith.constant 22 : index
    %c0_340 = arith.constant 0 : index
    %267 = vector.load %arg27[%c22_339, %c0_340] : memref<80x32xf32, #tpu.memory_space<vmem>>, vector<32x16xf32>
    %c0_341 = arith.constant 0 : index
    %c160_342 = arith.constant 160 : index
    %268 = vector.load %arg28[%c0_341, %c160_342] : memref<32x800xf32, #tpu.memory_space<vmem>>, vector<32x16xf32>
    tpu.vector_store %arg28[%c0_341, %c160_342], %267 {strides = array<i32>} : memref<32x800xf32, #tpu.memory_space<vmem>>, vector<32x16xf32>,
    %c23_343 = arith.constant 23 : index
    %c0_344 = arith.constant 0 : index
    %269 = vector.load %arg27[%c23_343, %c0_344] : memref<80x32xf32, #tpu.memory_space<vmem>>, vector<32x16xf32>
    %c0_345 = arith.constant 0 : index
    %c176_346 = arith.constant 176 : index
    %270 = vector.load %arg28[%c0_345, %c176_346] : memref<32x800xf32, #tpu.memory_space<vmem>>, vector<32x16xf32>
    tpu.vector_store %arg28[%c0_345, %c176_346], %269 {strides = array<i32>} : memref<32x800xf32, #tpu.memory_space<vmem>>, vector<32x16xf32>,
    %c24_347 = arith.constant 24 : index
    %c0_348 = arith.constant 0 : index
    %271 = vector.load %arg27[%c24_347, %c0_348] : memref<80x32xf32, #tpu.memory_space<vmem>>, vector<32x16xf32>
    %c0_349 = arith.constant 0 : index
    %c192_350 = arith.constant 192 : index
    %272 = vector.load %arg28[%c0_349, %c192_350] : memref<32x800xf32, #tpu.memory_space<vmem>>, vector<32x16xf32>
    tpu.vector_store %arg28[%c0_349, %c192_350], %271 {strides = array<i32>} : memref<32x800xf32, #tpu.memory_space<vmem>>, vector<32x16xf32>,
    %c25_351 = arith.constant 25 : index
    %c0_352 = arith.constant 0 : index
    %273 = vector.load %arg27[%c25_351, %c0_352] : memref<80x32xf32, #tpu.memory_space<vmem>>, vector<32x16xf32>
    %c0_353 = arith.constant 0 : index
    %c208_354 = arith.constant 208 : index
    %274 = vector.load %arg28[%c0_353, %c208_354] : memref<32x800xf32, #tpu.memory_space<vmem>>, vector<32x16xf32>
    tpu.vector_store %arg28[%c0_353, %c208_354], %273 {strides = array<i32>} : memref<32x800xf32, #tpu.memory_space<vmem>>, vector<32x16xf32>,
    %c26_355 = arith.constant 26 : index
    %c0_356 = arith.constant 0 : index
    %275 = vector.load %arg27[%c26_355, %c0_356] : memref<80x32xf32, #tpu.memory_space<vmem>>, vector<32x16xf32>
    %c0_357 = arith.constant 0 : index
    %c224_358 = arith.constant 224 : index
    %276 = vector.load %arg28[%c0_357, %c224_358] : memref<32x800xf32, #tpu.memory_space<vmem>>, vector<32x16xf32>
    tpu.vector_store %arg28[%c0_357, %c224_358], %275 {strides = array<i32>} : memref<32x800xf32, #tpu.memory_space<vmem>>, vector<32x16xf32>,
    %c30_359 = arith.constant 30 : index
    %c0_360 = arith.constant 0 : index
    %277 = vector.load %arg27[%c30_359, %c0_360] : memref<80x32xf32, #tpu.memory_space<vmem>>, vector<32x16xf32>
    %c0_361 = arith.constant 0 : index
    %c240_362 = arith.constant 240 : index
    %278 = vector.load %arg28[%c0_361, %c240_362] : memref<32x800xf32, #tpu.memory_space<vmem>>, vector<32x16xf32>
    tpu.vector_store %arg28[%c0_361, %c240_362], %277 {strides = array<i32>} : memref<32x800xf32, #tpu.memory_space<vmem>>, vector<32x16xf32>,
    %c31_363 = arith.constant 31 : index
    %c0_364 = arith.constant 0 : index
    %279 = vector.load %arg27[%c31_363, %c0_364] : memref<80x32xf32, #tpu.memory_space<vmem>>, vector<32x16xf32>
    %c0_365 = arith.constant 0 : index
    %c256_366 = arith.constant 256 : index
    %280 = vector.load %arg28[%c0_365, %c256_366] : memref<32x800xf32, #tpu.memory_space<vmem>>, vector<32x16xf32>
    tpu.vector_store %arg28[%c0_365, %c256_366], %279 {strides = array<i32>} : memref<32x800xf32, #tpu.memory_space<vmem>>, vector<32x16xf32>,
    %c32_367 = arith.constant 32 : index
    %c0_368 = arith.constant 0 : index
    %281 = vector.load %arg27[%c32_367, %c0_368] : memref<80x32xf32, #tpu.memory_space<vmem>>, vector<32x16xf32>
    %c0_369 = arith.constant 0 : index
    %c272_370 = arith.constant 272 : index
    %282 = vector.load %arg28[%c0_369, %c272_370] : memref<32x800xf32, #tpu.memory_space<vmem>>, vector<32x16xf32>
    tpu.vector_store %arg28[%c0_369, %c272_370], %281 {strides = array<i32>} : memref<32x800xf32, #tpu.memory_space<vmem>>, vector<32x16xf32>,
    %c33_371 = arith.constant 33 : index
    %c0_372 = arith.constant 0 : index
    %283 = vector.load %arg27[%c33_371, %c0_372] : memref<80x32xf32, #tpu.memory_space<vmem>>, vector<32x16xf32>
    %c0_373 = arith.constant 0 : index
    %c288_374 = arith.constant 288 : index
    %284 = vector.load %arg28[%c0_373, %c288_374] : memref<32x800xf32, #tpu.memory_space<vmem>>, vector<32x16xf32>
    tpu.vector_store %arg28[%c0_373, %c288_374], %283 {strides = array<i32>} : memref<32x800xf32, #tpu.memory_space<vmem>>, vector<32x16xf32>,
    %c34_375 = arith.constant 34 : index
    %c0_376 = arith.constant 0 : index
    %285 = vector.load %arg27[%c34_375, %c0_376] : memref<80x32xf32, #tpu.memory_space<vmem>>, vector<32x16xf32>
    %c0_377 = arith.constant 0 : index
    %c304_378 = arith.constant 304 : index
    %286 = vector.load %arg28[%c0_377, %c304_378] : memref<32x800xf32, #tpu.memory_space<vmem>>, vector<32x16xf32>
    tpu.vector_store %arg28[%c0_377, %c304_378], %285 {strides = array<i32>} : memref<32x800xf32, #tpu.memory_space<vmem>>, vector<32x16xf32>,
    %c38_379 = arith.constant 38 : index
    %c0_380 = arith.constant 0 : index
    %287 = vector.load %arg27[%c38_379, %c0_380] : memref<80x32xf32, #tpu.memory_space<vmem>>, vector<32x16xf32>
    %c0_381 = arith.constant 0 : index
    %c320_382 = arith.constant 320 : index
    %288 = vector.load %arg28[%c0_381, %c320_382] : memref<32x800xf32, #tpu.memory_space<vmem>>, vector<32x16xf32>
    tpu.vector_store %arg28[%c0_381, %c320_382], %287 {strides = array<i32>} : memref<32x800xf32, #tpu.memory_space<vmem>>, vector<32x16xf32>,
    %c39_383 = arith.constant 39 : index
    %c0_384 = arith.constant 0 : index
    %289 = vector.load %arg27[%c39_383, %c0_384] : memref<80x32xf32, #tpu.memory_space<vmem>>, vector<32x16xf32>
    %c0_385 = arith.constant 0 : index
    %c336_386 = arith.constant 336 : index
    %290 = vector.load %arg28[%c0_385, %c336_386] : memref<32x800xf32, #tpu.memory_space<vmem>>, vector<32x16xf32>
    tpu.vector_store %arg28[%c0_385, %c336_386], %289 {strides = array<i32>} : memref<32x800xf32, #tpu.memory_space<vmem>>, vector<32x16xf32>,
    %c40_387 = arith.constant 40 : index
    %c0_388 = arith.constant 0 : index
    %291 = vector.load %arg27[%c40_387, %c0_388] : memref<80x32xf32, #tpu.memory_space<vmem>>, vector<32x16xf32>
    %c0_389 = arith.constant 0 : index
    %c352_390 = arith.constant 352 : index
    %292 = vector.load %arg28[%c0_389, %c352_390] : memref<32x800xf32, #tpu.memory_space<vmem>>, vector<32x16xf32>
    tpu.vector_store %arg28[%c0_389, %c352_390], %291 {strides = array<i32>} : memref<32x800xf32, #tpu.memory_space<vmem>>, vector<32x16xf32>,
    %c41_391 = arith.constant 41 : index
    %c0_392 = arith.constant 0 : index
    %293 = vector.load %arg27[%c41_391, %c0_392] : memref<80x32xf32, #tpu.memory_space<vmem>>, vector<32x16xf32>
    %c0_393 = arith.constant 0 : index
    %c368_394 = arith.constant 368 : index
    %294 = vector.load %arg28[%c0_393, %c368_394] : memref<32x800xf32, #tpu.memory_space<vmem>>, vector<32x16xf32>
    tpu.vector_store %arg28[%c0_393, %c368_394], %293 {strides = array<i32>} : memref<32x800xf32, #tpu.memory_space<vmem>>, vector<32x16xf32>,
    %c42_395 = arith.constant 42 : index
    %c0_396 = arith.constant 0 : index
    %295 = vector.load %arg27[%c42_395, %c0_396] : memref<80x32xf32, #tpu.memory_space<vmem>>, vector<32x16xf32>
    %c0_397 = arith.constant 0 : index
    %c384_398 = arith.constant 384 : index
    %296 = vector.load %arg28[%c0_397, %c384_398] : memref<32x800xf32, #tpu.memory_space<vmem>>, vector<32x16xf32>
    tpu.vector_store %arg28[%c0_397, %c384_398], %295 {strides = array<i32>} : memref<32x800xf32, #tpu.memory_space<vmem>>, vector<32x16xf32>,
    %c0_399 = arith.constant 0 : index
    %c0_400 = arith.constant 0 : index
    %297 = vector.load %arg28[%c0_399, %c0_400] : memref<32x800xf32, #tpu.memory_space<vmem>>, vector<32x400xf32>
    %298 = arith.truncf %297 : vector<32x400xf32> to vector<32x400xbf16>
    %c0_401 = arith.constant 0 : index
    %c0_402 = arith.constant 0 : index
    %299 = vector.load %arg9[%c0_401, %c0_402] : memref<400x8xbf16, #tpu.memory_space<vmem>>, vector<400x8xbf16>
    %cst_403 = arith.constant dense<0.000000e+00> : vector<32x8xf32>
    %300 = tpu.matmul %298, %299, %cst_403 {dimension_numbers = #tpu.dot_dimension_numbers<[1], [0], [0], [1], [0, 0, 1, 1], [], []>} : vector<32x400xbf16>, vector<400x8xbf16>, vector<32x8xf32> -> vector<32x8xf32>
    %c0_404 = arith.constant 0 : index
    %c0_405 = arith.constant 0 : index
    %301 = vector.load %arg10[%c0_404, %c0_405] : memref<1x8xf32, #tpu.memory_space<vmem>>, vector<1x8xf32>
    %302 = vector.broadcast %301 : vector<1x8xf32> to vector<32x8xf32>
    %303 = arith.addf %300, %302 : vector<32x8xf32>
    %304 = vector.extract_strided_slice %303 {offsets = [0, 0], sizes = [32, 4], strides = [1, 1]} : vector<32x8xf32> to vector<32x4xf32>
    %305 = vector.extract_strided_slice %303 {offsets = [0, 4], sizes = [32, 4], strides = [1, 1]} : vector<32x8xf32> to vector<32x4xf32>
    %cst_406 = arith.constant 0.000000e+00 : f32
    %306 = vector.broadcast %cst_406 : f32 to vector<32x4xf32>
    %307 = arith.maximumf %305, %306 : vector<32x4xf32>
    %308 = math.absf %305 : vector<32x4xf32>
    %cst_407 = arith.constant 0.000000e+00 : f32
    %309 = vector.broadcast %cst_407 : f32 to vector<32x4xf32>
    %310 = arith.subf %309, %308 : vector<32x4xf32>
    %311 = math.exp %310 : vector<32x4xf32>
    %cst_408 = arith.constant 1.000000e+00 : f32
    %312 = vector.broadcast %cst_408 : f32 to vector<32x4xf32>
    %313 = arith.addf %312, %311 : vector<32x4xf32>
    %314 = math.log %313 : vector<32x4xf32>
    %315 = arith.addf %307, %314 : vector<32x4xf32>
    %cst_409 = arith.constant 9.99999997E-7 : f32
    %316 = vector.broadcast %cst_409 : f32 to vector<32x4xf32>
    %317 = arith.maximumf %315, %316 : vector<32x4xf32>
    %cst_410 = arith.constant 0.000000e+00 : f32
    %318 = vector.broadcast %cst_410 : f32 to vector<32x4xf32>
    %319 = arith.maximumf %78, %318 : vector<32x4xf32>
    %320 = math.absf %78 : vector<32x4xf32>
    %cst_411 = arith.constant 0.000000e+00 : f32
    %321 = vector.broadcast %cst_411 : f32 to vector<32x4xf32>
    %322 = arith.subf %321, %320 : vector<32x4xf32>
    %323 = math.exp %322 : vector<32x4xf32>
    %cst_412 = arith.constant 1.000000e+00 : f32
    %324 = vector.broadcast %cst_412 : f32 to vector<32x4xf32>
    %325 = arith.addf %324, %323 : vector<32x4xf32>
    %326 = math.log %325 : vector<32x4xf32>
    %327 = arith.addf %319, %326 : vector<32x4xf32>
    %cst_413 = arith.constant 9.99999997E-7 : f32
    %328 = vector.broadcast %cst_413 : f32 to vector<32x4xf32>
    %329 = arith.maximumf %327, %328 : vector<32x4xf32>
    %330 = arith.index_cast %arg1 : i32 to index
    %c0_414 = arith.constant 0 : index
    %c0_415 = arith.constant 0 : index
    %331 = vector.load %arg5[%330, %c0_414, %c0_415] : memref<3x32x4xf32, #tpu.memory_space<vmem>>, vector<1x32x4xf32>
    %332 = vector.shape_cast %331 : vector<1x32x4xf32> to vector<32x4xf32>
    %333 = arith.mulf %317, %332 : vector<32x4xf32>
    %334 = arith.addf %304, %333 : vector<32x4xf32>
    %cst_416 = arith.constant 2.000000e+00 : f32
    %335 = vector.broadcast %cst_416 : f32 to vector<32x4xf32>
    %336 = arith.mulf %335, %329 : vector<32x4xf32>
    %337 = arith.mulf %336, %329 : vector<32x4xf32>
    %338 = tpu.reciprocal %337 : vector<32x4xf32> -> vector<32x4xf32>
    %c0_417 = arith.constant 0 : index
    %c0_418 = arith.constant 0 : index
    %339 = vector.load %arg26[%c0_417, %c0_418] : memref<32x4xf32, #tpu.memory_space<vmem>>, vector<32x4xf32>
    %340 = math.log %329 : vector<32x4xf32>
    %341 = math.log %317 : vector<32x4xf32>
    %342 = arith.subf %340, %341 : vector<32x4xf32>
    %343 = arith.mulf %317, %317 : vector<32x4xf32>
    %344 = arith.subf %304, %77 : vector<32x4xf32>
    %345 = arith.mulf %344, %344 : vector<32x4xf32>
    %346 = arith.addf %343, %345 : vector<32x4xf32>
    %347 = arith.mulf %346, %338 : vector<32x4xf32>
    %348 = arith.addf %342, %347 : vector<32x4xf32>
    %cst_419 = arith.constant 5.000000e-01 : f32
    %349 = vector.broadcast %cst_419 : f32 to vector<32x4xf32>
    %350 = arith.subf %348, %349 : vector<32x4xf32>
    %351 = arith.addf %339, %350 : vector<32x4xf32>
    %c0_420 = arith.constant 0 : index
    %c0_421 = arith.constant 0 : index
    %352 = vector.load %arg26[%c0_420, %c0_421] : memref<32x4xf32, #tpu.memory_space<vmem>>, vector<32x4xf32>
    tpu.vector_store %arg26[%c0_420, %c0_421], %351 {strides = array<i32>} : memref<32x4xf32, #tpu.memory_space<vmem>>, vector<32x4xf32>,
    %cst_422 = arith.constant 0.000000e+00 : f32
    %353 = vector.broadcast %cst_422 : f32 to vector<32x13xf32>
    %354 = tpu.concatenate %334, %353 in 1 : vector<32x4xf32>, vector<32x13xf32> -> vector<32x17xf32>
    %c0_423 = arith.constant 0 : index
    %c0_424 = arith.constant 0 : index
    %355 = vector.load %arg4[%c0_423, %c0_424] : memref<32x17xf32, #tpu.memory_space<vmem>>, vector<32x17xf32>
    %356 = arith.addf %79, %355 : vector<32x17xf32>
    %357 = arith.addf %356, %354 : vector<32x17xf32>
    %358 = vector.broadcast %14 : vector<32x1xf32> to vector<32x17xf32>
    %359 = arith.mulf %357, %358 : vector<32x17xf32>
    %c24_425 = arith.constant 24 : index
    %c0_426 = arith.constant 0 : index
    %360 = vector.load %arg27[%c24_425, %c0_426] : memref<80x32xf32, #tpu.memory_space<vmem>>, vector<32x17xf32>
    tpu.vector_store %arg27[%c24_425, %c0_426], %359 {strides = array<i32>} : memref<80x32xf32, #tpu.memory_space<vmem>>, vector<32x17xf32>,
    %c6_427 = arith.constant 6 : index
    %c0_428 = arith.constant 0 : index
    %361 = vector.load %arg27[%c6_427, %c0_428] : memref<80x32xf32, #tpu.memory_space<vmem>>, vector<32x17xf32>
    %c0_429 = arith.constant 0 : index
    %c0_430 = arith.constant 0 : index
    %362 = vector.load %arg28[%c0_429, %c0_430] : memref<32x800xf32, #tpu.memory_space<vmem>>, vector<32x17xf32>
    tpu.vector_store %arg28[%c0_429, %c0_430], %361 {strides = array<i32>} : memref<32x800xf32, #tpu.memory_space<vmem>>, vector<32x17xf32>,
    %c7_431 = arith.constant 7 : index
    %c0_432 = arith.constant 0 : index
    %363 = vector.load %arg27[%c7_431, %c0_432] : memref<80x32xf32, #tpu.memory_space<vmem>>, vector<32x17xf32>
    %c0_433 = arith.constant 0 : index
    %c17_434 = arith.constant 17 : index
    %364 = vector.load %arg28[%c0_433, %c17_434] : memref<32x800xf32, #tpu.memory_space<vmem>>, vector<32x17xf32>
    tpu.vector_store %arg28[%c0_433, %c17_434], %363 {strides = array<i32>} : memref<32x800xf32, #tpu.memory_space<vmem>>, vector<32x17xf32>,
    %c8_435 = arith.constant 8 : index
    %c0_436 = arith.constant 0 : index
    %365 = vector.load %arg27[%c8_435, %c0_436] : memref<80x32xf32, #tpu.memory_space<vmem>>, vector<32x17xf32>
    %c0_437 = arith.constant 0 : index
    %c34_438 = arith.constant 34 : index
    %366 = vector.load %arg28[%c0_437, %c34_438] : memref<32x800xf32, #tpu.memory_space<vmem>>, vector<32x17xf32>
    tpu.vector_store %arg28[%c0_437, %c34_438], %365 {strides = array<i32>} : memref<32x800xf32, #tpu.memory_space<vmem>>, vector<32x17xf32>,
    %c9_439 = arith.constant 9 : index
    %c0_440 = arith.constant 0 : index
    %367 = vector.load %arg27[%c9_439, %c0_440] : memref<80x32xf32, #tpu.memory_space<vmem>>, vector<32x17xf32>
    %c0_441 = arith.constant 0 : index
    %c51 = arith.constant 51 : index
    %368 = vector.load %arg28[%c0_441, %c51] : memref<32x800xf32, #tpu.memory_space<vmem>>, vector<32x17xf32>
    tpu.vector_store %arg28[%c0_441, %c51], %367 {strides = array<i32>} : memref<32x800xf32, #tpu.memory_space<vmem>>, vector<32x17xf32>,
    %c10_442 = arith.constant 10 : index
    %c0_443 = arith.constant 0 : index
    %369 = vector.load %arg27[%c10_442, %c0_443] : memref<80x32xf32, #tpu.memory_space<vmem>>, vector<32x17xf32>
    %c0_444 = arith.constant 0 : index
    %c68 = arith.constant 68 : index
    %370 = vector.load %arg28[%c0_444, %c68] : memref<32x800xf32, #tpu.memory_space<vmem>>, vector<32x17xf32>
    tpu.vector_store %arg28[%c0_444, %c68], %369 {strides = array<i32>} : memref<32x800xf32, #tpu.memory_space<vmem>>, vector<32x17xf32>,
    %c14_445 = arith.constant 14 : index
    %c0_446 = arith.constant 0 : index
    %371 = vector.load %arg27[%c14_445, %c0_446] : memref<80x32xf32, #tpu.memory_space<vmem>>, vector<32x17xf32>
    %c0_447 = arith.constant 0 : index
    %c85 = arith.constant 85 : index
    %372 = vector.load %arg28[%c0_447, %c85] : memref<32x800xf32, #tpu.memory_space<vmem>>, vector<32x17xf32>
    tpu.vector_store %arg28[%c0_447, %c85], %371 {strides = array<i32>} : memref<32x800xf32, #tpu.memory_space<vmem>>, vector<32x17xf32>,
    %c15_448 = arith.constant 15 : index
    %c0_449 = arith.constant 0 : index
    %373 = vector.load %arg27[%c15_448, %c0_449] : memref<80x32xf32, #tpu.memory_space<vmem>>, vector<32x17xf32>
    %c0_450 = arith.constant 0 : index
    %c102 = arith.constant 102 : index
    %374 = vector.load %arg28[%c0_450, %c102] : memref<32x800xf32, #tpu.memory_space<vmem>>, vector<32x17xf32>
    tpu.vector_store %arg28[%c0_450, %c102], %373 {strides = array<i32>} : memref<32x800xf32, #tpu.memory_space<vmem>>, vector<32x17xf32>,
    %c16_451 = arith.constant 16 : index
    %c0_452 = arith.constant 0 : index
    %375 = vector.load %arg27[%c16_451, %c0_452] : memref<80x32xf32, #tpu.memory_space<vmem>>, vector<32x17xf32>
    %c0_453 = arith.constant 0 : index
    %c119 = arith.constant 119 : index
    %376 = vector.load %arg28[%c0_453, %c119] : memref<32x800xf32, #tpu.memory_space<vmem>>, vector<32x17xf32>
    tpu.vector_store %arg28[%c0_453, %c119], %375 {strides = array<i32>} : memref<32x800xf32, #tpu.memory_space<vmem>>, vector<32x17xf32>,
    %c17_454 = arith.constant 17 : index
    %c0_455 = arith.constant 0 : index
    %377 = vector.load %arg27[%c17_454, %c0_455] : memref<80x32xf32, #tpu.memory_space<vmem>>, vector<32x17xf32>
    %c0_456 = arith.constant 0 : index
    %c136 = arith.constant 136 : index
    %378 = vector.load %arg28[%c0_456, %c136] : memref<32x800xf32, #tpu.memory_space<vmem>>, vector<32x17xf32>
    tpu.vector_store %arg28[%c0_456, %c136], %377 {strides = array<i32>} : memref<32x800xf32, #tpu.memory_space<vmem>>, vector<32x17xf32>,
    %c18_457 = arith.constant 18 : index
    %c0_458 = arith.constant 0 : index
    %379 = vector.load %arg27[%c18_457, %c0_458] : memref<80x32xf32, #tpu.memory_space<vmem>>, vector<32x17xf32>
    %c0_459 = arith.constant 0 : index
    %c153 = arith.constant 153 : index
    %380 = vector.load %arg28[%c0_459, %c153] : memref<32x800xf32, #tpu.memory_space<vmem>>, vector<32x17xf32>
    tpu.vector_store %arg28[%c0_459, %c153], %379 {strides = array<i32>} : memref<32x800xf32, #tpu.memory_space<vmem>>, vector<32x17xf32>,
    %c22_460 = arith.constant 22 : index
    %c0_461 = arith.constant 0 : index
    %381 = vector.load %arg27[%c22_460, %c0_461] : memref<80x32xf32, #tpu.memory_space<vmem>>, vector<32x17xf32>
    %c0_462 = arith.constant 0 : index
    %c170 = arith.constant 170 : index
    %382 = vector.load %arg28[%c0_462, %c170] : memref<32x800xf32, #tpu.memory_space<vmem>>, vector<32x17xf32>
    tpu.vector_store %arg28[%c0_462, %c170], %381 {strides = array<i32>} : memref<32x800xf32, #tpu.memory_space<vmem>>, vector<32x17xf32>,
    %c23_463 = arith.constant 23 : index
    %c0_464 = arith.constant 0 : index
    %383 = vector.load %arg27[%c23_463, %c0_464] : memref<80x32xf32, #tpu.memory_space<vmem>>, vector<32x17xf32>
    %c0_465 = arith.constant 0 : index
    %c187 = arith.constant 187 : index
    %384 = vector.load %arg28[%c0_465, %c187] : memref<32x800xf32, #tpu.memory_space<vmem>>, vector<32x17xf32>
    tpu.vector_store %arg28[%c0_465, %c187], %383 {strides = array<i32>} : memref<32x800xf32, #tpu.memory_space<vmem>>, vector<32x17xf32>,
    %c24_466 = arith.constant 24 : index
    %c0_467 = arith.constant 0 : index
    %385 = vector.load %arg27[%c24_466, %c0_467] : memref<80x32xf32, #tpu.memory_space<vmem>>, vector<32x17xf32>
    %c0_468 = arith.constant 0 : index
    %c204 = arith.constant 204 : index
    %386 = vector.load %arg28[%c0_468, %c204] : memref<32x800xf32, #tpu.memory_space<vmem>>, vector<32x17xf32>
    tpu.vector_store %arg28[%c0_468, %c204], %385 {strides = array<i32>} : memref<32x800xf32, #tpu.memory_space<vmem>>, vector<32x17xf32>,
    %c25_469 = arith.constant 25 : index
    %c0_470 = arith.constant 0 : index
    %387 = vector.load %arg27[%c25_469, %c0_470] : memref<80x32xf32, #tpu.memory_space<vmem>>, vector<32x17xf32>
    %c0_471 = arith.constant 0 : index
    %c221 = arith.constant 221 : index
    %388 = vector.load %arg28[%c0_471, %c221] : memref<32x800xf32, #tpu.memory_space<vmem>>, vector<32x17xf32>
    tpu.vector_store %arg28[%c0_471, %c221], %387 {strides = array<i32>} : memref<32x800xf32, #tpu.memory_space<vmem>>, vector<32x17xf32>,
    %c26_472 = arith.constant 26 : index
    %c0_473 = arith.constant 0 : index
    %389 = vector.load %arg27[%c26_472, %c0_473] : memref<80x32xf32, #tpu.memory_space<vmem>>, vector<32x17xf32>
    %c0_474 = arith.constant 0 : index
    %c238 = arith.constant 238 : index
    %390 = vector.load %arg28[%c0_474, %c238] : memref<32x800xf32, #tpu.memory_space<vmem>>, vector<32x17xf32>
    tpu.vector_store %arg28[%c0_474, %c238], %389 {strides = array<i32>} : memref<32x800xf32, #tpu.memory_space<vmem>>, vector<32x17xf32>,
    %c30_475 = arith.constant 30 : index
    %c0_476 = arith.constant 0 : index
    %391 = vector.load %arg27[%c30_475, %c0_476] : memref<80x32xf32, #tpu.memory_space<vmem>>, vector<32x17xf32>
    %c0_477 = arith.constant 0 : index
    %c255 = arith.constant 255 : index
    %392 = vector.load %arg28[%c0_477, %c255] : memref<32x800xf32, #tpu.memory_space<vmem>>, vector<32x17xf32>
    tpu.vector_store %arg28[%c0_477, %c255], %391 {strides = array<i32>} : memref<32x800xf32, #tpu.memory_space<vmem>>, vector<32x17xf32>,
    %c31_478 = arith.constant 31 : index
    %c0_479 = arith.constant 0 : index
    %393 = vector.load %arg27[%c31_478, %c0_479] : memref<80x32xf32, #tpu.memory_space<vmem>>, vector<32x17xf32>
    %c0_480 = arith.constant 0 : index
    %c272_481 = arith.constant 272 : index
    %394 = vector.load %arg28[%c0_480, %c272_481] : memref<32x800xf32, #tpu.memory_space<vmem>>, vector<32x17xf32>
    tpu.vector_store %arg28[%c0_480, %c272_481], %393 {strides = array<i32>} : memref<32x800xf32, #tpu.memory_space<vmem>>, vector<32x17xf32>,
    %c32_482 = arith.constant 32 : index
    %c0_483 = arith.constant 0 : index
    %395 = vector.load %arg27[%c32_482, %c0_483] : memref<80x32xf32, #tpu.memory_space<vmem>>, vector<32x17xf32>
    %c0_484 = arith.constant 0 : index
    %c289 = arith.constant 289 : index
    %396 = vector.load %arg28[%c0_484, %c289] : memref<32x800xf32, #tpu.memory_space<vmem>>, vector<32x17xf32>
    tpu.vector_store %arg28[%c0_484, %c289], %395 {strides = array<i32>} : memref<32x800xf32, #tpu.memory_space<vmem>>, vector<32x17xf32>,
    %c33_485 = arith.constant 33 : index
    %c0_486 = arith.constant 0 : index
    %397 = vector.load %arg27[%c33_485, %c0_486] : memref<80x32xf32, #tpu.memory_space<vmem>>, vector<32x17xf32>
    %c0_487 = arith.constant 0 : index
    %c306 = arith.constant 306 : index
    %398 = vector.load %arg28[%c0_487, %c306] : memref<32x800xf32, #tpu.memory_space<vmem>>, vector<32x17xf32>
    tpu.vector_store %arg28[%c0_487, %c306], %397 {strides = array<i32>} : memref<32x800xf32, #tpu.memory_space<vmem>>, vector<32x17xf32>,
    %c34_488 = arith.constant 34 : index
    %c0_489 = arith.constant 0 : index
    %399 = vector.load %arg27[%c34_488, %c0_489] : memref<80x32xf32, #tpu.memory_space<vmem>>, vector<32x17xf32>
    %c0_490 = arith.constant 0 : index
    %c323 = arith.constant 323 : index
    %400 = vector.load %arg28[%c0_490, %c323] : memref<32x800xf32, #tpu.memory_space<vmem>>, vector<32x17xf32>
    tpu.vector_store %arg28[%c0_490, %c323], %399 {strides = array<i32>} : memref<32x800xf32, #tpu.memory_space<vmem>>, vector<32x17xf32>,
    %c38_491 = arith.constant 38 : index
    %c0_492 = arith.constant 0 : index
    %401 = vector.load %arg27[%c38_491, %c0_492] : memref<80x32xf32, #tpu.memory_space<vmem>>, vector<32x17xf32>
    %c0_493 = arith.constant 0 : index
    %c340 = arith.constant 340 : index
    %402 = vector.load %arg28[%c0_493, %c340] : memref<32x800xf32, #tpu.memory_space<vmem>>, vector<32x17xf32>
    tpu.vector_store %arg28[%c0_493, %c340], %401 {strides = array<i32>} : memref<32x800xf32, #tpu.memory_space<vmem>>, vector<32x17xf32>,
    %c39_494 = arith.constant 39 : index
    %c0_495 = arith.constant 0 : index
    %403 = vector.load %arg27[%c39_494, %c0_495] : memref<80x32xf32, #tpu.memory_space<vmem>>, vector<32x17xf32>
    %c0_496 = arith.constant 0 : index
    %c357 = arith.constant 357 : index
    %404 = vector.load %arg28[%c0_496, %c357] : memref<32x800xf32, #tpu.memory_space<vmem>>, vector<32x17xf32>
    tpu.vector_store %arg28[%c0_496, %c357], %403 {strides = array<i32>} : memref<32x800xf32, #tpu.memory_space<vmem>>, vector<32x17xf32>,
    %c40_497 = arith.constant 40 : index
    %c0_498 = arith.constant 0 : index
    %405 = vector.load %arg27[%c40_497, %c0_498] : memref<80x32xf32, #tpu.memory_space<vmem>>, vector<32x17xf32>
    %c0_499 = arith.constant 0 : index
    %c374 = arith.constant 374 : index
    %406 = vector.load %arg28[%c0_499, %c374] : memref<32x800xf32, #tpu.memory_space<vmem>>, vector<32x17xf32>
    tpu.vector_store %arg28[%c0_499, %c374], %405 {strides = array<i32>} : memref<32x800xf32, #tpu.memory_space<vmem>>, vector<32x17xf32>,
    %c41_500 = arith.constant 41 : index
    %c0_501 = arith.constant 0 : index
    %407 = vector.load %arg27[%c41_500, %c0_501] : memref<80x32xf32, #tpu.memory_space<vmem>>, vector<32x17xf32>
    %c0_502 = arith.constant 0 : index
    %c391 = arith.constant 391 : index
    %408 = vector.load %arg28[%c0_502, %c391] : memref<32x800xf32, #tpu.memory_space<vmem>>, vector<32x17xf32>
    tpu.vector_store %arg28[%c0_502, %c391], %407 {strides = array<i32>} : memref<32x800xf32, #tpu.memory_space<vmem>>, vector<32x17xf32>,
    %c42_503 = arith.constant 42 : index
    %c0_504 = arith.constant 0 : index
    %409 = vector.load %arg27[%c42_503, %c0_504] : memref<80x32xf32, #tpu.memory_space<vmem>>, vector<32x17xf32>
    %c0_505 = arith.constant 0 : index
    %c408 = arith.constant 408 : index
    %410 = vector.load %arg28[%c0_505, %c408] : memref<32x800xf32, #tpu.memory_space<vmem>>, vector<32x17xf32>
    tpu.vector_store %arg28[%c0_505, %c408], %409 {strides = array<i32>} : memref<32x800xf32, #tpu.memory_space<vmem>>, vector<32x17xf32>,
    %c0_506 = arith.constant 0 : index
    %c0_507 = arith.constant 0 : index
    %411 = vector.load %arg28[%c0_506, %c0_507] : memref<32x800xf32, #tpu.memory_space<vmem>>, vector<32x425xf32>
    %412 = arith.truncf %411 : vector<32x425xf32> to vector<32x425xbf16>
    %c0_508 = arith.constant 0 : index
    %c0_509 = arith.constant 0 : index
    %413 = vector.load %arg15[%c0_508, %c0_509] : memref<425x64xbf16, #tpu.memory_space<vmem>>, vector<425x64xbf16>
    %cst_510 = arith.constant dense<0.000000e+00> : vector<32x64xf32>
    %414 = tpu.matmul %412, %413, %cst_510 {dimension_numbers = #tpu.dot_dimension_numbers<[1], [0], [0], [1], [0, 0, 1, 1], [], []>} : vector<32x425xbf16>, vector<425x64xbf16>, vector<32x64xf32> -> vector<32x64xf32>
    %c0_511 = arith.constant 0 : index
    %c0_512 = arith.constant 0 : index
    %415 = vector.load %arg16[%c0_511, %c0_512] : memref<1x64xf32, #tpu.memory_space<vmem>>, vector<1x64xf32>
    %416 = vector.broadcast %415 : vector<1x64xf32> to vector<32x64xf32>
    %417 = arith.addf %414, %416 : vector<32x64xf32>
    %c0_513 = arith.constant 0 : index
    %c0_514 = arith.constant 0 : index
    %418 = vector.load %arg24[%c0_513, %c0_514] : memref<32x16xf32, #tpu.memory_space<vmem>>, vector<32x16xf32>
    %419 = vector.extract_strided_slice %417 {offsets = [0, 0], sizes = [32, 16], strides = [1, 1]} : vector<32x64xf32> to vector<32x16xf32>
    %cst_515 = arith.constant 5.000000e-01 : f32
    %420 = vector.broadcast %cst_515 : f32 to vector<32x16xf32>
    %421 = arith.mulf %420, %419 : vector<32x16xf32>
    %422 = math.tanh %421 : vector<32x16xf32>
    %cst_516 = arith.constant 5.000000e-01 : f32
    %423 = vector.broadcast %cst_516 : f32 to vector<32x16xf32>
    %424 = arith.mulf %423, %422 : vector<32x16xf32>
    %cst_517 = arith.constant 5.000000e-01 : f32
    %425 = vector.broadcast %cst_517 : f32 to vector<32x16xf32>
    %426 = arith.addf %424, %425 : vector<32x16xf32>
    %427 = vector.extract_strided_slice %417 {offsets = [0, 16], sizes = [32, 16], strides = [1, 1]} : vector<32x64xf32> to vector<32x16xf32>
    %cst_518 = arith.constant 5.000000e-01 : f32
    %428 = vector.broadcast %cst_518 : f32 to vector<32x16xf32>
    %429 = arith.mulf %428, %427 : vector<32x16xf32>
    %430 = math.tanh %429 : vector<32x16xf32>
    %cst_519 = arith.constant 5.000000e-01 : f32
    %431 = vector.broadcast %cst_519 : f32 to vector<32x16xf32>
    %432 = arith.mulf %431, %430 : vector<32x16xf32>
    %cst_520 = arith.constant 5.000000e-01 : f32
    %433 = vector.broadcast %cst_520 : f32 to vector<32x16xf32>
    %434 = arith.addf %432, %433 : vector<32x16xf32>
    %435 = vector.extract_strided_slice %417 {offsets = [0, 32], sizes = [32, 16], strides = [1, 1]} : vector<32x64xf32> to vector<32x16xf32>
    %cst_521 = arith.constant 5.000000e-01 : f32
    %436 = vector.broadcast %cst_521 : f32 to vector<32x16xf32>
    %437 = arith.mulf %436, %435 : vector<32x16xf32>
    %438 = math.tanh %437 : vector<32x16xf32>
    %cst_522 = arith.constant 5.000000e-01 : f32
    %439 = vector.broadcast %cst_522 : f32 to vector<32x16xf32>
    %440 = arith.mulf %439, %438 : vector<32x16xf32>
    %cst_523 = arith.constant 5.000000e-01 : f32
    %441 = vector.broadcast %cst_523 : f32 to vector<32x16xf32>
    %442 = arith.addf %440, %441 : vector<32x16xf32>
    %443 = vector.extract_strided_slice %417 {offsets = [0, 48], sizes = [32, 16], strides = [1, 1]} : vector<32x64xf32> to vector<32x16xf32>
    %444 = math.tanh %443 : vector<32x16xf32>
    %445 = arith.mulf %426, %418 : vector<32x16xf32>
    %446 = arith.mulf %434, %444 : vector<32x16xf32>
    %447 = arith.addf %445, %446 : vector<32x16xf32>
    %448 = math.tanh %447 : vector<32x16xf32>
    %449 = arith.mulf %442, %448 : vector<32x16xf32>
    %c0_524 = arith.constant 0 : index
    %c0_525 = arith.constant 0 : index
    %450 = vector.load %arg23[%c0_524, %c0_525] : memref<32x16xf32, #tpu.memory_space<vmem>>, vector<32x16xf32>
    tpu.vector_store %arg23[%c0_524, %c0_525], %449 {strides = array<i32>} : memref<32x16xf32, #tpu.memory_space<vmem>>, vector<32x16xf32>,
    %c0_526 = arith.constant 0 : index
    %c0_527 = arith.constant 0 : index
    %451 = vector.load %arg24[%c0_526, %c0_527] : memref<32x16xf32, #tpu.memory_space<vmem>>, vector<32x16xf32>
    tpu.vector_store %arg24[%c0_526, %c0_527], %447 {strides = array<i32>} : memref<32x16xf32, #tpu.memory_space<vmem>>, vector<32x16xf32>,
    %c0_528 = arith.constant 0 : index
    %c0_529 = arith.constant 0 : index
    %452 = vector.load %arg25[%c0_528, %c0_529] : memref<32x16xf32, #tpu.memory_space<vmem>>, vector<32x16xf32>
    %453 = arith.addf %452, %449 : vector<32x16xf32>
    %c0_530 = arith.constant 0 : index
    %c0_531 = arith.constant 0 : index
    %454 = vector.load %arg25[%c0_530, %c0_531] : memref<32x16xf32, #tpu.memory_space<vmem>>, vector<32x16xf32>
    tpu.vector_store %arg25[%c0_530, %c0_531], %453 {strides = array<i32>} : memref<32x16xf32, #tpu.memory_space<vmem>>, vector<32x16xf32>,
    %c2_i32 = arith.constant 2 : i32
    %455 = arith.cmpi eq, %arg1, %c2_i32 : i32
    %456 = arith.extui %455 : i1 to i32
    %c0_i32_532 = arith.constant 0 : i32
    %457 = arith.cmpi ne, %456, %c0_i32_532 : i32
    scf.if %457 {
      %c0_533 = arith.constant 0 : index
      %c0_534 = arith.constant 0 : index
      %458 = vector.load %arg25[%c0_533, %c0_534] : memref<32x16xf32, #tpu.memory_space<vmem>>, vector<32x16xf32>
      %459 = arith.truncf %458 : vector<32x16xf32> to vector<32x16xbf16>
      %c0_535 = arith.constant 0 : index
      %c0_536 = arith.constant 0 : index
      %460 = vector.load %arg17[%c0_535, %c0_536] : memref<16x128xbf16, #tpu.memory_space<vmem>>, vector<16x128xbf16>
      %cst_537 = arith.constant dense<0.000000e+00> : vector<32x128xf32>
      %461 = tpu.matmul %459, %460, %cst_537 {dimension_numbers = #tpu.dot_dimension_numbers<[1], [0], [0], [1], [0, 0, 1, 1], [], []>} : vector<32x16xbf16>, vector<16x128xbf16>, vector<32x128xf32> -> vector<32x128xf32>
      %c0_538 = arith.constant 0 : index
      %c0_539 = arith.constant 0 : index
      %462 = vector.load %arg18[%c0_538, %c0_539] : memref<1x128xf32, #tpu.memory_space<vmem>>, vector<1x128xf32>
      %463 = vector.broadcast %462 : vector<1x128xf32> to vector<32x128xf32>
      %464 = arith.addf %461, %463 : vector<32x128xf32>
      %cst_540 = arith.constant 5.000000e-01 : f32
      %465 = vector.broadcast %cst_540 : f32 to vector<32x128xf32>
      %466 = arith.mulf %465, %464 : vector<32x128xf32>
      %467 = math.tanh %466 : vector<32x128xf32>
      %cst_541 = arith.constant 5.000000e-01 : f32
      %468 = vector.broadcast %cst_541 : f32 to vector<32x128xf32>
      %469 = arith.mulf %468, %467 : vector<32x128xf32>
      %cst_542 = arith.constant 5.000000e-01 : f32
      %470 = vector.broadcast %cst_542 : f32 to vector<32x128xf32>
      %471 = arith.addf %469, %470 : vector<32x128xf32>
      %c0_543 = arith.constant 0 : index
      %c0_544 = arith.constant 0 : index
      %472 = vector.load %arg19[%c0_543, %c0_544] : memref<32x128xf32, #tpu.memory_space<vmem>>, vector<32x128xf32>
      tpu.vector_store %arg19[%c0_543, %c0_544], %471 {strides = array<i32>} : memref<32x128xf32, #tpu.memory_space<vmem>>, vector<32x128xf32>,
      %c0_545 = arith.constant 0 : index
      %c0_546 = arith.constant 0 : index
      %473 = vector.load %arg26[%c0_545, %c0_546] : memref<32x4xf32, #tpu.memory_space<vmem>>, vector<32x4xf32>
      %cst_547 = arith.constant 0.000000e+00 : f32
      %474 = vector.broadcast %cst_547 : f32 to vector<32x124xf32>
      %475 = tpu.concatenate %473, %474 in 1 : vector<32x4xf32>, vector<32x124xf32> -> vector<32x128xf32>
      %c0_548 = arith.constant 0 : index
      %c0_549 = arith.constant 0 : index
      %476 = vector.load %arg20[%c0_548, %c0_549] : memref<32x128xf32, #tpu.memory_space<vmem>>, vector<32x128xf32>
      tpu.vector_store %arg20[%c0_548, %c0_549], %475 {strides = array<i32>} : memref<32x128xf32, #tpu.memory_space<vmem>>, vector<32x128xf32>,
    } else {
    }
    return
  }
  func.func @transform_0(%arg0: i32, %arg1: i32) -> (i32, i32) {
    %c0_i32 = arith.constant 0 : i32
    %c0_i32_0 = arith.constant 0 : i32
    return %arg0, %c0_i32 : i32, i32
  }
  func.func @transform_1(%arg0: i32, %arg1: i32) -> (i32, i32) {
    %c0_i32 = arith.constant 0 : i32
    %c0_i32_0 = arith.constant 0 : i32
    return %arg0, %c0_i32 : i32, i32
  }
  func.func @transform_2(%arg0: i32, %arg1: i32) -> (i32, i32) {
    %c0_i32 = arith.constant 0 : i32
    %c0_i32_0 = arith.constant 0 : i32
    return %arg0, %c0_i32 : i32, i32
  }
  func.func @transform_3(%arg0: i32, %arg1: i32) -> (i32, i32, i32) {
    %c0_i32 = arith.constant 0 : i32
    %c0_i32_0 = arith.constant 0 : i32
    %c0_i32_1 = arith.constant 0 : i32
    return %c0_i32, %arg0, %c0_i32_0 : i32, i32, i32
  }
  func.func @transform_4(%arg0: i32, %arg1: i32) -> (i32, i32) {
    %c0_i32 = arith.constant 0 : i32
    %c0_i32_0 = arith.constant 0 : i32
    %c0_i32_1 = arith.constant 0 : i32
    return %c0_i32, %c0_i32_0 : i32, i32
  }
  func.func @transform_5(%arg0: i32, %arg1: i32) -> (i32, i32) {
    %c0_i32 = arith.constant 0 : i32
    %c0_i32_0 = arith.constant 0 : i32
    %c0_i32_1 = arith.constant 0 : i32
    return %c0_i32, %c0_i32_0 : i32, i32
  }
  func.func @transform_6(%arg0: i32, %arg1: i32) -> (i32, i32) {
    %c0_i32 = arith.constant 0 : i32
    %c0_i32_0 = arith.constant 0 : i32
    %c0_i32_1 = arith.constant 0 : i32
    return %c0_i32, %c0_i32_0 : i32, i32
  }
  func.func @transform_7(%arg0: i32, %arg1: i32) -> (i32, i32) {
    %c0_i32 = arith.constant 0 : i32
    %c0_i32_0 = arith.constant 0 : i32
    %c0_i32_1 = arith.constant 0 : i32
    return %c0_i32, %c0_i32_0 : i32, i32
  }
  func.func @transform_8(%arg0: i32, %arg1: i32) -> (i32, i32) {
    %c0_i32 = arith.constant 0 : i32
    %c0_i32_0 = arith.constant 0 : i32
    %c0_i32_1 = arith.constant 0 : i32
    return %c0_i32, %c0_i32_0 : i32, i32
  }
  func.func @transform_9(%arg0: i32, %arg1: i32) -> (i32, i32) {
    %c0_i32 = arith.constant 0 : i32
    %c0_i32_0 = arith.constant 0 : i32
    %c0_i32_1 = arith.constant 0 : i32
    return %c0_i32, %c0_i32_0 : i32, i32
  }
  func.func @transform_10(%arg0: i32, %arg1: i32) -> (i32, i32) {
    %c0_i32 = arith.constant 0 : i32
    %c0_i32_0 = arith.constant 0 : i32
    %c0_i32_1 = arith.constant 0 : i32
    return %c0_i32, %c0_i32_0 : i32, i32
  }
  func.func @transform_11(%arg0: i32, %arg1: i32) -> (i32, i32) {
    %c0_i32 = arith.constant 0 : i32
    %c0_i32_0 = arith.constant 0 : i32
    %c0_i32_1 = arith.constant 0 : i32
    return %c0_i32, %c0_i32_0 : i32, i32
  }
  func.func @transform_12(%arg0: i32, %arg1: i32) -> (i32, i32) {
    %c0_i32 = arith.constant 0 : i32
    %c0_i32_0 = arith.constant 0 : i32
    %c0_i32_1 = arith.constant 0 : i32
    return %c0_i32, %c0_i32_0 : i32, i32
  }
  func.func @transform_13(%arg0: i32, %arg1: i32) -> (i32, i32) {
    %c0_i32 = arith.constant 0 : i32
    %c0_i32_0 = arith.constant 0 : i32
    %c0_i32_1 = arith.constant 0 : i32
    return %c0_i32, %c0_i32_0 : i32, i32
  }
  func.func @transform_14(%arg0: i32, %arg1: i32) -> (i32, i32) {
    %c0_i32 = arith.constant 0 : i32
    %c0_i32_0 = arith.constant 0 : i32
    %c0_i32_1 = arith.constant 0 : i32
    return %c0_i32, %c0_i32_0 : i32, i32
  }
  func.func @transform_15(%arg0: i32, %arg1: i32) -> (i32, i32) {
    %c0_i32 = arith.constant 0 : i32
    %c0_i32_0 = arith.constant 0 : i32
    %c0_i32_1 = arith.constant 0 : i32
    return %c0_i32, %c0_i32_0 : i32, i32
  }
  func.func @transform_16(%arg0: i32, %arg1: i32) -> (i32, i32) {
    %c0_i32 = arith.constant 0 : i32
    %c0_i32_0 = arith.constant 0 : i32
    %c0_i32_1 = arith.constant 0 : i32
    return %c0_i32, %c0_i32_0 : i32, i32
  }
  func.func @transform_17(%arg0: i32, %arg1: i32) -> (i32, i32) {
    %c0_i32 = arith.constant 0 : i32
    %c0_i32_0 = arith.constant 0 : i32
    return %arg0, %c0_i32 : i32, i32
  }
  func.func @transform_18(%arg0: i32, %arg1: i32) -> (i32, i32) {
    %c0_i32 = arith.constant 0 : i32
    %c0_i32_0 = arith.constant 0 : i32
    return %arg0, %c0_i32 : i32, i32
  }
}

</mosaic_0001>

<llo_original>
// kernel: tile.8
$region0: #{tile.8}
  #allocation0 [shape = 's32[1]{0}', space=sflag, size = 0x4, scoped, tag = 'scoped memory for tile.8']
  %s0 = inlined_call_operand.vmem [shape: f32[3], index: 0, kind: input, shape index: {}]
  %s1 = inlined_call_operand.vmem [shape: f32[16,3], index: 1, kind: output, shape index: {}]
  // Predicated region
  $region2: #{tile.8} parent=0 // pred_check
    _
  $region3: #{tile.8} parent=0 // pred_check_branch
    %3 = sbr.rel (0) target = $region5
  $region4: #{tile.8} parent=0 // pred_region
    _
  $region5: #{tile.8} parent=0 // pred_fallthru
    _
  %v4 = vld [vmem:[%s0] ss:$0 sm:$0xff]
  %5 = vst [vmem:[%s1] sm:$0xff] %v4
  %s6 = scalar_lea.vmem %s1, 8
  %7 = vst [vmem:[%s6] sm:$0xff] %v4

// kernel: tile.9
$region0: #{tile.9}
  %s0 = inlined_call_operand.vmem [shape: f32[16,3], index: 0, kind: input, shape index: {}]
  %s1 = inlined_call_operand.vmem [shape: f32[48], index: 1, kind: output, shape index: {}]
  $region1: #{tile.9} parent=0
    #allocation0 [shape = 'u8[4096]{0}', space=vmem, size = 0x1000, scoped, tag = 'scoped mem for output reshape']
    %v2 = vld [vmem:[%s0] sm:$0x1]
    %vm3 = vcmask 23552
    %4 = vst.msk [vmem:[#allocation0] sm:$0x1] %vm3, %v2
    %s5 = scalar_lea.vmem %s0, 15
    %v6 = vld [vmem:[%s5] sm:$0x1]
    %7 = vrot.lane.b32.xlu0 %v6, 45
    %v8 = vpop.permute.xlu0 %7
    %vm9 = vcmask 392552
    %10 = vst.msk [vmem:[#allocation0] sm:$0x1] %vm9, %v8
    %s11 = scalar_lea.vmem %s0, 14
    %v12 = vld [vmem:[%s11] sm:$0x1]
    %13 = vrot.lane.b32.xlu0 %v12, 42
    %v14 = vpop.permute.xlu0 %13
    %vm15 = vcmask 367952
    %16 = vst.msk [vmem:[#allocation0] sm:$0x1] %vm15, %v14
    %s17 = scalar_lea.vmem %s0, 13
    %v18 = vld [vmem:[%s17] sm:$0x1]
    %19 = vrot.lane.b32.xlu0 %v18, 39
    %v20 = vpop.permute.xlu0 %19
    %vm21 = vcmask 343352
    %22 = vst.msk [vmem:[#allocation0] sm:$0x1] %vm21, %v20
    %s23 = scalar_lea.vmem %s0, 12
    %v24 = vld [vmem:[%s23] sm:$0x1]
    %25 = vrot.lane.b32.xlu0 %v24, 36
    %v26 = vpop.permute.xlu0 %25
    %vm27 = vcmask 318752
    %28 = vst.msk [vmem:[#allocation0] sm:$0x1] %vm27, %v26
    %s29 = scalar_lea.vmem %s0, 11
    %v30 = vld [vmem:[%s29] sm:$0x1]
    %31 = vrot.lane.b32.xlu0 %v30, 33
    %v32 = vpop.permute.xlu0 %31
    %vm33 = vcmask 294152
    %34 = vst.msk [vmem:[#allocation0] sm:$0x1] %vm33, %v32
    %s35 = scalar_lea.vmem %s0, 10
    %v36 = vld [vmem:[%s35] sm:$0x1]
    %37 = vrot.lane.b32.xlu0 %v36, 30
    %v38 = vpop.permute.xlu0 %37
    %vm39 = vcmask 269552
    %40 = vst.msk [vmem:[#allocation0] sm:$0x1] %vm39, %v38
    %s41 = scalar_lea.vmem %s0, 9
    %v42 = vld [vmem:[%s41] sm:$0x1]
    %43 = vrot.lane.b32.xlu0 %v42, 27
    %v44 = vpop.permute.xlu0 %43
    %vm45 = vcmask 244952
    %46 = vst.msk [vmem:[#allocation0] sm:$0x1] %vm45, %v44
    %s47 = scalar_lea.vmem %s0, 8
    %v48 = vld [vmem:[%s47] sm:$0x1]
    %49 = vrot.lane.b32.xlu0 %v48, 24
    %v50 = vpop.permute.xlu0 %49
    %vm51 = vcmask 220352
    %52 = vst.msk [vmem:[#allocation0] sm:$0x1] %vm51, %v50
    %s53 = scalar_lea.vmem %s0, 7
    %v54 = vld [vmem:[%s53] sm:$0x1]
    %55 = vrot.lane.b32.xlu0 %v54, 21
    %v56 = vpop.permute.xlu0 %55
    %vm57 = vcmask 195752
    %58 = vst.msk [vmem:[#allocation0] sm:$0x1] %vm57, %v56
    %s59 = scalar_lea.vmem %s0, 6
    %v60 = vld [vmem:[%s59] sm:$0x1]
    %61 = vrot.lane.b32.xlu0 %v60, 18
    %v62 = vpop.permute.xlu0 %61
    %vm63 = vcmask 171152
    %64 = vst.msk [vmem:[#allocation0] sm:$0x1] %vm63, %v62
    %s65 = scalar_lea.vmem %s0, 5
    %v66 = vld [vmem:[%s65] sm:$0x1]
    %67 = vrot.lane.b32.xlu0 %v66, 15
    %v68 = vpop.permute.xlu0 %67
    %vm69 = vcmask 146552
    %70 = vst.msk [vmem:[#allocation0] sm:$0x1] %vm69, %v68
    %s71 = scalar_lea.vmem %s0, 4
    %v72 = vld [vmem:[%s71] sm:$0x1]
    %73 = vrot.lane.b32.xlu0 %v72, 12
    %v74 = vpop.permute.xlu0 %73
    %vm75 = vcmask 121952
    %76 = vst.msk [vmem:[#allocation0] sm:$0x1] %vm75, %v74
    %s77 = scalar_lea.vmem %s0, 3
    %v78 = vld [vmem:[%s77] sm:$0x1]
    %79 = vrot.lane.b32.xlu0 %v78, 9
    %v80 = vpop.permute.xlu0 %79
    %vm81 = vcmask 97352
    %82 = vst.msk [vmem:[#allocation0] sm:$0x1] %vm81, %v80
    %s83 = scalar_lea.vmem %s0, 2
    %v84 = vld [vmem:[%s83] sm:$0x1]
    %85 = vrot.lane.b32.xlu0 %v84, 6
    %v86 = vpop.permute.xlu0 %85
    %vm87 = vcmask 72752
    %88 = vst.msk [vmem:[#allocation0] sm:$0x1] %vm87, %v86
    %s89 = scalar_lea.vmem %s0, 1
    %v90 = vld [vmem:[%s89] sm:$0x1]
    %91 = vrot.lane.b32.xlu0 %v90, 3
    %v92 = vpop.permute.xlu0 %91
    %vm93 = vcmask 48152
    %94 = vst.msk [vmem:[#allocation0] sm:$0x1] %vm93, %v92
    %s96 = sshllo.u32 0, 1
    %v98 = vld [vmem:[#allocation0] sm:%s96]
    %s99 = sshllo.u32 0, 1
    %100 = vst [vmem:[%s1] sm:%s99] %v98

// kernel: generator_forward.1
$region0: #{generator_forward.1}
  #allocation0 [shape = 'u32[]', space=smem, size = 0x4, offset = 0x4, fixed_abs, tag = 'smem constant byte address 0x4 - core index']
  #allocation1 [shape = 'u32[144,128]{1,0:T(1,128)}', space=vmem, size = 0x12000, scoped, tag = 'internal scratch']
  #allocation2 [shape = 'f32[32,16]{1,0:T(8,128)}', space=vmem, size = 0x4000, scoped, tag = 'scratch operand']
  #allocation3 [shape = 'f32[32,16]{1,0:T(8,128)}', space=vmem, size = 0x4000, scoped, tag = 'scratch operand']
  #allocation4 [shape = 'f32[32,16]{1,0:T(8,128)}', space=vmem, size = 0x4000, scoped, tag = 'scratch operand']
  #allocation5 [shape = 'f32[32,16]{1,0:T(8,128)}', space=vmem, size = 0x4000, scoped, tag = 'scratch operand']
  #allocation6 [shape = 'f32[32,16]{1,0:T(8,128)}', space=vmem, size = 0x4000, scoped, tag = 'scratch operand']
  #allocation7 [shape = 'f32[32,4]{1,0:T(8,128)}', space=vmem, size = 0x4000, scoped, tag = 'scratch operand']
  #allocation8 [shape = 'f32[80,32]{1,0:T(8,128)}', space=vmem, size = 0xa000, scoped, tag = 'scratch operand']
  #allocation9 [shape = 'f32[32,800]{1,0:T(8,128)}', space=vmem, size = 0x1c000, scoped, tag = 'scratch operand']
  %s0 = inlined_call_operand.vmem [shape: f32[64,48], index: 0, kind: input, shape index: {}]
  %s1 = inlined_call_operand.vmem [shape: f32[64,32], index: 1, kind: input, shape index: {}]
  %s2 = inlined_call_operand.vmem [shape: f32[64,17], index: 2, kind: input, shape index: {}]
  %s3 = inlined_call_operand.vmem [shape: f32[3,64,4], index: 3, kind: input, shape index: {}]
  %s4 = inlined_call_operand.vmem [shape: bf16[48,32], index: 4, kind: input, shape index: {}]
  %s5 = inlined_call_operand.vmem [shape: bf16[400,25], index: 5, kind: input, shape index: {}]
  %s6 = inlined_call_operand.vmem [shape: f32[1,25], index: 6, kind: input, shape index: {}]
  %s7 = inlined_call_operand.vmem [shape: bf16[400,8], index: 7, kind: input, shape index: {}]
  %s8 = inlined_call_operand.vmem [shape: f32[1,8], index: 8, kind: input, shape index: {}]
  %s9 = inlined_call_operand.vmem [shape: bf16[400,32], index: 9, kind: input, shape index: {}]
  %s10 = inlined_call_operand.vmem [shape: f32[1,32], index: 10, kind: input, shape index: {}]
  %s11 = inlined_call_operand.vmem [shape: bf16[800,64], index: 11, kind: input, shape index: {}]
  %s12 = inlined_call_operand.vmem [shape: f32[1,64], index: 12, kind: input, shape index: {}]
  %s13 = inlined_call_operand.vmem [shape: bf16[425,64], index: 13, kind: input, shape index: {}]
  %s14 = inlined_call_operand.vmem [shape: f32[1,64], index: 14, kind: input, shape index: {}]
  %s15 = inlined_call_operand.vmem [shape: bf16[16,128], index: 15, kind: input, shape index: {}]
  %s16 = inlined_call_operand.vmem [shape: f32[1,128], index: 16, kind: input, shape index: {}]
  %s17 = inlined_call_operand.vmem [shape: f32[64,128], index: 17, kind: output, shape index: {0}]
  %s18 = inlined_call_operand.vmem [shape: f32[64,128], index: 18, kind: output, shape index: {1}]
  %19 = xla_tuple %s17, %s18
  %s20 = sld [smem:[#allocation0]]
  $region155: #{generator_forward.1} parent=0
    _
  %s22 = ssub.s32 1, %s20
  %s23 = scalar_select 0, %s22, %s20
  $region1: #{generator_forward.1} parent=0
    #allocation10 [shape = 'u8[98304]{0}', space=vmem, size = 0x18000, scoped, tag = 'input window, operand 3']
    loop: start=0, step=1, limit=8
    $region2: #{generator_forward.1} parent=1 // loop_pre_header
      _
    $region3: #{generator_forward.1} parent=1 // loop_header
      %s25 = sphi 0, %s29
      %p26 = scmp.ge.s32.totalorder %s25, 8
      %s32 = sphi 0, %s44
      %s33 = sphi 0, %s40
      %s34 = sphi 0, %s32
      %s35 = sphi 0, %s33
      %s36 = sphi 0, %s34
      %s37 = sphi 0, %s35
      %s47 = sphi 0, %s49
      %s50 = sphi 0, %s47
      %s51 = sphi 0, %s50
      %s67 = sphi 0, %s51
      %s73 = sphi 0, %s75
      %s76 = sphi 0, %s73
      %s77 = sphi 0, %s76
      %s93 = sphi 0, %s77
      %s99 = sphi 0, %s101
      %s102 = sphi 0, %s99
      %s103 = sphi 0, %s102
      %s119 = sphi 0, %s103
      %s125 = sphi 0, %s127
      %s128 = sphi 0, %s125
      %s129 = sphi 0, %s128
      %s145 = sphi 0, %s129
      %s149 = sphi 0, %s149
      %s151 = sphi 0, %s149
      %s152 = sphi 0, %s151
      %s166 = sphi 0, %s152
      %s170 = sphi 0, %s170
      %s172 = sphi 0, %s170
      %s173 = sphi 0, %s172
      %s187 = sphi 0, %s173
      %s191 = sphi 0, %s191
      %s193 = sphi 0, %s191
      %s194 = sphi 0, %s193
      %s208 = sphi 0, %s194
      %s212 = sphi 0, %s212
      %s214 = sphi 0, %s212
      %s215 = sphi 0, %s214
      %s229 = sphi 0, %s215
      %s233 = sphi 0, %s233
      %s235 = sphi 0, %s233
      %s236 = sphi 0, %s235
      %s250 = sphi 0, %s236
      %s254 = sphi 0, %s254
      %s256 = sphi 0, %s254
      %s257 = sphi 0, %s256
      %s271 = sphi 0, %s257
      %s275 = sphi 0, %s275
      %s277 = sphi 0, %s275
      %s278 = sphi 0, %s277
      %s292 = sphi 0, %s278
      %s296 = sphi 0, %s296
      %s298 = sphi 0, %s296
      %s299 = sphi 0, %s298
      %s313 = sphi 0, %s299
      %s317 = sphi 0, %s317
      %s319 = sphi 0, %s317
      %s320 = sphi 0, %s319
      %s334 = sphi 0, %s320
      %s338 = sphi 0, %s338
      %s340 = sphi 0, %s338
      %s341 = sphi 0, %s340
      %s355 = sphi 0, %s341
      %s359 = sphi 0, %s359
      %s361 = sphi 0, %s359
      %s362 = sphi 0, %s361
      %s376 = sphi 0, %s362
      %s380 = sphi 0, %s380
      %s382 = sphi 0, %s380
      %s383 = sphi 0, %s382
      %s397 = sphi 0, %s383
      %s401 = sphi 0, %s401
      %s403 = sphi 0, %s401
      %s404 = sphi 0, %s403
      %s418 = sphi 0, %s404
      %s424 = sphi 0, %s426
      %s427 = sphi 0, %s424
      %s428 = sphi 0, %s427
      %s444 = sphi 0, %s428
      %s450 = sphi 0, %s452
      %s453 = sphi 0, %s450
      %s454 = sphi 0, %s453
      %s470 = sphi 0, %s454
    $region4: #{generator_forward.1} parent=1 // loop_header_branch
      %28 = sbr.rel (%p26) target = $region8
    $region5: #{generator_forward.1} parent=1 // loop_body
      %s30 = ssub.s32 %s25, 1
      %s31 = ssub.s32 %s25, 2
      %s38 = sadd.s32 1, %s33
      %p39 = scmp.ge.s32.totalorder %s38, 3
      %s40 = scalar_select %p39, 0, %s38
      %s41 = sadd.s32 1, %s32
      %s42 = scalar_select %p39, %s41, %s32
      %p43 = scmp.ge.s32.totalorder %s42, 2
      %s44 = scalar_select %p43, 0, %s42
      %s45 = ssub.s32 %s32, %s44
      %p46 = scmp.eq.s32.totalorder %s45, 0
      %s48 = sadd.s32 %s47, 1
      %s49 = scalar_select %p46, %s47, %s48
      %p52 = pneg %p46
      %p53 = scmp.eq.s32.totalorder %s25, 5
      %p54 = por %p52, %p53
      %p55 = scmp.ne.s32.totalorder %s47, %s50
      %p56 = scmp.eq.s32.totalorder %s25, 0
      %p57 = por %p55, %p56
      %p58 = scmp.ne.s32.totalorder %s47, %s50
      %p59 = scmp.eq.s32.totalorder %s30, 5
      %p60 = por %p58, %p59
      %p61 = scmp.ne.s32.totalorder %s50, %s51
      %p62 = scmp.eq.s32.totalorder %s30, 0
      %p63 = por %p61, %p62
      %p64 = scmp.ne.s32.totalorder %s50, %s51
      %p65 = scmp.eq.s32.totalorder %s31, 5
      %p66 = por %p64, %p65
      %p68 = scmp.ne.s32.totalorder %s51, %s67
      %p69 = scmp.eq.s32.totalorder %s31, 0
      %p70 = por %p68, %p69
      %s71 = ssub.s32 %s32, %s44
      %p72 = scmp.eq.s32.totalorder %s71, 0
      %s74 = sadd.s32 %s73, 1
      %s75 = scalar_select %p72, %s73, %s74
      %p78 = pneg %p72
      %p79 = scmp.eq.s32.totalorder %s25, 5
      %p80 = por %p78, %p79
      %p81 = scmp.ne.s32.totalorder %s73, %s76
      %p82 = scmp.eq.s32.totalorder %s25, 0
      %p83 = por %p81, %p82
      %p84 = scmp.ne.s32.totalorder %s73, %s76
      %p85 = scmp.eq.s32.totalorder %s30, 5
      %p86 = por %p84, %p85
      %p87 = scmp.ne.s32.totalorder %s76, %s77
      %p88 = scmp.eq.s32.totalorder %s30, 0
      %p89 = por %p87, %p88
      %p90 = scmp.ne.s32.totalorder %s76, %s77
      %p91 = scmp.eq.s32.totalorder %s31, 5
      %p92 = por %p90, %p91
      %p94 = scmp.ne.s32.totalorder %s77, %s93
      %p95 = scmp.eq.s32.totalorder %s31, 0
      %p96 = por %p94, %p95
      %s97 = ssub.s32 %s32, %s44
      %p98 = scmp.eq.s32.totalorder %s97, 0
      %s100 = sadd.s32 %s99, 1
      %s101 = scalar_select %p98, %s99, %s100
      %p104 = pneg %p98
      %p105 = scmp.eq.s32.totalorder %s25, 5
      %p106 = por %p104, %p105
      %p107 = scmp.ne.s32.totalorder %s99, %s102
      %p108 = scmp.eq.s32.totalorder %s25, 0
      %p109 = por %p107, %p108
      %p110 = scmp.ne.s32.totalorder %s99, %s102
      %p111 = scmp.eq.s32.totalorder %s30, 5
      %p112 = por %p110, %p111
      %p113 = scmp.ne.s32.totalorder %s102, %s103
      %p114 = scmp.eq.s32.totalorder %s30, 0
      %p115 = por %p113, %p114
      %p116 = scmp.ne.s32.totalorder %s102, %s103
      %p117 = scmp.eq.s32.totalorder %s31, 5
      %p118 = por %p116, %p117
      %p120 = scmp.ne.s32.totalorder %s103, %s119
      %p121 = scmp.eq.s32.totalorder %s31, 0
      %p122 = por %p120, %p121
      %s123 = ssub.s32 %s32, %s44
      %p124 = scmp.eq.s32.totalorder %s123, 0
      %s126 = sadd.s32 %s125, 1
      %s127 = scalar_select %p124, %s125, %s126
      %p130 = pneg %p124
      %p131 = scmp.eq.s32.totalorder %s25, 5
      %p132 = por %p130, %p131
      %p133 = scmp.ne.s32.totalorder %s125, %s128
      %p134 = scmp.eq.s32.totalorder %s25, 0
      %p135 = por %p133, %p134
      %p136 = scmp.ne.s32.totalorder %s125, %s128
      %p137 = scmp.eq.s32.totalorder %s30, 5
      %p138 = por %p136, %p137
      %p139 = scmp.ne.s32.totalorder %s128, %s129
      %p140 = scmp.eq.s32.totalorder %s30, 0
      %p141 = por %p139, %p140
      %p142 = scmp.ne.s32.totalorder %s128, %s129
      %p143 = scmp.eq.s32.totalorder %s31, 5
      %p144 = por %p142, %p143
      %p146 = scmp.ne.s32.totalorder %s129, %s145
      %p147 = scmp.eq.s32.totalorder %s31, 0
      %p148 = por %p146, %p147
      %s150 = sadd.s32 %s149, 1
      %p153 = scmp.eq.s32.totalorder %s25, 5
      %p154 = scmp.ne.s32.totalorder %s149, %s151
      %p155 = scmp.eq.s32.totalorder %s25, 0
      %p156 = por %p154, %p155
      %p157 = scmp.ne.s32.totalorder %s149, %s151
      %p158 = scmp.eq.s32.totalorder %s30, 5
      %p159 = por %p157, %p158
      %p160 = scmp.ne.s32.totalorder %s151, %s152
      %p161 = scmp.eq.s32.totalorder %s30, 0
      %p162 = por %p160, %p161
      %p163 = scmp.ne.s32.totalorder %s151, %s152
      %p164 = scmp.eq.s32.totalorder %s31, 5
      %p165 = por %p163, %p164
      %p167 = scmp.ne.s32.totalorder %s152, %s166
      %p168 = scmp.eq.s32.totalorder %s31, 0
      %p169 = por %p167, %p168
      %s171 = sadd.s32 %s170, 1
      %p174 = scmp.eq.s32.totalorder %s25, 5
      %p175 = scmp.ne.s32.totalorder %s170, %s172
      %p176 = scmp.eq.s32.totalorder %s25, 0
      %p177 = por %p175, %p176
      %p178 = scmp.ne.s32.totalorder %s170, %s172
      %p179 = scmp.eq.s32.totalorder %s30, 5
      %p180 = por %p178, %p179
      %p181 = scmp.ne.s32.totalorder %s172, %s173
      %p182 = scmp.eq.s32.totalorder %s30, 0
      %p183 = por %p181, %p182
      %p184 = scmp.ne.s32.totalorder %s172, %s173
      %p185 = scmp.eq.s32.totalorder %s31, 5
      %p186 = por %p184, %p185
      %p188 = scmp.ne.s32.totalorder %s173, %s187
      %p189 = scmp.eq.s32.totalorder %s31, 0
      %p190 = por %p188, %p189
      %s192 = sadd.s32 %s191, 1
      %p195 = scmp.eq.s32.totalorder %s25, 5
      %p196 = scmp.ne.s32.totalorder %s191, %s193
      %p197 = scmp.eq.s32.totalorder %s25, 0
      %p198 = por %p196, %p197
      %p199 = scmp.ne.s32.totalorder %s191, %s193
      %p200 = scmp.eq.s32.totalorder %s30, 5
      %p201 = por %p199, %p200
      %p202 = scmp.ne.s32.totalorder %s193, %s194
      %p203 = scmp.eq.s32.totalorder %s30, 0
      %p204 = por %p202, %p203
      %p205 = scmp.ne.s32.totalorder %s193, %s194
      %p206 = scmp.eq.s32.totalorder %s31, 5
      %p207 = por %p205, %p206
      %p209 = scmp.ne.s32.totalorder %s194, %s208
      %p210 = scmp.eq.s32.totalorder %s31, 0
      %p211 = por %p209, %p210
      %s213 = sadd.s32 %s212, 1
      %p216 = scmp.eq.s32.totalorder %s25, 5
      %p217 = scmp.ne.s32.totalorder %s212, %s214
      %p218 = scmp.eq.s32.totalorder %s25, 0
      %p219 = por %p217, %p218
      %p220 = scmp.ne.s32.totalorder %s212, %s214
      %p221 = scmp.eq.s32.totalorder %s30, 5
      %p222 = por %p220, %p221
      %p223 = scmp.ne.s32.totalorder %s214, %s215
      %p224 = scmp.eq.s32.totalorder %s30, 0
      %p225 = por %p223, %p224
      %p226 = scmp.ne.s32.totalorder %s214, %s215
      %p227 = scmp.eq.s32.totalorder %s31, 5
      %p228 = por %p226, %p227
      %p230 = scmp.ne.s32.totalorder %s215, %s229
      %p231 = scmp.eq.s32.totalorder %s31, 0
      %p232 = por %p230, %p231
      %s234 = sadd.s32 %s233, 1
      %p237 = scmp.eq.s32.totalorder %s25, 5
      %p238 = scmp.ne.s32.totalorder %s233, %s235
      %p239 = scmp.eq.s32.totalorder %s25, 0
      %p240 = por %p238, %p239
      %p241 = scmp.ne.s32.totalorder %s233, %s235
      %p242 = scmp.eq.s32.totalorder %s30, 5
      %p243 = por %p241, %p242
      %p244 = scmp.ne.s32.totalorder %s235, %s236
      %p245 = scmp.eq.s32.totalorder %s30, 0
      %p246 = por %p244, %p245
      %p247 = scmp.ne.s32.totalorder %s235, %s236
      %p248 = scmp.eq.s32.totalorder %s31, 5
      %p249 = por %p247, %p248
      %p251 = scmp.ne.s32.totalorder %s236, %s250
      %p252 = scmp.eq.s32.totalorder %s31, 0
      %p253 = por %p251, %p252
      %s255 = sadd.s32 %s254, 1
      %p258 = scmp.eq.s32.totalorder %s25, 5
      %p259 = scmp.ne.s32.totalorder %s254, %s256
      %p260 = scmp.eq.s32.totalorder %s25, 0
      %p261 = por %p259, %p260
      %p262 = scmp.ne.s32.totalorder %s254, %s256
      %p263 = scmp.eq.s32.totalorder %s30, 5
      %p264 = por %p262, %p263
      %p265 = scmp.ne.s32.totalorder %s256, %s257
      %p266 = scmp.eq.s32.totalorder %s30, 0
      %p267 = por %p265, %p266
      %p268 = scmp.ne.s32.totalorder %s256, %s257
      %p269 = scmp.eq.s32.totalorder %s31, 5
      %p270 = por %p268, %p269
      %p272 = scmp.ne.s32.totalorder %s257, %s271
      %p273 = scmp.eq.s32.totalorder %s31, 0
      %p274 = por %p272, %p273
      %s276 = sadd.s32 %s275, 1
      %p279 = scmp.eq.s32.totalorder %s25, 5
      %p280 = scmp.ne.s32.totalorder %s275, %s277
      %p281 = scmp.eq.s32.totalorder %s25, 0
      %p282 = por %p280, %p281
      %p283 = scmp.ne.s32.totalorder %s275, %s277
      %p284 = scmp.eq.s32.totalorder %s30, 5
      %p285 = por %p283, %p284
      %p286 = scmp.ne.s32.totalorder %s277, %s278
      %p287 = scmp.eq.s32.totalorder %s30, 0
      %p288 = por %p286, %p287
      %p289 = scmp.ne.s32.totalorder %s277, %s278
      %p290 = scmp.eq.s32.totalorder %s31, 5
      %p291 = por %p289, %p290
      %p293 = scmp.ne.s32.totalorder %s278, %s292
      %p294 = scmp.eq.s32.totalorder %s31, 0
      %p295 = por %p293, %p294
      %s297 = sadd.s32 %s296, 1
      %p300 = scmp.eq.s32.totalorder %s25, 5
      %p301 = scmp.ne.s32.totalorder %s296, %s298
      %p302 = scmp.eq.s32.totalorder %s25, 0
      %p303 = por %p301, %p302
      %p304 = scmp.ne.s32.totalorder %s296, %s298
      %p305 = scmp.eq.s32.totalorder %s30, 5
      %p306 = por %p304, %p305
      %p307 = scmp.ne.s32.totalorder %s298, %s299
      %p308 = scmp.eq.s32.totalorder %s30, 0
      %p309 = por %p307, %p308
      %p310 = scmp.ne.s32.totalorder %s298, %s299
      %p311 = scmp.eq.s32.totalorder %s31, 5
      %p312 = por %p310, %p311
      %p314 = scmp.ne.s32.totalorder %s299, %s313
      %p315 = scmp.eq.s32.totalorder %s31, 0
      %p316 = por %p314, %p315
      %s318 = sadd.s32 %s317, 1
      %p321 = scmp.eq.s32.totalorder %s25, 5
      %p322 = scmp.ne.s32.totalorder %s317, %s319
      %p323 = scmp.eq.s32.totalorder %s25, 0
      %p324 = por %p322, %p323
      %p325 = scmp.ne.s32.totalorder %s317, %s319
      %p326 = scmp.eq.s32.totalorder %s30, 5
      %p327 = por %p325, %p326
      %p328 = scmp.ne.s32.totalorder %s319, %s320
      %p329 = scmp.eq.s32.totalorder %s30, 0
      %p330 = por %p328, %p329
      %p331 = scmp.ne.s32.totalorder %s319, %s320
      %p332 = scmp.eq.s32.totalorder %s31, 5
      %p333 = por %p331, %p332
      %p335 = scmp.ne.s32.totalorder %s320, %s334
      %p336 = scmp.eq.s32.totalorder %s31, 0
      %p337 = por %p335, %p336
      %s339 = sadd.s32 %s338, 1
      %p342 = scmp.eq.s32.totalorder %s25, 5
      %p343 = scmp.ne.s32.totalorder %s338, %s340
      %p344 = scmp.eq.s32.totalorder %s25, 0
      %p345 = por %p343, %p344
      %p346 = scmp.ne.s32.totalorder %s338, %s340
      %p347 = scmp.eq.s32.totalorder %s30, 5
      %p348 = por %p346, %p347
      %p349 = scmp.ne.s32.totalorder %s340, %s341
      %p350 = scmp.eq.s32.totalorder %s30, 0
      %p351 = por %p349, %p350
      %p352 = scmp.ne.s32.totalorder %s340, %s341
      %p353 = scmp.eq.s32.totalorder %s31, 5
      %p354 = por %p352, %p353
      %p356 = scmp.ne.s32.totalorder %s341, %s355
      %p357 = scmp.eq.s32.totalorder %s31, 0
      %p358 = por %p356, %p357
      %s360 = sadd.s32 %s359, 1
      %p363 = scmp.eq.s32.totalorder %s25, 5
      %p364 = scmp.ne.s32.totalorder %s359, %s361
      %p365 = scmp.eq.s32.totalorder %s25, 0
      %p366 = por %p364, %p365
      %p367 = scmp.ne.s32.totalorder %s359, %s361
      %p368 = scmp.eq.s32.totalorder %s30, 5
      %p369 = por %p367, %p368
      %p370 = scmp.ne.s32.totalorder %s361, %s362
      %p371 = scmp.eq.s32.totalorder %s30, 0
      %p372 = por %p370, %p371
      %p373 = scmp.ne.s32.totalorder %s361, %s362
      %p374 = scmp.eq.s32.totalorder %s31, 5
      %p375 = por %p373, %p374
      %p377 = scmp.ne.s32.totalorder %s362, %s376
      %p378 = scmp.eq.s32.totalorder %s31, 0
      %p379 = por %p377, %p378
      %s381 = sadd.s32 %s380, 1
      %p384 = scmp.eq.s32.totalorder %s25, 5
      %p385 = scmp.ne.s32.totalorder %s380, %s382
      %p386 = scmp.eq.s32.totalorder %s25, 0
      %p387 = por %p385, %p386
      %p388 = scmp.ne.s32.totalorder %s380, %s382
      %p389 = scmp.eq.s32.totalorder %s30, 5
      %p390 = por %p388, %p389
      %p391 = scmp.ne.s32.totalorder %s382, %s383
      %p392 = scmp.eq.s32.totalorder %s30, 0
      %p393 = por %p391, %p392
      %p394 = scmp.ne.s32.totalorder %s382, %s383
      %p395 = scmp.eq.s32.totalorder %s31, 5
      %p396 = por %p394, %p395
      %p398 = scmp.ne.s32.totalorder %s383, %s397
      %p399 = scmp.eq.s32.totalorder %s31, 0
      %p400 = por %p398, %p399
      %s402 = sadd.s32 %s401, 1
      %p405 = scmp.eq.s32.totalorder %s25, 5
      %p406 = scmp.ne.s32.totalorder %s401, %s403
      %p407 = scmp.eq.s32.totalorder %s25, 0
      %p408 = por %p406, %p407
      %p409 = scmp.ne.s32.totalorder %s401, %s403
      %p410 = scmp.eq.s32.totalorder %s30, 5
      %p411 = por %p409, %p410
      %p412 = scmp.ne.s32.totalorder %s403, %s404
      %p413 = scmp.eq.s32.totalorder %s30, 0
      %p414 = por %p412, %p413
      %p415 = scmp.ne.s32.totalorder %s403, %s404
      %p416 = scmp.eq.s32.totalorder %s31, 5
      %p417 = por %p415, %p416
      %p419 = scmp.ne.s32.totalorder %s404, %s418
      %p420 = scmp.eq.s32.totalorder %s31, 0
      %p421 = por %p419, %p420
      %s422 = ssub.s32 %s32, %s44
      %p423 = scmp.eq.s32.totalorder %s422, 0
      %s425 = sadd.s32 %s424, 1
      %s426 = scalar_select %p423, %s424, %s425
      %p429 = pneg %p423
      %p430 = scmp.eq.s32.totalorder %s25, 5
      %p431 = por %p429, %p430
      %p432 = scmp.ne.s32.totalorder %s424, %s427
      %p433 = scmp.eq.s32.totalorder %s25, 0
      %p434 = por %p432, %p433
      %p435 = scmp.ne.s32.totalorder %s424, %s427
      %p436 = scmp.eq.s32.totalorder %s30, 5
      %p437 = por %p435, %p436
      %p438 = scmp.ne.s32.totalorder %s427, %s428
      %p439 = scmp.eq.s32.totalorder %s30, 0
      %p440 = por %p438, %p439
      %p441 = scmp.ne.s32.totalorder %s427, %s428
      %p442 = scmp.eq.s32.totalorder %s31, 5
      %p443 = por %p441, %p442
      %p445 = scmp.ne.s32.totalorder %s428, %s444
      %p446 = scmp.eq.s32.totalorder %s31, 0
      %p447 = por %p445, %p446
      %s448 = ssub.s32 %s32, %s44
      %p449 = scmp.eq.s32.totalorder %s448, 0
      %s451 = sadd.s32 %s450, 1
      %s452 = scalar_select %p449, %s450, %s451
      %p455 = pneg %p449
      %p456 = scmp.eq.s32.totalorder %s25, 5
      %p457 = por %p455, %p456
      %p458 = scmp.ne.s32.totalorder %s450, %s453
      %p459 = scmp.eq.s32.totalorder %s25, 0
      %p460 = por %p458, %p459
      %p461 = scmp.ne.s32.totalorder %s450, %s453
      %p462 = scmp.eq.s32.totalorder %s30, 5
      %p463 = por %p461, %p462
      %p464 = scmp.ne.s32.totalorder %s453, %s454
      %p465 = scmp.eq.s32.totalorder %s30, 0
      %p466 = por %p464, %p465
      %p467 = scmp.ne.s32.totalorder %s453, %s454
      %p468 = scmp.eq.s32.totalorder %s31, 5
      %p469 = por %p467, %p468
      %p471 = scmp.ne.s32.totalorder %s454, %s470
      %p472 = scmp.eq.s32.totalorder %s31, 0
      %p473 = por %p471, %p472
      %p474 = scmp.le.s32.totalorder 1, %s25
      %p475 = scmp.lt.s32.totalorder %s25, 7
      %p476 = pnand %p474, %p475
      %p477 = pneg %p476
      // Predicated region
      $region9: #{generator_forward.1} parent=5 // pred_check
        _
      $region10: #{generator_forward.1} parent=5 // pred_check_branch
        %479 = sbr.rel (%p476) target = $region12
      $region11: #{generator_forward.1} parent=5 // pred_region
        %s480 = ssub.s32 %s25, 1
        // Predicated region
        $region13: #{generator_forward.1} parent=11 // pred_check
          %p481 = pneg %p162
        $region14: #{generator_forward.1} parent=11 // pred_check_branch
          %483 = sbr.rel (%p481) target = $region16
        $region15: #{generator_forward.1} parent=11 // pred_region
          _
        $region16: #{generator_forward.1} parent=11 // pred_fallthru
          _
        // Predicated region
        $region17: #{generator_forward.1} parent=11 // pred_check
          %p484 = pneg %p183
        $region18: #{generator_forward.1} parent=11 // pred_check_branch
          %486 = sbr.rel (%p484) target = $region20
        $region19: #{generator_forward.1} parent=11 // pred_region
          _
        $region20: #{generator_forward.1} parent=11 // pred_fallthru
          _
        // Predicated region
        $region21: #{generator_forward.1} parent=11 // pred_check
          %p487 = pneg %p204
        $region22: #{generator_forward.1} parent=11 // pred_check_branch
          %489 = sbr.rel (%p487) target = $region24
        $region23: #{generator_forward.1} parent=11 // pred_region
          _
        $region24: #{generator_forward.1} parent=11 // pred_fallthru
          _
        // Predicated region
        $region25: #{generator_forward.1} parent=11 // pred_check
          %p490 = pneg %p225
        $region26: #{generator_forward.1} parent=11 // pred_check_branch
          %492 = sbr.rel (%p490) target = $region28
        $region27: #{generator_forward.1} parent=11 // pred_region
          _
        $region28: #{generator_forward.1} parent=11 // pred_fallthru
          _
        // Predicated region
        $region29: #{generator_forward.1} parent=11 // pred_check
          %p493 = pneg %p246
        $region30: #{generator_forward.1} parent=11 // pred_check_branch
          %495 = sbr.rel (%p493) target = $region32
        $region31: #{generator_forward.1} parent=11 // pred_region
          _
        $region32: #{generator_forward.1} parent=11 // pred_fallthru
          _
        // Predicated region
        $region33: #{generator_forward.1} parent=11 // pred_check
          %p496 = pneg %p267
        $region34: #{generator_forward.1} parent=11 // pred_check_branch
          %498 = sbr.rel (%p496) target = $region36
        $region35: #{generator_forward.1} parent=11 // pred_region
          _
        $region36: #{generator_forward.1} parent=11 // pred_fallthru
          _
        // Predicated region
        $region37: #{generator_forward.1} parent=11 // pred_check
          %p499 = pneg %p288
        $region38: #{generator_forward.1} parent=11 // pred_check_branch
          %501 = sbr.rel (%p499) target = $region40
        $region39: #{generator_forward.1} parent=11 // pred_region
          _
        $region40: #{generator_forward.1} parent=11 // pred_fallthru
          _
        // Predicated region
        $region41: #{generator_forward.1} parent=11 // pred_check
          %p502 = pneg %p309
        $region42: #{generator_forward.1} parent=11 // pred_check_branch
          %504 = sbr.rel (%p502) target = $region44
        $region43: #{generator_forward.1} parent=11 // pred_region
          _
        $region44: #{generator_forward.1} parent=11 // pred_fallthru
          _
        // Predicated region
        $region45: #{generator_forward.1} parent=11 // pred_check
          %p505 = pneg %p330
        $region46: #{generator_forward.1} parent=11 // pred_check_branch
          %507 = sbr.rel (%p505) target = $region48
        $region47: #{generator_forward.1} parent=11 // pred_region
          _
        $region48: #{generator_forward.1} parent=11 // pred_fallthru
          _
        // Predicated region
        $region49: #{generator_forward.1} parent=11 // pred_check
          %p508 = pneg %p351
        $region50: #{generator_forward.1} parent=11 // pred_check_branch
          %510 = sbr.rel (%p508) target = $region52
        $region51: #{generator_forward.1} parent=11 // pred_region
          _
        $region52: #{generator_forward.1} parent=11 // pred_fallthru
          _
        // Predicated region
        $region53: #{generator_forward.1} parent=11 // pred_check
          %p511 = pneg %p372
        $region54: #{generator_forward.1} parent=11 // pred_check_branch
          %513 = sbr.rel (%p511) target = $region56
        $region55: #{generator_forward.1} parent=11 // pred_region
          _
        $region56: #{generator_forward.1} parent=11 // pred_fallthru
          _
        // Predicated region
        $region57: #{generator_forward.1} parent=11 // pred_check
          %p514 = pneg %p393
        $region58: #{generator_forward.1} parent=11 // pred_check_branch
          %516 = sbr.rel (%p514) target = $region60
        $region59: #{generator_forward.1} parent=11 // pred_region
          _
        $region60: #{generator_forward.1} parent=11 // pred_fallthru
          _
        // Predicated region
        $region61: #{generator_forward.1} parent=11 // pred_check
          %p517 = pneg %p414
        $region62: #{generator_forward.1} parent=11 // pred_check_branch
          %519 = sbr.rel (%p517) target = $region64
        $region63: #{generator_forward.1} parent=11 // pred_region
          _
        $region64: #{generator_forward.1} parent=11 // pred_fallthru
          _
      $region12: #{generator_forward.1} parent=5 // pred_fallthru
        _
      %p520 = scmp.lt.s32.totalorder %s25, 6
      // Predicated region
      $region65: #{generator_forward.1} parent=5 // pred_check
        %p521 = pneg %p520
      $region66: #{generator_forward.1} parent=5 // pred_check_branch
        %523 = sbr.rel (%p521) target = $region68
      $region67: #{generator_forward.1} parent=5 // pred_region
        // Predicated region
        $region69: #{generator_forward.1} parent=67 // pred_check
          %p524 = pneg %p57
        $region70: #{generator_forward.1} parent=67 // pred_check_branch
          %526 = sbr.rel (%p524) target = $region72
        $region71: #{generator_forward.1} parent=67 // pred_region
          %s527 = smul.u32 4, %s32
          %p528 = scmp.lt.s32.totalorder %s527, 7
          %s529 = scalar_select %p528, %s527, 7
          %s530 = smul.addr %s529, 8
          %s531 = scalar_lea.vmem %s0, %s530
          %s532 = smul.u32 4, %s32
        $region72: #{generator_forward.1} parent=67 // pred_fallthru
          _
        // Predicated region
        $region73: #{generator_forward.1} parent=67 // pred_check
          %p533 = pneg %p83
        $region74: #{generator_forward.1} parent=67 // pred_check_branch
          %535 = sbr.rel (%p533) target = $region76
        $region75: #{generator_forward.1} parent=67 // pred_region
          %s536 = smul.u32 4, %s32
          %p537 = scmp.lt.s32.totalorder %s536, 7
          %s538 = scalar_select %p537, %s536, 7
          %s539 = smul.addr %s538, 8
          %s540 = scalar_lea.vmem %s1, %s539
          %s541 = smul.u32 4, %s32
        $region76: #{generator_forward.1} parent=67 // pred_fallthru
          _
        // Predicated region
        $region77: #{generator_forward.1} parent=67 // pred_check
          %p542 = pneg %p109
        $region78: #{generator_forward.1} parent=67 // pred_check_branch
          %544 = sbr.rel (%p542) target = $region80
        $region79: #{generator_forward.1} parent=67 // pred_region
          %s545 = smul.u32 4, %s32
          %p546 = scmp.lt.s32.totalorder %s545, 7
          %s547 = scalar_select %p546, %s545, 7
          %s548 = smul.addr %s547, 8
          %s549 = scalar_lea.vmem %s2, %s548
          %s550 = smul.u32 4, %s32
        $region80: #{generator_forward.1} parent=67 // pred_fallthru
          _
        // Predicated region
        $region81: #{generator_forward.1} parent=67 // pred_check
          %p551 = pneg %p135
        $region82: #{generator_forward.1} parent=67 // pred_check_branch
          %553 = sbr.rel (%p551) target = $region84
        $region83: #{generator_forward.1} parent=67 // pred_region
          %s554 = sand.u32 %s125, 1
          %s555 = sand.u32 %s125, 1
          %s556 = smul.addr %s555, 96
          %s557 = scalar_lea.vmem [#allocation10], %s556
          %s558 = smul.u32 4, %s32
          %s559 = smul.addr %s558, 8
          %s560 = scalar_lea.vmem %s3, %s559
          // Predicated region
          $region85: #{generator_forward.1} parent=83 // pred_check
            _
          $region86: #{generator_forward.1} parent=83 // pred_check_branch
            %562 = sbr.rel (0) target = $region88
          $region87: #{generator_forward.1} parent=83 // pred_region
            // Predicated region
            $region89: #{generator_forward.1} parent=87 // pred_check
              _
            $region90: #{generator_forward.1} parent=87 // pred_check_branch
              %564 = sbr.rel (0) target = $region92
            $region91: #{generator_forward.1} parent=87 // pred_region
              // Predicated region
              $region104: #{generator_forward.1} parent=91 // pred_check
                _
              $region105: #{generator_forward.1} parent=91 // pred_check_branch
                %601 = sbr.rel (0) target = $region107
              $region106: #{generator_forward.1} parent=91 // pred_region
                loop: start=0, step=1, limit=1
                $region108: #{generator_forward.1} parent=106 // loop_pre_header
                  _
                $region109: #{generator_forward.1} parent=106 // loop_header
                  %s603 = sphi 0, %s607
                  %p604 = scmp.ge.s32.totalorder %s603, 1
                  %s608 = sphi %s560, %s560
                  %s609 = sphi %s557, %s557
                $region110: #{generator_forward.1} parent=106 // loop_header_branch
                  %606 = sbr.rel (%p604) target = $region114
                $region111: #{generator_forward.1} parent=106 // loop_body
                  %v610 = vld [vmem:[%s608] sm:$0xff]
                  %611 = vst [vmem:[%s609] sm:$0xff] %v610
                  %v612 = vld [vmem:[%s608 + $0x8] sm:$0xff]
                  %613 = vst [vmem:[%s609 + $0x8] sm:$0xff] %v612
                  %v614 = vld [vmem:[%s608 + $0x10] sm:$0xff]
                  %615 = vst [vmem:[%s609 + $0x10] sm:$0xff] %v614
                  %v616 = vld [vmem:[%s608 + $0x18] sm:$0xff]
                  %617 = vst [vmem:[%s609 + $0x18] sm:$0xff] %v616
                  %v618 = vld [vmem:[%s608 + $0x40] sm:$0xff]
                  %619 = vst [vmem:[%s609 + $0x20] sm:$0xff] %v618
                  %v620 = vld [vmem:[%s608 + $0x48] sm:$0xff]
                  %621 = vst [vmem:[%s609 + $0x28] sm:$0xff] %v620
                  %v622 = vld [vmem:[%s608 + $0x50] sm:$0xff]
                  %623 = vst [vmem:[%s609 + $0x30] sm:$0xff] %v622
                  %v624 = vld [vmem:[%s608 + $0x58] sm:$0xff]
                  %625 = vst [vmem:[%s609 + $0x38] sm:$0xff] %v624
                  %v626 = vld [vmem:[%s608 + $0x80] sm:$0xff]
                  %627 = vst [vmem:[%s609 + $0x40] sm:$0xff] %v626
                  %v628 = vld [vmem:[%s608 + $0x88] sm:$0xff]
                  %629 = vst [vmem:[%s609 + $0x48] sm:$0xff] %v628
                  %v630 = vld [vmem:[%s608 + $0x90] sm:$0xff]
                  %631 = vst [vmem:[%s609 + $0x50] sm:$0xff] %v630
                  %v632 = vld [vmem:[%s608 + $0x98] sm:$0xff]
                  %633 = vst [vmem:[%s609 + $0x58] sm:$0xff] %v632
                $region112: #{generator_forward.1} parent=106 // loop_footer
                  %s607 = sadd.s32 1, %s603
                $region113: #{generator_forward.1} parent=106 // loop_footer_branch
                  %602 = sbr.rel target = $region109
                $region114: #{generator_forward.1} parent=106 // loop_exit
                  _
              $region107: #{generator_forward.1} parent=91 // pred_fallthru
                _
              // Predicated region
              $region115: #{generator_forward.1} parent=91 // pred_check
                _
              $region116: #{generator_forward.1} parent=91 // pred_check_branch
                %635 = sbr.rel target = $region118
              $region117: #{generator_forward.1} parent=91 // pred_region
                _
              $region118: #{generator_forward.1} parent=91 // pred_fallthru
                _
            $region92: #{generator_forward.1} parent=87 // pred_fallthru
              _
            // Predicated region
            $region93: #{generator_forward.1} parent=87 // pred_check
              _
            $region94: #{generator_forward.1} parent=87 // pred_check_branch
              %566 = sbr.rel target = $region96
            $region95: #{generator_forward.1} parent=87 // pred_region
              loop: start=0, step=1, limit=1
              $region97: #{generator_forward.1} parent=95 // loop_pre_header
                _
              $region98: #{generator_forward.1} parent=95 // loop_header
                %s569 = sphi 0, %s573
                %p570 = scmp.ge.s32.totalorder %s569, 1
                %s574 = sphi %s560, %s560
                %s575 = sphi %s557, %s557
              $region99: #{generator_forward.1} parent=95 // loop_header_branch
                %572 = sbr.rel (%p570) target = $region103
              $region100: #{generator_forward.1} parent=95 // loop_body
                %v576 = vld [vmem:[%s574] sm:$0xff]
                %577 = vst [vmem:[%s575] sm:$0xff] %v576
                %v578 = vld [vmem:[%s574 + $0x8] sm:$0xff]
                %579 = vst [vmem:[%s575 + $0x8] sm:$0xff] %v578
                %v580 = vld [vmem:[%s574 + $0x10] sm:$0xff]
                %581 = vst [vmem:[%s575 + $0x10] sm:$0xff] %v580
                %v582 = vld [vmem:[%s574 + $0x18] sm:$0xff]
                %583 = vst [vmem:[%s575 + $0x18] sm:$0xff] %v582
                %v584 = vld [vmem:[%s574 + $0x40] sm:$0xff]
                %585 = vst [vmem:[%s575 + $0x20] sm:$0xff] %v584
                %v586 = vld [vmem:[%s574 + $0x48] sm:$0xff]
                %587 = vst [vmem:[%s575 + $0x28] sm:$0xff] %v586
                %v588 = vld [vmem:[%s574 + $0x50] sm:$0xff]
                %589 = vst [vmem:[%s575 + $0x30] sm:$0xff] %v588
                %v590 = vld [vmem:[%s574 + $0x58] sm:$0xff]
                %591 = vst [vmem:[%s575 + $0x38] sm:$0xff] %v590
                %v592 = vld [vmem:[%s574 + $0x80] sm:$0xff]
                %593 = vst [vmem:[%s575 + $0x40] sm:$0xff] %v592
                %v594 = vld [vmem:[%s574 + $0x88] sm:$0xff]
                %595 = vst [vmem:[%s575 + $0x48] sm:$0xff] %v594
                %v596 = vld [vmem:[%s574 + $0x90] sm:$0xff]
                %597 = vst [vmem:[%s575 + $0x50] sm:$0xff] %v596
                %v598 = vld [vmem:[%s574 + $0x98] sm:$0xff]
                %599 = vst [vmem:[%s575 + $0x58] sm:$0xff] %v598
              $region101: #{generator_forward.1} parent=95 // loop_footer
                %s573 = sadd.s32 1, %s569
              $region102: #{generator_forward.1} parent=95 // loop_footer_branch
                %568 = sbr.rel target = $region98
              $region103: #{generator_forward.1} parent=95 // loop_exit
                _
            $region96: #{generator_forward.1} parent=87 // pred_fallthru
              _
          $region88: #{generator_forward.1} parent=83 // pred_fallthru
            _
          %636 = vnop
        $region84: #{generator_forward.1} parent=67 // pred_fallthru
          _
      $region68: #{generator_forward.1} parent=5 // pred_fallthru
        _
      %p637 = scmp.le.s32.totalorder 1, %s25
      %p638 = scmp.lt.s32.totalorder %s25, 7
      %p639 = pnand %p637, %p638
      %p640 = pneg %p639
      // Predicated region
      $region119: #{generator_forward.1} parent=5 // pred_check
        _
      $region120: #{generator_forward.1} parent=5 // pred_check_branch
        %642 = sbr.rel (%p639) target = $region122
      $region121: #{generator_forward.1} parent=5 // pred_region
        %s643 = ssub.s32 %s25, 1
        %s644 = sand.u32 %s128, 1
        %s645 = sand.u32 %s128, 1
        %s646 = smul.addr %s645, 96
        %s647 = scalar_lea.vmem [#allocation10], %s646
        // Predicated region
        $region123: #{generator_forward.1} parent=121 // pred_check
          %p648 = pneg %p141
        $region124: #{generator_forward.1} parent=121 // pred_check_branch
          %650 = sbr.rel (%p648) target = $region126
        $region125: #{generator_forward.1} parent=121 // pred_region
          _
        $region126: #{generator_forward.1} parent=121 // pred_fallthru
          _
        %s651 = smul.u32 4, %s34
        %p652 = scmp.lt.s32.totalorder %s651, 7
        %s653 = scalar_select %p652, %s651, 7
        %s654 = smul.addr %s653, 8
        %s655 = scalar_lea.vmem %s0, %s654
        %p656 = pneg %p63
        %p657 = pneg %p60
        %s658 = smul.u32 4, %s34
        %p659 = scmp.lt.s32.totalorder %s658, 7
        %s660 = scalar_select %p659, %s658, 7
        %s661 = smul.addr %s660, 8
        %s662 = scalar_lea.vmem %s1, %s661
        %p663 = pneg %p89
        %p664 = pneg %p86
        %s665 = smul.u32 4, %s34
        %p666 = scmp.lt.s32.totalorder %s665, 7
        %s667 = scalar_select %p666, %s665, 7
        %s668 = smul.addr %s667, 8
        %s669 = scalar_lea.vmem %s2, %s668
        %p670 = pneg %p115
        %p671 = pneg %p112
        %s672 = sand.u32 %s128, 1
        %s673 = sand.u32 %s128, 1
        %s674 = smul.addr %s673, 96
        %s675 = scalar_lea.vmem [#allocation10], %s674
        %p676 = pneg %p141
        %p677 = pneg %p138
        %p678 = pneg %p162
        %p679 = pneg %p159
        %p680 = pneg %p183
        %p681 = pneg %p180
        %p682 = pneg %p204
        %p683 = pneg %p201
        %p684 = pneg %p225
        %p685 = pneg %p222
        %p686 = pneg %p246
        %p687 = pneg %p243
        %p688 = pneg %p267
        %p689 = pneg %p264
        %p690 = pneg %p288
        %p691 = pneg %p285
        %p692 = pneg %p309
        %p693 = pneg %p306
        %p694 = pneg %p330
        %p695 = pneg %p327
        %p696 = pneg %p351
        %p697 = pneg %p348
        %p698 = pneg %p372
        %p699 = pneg %p369
        %p700 = pneg %p393
        %p701 = pneg %p390
        %p702 = pneg %p414
        %p703 = pneg %p411
        %p704 = pneg %p440
        %p705 = pneg %p437
        %s706 = smul.u32 4, %s34
        %p707 = scmp.lt.s32.totalorder %s706, 7
        %s708 = scalar_select %p707, %s706, 7
        %s709 = smul.addr %s708, 8
        %s710 = scalar_lea.vmem %s17, %s709
        %p711 = pneg %p466
        %p712 = pneg %p463
        %s713 = smul.u32 4, %s34
        %p714 = scmp.lt.s32.totalorder %s713, 7
        %s715 = scalar_select %p714, %s713, 7
        %s716 = smul.addr %s715, 8
        %s717 = scalar_lea.vmem %s18, %s716
        %s718 = smul.u32 4, %s34
        %p719 = scmp.lt.s32.totalorder %s718, 7
        %s720 = scalar_select %p719, %s718, 7
        %s721 = smul.addr %s720, 8
        %s722 = scalar_lea.vmem %s0, %s721
        %s723 = smul.u32 4, %s34
        %s724 = smul.u32 4, %s34
        %p725 = scmp.lt.s32.totalorder %s724, 7
        %s726 = scalar_select %p725, %s724, 7
        %s727 = smul.addr %s726, 8
        %s728 = scalar_lea.vmem %s1, %s727
        %s729 = smul.u32 4, %s34
        %s730 = smul.u32 4, %s34
        %p731 = scmp.lt.s32.totalorder %s730, 7
        %s732 = scalar_select %p731, %s730, 7
        %s733 = smul.addr %s732, 8
        %s734 = scalar_lea.vmem %s2, %s733
        %s735 = smul.u32 4, %s34
        %s736 = smul.u32 4, %s34
        %s737 = smul.u32 4, %s34
        %p738 = scmp.lt.s32.totalorder %s737, 7
        %s739 = scalar_select %p738, %s737, 7
        %s740 = smul.addr %s739, 8
        %s741 = scalar_lea.vmem %s17, %s740
        %s742 = smul.u32 4, %s34
        %s743 = smul.u32 4, %s34
        %p744 = scmp.lt.s32.totalorder %s743, 7
        %s745 = scalar_select %p744, %s743, 7
        %s746 = smul.addr %s745, 8
        %s747 = scalar_lea.vmem %s18, %s746
        %s748 = smul.u32 4, %s34
        %p750 = scmp.eq.s32.totalorder %s35, 0
        // Predicated region
        $region127: #{generator_forward.1} parent=121 // pred_check
          %p751 = pneg %p750
        $region128: #{generator_forward.1} parent=121 // pred_check_branch
          %753 = sbr.rel (%p751) target = $region130
        $region129: #{generator_forward.1} parent=121 // pred_region
          %vm754 = vcmask 130048
          %755 = vst.msk [vmem:[#allocation2] sm:$0xff] %vm754, 0.0
          %756 = vst.msk [vmem:[#allocation2 + $0x8] sm:$0xff] %vm754, 0.0
          %757 = vst.msk [vmem:[#allocation2 + $0x10] sm:$0xff] %vm754, 0.0
          %758 = vst.msk [vmem:[#allocation2 + $0x18] sm:$0xff] %vm754, 0.0
          %759 = vst.msk [vmem:[#allocation3] sm:$0xff] %vm754, 0.0
          %760 = vst.msk [vmem:[#allocation3 + $0x8] sm:$0xff] %vm754, 0.0
          %761 = vst.msk [vmem:[#allocation3 + $0x10] sm:$0xff] %vm754, 0.0
          %762 = vst.msk [vmem:[#allocation3 + $0x18] sm:$0xff] %vm754, 0.0
          %763 = vst.msk [vmem:[#allocation4] sm:$0xff] %vm754, 0.0
          %764 = vst.msk [vmem:[#allocation4 + $0x8] sm:$0xff] %vm754, 0.0
          %765 = vst.msk [vmem:[#allocation4 + $0x10] sm:$0xff] %vm754, 0.0
          %766 = vst.msk [vmem:[#allocation4 + $0x18] sm:$0xff] %vm754, 0.0
          %767 = vst.msk [vmem:[#allocation5] sm:$0xff] %vm754, 0.0
          %768 = vst.msk [vmem:[#allocation5 + $0x8] sm:$0xff] %vm754, 0.0
          %769 = vst.msk [vmem:[#allocation5 + $0x10] sm:$0xff] %vm754, 0.0
          %770 = vst.msk [vmem:[#allocation5 + $0x18] sm:$0xff] %vm754, 0.0
          %771 = vst.msk [vmem:[#allocation6] sm:$0xff] %vm754, 0.0
          %772 = vst.msk [vmem:[#allocation6 + $0x8] sm:$0xff] %vm754, 0.0
          %773 = vst.msk [vmem:[#allocation6 + $0x10] sm:$0xff] %vm754, 0.0
          %774 = vst.msk [vmem:[#allocation6 + $0x18] sm:$0xff] %vm754, 0.0
          %vm775 = vcmask 31744
          %776 = vst.msk [vmem:[#allocation7] sm:$0xff] %vm775, 0.0
          %777 = vst.msk [vmem:[#allocation7 + $0x8] sm:$0xff] %vm775, 0.0
          %778 = vst.msk [vmem:[#allocation7 + $0x10] sm:$0xff] %vm775, 0.0
          %779 = vst.msk [vmem:[#allocation7 + $0x18] sm:$0xff] %vm775, 0.0
          %vm780 = vcmask 261120
          %781 = vst.msk [vmem:[#allocation8] sm:$0xff] %vm780, 0.0
          %782 = vst.msk [vmem:[#allocation8 + $0x8] sm:$0xff] %vm780, 0.0
          %783 = vst.msk [vmem:[#allocation8 + $0x10] sm:$0xff] %vm780, 0.0
          %784 = vst.msk [vmem:[#allocation8 + $0x18] sm:$0xff] %vm780, 0.0
          %785 = vst.msk [vmem:[#allocation8 + $0x20] sm:$0xff] %vm780, 0.0
          %786 = vst.msk [vmem:[#allocation8 + $0x28] sm:$0xff] %vm780, 0.0
          %787 = vst.msk [vmem:[#allocation8 + $0x30] sm:$0xff] %vm780, 0.0
          %788 = vst.msk [vmem:[#allocation8 + $0x38] sm:$0xff] %vm780, 0.0
          %789 = vst.msk [vmem:[#allocation8 + $0x40] sm:$0xff] %vm780, 0.0
          %790 = vst.msk [vmem:[#allocation8 + $0x48] sm:$0xff] %vm780, 0.0
          %791 = vst [vmem:[#allocation9] sm:$0xff] 0.0
          %792 = vst [vmem:[#allocation9 + $0x8] sm:$0xff] 0.0
          %793 = vst [vmem:[#allocation9 + $0x10] sm:$0xff] 0.0
          %794 = vst [vmem:[#allocation9 + $0x18] sm:$0xff] 0.0
          %795 = vst [vmem:[#allocation9 + $0x20] sm:$0xff] 0.0
          %796 = vst [vmem:[#allocation9 + $0x28] sm:$0xff] 0.0
          %797 = vst.msk [vmem:[#allocation9 + $0x30] sm:$0xff] %vm780, 0.0
          %798 = vst [vmem:[#allocation9 + $0x38] sm:$0xff] 0.0
          %799 = vst [vmem:[#allocation9 + $0x40] sm:$0xff] 0.0
          %800 = vst [vmem:[#allocation9 + $0x48] sm:$0xff] 0.0
          %801 = vst [vmem:[#allocation9 + $0x50] sm:$0xff] 0.0
          %802 = vst [vmem:[#allocation9 + $0x58] sm:$0xff] 0.0
          %803 = vst [vmem:[#allocation9 + $0x60] sm:$0xff] 0.0
          %804 = vst.msk [vmem:[#allocation9 + $0x68] sm:$0xff] %vm780, 0.0
          %805 = vst [vmem:[#allocation9 + $0x70] sm:$0xff] 0.0
          %806 = vst [vmem:[#allocation9 + $0x78] sm:$0xff] 0.0
          %807 = vst [vmem:[#allocation9 + $0x80] sm:$0xff] 0.0
          %808 = vst [vmem:[#allocation9 + $0x88] sm:$0xff] 0.0
          %809 = vst [vmem:[#allocation9 + $0x90] sm:$0xff] 0.0
          %810 = vst [vmem:[#allocation9 + $0x98] sm:$0xff] 0.0
          %811 = vst.msk [vmem:[#allocation9 + $0xa0] sm:$0xff] %vm780, 0.0
          %812 = vst [vmem:[#allocation9 + $0xa8] sm:$0xff] 0.0
          %813 = vst [vmem:[#allocation9 + $0xb0] sm:$0xff] 0.0
          %814 = vst [vmem:[#allocation9 + $0xb8] sm:$0xff] 0.0
          %815 = vst [vmem:[#allocation9 + $0xc0] sm:$0xff] 0.0
          %816 = vst [vmem:[#allocation9 + $0xc8] sm:$0xff] 0.0
          %817 = vst [vmem:[#allocation9 + $0xd0] sm:$0xff] 0.0
          %818 = vst.msk [vmem:[#allocation9 + $0xd8] sm:$0xff] %vm780, 0.0
        $region130: #{generator_forward.1} parent=121 // pred_fallthru
          _
        %v819 = vlaneseq
        %v820 = vshrl.u32 %v819, 7
        %v821 = vadd.s32 %v820, 8
        %v822 = vadd.s32 %v820, 16
        %v823 = vadd.s32 %v820, 24
        %v824 = vcvt.s32.f32 %v820
        %v825 = vcvt.s32.f32 %v821
        %v826 = vcvt.s32.f32 %v822
        %v827 = vcvt.s32.f32 %v823
        %v828 = vrcp.pop 8.0
        %v829 = vmul.f32 %v824, %v828
        %v830 = vmul.f32 %v825, %v828
        %v831 = vmul.f32 %v826, %v828
        %v832 = vmul.f32 %v827, %v828
        %v833 = vfloor.f32 %v829
        %v834 = vfloor.f32 %v830
        %v835 = vfloor.f32 %v831
        %v836 = vfloor.f32 %v832
        %v837 = vmul.f32 %v833, 8.0
        %v838 = vmul.f32 %v834, 8.0
        %v839 = vmul.f32 %v835, 8.0
        %v840 = vmul.f32 %v836, 8.0
        %v841 = vsub.f32 %v824, %v837
        %v842 = vsub.f32 %v825, %v838
        %v843 = vsub.f32 %v826, %v839
        %v844 = vsub.f32 %v827, %v840
        %vm845 = vcmp.lt.f32.partialorder %v841, 3.5
        %vm846 = vcmp.lt.f32.partialorder %v842, 3.5
        %vm847 = vcmp.lt.f32.partialorder %v843, 3.5
        %vm848 = vcmp.lt.f32.partialorder %v844, 3.5
        %v849 = vsel %vm845, 1, 0
        %v850 = vsel %vm846, 1, 0
        %v851 = vsel %vm847, 1, 0
        %v852 = vsel %vm848, 1, 0
        %v853 = vcvt.s32.f32 %v849
        %v854 = vcvt.s32.f32 %v850
        %v855 = vcvt.s32.f32 %v851
        %v856 = vcvt.s32.f32 %v852
        %v857 = vld [vmem:[#allocation4] sm:$0xff]
        %v858 = vld [vmem:[#allocation4 + $0x8] sm:$0xff]
        %v859 = vld [vmem:[#allocation4 + $0x10] sm:$0xff]
        %v860 = vld [vmem:[#allocation4 + $0x18] sm:$0xff]
        %v861 = vld [vmem:[#allocation2] sm:$0xff]
        %v862 = vld [vmem:[#allocation2 + $0x8] sm:$0xff]
        %v863 = vld [vmem:[#allocation2 + $0x10] sm:$0xff]
        %v864 = vld [vmem:[#allocation2 + $0x18] sm:$0xff]
        %v865 = vmul.f32 %v857, %v853
        %v866 = vmul.f32 %v858, %v854
        %v867 = vmul.f32 %v859, %v855
        %v868 = vmul.f32 %v860, %v856
        %vm869 = vcmask 130048
        %870 = vst.msk [vmem:[#allocation8 + $0x18] sm:$0xff] %vm869, %v865
        %871 = vst.msk [vmem:[#allocation8 + $0x20] sm:$0xff] %vm869, %v866
        %872 = vst.msk [vmem:[#allocation8 + $0x28] sm:$0xff] %vm869, %v867
        %873 = vst.msk [vmem:[#allocation8 + $0x30] sm:$0xff] %vm869, %v868
        %v874 = vld [vmem:[#allocation8 + $0x6] sm:$0xff]
        %v875 = vld [vmem:[#allocation8 + $0xe] sm:$0xff]
        %v876 = vld [vmem:[#allocation8 + $0x16] sm:$0xff]
        %v877 = vld [vmem:[#allocation8 + $0x1e] sm:$0xff]
        %878 = vst.msk [vmem:[#allocation9] sm:$0xff] %vm869, %v874
        %879 = vst.msk [vmem:[#allocation9 + $0x38] sm:$0xff] %vm869, %v875
        %880 = vst.msk [vmem:[#allocation9 + $0x70] sm:$0xff] %vm869, %v876
        %881 = vst.msk [vmem:[#allocation9 + $0xa8] sm:$0xff] %vm869, %v877
        %v882 = vld [vmem:[#allocation8 + $0x7] sm:$0xff]
        %v883 = vld [vmem:[#allocation8 + $0xf] sm:$0xff]
        %v884 = vld [vmem:[#allocation8 + $0x17] sm:$0xff]
        %v885 = vld [vmem:[#allocation8 + $0x1f] sm:$0xff]
        %890 = vrot.lane.b32.xlu0 %v882, 16
        %v891 = vpop.permute.xlu0 %890
        %892 = vrot.lane.b32.xlu0 %v883, 16
        %v893 = vpop.permute.xlu0 %892
        %894 = vrot.lane.b32.xlu0 %v884, 16
        %v895 = vpop.permute.xlu0 %894
        %896 = vrot.lane.b32.xlu0 %v885, 16
        %v897 = vpop.permute.xlu0 %896
        %vm902 = vcmask 261248
        %903 = vst.msk [vmem:[#allocation9] sm:$0xff] %vm902, %v891
        %904 = vst.msk [vmem:[#allocation9 + $0x38] sm:$0xff] %vm902, %v893
        %905 = vst.msk [vmem:[#allocation9 + $0x70] sm:$0xff] %vm902, %v895
        %906 = vst.msk [vmem:[#allocation9 + $0xa8] sm:$0xff] %vm902, %v897
        %v907 = vld [vmem:[#allocation8 + $0x8] sm:$0xff]
        %v908 = vld [vmem:[#allocation8 + $0x10] sm:$0xff]
        %v909 = vld [vmem:[#allocation8 + $0x18] sm:$0xff]
        %v910 = vld [vmem:[#allocation8 + $0x20] sm:$0xff]
        %915 = vrot.lane.b32.xlu0 %v907, 32
        %v916 = vpop.permute.xlu0 %915
        %917 = vrot.lane.b32.xlu0 %v908, 32
        %v918 = vpop.permute.xlu0 %917
        %919 = vrot.lane.b32.xlu0 %v909, 32
        %v920 = vpop.permute.xlu0 %919
        %921 = vrot.lane.b32.xlu0 %v910, 32
        %v922 = vpop.permute.xlu0 %921
        %vm927 = vcmask 392448
        %928 = vst.msk [vmem:[#allocation9] sm:$0xff] %vm927, %v916
        %929 = vst.msk [vmem:[#allocation9 + $0x38] sm:$0xff] %vm927, %v918
        %930 = vst.msk [vmem:[#allocation9 + $0x70] sm:$0xff] %vm927, %v920
        %931 = vst.msk [vmem:[#allocation9 + $0xa8] sm:$0xff] %vm927, %v922
        %v932 = vld [vmem:[#allocation8 + $0x9] sm:$0xff]
        %v933 = vld [vmem:[#allocation8 + $0x11] sm:$0xff]
        %v934 = vld [vmem:[#allocation8 + $0x19] sm:$0xff]
        %v935 = vld [vmem:[#allocation8 + $0x21] sm:$0xff]
        %940 = vrot.lane.b32.xlu0 %v932, 48
        %v941 = vpop.permute.xlu0 %940
        %942 = vrot.lane.b32.xlu0 %v933, 48
        %v943 = vpop.permute.xlu0 %942
        %944 = vrot.lane.b32.xlu0 %v934, 48
        %v945 = vpop.permute.xlu0 %944
        %946 = vrot.lane.b32.xlu0 %v935, 48
        %v947 = vpop.permute.xlu0 %946
        %vm952 = vcmask 523648
        %953 = vst.msk [vmem:[#allocation9] sm:$0xff] %vm952, %v941
        %954 = vst.msk [vmem:[#allocation9 + $0x38] sm:$0xff] %vm952, %v943
        %955 = vst.msk [vmem:[#allocation9 + $0x70] sm:$0xff] %vm952, %v945
        %956 = vst.msk [vmem:[#allocation9 + $0xa8] sm:$0xff] %vm952, %v947
        %v957 = vld [vmem:[#allocation8 + $0xa] sm:$0xff]
        %v958 = vld [vmem:[#allocation8 + $0x12] sm:$0xff]
        %v959 = vld [vmem:[#allocation8 + $0x1a] sm:$0xff]
        %v960 = vld [vmem:[#allocation8 + $0x22] sm:$0xff]
        %965 = vrot.lane.b32.xlu0 %v957, 64
        %v966 = vpop.permute.xlu0 %965
        %967 = vrot.lane.b32.xlu0 %v958, 64
        %v968 = vpop.permute.xlu0 %967
        %969 = vrot.lane.b32.xlu0 %v959, 64
        %v970 = vpop.permute.xlu0 %969
        %971 = vrot.lane.b32.xlu0 %v960, 64
        %v972 = vpop.permute.xlu0 %971
        %vm977 = vcmask 654848
        %978 = vst.msk [vmem:[#allocation9] sm:$0xff] %vm977, %v966
        %979 = vst.msk [vmem:[#allocation9 + $0x38] sm:$0xff] %vm977, %v968
        %980 = vst.msk [vmem:[#allocation9 + $0x70] sm:$0xff] %vm977, %v970
        %981 = vst.msk [vmem:[#allocation9 + $0xa8] sm:$0xff] %vm977, %v972
        %v982 = vld [vmem:[#allocation8 + $0xe] sm:$0xff]
        %v983 = vld [vmem:[#allocation8 + $0x16] sm:$0xff]
        %v984 = vld [vmem:[#allocation8 + $0x1e] sm:$0xff]
        %v985 = vld [vmem:[#allocation8 + $0x26] sm:$0xff]
        %990 = vrot.lane.b32.xlu0 %v982, 80
        %v991 = vpop.permute.xlu0 %990
        %992 = vrot.lane.b32.xlu0 %v983, 80
        %v993 = vpop.permute.xlu0 %992
        %994 = vrot.lane.b32.xlu0 %v984, 80
        %v995 = vpop.permute.xlu0 %994
        %996 = vrot.lane.b32.xlu0 %v985, 80
        %v997 = vpop.permute.xlu0 %996
        %vm1002 = vcmask 786048
        %1003 = vst.msk [vmem:[#allocation9] sm:$0xff] %vm1002, %v991
        %1004 = vst.msk [vmem:[#allocation9 + $0x38] sm:$0xff] %vm1002, %v993
        %1005 = vst.msk [vmem:[#allocation9 + $0x70] sm:$0xff] %vm1002, %v995
        %1006 = vst.msk [vmem:[#allocation9 + $0xa8] sm:$0xff] %vm1002, %v997
        %v1007 = vld [vmem:[#allocation8 + $0xf] sm:$0xff]
        %v1008 = vld [vmem:[#allocation8 + $0x17] sm:$0xff]
        %v1009 = vld [vmem:[#allocation8 + $0x1f] sm:$0xff]
        %v1010 = vld [vmem:[#allocation8 + $0x27] sm:$0xff]
        %1015 = vrot.lane.b32.xlu0 %v1007, 96
        %v1016 = vpop.permute.xlu0 %1015
        %1017 = vrot.lane.b32.xlu0 %v1008, 96
        %v1018 = vpop.permute.xlu0 %1017
        %1019 = vrot.lane.b32.xlu0 %v1009, 96
        %v1020 = vpop.permute.xlu0 %1019
        %1021 = vrot.lane.b32.xlu0 %v1010, 96
        %v1022 = vpop.permute.xlu0 %1021
        %vm1027 = vcmask 917248
        %1028 = vst.msk [vmem:[#allocation9] sm:$0xff] %vm1027, %v1016
        %1029 = vst.msk [vmem:[#allocation9 + $0x38] sm:$0xff] %vm1027, %v1018
        %1030 = vst.msk [vmem:[#allocation9 + $0x70] sm:$0xff] %vm1027, %v1020
        %1031 = vst.msk [vmem:[#allocation9 + $0xa8] sm:$0xff] %vm1027, %v1022
        %v1032 = vld [vmem:[#allocation8 + $0x10] sm:$0xff]
        %v1033 = vld [vmem:[#allocation8 + $0x18] sm:$0xff]
        %v1034 = vld [vmem:[#allocation8 + $0x20] sm:$0xff]
        %v1035 = vld [vmem:[#allocation8 + $0x28] sm:$0xff]
        %1040 = vrot.lane.b32.xlu0 %v1032, 112
        %v1041 = vpop.permute.xlu0 %1040
        %1042 = vrot.lane.b32.xlu0 %v1033, 112
        %v1043 = vpop.permute.xlu0 %1042
        %1044 = vrot.lane.b32.xlu0 %v1034, 112
        %v1045 = vpop.permute.xlu0 %1044
        %1046 = vrot.lane.b32.xlu0 %v1035, 112
        %v1047 = vpop.permute.xlu0 %1046
        %vm1052 = vcmask 1048448
        %1053 = vst.msk [vmem:[#allocation9] sm:$0xff] %vm1052, %v1041
        %1054 = vst.msk [vmem:[#allocation9 + $0x38] sm:$0xff] %vm1052, %v1043
        %1055 = vst.msk [vmem:[#allocation9 + $0x70] sm:$0xff] %vm1052, %v1045
        %1056 = vst.msk [vmem:[#allocation9 + $0xa8] sm:$0xff] %vm1052, %v1047
        %v1057 = vld [vmem:[#allocation8 + $0x11] sm:$0xff]
        %v1058 = vld [vmem:[#allocation8 + $0x19] sm:$0xff]
        %v1059 = vld [vmem:[#allocation8 + $0x21] sm:$0xff]
        %v1060 = vld [vmem:[#allocation8 + $0x29] sm:$0xff]
        %1061 = vst.msk [vmem:[#allocation9 + $0x8] sm:$0xff] %vm869, %v1057
        %1062 = vst.msk [vmem:[#allocation9 + $0x40] sm:$0xff] %vm869, %v1058
        %1063 = vst.msk [vmem:[#allocation9 + $0x78] sm:$0xff] %vm869, %v1059
        %1064 = vst.msk [vmem:[#allocation9 + $0xb0] sm:$0xff] %vm869, %v1060
        %v1065 = vld [vmem:[#allocation8 + $0x12] sm:$0xff]
        %v1066 = vld [vmem:[#allocation8 + $0x1a] sm:$0xff]
        %v1067 = vld [vmem:[#allocation8 + $0x22] sm:$0xff]
        %v1068 = vld [vmem:[#allocation8 + $0x2a] sm:$0xff]
        %1073 = vrot.lane.b32.xlu0 %v1065, 16
        %v1074 = vpop.permute.xlu0 %1073
        %1075 = vrot.lane.b32.xlu0 %v1066, 16
        %v1076 = vpop.permute.xlu0 %1075
        %1077 = vrot.lane.b32.xlu0 %v1067, 16
        %v1078 = vpop.permute.xlu0 %1077
        %1079 = vrot.lane.b32.xlu0 %v1068, 16
        %v1080 = vpop.permute.xlu0 %1079
        %1085 = vst.msk [vmem:[#allocation9 + $0x8] sm:$0xff] %vm902, %v1074
        %1086 = vst.msk [vmem:[#allocation9 + $0x40] sm:$0xff] %vm902, %v1076
        %1087 = vst.msk [vmem:[#allocation9 + $0x78] sm:$0xff] %vm902, %v1078
        %1088 = vst.msk [vmem:[#allocation9 + $0xb0] sm:$0xff] %vm902, %v1080
        %v1089 = vld [vmem:[#allocation8 + $0x16] sm:$0xff]
        %v1090 = vld [vmem:[#allocation8 + $0x1e] sm:$0xff]
        %v1091 = vld [vmem:[#allocation8 + $0x26] sm:$0xff]
        %v1092 = vld [vmem:[#allocation8 + $0x2e] sm:$0xff]
        %1097 = vrot.lane.b32.xlu0 %v1089, 32
        %v1098 = vpop.permute.xlu0 %1097
        %1099 = vrot.lane.b32.xlu0 %v1090, 32
        %v1100 = vpop.permute.xlu0 %1099
        %1101 = vrot.lane.b32.xlu0 %v1091, 32
        %v1102 = vpop.permute.xlu0 %1101
        %1103 = vrot.lane.b32.xlu0 %v1092, 32
        %v1104 = vpop.permute.xlu0 %1103
        %1109 = vst.msk [vmem:[#allocation9 + $0x8] sm:$0xff] %vm927, %v1098
        %1110 = vst.msk [vmem:[#allocation9 + $0x40] sm:$0xff] %vm927, %v1100
        %1111 = vst.msk [vmem:[#allocation9 + $0x78] sm:$0xff] %vm927, %v1102
        %1112 = vst.msk [vmem:[#allocation9 + $0xb0] sm:$0xff] %vm927, %v1104
        %v1113 = vld [vmem:[#allocation8 + $0x17] sm:$0xff]
        %v1114 = vld [vmem:[#allocation8 + $0x1f] sm:$0xff]
        %v1115 = vld [vmem:[#allocation8 + $0x27] sm:$0xff]
        %v1116 = vld [vmem:[#allocation8 + $0x2f] sm:$0xff]
        %1121 = vrot.lane.b32.xlu0 %v1113, 48
        %v1122 = vpop.permute.xlu0 %1121
        %1123 = vrot.lane.b32.xlu0 %v1114, 48
        %v1124 = vpop.permute.xlu0 %1123
        %1125 = vrot.lane.b32.xlu0 %v1115, 48
        %v1126 = vpop.permute.xlu0 %1125
        %1127 = vrot.lane.b32.xlu0 %v1116, 48
        %v1128 = vpop.permute.xlu0 %1127
        %1133 = vst.msk [vmem:[#allocation9 + $0x8] sm:$0xff] %vm952, %v1122
        %1134 = vst.msk [vmem:[#allocation9 + $0x40] sm:$0xff] %vm952, %v1124
        %1135 = vst.msk [vmem:[#allocation9 + $0x78] sm:$0xff] %vm952, %v1126
        %1136 = vst.msk [vmem:[#allocation9 + $0xb0] sm:$0xff] %vm952, %v1128
        %v1137 = vld [vmem:[#allocation8 + $0x18] sm:$0xff]
        %v1138 = vld [vmem:[#allocation8 + $0x20] sm:$0xff]
        %v1139 = vld [vmem:[#allocation8 + $0x28] sm:$0xff]
        %v1140 = vld [vmem:[#allocation8 + $0x30] sm:$0xff]
        %1145 = vrot.lane.b32.xlu0 %v1137, 64
        %v1146 = vpop.permute.xlu0 %1145
        %1147 = vrot.lane.b32.xlu0 %v1138, 64
        %v1148 = vpop.permute.xlu0 %1147
        %1149 = vrot.lane.b32.xlu0 %v1139, 64
        %v1150 = vpop.permute.xlu0 %1149
        %1151 = vrot.lane.b32.xlu0 %v1140, 64
        %v1152 = vpop.permute.xlu0 %1151
        %1157 = vst.msk [vmem:[#allocation9 + $0x8] sm:$0xff] %vm977, %v1146
        %1158 = vst.msk [vmem:[#allocation9 + $0x40] sm:$0xff] %vm977, %v1148
        %1159 = vst.msk [vmem:[#allocation9 + $0x78] sm:$0xff] %vm977, %v1150
        %1160 = vst.msk [vmem:[#allocation9 + $0xb0] sm:$0xff] %vm977, %v1152
        %v1161 = vld [vmem:[#allocation8 + $0x19] sm:$0xff]
        %v1162 = vld [vmem:[#allocation8 + $0x21] sm:$0xff]
        %v1163 = vld [vmem:[#allocation8 + $0x29] sm:$0xff]
        %v1164 = vld [vmem:[#allocation8 + $0x31] sm:$0xff]
        %1169 = vrot.lane.b32.xlu0 %v1161, 80
        %v1170 = vpop.permute.xlu0 %1169
        %1171 = vrot.lane.b32.xlu0 %v1162, 80
        %v1172 = vpop.permute.xlu0 %1171
        %1173 = vrot.lane.b32.xlu0 %v1163, 80
        %v1174 = vpop.permute.xlu0 %1173
        %1175 = vrot.lane.b32.xlu0 %v1164, 80
        %v1176 = vpop.permute.xlu0 %1175
        %1181 = vst.msk [vmem:[#allocation9 + $0x8] sm:$0xff] %vm1002, %v1170
        %1182 = vst.msk [vmem:[#allocation9 + $0x40] sm:$0xff] %vm1002, %v1172
        %1183 = vst.msk [vmem:[#allocation9 + $0x78] sm:$0xff] %vm1002, %v1174
        %1184 = vst.msk [vmem:[#allocation9 + $0xb0] sm:$0xff] %vm1002, %v1176
        %v1185 = vld [vmem:[#allocation8 + $0x1a] sm:$0xff]
        %v1186 = vld [vmem:[#allocation8 + $0x22] sm:$0xff]
        %v1187 = vld [vmem:[#allocation8 + $0x2a] sm:$0xff]
        %v1188 = vld [vmem:[#allocation8 + $0x32] sm:$0xff]
        %1193 = vrot.lane.b32.xlu0 %v1185, 96
        %v1194 = vpop.permute.xlu0 %1193
        %1195 = vrot.lane.b32.xlu0 %v1186, 96
        %v1196 = vpop.permute.xlu0 %1195
        %1197 = vrot.lane.b32.xlu0 %v1187, 96
        %v1198 = vpop.permute.xlu0 %1197
        %1199 = vrot.lane.b32.xlu0 %v1188, 96
        %v1200 = vpop.permute.xlu0 %1199
        %1205 = vst.msk [vmem:[#allocation9 + $0x8] sm:$0xff] %vm1027, %v1194
        %1206 = vst.msk [vmem:[#allocation9 + $0x40] sm:$0xff] %vm1027, %v1196
        %1207 = vst.msk [vmem:[#allocation9 + $0x78] sm:$0xff] %vm1027, %v1198
        %1208 = vst.msk [vmem:[#allocation9 + $0xb0] sm:$0xff] %vm1027, %v1200
        %v1209 = vld [vmem:[#allocation8 + $0x1e] sm:$0xff]
        %v1210 = vld [vmem:[#allocation8 + $0x26] sm:$0xff]
        %v1211 = vld [vmem:[#allocation8 + $0x2e] sm:$0xff]
        %v1212 = vld [vmem:[#allocation8 + $0x36] sm:$0xff]
        %1217 = vrot.lane.b32.xlu0 %v1209, 112
        %v1218 = vpop.permute.xlu0 %1217
        %1219 = vrot.lane.b32.xlu0 %v1210, 112
        %v1220 = vpop.permute.xlu0 %1219
        %1221 = vrot.lane.b32.xlu0 %v1211, 112
        %v1222 = vpop.permute.xlu0 %1221
        %1223 = vrot.lane.b32.xlu0 %v1212, 112
        %v1224 = vpop.permute.xlu0 %1223
        %1229 = vst.msk [vmem:[#allocation9 + $0x8] sm:$0xff] %vm1052, %v1218
        %1230 = vst.msk [vmem:[#allocation9 + $0x40] sm:$0xff] %vm1052, %v1220
        %1231 = vst.msk [vmem:[#allocation9 + $0x78] sm:$0xff] %vm1052, %v1222
        %1232 = vst.msk [vmem:[#allocation9 + $0xb0] sm:$0xff] %vm1052, %v1224
        %v1233 = vld [vmem:[#allocation8 + $0x1f] sm:$0xff]
        %v1234 = vld [vmem:[#allocation8 + $0x27] sm:$0xff]
        %v1235 = vld [vmem:[#allocation8 + $0x2f] sm:$0xff]
        %v1236 = vld [vmem:[#allocation8 + $0x37] sm:$0xff]
        %1237 = vst.msk [vmem:[#allocation9 + $0x10] sm:$0xff] %vm869, %v1233
        %1238 = vst.msk [vmem:[#allocation9 + $0x48] sm:$0xff] %vm869, %v1234
        %1239 = vst.msk [vmem:[#allocation9 + $0x80] sm:$0xff] %vm869, %v1235
        %1240 = vst.msk [vmem:[#allocation9 + $0xb8] sm:$0xff] %vm869, %v1236
        %v1241 = vld [vmem:[#allocation8 + $0x20] sm:$0xff]
        %v1242 = vld [vmem:[#allocation8 + $0x28] sm:$0xff]
        %v1243 = vld [vmem:[#allocation8 + $0x30] sm:$0xff]
        %v1244 = vld [vmem:[#allocation8 + $0x38] sm:$0xff]
        %1249 = vrot.lane.b32.xlu0 %v1241, 16
        %v1250 = vpop.permute.xlu0 %1249
        %1251 = vrot.lane.b32.xlu0 %v1242, 16
        %v1252 = vpop.permute.xlu0 %1251
        %1253 = vrot.lane.b32.xlu0 %v1243, 16
        %v1254 = vpop.permute.xlu0 %1253
        %1255 = vrot.lane.b32.xlu0 %v1244, 16
        %v1256 = vpop.permute.xlu0 %1255
        %1261 = vst.msk [vmem:[#allocation9 + $0x10] sm:$0xff] %vm902, %v1250
        %1262 = vst.msk [vmem:[#allocation9 + $0x48] sm:$0xff] %vm902, %v1252
        %1263 = vst.msk [vmem:[#allocation9 + $0x80] sm:$0xff] %vm902, %v1254
        %1264 = vst.msk [vmem:[#allocation9 + $0xb8] sm:$0xff] %vm902, %v1256
        %v1265 = vld [vmem:[#allocation8 + $0x21] sm:$0xff]
        %v1266 = vld [vmem:[#allocation8 + $0x29] sm:$0xff]
        %v1267 = vld [vmem:[#allocation8 + $0x31] sm:$0xff]
        %v1268 = vld [vmem:[#allocation8 + $0x39] sm:$0xff]
        %1273 = vrot.lane.b32.xlu0 %v1265, 32
        %v1274 = vpop.permute.xlu0 %1273
        %1275 = vrot.lane.b32.xlu0 %v1266, 32
        %v1276 = vpop.permute.xlu0 %1275
        %1277 = vrot.lane.b32.xlu0 %v1267, 32
        %v1278 = vpop.permute.xlu0 %1277
        %1279 = vrot.lane.b32.xlu0 %v1268, 32
        %v1280 = vpop.permute.xlu0 %1279
        %1285 = vst.msk [vmem:[#allocation9 + $0x10] sm:$0xff] %vm927, %v1274
        %1286 = vst.msk [vmem:[#allocation9 + $0x48] sm:$0xff] %vm927, %v1276
        %1287 = vst.msk [vmem:[#allocation9 + $0x80] sm:$0xff] %vm927, %v1278
        %1288 = vst.msk [vmem:[#allocation9 + $0xb8] sm:$0xff] %vm927, %v1280
        %v1289 = vld [vmem:[#allocation8 + $0x22] sm:$0xff]
        %v1290 = vld [vmem:[#allocation8 + $0x2a] sm:$0xff]
        %v1291 = vld [vmem:[#allocation8 + $0x32] sm:$0xff]
        %v1292 = vld [vmem:[#allocation8 + $0x3a] sm:$0xff]
        %1297 = vrot.lane.b32.xlu0 %v1289, 48
        %v1298 = vpop.permute.xlu0 %1297
        %1299 = vrot.lane.b32.xlu0 %v1290, 48
        %v1300 = vpop.permute.xlu0 %1299
        %1301 = vrot.lane.b32.xlu0 %v1291, 48
        %v1302 = vpop.permute.xlu0 %1301
        %1303 = vrot.lane.b32.xlu0 %v1292, 48
        %v1304 = vpop.permute.xlu0 %1303
        %1309 = vst.msk [vmem:[#allocation9 + $0x10] sm:$0xff] %vm952, %v1298
        %1310 = vst.msk [vmem:[#allocation9 + $0x48] sm:$0xff] %vm952, %v1300
        %1311 = vst.msk [vmem:[#allocation9 + $0x80] sm:$0xff] %vm952, %v1302
        %1312 = vst.msk [vmem:[#allocation9 + $0xb8] sm:$0xff] %vm952, %v1304
        %v1313 = vld [vmem:[#allocation8 + $0x26] sm:$0xff]
        %v1314 = vld [vmem:[#allocation8 + $0x2e] sm:$0xff]
        %v1315 = vld [vmem:[#allocation8 + $0x36] sm:$0xff]
        %v1316 = vld [vmem:[#allocation8 + $0x3e] sm:$0xff]
        %1321 = vrot.lane.b32.xlu0 %v1313, 64
        %v1322 = vpop.permute.xlu0 %1321
        %1323 = vrot.lane.b32.xlu0 %v1314, 64
        %v1324 = vpop.permute.xlu0 %1323
        %1325 = vrot.lane.b32.xlu0 %v1315, 64
        %v1326 = vpop.permute.xlu0 %1325
        %1327 = vrot.lane.b32.xlu0 %v1316, 64
        %v1328 = vpop.permute.xlu0 %1327
        %1333 = vst.msk [vmem:[#allocation9 + $0x10] sm:$0xff] %vm977, %v1322
        %1334 = vst.msk [vmem:[#allocation9 + $0x48] sm:$0xff] %vm977, %v1324
        %1335 = vst.msk [vmem:[#allocation9 + $0x80] sm:$0xff] %vm977, %v1326
        %1336 = vst.msk [vmem:[#allocation9 + $0xb8] sm:$0xff] %vm977, %v1328
        %v1337 = vld [vmem:[#allocation8 + $0x27] sm:$0xff]
        %v1338 = vld [vmem:[#allocation8 + $0x2f] sm:$0xff]
        %v1339 = vld [vmem:[#allocation8 + $0x37] sm:$0xff]
        %v1340 = vld [vmem:[#allocation8 + $0x3f] sm:$0xff]
        %1345 = vrot.lane.b32.xlu0 %v1337, 80
        %v1346 = vpop.permute.xlu0 %1345
        %1347 = vrot.lane.b32.xlu0 %v1338, 80
        %v1348 = vpop.permute.xlu0 %1347
        %1349 = vrot.lane.b32.xlu0 %v1339, 80
        %v1350 = vpop.permute.xlu0 %1349
        %1351 = vrot.lane.b32.xlu0 %v1340, 80
        %v1352 = vpop.permute.xlu0 %1351
        %1357 = vst.msk [vmem:[#allocation9 + $0x10] sm:$0xff] %vm1002, %v1346
        %1358 = vst.msk [vmem:[#allocation9 + $0x48] sm:$0xff] %vm1002, %v1348
        %1359 = vst.msk [vmem:[#allocation9 + $0x80] sm:$0xff] %vm1002, %v1350
        %1360 = vst.msk [vmem:[#allocation9 + $0xb8] sm:$0xff] %vm1002, %v1352
        %v1361 = vld [vmem:[#allocation8 + $0x28] sm:$0xff]
        %v1362 = vld [vmem:[#allocation8 + $0x30] sm:$0xff]
        %v1363 = vld [vmem:[#allocation8 + $0x38] sm:$0xff]
        %v1364 = vld [vmem:[#allocation8 + $0x40] sm:$0xff]
        %1369 = vrot.lane.b32.xlu0 %v1361, 96
        %v1370 = vpop.permute.xlu0 %1369
        %1371 = vrot.lane.b32.xlu0 %v1362, 96
        %v1372 = vpop.permute.xlu0 %1371
        %1373 = vrot.lane.b32.xlu0 %v1363, 96
        %v1374 = vpop.permute.xlu0 %1373
        %1375 = vrot.lane.b32.xlu0 %v1364, 96
        %v1376 = vpop.permute.xlu0 %1375
        %1381 = vst.msk [vmem:[#allocation9 + $0x10] sm:$0xff] %vm1027, %v1370
        %1382 = vst.msk [vmem:[#allocation9 + $0x48] sm:$0xff] %vm1027, %v1372
        %1383 = vst.msk [vmem:[#allocation9 + $0x80] sm:$0xff] %vm1027, %v1374
        %1384 = vst.msk [vmem:[#allocation9 + $0xb8] sm:$0xff] %vm1027, %v1376
        %v1385 = vld [vmem:[#allocation8 + $0x29] sm:$0xff]
        %v1386 = vld [vmem:[#allocation8 + $0x31] sm:$0xff]
        %v1387 = vld [vmem:[#allocation8 + $0x39] sm:$0xff]
        %v1388 = vld [vmem:[#allocation8 + $0x41] sm:$0xff]
        %1393 = vrot.lane.b32.xlu0 %v1385, 112
        %v1394 = vpop.permute.xlu0 %1393
        %1395 = vrot.lane.b32.xlu0 %v1386, 112
        %v1396 = vpop.permute.xlu0 %1395
        %1397 = vrot.lane.b32.xlu0 %v1387, 112
        %v1398 = vpop.permute.xlu0 %1397
        %1399 = vrot.lane.b32.xlu0 %v1388, 112
        %v1400 = vpop.permute.xlu0 %1399
        %1405 = vst.msk [vmem:[#allocation9 + $0x10] sm:$0xff] %vm1052, %v1394
        %1406 = vst.msk [vmem:[#allocation9 + $0x48] sm:$0xff] %vm1052, %v1396
        %1407 = vst.msk [vmem:[#allocation9 + $0x80] sm:$0xff] %vm1052, %v1398
        %1408 = vst.msk [vmem:[#allocation9 + $0xb8] sm:$0xff] %vm1052, %v1400
        %v1409 = vld [vmem:[#allocation8 + $0x2a] sm:$0xff]
        %v1410 = vld [vmem:[#allocation8 + $0x32] sm:$0xff]
        %v1411 = vld [vmem:[#allocation8 + $0x3a] sm:$0xff]
        %v1412 = vld [vmem:[#allocation8 + $0x42] sm:$0xff]
        %1413 = vst.msk [vmem:[#allocation9 + $0x18] sm:$0xff] %vm869, %v1409
        %1414 = vst.msk [vmem:[#allocation9 + $0x50] sm:$0xff] %vm869, %v1410
        %1415 = vst.msk [vmem:[#allocation9 + $0x88] sm:$0xff] %vm869, %v1411
        %1416 = vst.msk [vmem:[#allocation9 + $0xc0] sm:$0xff] %vm869, %v1412
        %v1417 = vld [vmem:[#allocation9] sm:$0xff]
        %v1418 = vld [vmem:[#allocation9 + $0x8] sm:$0xff]
        %v1419 = vld [vmem:[#allocation9 + $0x10] sm:$0xff]
        %v1420 = vld [vmem:[#allocation9 + $0x18] sm:$0xff]
        %v1421 = vld [vmem:[#allocation9 + $0x38] sm:$0xff]
        %v1422 = vld [vmem:[#allocation9 + $0x40] sm:$0xff]
        %v1423 = vld [vmem:[#allocation9 + $0x48] sm:$0xff]
        %v1424 = vld [vmem:[#allocation9 + $0x50] sm:$0xff]
        %v1425 = vld [vmem:[#allocation9 + $0x70] sm:$0xff]
        %v1426 = vld [vmem:[#allocation9 + $0x78] sm:$0xff]
        %v1427 = vld [vmem:[#allocation9 + $0x80] sm:$0xff]
        %v1428 = vld [vmem:[#allocation9 + $0x88] sm:$0xff]
        %v1429 = vld [vmem:[#allocation9 + $0xa8] sm:$0xff]
        %v1430 = vld [vmem:[#allocation9 + $0xb0] sm:$0xff]
        %v1431 = vld [vmem:[#allocation9 + $0xb8] sm:$0xff]
        %v1432 = vld [vmem:[#allocation9 + $0xc0] sm:$0xff]
        %v1433 = vpack.c.bf16 %v1421, %v1417
        %v1434 = vpack.c.bf16 %v1422, %v1418
        %v1435 = vpack.c.bf16 %v1423, %v1419
        %v1436 = vpack.c.bf16 %v1424, %v1420
        %v1437 = vpack.c.bf16 %v1429, %v1425
        %v1438 = vpack.c.bf16 %v1430, %v1426
        %v1439 = vpack.c.bf16 %v1431, %v1427
        %v1440 = vpack.c.bf16 %v1432, %v1428
        %v1441 = vld [vmem:[%s5] sm:$0xf]
        %v1442 = vld [vmem:[%s5 + $0x4] sm:$0xf]
        %v1443 = vld [vmem:[%s5 + $0x8] sm:$0xf]
        %v1444 = vld [vmem:[%s5 + $0xc] sm:$0xf]
        %v1445 = vld [vmem:[%s5 + $0x10] sm:$0xf]
        %v1446 = vld [vmem:[%s5 + $0x14] sm:$0xf]
        %v1447 = vld [vmem:[%s5 + $0x18] sm:$0xf]
        %v1448 = vld [vmem:[%s5 + $0x1c] sm:$0xf]
        %v1449 = vld [vmem:[%s5 + $0x20] sm:$0xf]
        %v1450 = vld [vmem:[%s5 + $0x24] sm:$0xf]
        %v1451 = vld [vmem:[%s5 + $0x28] sm:$0xf]
        %v1452 = vld [vmem:[%s5 + $0x2c] sm:$0xf]
        %v1453 = vld [vmem:[%s5 + $0x30] sm:$0xf]
        %v1454 = vld [vmem:[%s5 + $0x34] sm:$0xf]
        %v1455 = vld [vmem:[%s5 + $0x38] sm:$0xf]
        %v1456 = vld [vmem:[%s5 + $0x3c] sm:$0xf]
        %v1457 = vld [vmem:[%s5 + $0x40] sm:$0xf]
        %v1458 = vld [vmem:[%s5 + $0x44] sm:$0xf]
        %v1459 = vld [vmem:[%s5 + $0x48] sm:$0xf]
        %v1460 = vld [vmem:[%s5 + $0x4c] sm:$0xf]
        %v1461 = vld [vmem:[%s5 + $0x50] sm:$0xf]
        %v1462 = vld [vmem:[%s5 + $0x54] sm:$0xf]
        %v1463 = vld [vmem:[%s5 + $0x58] sm:$0xf]
        %v1464 = vld [vmem:[%s5 + $0x5c] sm:$0xf]
        %v1465 = vld [vmem:[%s5 + $0x60] sm:$0xf]
        %v1466 = vld [vmem:[%s5 + $0x64] sm:$0xf]
        %v1467 = vld [vmem:[%s5 + $0x68] sm:$0xf]
        %v1468 = vld [vmem:[%s5 + $0x6c] sm:$0xf]
        %v1469 = vld [vmem:[%s5 + $0x70] sm:$0xf]
        %v1470 = vld [vmem:[%s5 + $0x74] sm:$0xf]
        %v1471 = vld [vmem:[%s5 + $0x78] sm:$0xf]
        %v1472 = vld [vmem:[%s5 + $0x7c] sm:$0xf]
        %v1473 = vld [vmem:[%s5 + $0x80] sm:$0xf]
        %v1474 = vld [vmem:[%s5 + $0x84] sm:$0xf]
        %v1475 = vld [vmem:[%s5 + $0x88] sm:$0xf]
        %v1476 = vld [vmem:[%s5 + $0x8c] sm:$0xf]
        %v1477 = vld [vmem:[%s5 + $0x90] sm:$0xf]
        %v1478 = vld [vmem:[%s5 + $0x94] sm:$0xf]
        %v1479 = vld [vmem:[%s5 + $0x98] sm:$0xf]
        %v1480 = vld [vmem:[%s5 + $0x9c] sm:$0xf]
        %v1481 = vld [vmem:[%s5 + $0xa0] sm:$0xf]
        %v1482 = vld [vmem:[%s5 + $0xa4] sm:$0xf]
        %v1483 = vld [vmem:[%s5 + $0xa8] sm:$0xf]
        %v1484 = vld [vmem:[%s5 + $0xac] sm:$0xf]
        %v1485 = vld [vmem:[%s5 + $0xb0] sm:$0xf]
        %v1486 = vld [vmem:[%s5 + $0xb4] sm:$0xf]
        %v1487 = vld [vmem:[%s5 + $0xb8] sm:$0xf]
        %v1488 = vld [vmem:[%s5 + $0xbc] sm:$0xf]
        %v1489 = vld [vmem:[%s5 + $0xc0] sm:$0xf]
        %v1490 = vld [vmem:[%s5 + $0xc4] sm:$0xf]
        %v1491 = vld [vmem:[%s6] sm:$0x1]
        %v1493 = vlaneseq
        %v1494 = vshrl.u32 %v1493, 7
        %v1495 = vsub.s32 0, %v1494
        %v1496 = vrot.slane %v1491, %v1495
        %v1548 = vunpack.c.l.b16 %v1441
        %v1549 = vunpack.c.l.b16 %v1442
        %v1550 = vunpack.c.l.b16 %v1443
        %v1551 = vunpack.c.l.b16 %v1444
        %v1552 = vunpack.c.l.b16 %v1445
        %v1553 = vunpack.c.l.b16 %v1446
        %v1554 = vunpack.c.l.b16 %v1447
        %v1555 = vunpack.c.l.b16 %v1448
        %v1556 = vunpack.c.l.b16 %v1449
        %v1557 = vunpack.c.l.b16 %v1450
        %v1558 = vunpack.c.l.b16 %v1451
        %v1559 = vunpack.c.l.b16 %v1452
        %v1560 = vunpack.c.l.b16 %v1453
        %v1561 = vunpack.c.l.b16 %v1454
        %v1562 = vunpack.c.l.b16 %v1455
        %v1563 = vunpack.c.l.b16 %v1456
        %v1564 = vunpack.c.l.b16 %v1457
        %v1565 = vunpack.c.l.b16 %v1458
        %v1566 = vunpack.c.l.b16 %v1459
        %v1567 = vunpack.c.l.b16 %v1460
        %v1568 = vunpack.c.l.b16 %v1461
        %v1569 = vunpack.c.l.b16 %v1462
        %v1570 = vunpack.c.l.b16 %v1463
        %v1571 = vunpack.c.l.b16 %v1464
        %v1572 = vunpack.c.l.b16 %v1465
        %v1573 = vunpack.c.l.b16 %v1466
        %v1574 = vunpack.c.l.b16 %v1467
        %v1575 = vunpack.c.l.b16 %v1468
        %v1576 = vunpack.c.l.b16 %v1469
        %v1577 = vunpack.c.l.b16 %v1470
        %v1578 = vunpack.c.l.b16 %v1471
        %v1579 = vunpack.c.l.b16 %v1472
        %v1580 = vunpack.c.l.b16 %v1473
        %v1581 = vunpack.c.l.b16 %v1474
        %v1582 = vunpack.c.l.b16 %v1475
        %v1583 = vunpack.c.l.b16 %v1476
        %v1584 = vunpack.c.l.b16 %v1477
        %v1585 = vunpack.c.l.b16 %v1478
        %v1586 = vunpack.c.l.b16 %v1479
        %v1587 = vunpack.c.l.b16 %v1480
        %v1588 = vunpack.c.l.b16 %v1481
        %v1589 = vunpack.c.l.b16 %v1482
        %v1590 = vunpack.c.l.b16 %v1483
        %v1591 = vunpack.c.l.b16 %v1484
        %v1592 = vunpack.c.l.b16 %v1485
        %v1593 = vunpack.c.l.b16 %v1486
        %v1594 = vunpack.c.l.b16 %v1487
        %v1595 = vunpack.c.l.b16 %v1488
        %v1596 = vunpack.c.l.b16 %v1489
        %v1597 = vunpack.c.l.b16 %v1490
        %v1598 = vpack.c.b16 %v1549, %v1548
        %v1599 = vpack.c.b16 %v1551, %v1550
        %v1600 = vpack.c.b16 %v1553, %v1552
        %v1601 = vpack.c.b16 %v1555, %v1554
        %v1602 = vpack.c.b16 %v1557, %v1556
        %v1603 = vpack.c.b16 %v1559, %v1558
        %v1604 = vpack.c.b16 %v1561, %v1560
        %v1605 = vpack.c.b16 %v1563, %v1562
        %v1606 = vpack.c.b16 %v1565, %v1564
        %v1607 = vpack.c.b16 %v1567, %v1566
        %v1608 = vpack.c.b16 %v1569, %v1568
        %v1609 = vpack.c.b16 %v1571, %v1570
        %v1610 = vpack.c.b16 %v1573, %v1572
        %v1611 = vpack.c.b16 %v1575, %v1574
        %v1612 = vpack.c.b16 %v1577, %v1576
        %v1613 = vpack.c.b16 %v1579, %v1578
        %v1614 = vpack.c.b16 %v1581, %v1580
        %v1615 = vpack.c.b16 %v1583, %v1582
        %v1616 = vpack.c.b16 %v1585, %v1584
        %v1617 = vpack.c.b16 %v1587, %v1586
        %v1618 = vpack.c.b16 %v1589, %v1588
        %v1619 = vpack.c.b16 %v1591, %v1590
        %v1620 = vpack.c.b16 %v1593, %v1592
        %v1621 = vpack.c.b16 %v1595, %v1594
        %v1622 = vpack.c.b16 %v1597, %v1596
        %v1649 = vsel %vm869, %v1436, 0
        %v1652 = vsel %vm869, %v1440, 0
        %1654 = vmatprep.subr.bf16.mxu0 0
        %1655 = vmatpush1.bf16.msra.mxu0 %v1598
        %1656 = vmatprep.subr.bf16.mxu0 0
        %1657 = vmatpush1.bf16.msra.mxu0 %v1599
        %1658 = vmatprep.subr.bf16.mxu0 0
        %1659 = vmatpush1.bf16.msra.mxu0 %v1600
        %1660 = vmatprep.subr.bf16.mxu0 0
        %1661 = vmatpush1.bf16.msra.mxu0 %v1601
        %1662 = vmatprep.subr.bf16.mxu0 0
        %1663 = vmatpush1.bf16.msra.mxu0 %v1602
        %1664 = vmatprep.subr.bf16.mxu0 0
        %1665 = vmatpush1.bf16.msra.mxu0 %v1603
        %1666 = vmatprep.subr.bf16.mxu0 0
        %1667 = vmatpush1.bf16.msra.mxu0 %v1604
        %1668 = vmatprep.subr.bf16.mxu0 0
        %1669 = vmatpush1.bf16.msra.mxu0 %v1605
        %1670 = vmatprep.subr.bf16.mxu0 0
        %1671 = vmatpush1.bf16.msra.mxu0 %v1606
        %1672 = vmatprep.subr.bf16.mxu0 0
        %1673 = vmatpush1.bf16.msra.mxu0 %v1607
        %1674 = vmatprep.subr.bf16.mxu0 0
        %1675 = vmatpush1.bf16.msra.mxu0 %v1608
        %1676 = vmatprep.subr.bf16.mxu0 0
        %1677 = vmatpush1.bf16.msra.mxu0 %v1609
        %1678 = vmatprep.subr.bf16.mxu0 0
        %1679 = vmatpush1.bf16.msra.mxu0 %v1610
        %1680 = vmatprep.subr.bf16.mxu0 0
        %1681 = vmatpush1.bf16.msra.mxu0 %v1611
        %1682 = vmatprep.subr.bf16.mxu0 0
        %1683 = vmatpush1.bf16.msra.mxu0 %v1612
        %1684 = vmatprep.subr.bf16.mxu0 0
        %1685 = vmatpush1.bf16.msra.mxu0 %v1613
        %1686 = vmatprep.mubr.bf16.mxu0 %v1434
        %1687 = vmatmul.mubr.bf16.gmra.mrb[0].mxu0 %v1433
        %v1688 = vpop.f32.mrb[0].mxu0
        %v1689 = vadd.f32 %v1496, %v1688
        %v1690 = vpop.f32.mrb[0].mxu0
        %v1691 = vpop.f32.mrb[0].mxu0
        %v1692 = vadd.f32 %v1496, %v1691
        %v1693 = vpop.f32.mrb[0].mxu0
        %1694 = vmatprep.mubr.bf16.mxu0 %v1438
        %1695 = vmatmul.mubr.bf16.gmra.mrb[0].mxu0 %v1437
        %v1696 = vpop.f32.mrb[0].mxu0
        %v1697 = vadd.f32 %v1496, %v1696
        %v1698 = vpop.f32.mrb[0].mxu0
        %v1699 = vpop.f32.mrb[0].mxu0
        %v1700 = vadd.f32 %v1496, %v1699
        %v1701 = vpop.f32.mrb[0].mxu0
        %1702 = vdwg.mxu0
        %1703 = vmatprep.subr.bf16.mxu0 0
        %1704 = vmatpush1.bf16.msra.mxu0 %v1614
        %1705 = vmatprep.subr.bf16.mxu0 0
        %1706 = vmatpush1.bf16.msra.mxu0 %v1615
        %1707 = vmatprep.subr.bf16.mxu0 0
        %1708 = vmatpush1.bf16.msra.mxu0 %v1616
        %1709 = vmatprep.subr.bf16.mxu0 0
        %1710 = vmatpush1.bf16.msra.mxu0 %v1617
        %1711 = vmatprep.subr.bf16.mxu0 0
        %1712 = vmatpush1.bf16.msra.mxu0 %v1618
        %1713 = vmatprep.subr.bf16.mxu0 0
        %1714 = vmatpush1.bf16.msra.mxu0 %v1619
        %1715 = vmatprep.subr.bf16.mxu0 0
        %1716 = vmatpush1.bf16.msra.mxu0 %v1620
        %1717 = vmatprep.subr.bf16.mxu0 0
        %1718 = vmatpush1.bf16.msra.mxu0 %v1621
        %1719 = vmatprep.subr.bf16.mxu0 0
        %1720 = vmatpush1.bf16.msra.mxu0 %v1622
        %1721 = vmatprep.subr.bf16.mxu0 0
        %1722 = vmatpush1.bf16.msra.mxu0 0
        %1723 = vmatprep.subr.bf16.mxu0 0
        %1724 = vmatpush1.bf16.msra.mxu0 0
        %1725 = vmatprep.subr.bf16.mxu0 0
        %1726 = vmatpush1.bf16.msra.mxu0 0
        %1727 = vmatprep.subr.bf16.mxu0 0
        %1728 = vmatpush1.bf16.msra.mxu0 0
        %1729 = vmatprep.subr.bf16.mxu0 0
        %1730 = vmatpush1.bf16.msra.mxu0 0
        %1731 = vmatprep.subr.bf16.mxu0 0
        %1732 = vmatpush1.bf16.msra.mxu0 0
        %1733 = vmatprep.subr.bf16.mxu0 0
        %1734 = vmatpush1.bf16.msra.mxu0 0
        %1735 = vmatprep.mubr.bf16.mxu0 %v1649
        %1736 = vmatmul.mubr.bf16.gmra.mrb[0].mxu0 %v1435
        %v1737 = vpop.f32.mrb[0].mxu0
        %v1738 = vadd.f32 %v1689, %v1737
        %v1739 = vpop.f32.mrb[0].mxu0
        %v1740 = vpop.f32.mrb[0].mxu0
        %v1741 = vadd.f32 %v1692, %v1740
        %v1742 = vpop.f32.mrb[0].mxu0
        %1743 = vmatprep.mubr.bf16.mxu0 %v1652
        %1744 = vmatmul.mubr.bf16.gmra.mrb[0].mxu0 %v1439
        %v1745 = vpop.f32.mrb[0].mxu0
        %v1746 = vadd.f32 %v1697, %v1745
        %v1747 = vpop.f32.mrb[0].mxu0
        %v1748 = vpop.f32.mrb[0].mxu0
        %v1749 = vadd.f32 %v1700, %v1748
        %v1750 = vpop.f32.mrb[0].mxu0
        %1751 = vdwg.mxu0
        %v1752 = vmul.f32 %v861, %v853
        %v1753 = vmul.f32 %v862, %v854
        %v1754 = vmul.f32 %v863, %v855
        %v1755 = vmul.f32 %v864, %v856
        %1756 = vst.msk [vmem:[#allocation8 + $0x18] sm:$0xff] %vm869, %v1752
        %1757 = vst.msk [vmem:[#allocation8 + $0x20] sm:$0xff] %vm869, %v1753
        %1758 = vst.msk [vmem:[#allocation8 + $0x28] sm:$0xff] %vm869, %v1754
        %1759 = vst.msk [vmem:[#allocation8 + $0x30] sm:$0xff] %vm869, %v1755
        %v1760 = vld [vmem:[#allocation8 + $0x6] sm:$0xff]
        %v1761 = vld [vmem:[#allocation8 + $0xe] sm:$0xff]
        %v1762 = vld [vmem:[#allocation8 + $0x16] sm:$0xff]
        %v1763 = vld [vmem:[#allocation8 + $0x1e] sm:$0xff]
        %1764 = vst.msk [vmem:[#allocation9] sm:$0xff] %vm869, %v1760
        %1765 = vst.msk [vmem:[#allocation9 + $0x38] sm:$0xff] %vm869, %v1761
        %1766 = vst.msk [vmem:[#allocation9 + $0x70] sm:$0xff] %vm869, %v1762
        %1767 = vst.msk [vmem:[#allocation9 + $0xa8] sm:$0xff] %vm869, %v1763
        %v1768 = vld [vmem:[#allocation8 + $0x7] sm:$0xff]
        %v1769 = vld [vmem:[#allocation8 + $0xf] sm:$0xff]
        %v1770 = vld [vmem:[#allocation8 + $0x17] sm:$0xff]
        %v1771 = vld [vmem:[#allocation8 + $0x1f] sm:$0xff]
        %1776 = vrot.lane.b32.xlu0 %v1768, 16
        %v1777 = vpop.permute.xlu0 %1776
        %1778 = vrot.lane.b32.xlu0 %v1769, 16
        %v1779 = vpop.permute.xlu0 %1778
        %1780 = vrot.lane.b32.xlu0 %v1770, 16
        %v1781 = vpop.permute.xlu0 %1780
        %1782 = vrot.lane.b32.xlu0 %v1771, 16
        %v1783 = vpop.permute.xlu0 %1782
        %1788 = vst.msk [vmem:[#allocation9] sm:$0xff] %vm902, %v1777
        %1789 = vst.msk [vmem:[#allocation9 + $0x38] sm:$0xff] %vm902, %v1779
        %1790 = vst.msk [vmem:[#allocation9 + $0x70] sm:$0xff] %vm902, %v1781
        %1791 = vst.msk [vmem:[#allocation9 + $0xa8] sm:$0xff] %vm902, %v1783
        %v1792 = vld [vmem:[#allocation8 + $0x8] sm:$0xff]
        %v1793 = vld [vmem:[#allocation8 + $0x10] sm:$0xff]
        %v1794 = vld [vmem:[#allocation8 + $0x18] sm:$0xff]
        %v1795 = vld [vmem:[#allocation8 + $0x20] sm:$0xff]
        %1800 = vrot.lane.b32.xlu0 %v1792, 32
        %v1801 = vpop.permute.xlu0 %1800
        %1802 = vrot.lane.b32.xlu0 %v1793, 32
        %v1803 = vpop.permute.xlu0 %1802
        %1804 = vrot.lane.b32.xlu0 %v1794, 32
        %v1805 = vpop.permute.xlu0 %1804
        %1806 = vrot.lane.b32.xlu0 %v1795, 32
        %v1807 = vpop.permute.xlu0 %1806
        %1812 = vst.msk [vmem:[#allocation9] sm:$0xff] %vm927, %v1801
        %1813 = vst.msk [vmem:[#allocation9 + $0x38] sm:$0xff] %vm927, %v1803
        %1814 = vst.msk [vmem:[#allocation9 + $0x70] sm:$0xff] %vm927, %v1805
        %1815 = vst.msk [vmem:[#allocation9 + $0xa8] sm:$0xff] %vm927, %v1807
        %v1816 = vld [vmem:[#allocation8 + $0x9] sm:$0xff]
        %v1817 = vld [vmem:[#allocation8 + $0x11] sm:$0xff]
        %v1818 = vld [vmem:[#allocation8 + $0x19] sm:$0xff]
        %v1819 = vld [vmem:[#allocation8 + $0x21] sm:$0xff]
        %1824 = vrot.lane.b32.xlu0 %v1816, 48
        %v1825 = vpop.permute.xlu0 %1824
        %1826 = vrot.lane.b32.xlu0 %v1817, 48
        %v1827 = vpop.permute.xlu0 %1826
        %1828 = vrot.lane.b32.xlu0 %v1818, 48
        %v1829 = vpop.permute.xlu0 %1828
        %1830 = vrot.lane.b32.xlu0 %v1819, 48
        %v1831 = vpop.permute.xlu0 %1830
        %1836 = vst.msk [vmem:[#allocation9] sm:$0xff] %vm952, %v1825
        %1837 = vst.msk [vmem:[#allocation9 + $0x38] sm:$0xff] %vm952, %v1827
        %1838 = vst.msk [vmem:[#allocation9 + $0x70] sm:$0xff] %vm952, %v1829
        %1839 = vst.msk [vmem:[#allocation9 + $0xa8] sm:$0xff] %vm952, %v1831
        %v1840 = vld [vmem:[#allocation8 + $0xa] sm:$0xff]
        %v1841 = vld [vmem:[#allocation8 + $0x12] sm:$0xff]
        %v1842 = vld [vmem:[#allocation8 + $0x1a] sm:$0xff]
        %v1843 = vld [vmem:[#allocation8 + $0x22] sm:$0xff]
        %1848 = vrot.lane.b32.xlu0 %v1840, 64
        %v1849 = vpop.permute.xlu0 %1848
        %1850 = vrot.lane.b32.xlu0 %v1841, 64
        %v1851 = vpop.permute.xlu0 %1850
        %1852 = vrot.lane.b32.xlu0 %v1842, 64
        %v1853 = vpop.permute.xlu0 %1852
        %1854 = vrot.lane.b32.xlu0 %v1843, 64
        %v1855 = vpop.permute.xlu0 %1854
        %1860 = vst.msk [vmem:[#allocation9] sm:$0xff] %vm977, %v1849
        %1861 = vst.msk [vmem:[#allocation9 + $0x38] sm:$0xff] %vm977, %v1851
        %1862 = vst.msk [vmem:[#allocation9 + $0x70] sm:$0xff] %vm977, %v1853
        %1863 = vst.msk [vmem:[#allocation9 + $0xa8] sm:$0xff] %vm977, %v1855
        %v1864 = vld [vmem:[#allocation8 + $0xe] sm:$0xff]
        %v1865 = vld [vmem:[#allocation8 + $0x16] sm:$0xff]
        %v1866 = vld [vmem:[#allocation8 + $0x1e] sm:$0xff]
        %v1867 = vld [vmem:[#allocation8 + $0x26] sm:$0xff]
        %1872 = vrot.lane.b32.xlu0 %v1864, 80
        %v1873 = vpop.permute.xlu0 %1872
        %1874 = vrot.lane.b32.xlu0 %v1865, 80
        %v1875 = vpop.permute.xlu0 %1874
        %1876 = vrot.lane.b32.xlu0 %v1866, 80
        %v1877 = vpop.permute.xlu0 %1876
        %1878 = vrot.lane.b32.xlu0 %v1867, 80
        %v1879 = vpop.permute.xlu0 %1878
        %1884 = vst.msk [vmem:[#allocation9] sm:$0xff] %vm1002, %v1873
        %1885 = vst.msk [vmem:[#allocation9 + $0x38] sm:$0xff] %vm1002, %v1875
        %1886 = vst.msk [vmem:[#allocation9 + $0x70] sm:$0xff] %vm1002, %v1877
        %1887 = vst.msk [vmem:[#allocation9 + $0xa8] sm:$0xff] %vm1002, %v1879
        %v1888 = vld [vmem:[#allocation8 + $0xf] sm:$0xff]
        %v1889 = vld [vmem:[#allocation8 + $0x17] sm:$0xff]
        %v1890 = vld [vmem:[#allocation8 + $0x1f] sm:$0xff]
        %v1891 = vld [vmem:[#allocation8 + $0x27] sm:$0xff]
        %1896 = vrot.lane.b32.xlu0 %v1888, 96
        %v1897 = vpop.permute.xlu0 %1896
        %1898 = vrot.lane.b32.xlu0 %v1889, 96
        %v1899 = vpop.permute.xlu0 %1898
        %1900 = vrot.lane.b32.xlu0 %v1890, 96
        %v1901 = vpop.permute.xlu0 %1900
        %1902 = vrot.lane.b32.xlu0 %v1891, 96
        %v1903 = vpop.permute.xlu0 %1902
        %1908 = vst.msk [vmem:[#allocation9] sm:$0xff] %vm1027, %v1897
        %1909 = vst.msk [vmem:[#allocation9 + $0x38] sm:$0xff] %vm1027, %v1899
        %1910 = vst.msk [vmem:[#allocation9 + $0x70] sm:$0xff] %vm1027, %v1901
        %1911 = vst.msk [vmem:[#allocation9 + $0xa8] sm:$0xff] %vm1027, %v1903
        %v1912 = vld [vmem:[#allocation8 + $0x10] sm:$0xff]
        %v1913 = vld [vmem:[#allocation8 + $0x18] sm:$0xff]
        %v1914 = vld [vmem:[#allocation8 + $0x20] sm:$0xff]
        %v1915 = vld [vmem:[#allocation8 + $0x28] sm:$0xff]
        %1920 = vrot.lane.b32.xlu0 %v1912, 112
        %v1921 = vpop.permute.xlu0 %1920
        %1922 = vrot.lane.b32.xlu0 %v1913, 112
        %v1923 = vpop.permute.xlu0 %1922
        %1924 = vrot.lane.b32.xlu0 %v1914, 112
        %v1925 = vpop.permute.xlu0 %1924
        %1926 = vrot.lane.b32.xlu0 %v1915, 112
        %v1927 = vpop.permute.xlu0 %1926
        %1932 = vst.msk [vmem:[#allocation9] sm:$0xff] %vm1052, %v1921
        %1933 = vst.msk [vmem:[#allocation9 + $0x38] sm:$0xff] %vm1052, %v1923
        %1934 = vst.msk [vmem:[#allocation9 + $0x70] sm:$0xff] %vm1052, %v1925
        %1935 = vst.msk [vmem:[#allocation9 + $0xa8] sm:$0xff] %vm1052, %v1927
        %v1936 = vld [vmem:[#allocation8 + $0x11] sm:$0xff]
        %v1937 = vld [vmem:[#allocation8 + $0x19] sm:$0xff]
        %v1938 = vld [vmem:[#allocation8 + $0x21] sm:$0xff]
        %v1939 = vld [vmem:[#allocation8 + $0x29] sm:$0xff]
        %1940 = vst.msk [vmem:[#allocation9 + $0x8] sm:$0xff] %vm869, %v1936
        %1941 = vst.msk [vmem:[#allocation9 + $0x40] sm:$0xff] %vm869, %v1937
        %1942 = vst.msk [vmem:[#allocation9 + $0x78] sm:$0xff] %vm869, %v1938
        %1943 = vst.msk [vmem:[#allocation9 + $0xb0] sm:$0xff] %vm869, %v1939
        %v1944 = vld [vmem:[#allocation8 + $0x12] sm:$0xff]
        %v1945 = vld [vmem:[#allocation8 + $0x1a] sm:$0xff]
        %v1946 = vld [vmem:[#allocation8 + $0x22] sm:$0xff]
        %v1947 = vld [vmem:[#allocation8 + $0x2a] sm:$0xff]
        %1952 = vrot.lane.b32.xlu0 %v1944, 16
        %v1953 = vpop.permute.xlu0 %1952
        %1954 = vrot.lane.b32.xlu0 %v1945, 16
        %v1955 = vpop.permute.xlu0 %1954
        %1956 = vrot.lane.b32.xlu0 %v1946, 16
        %v1957 = vpop.permute.xlu0 %1956
        %1958 = vrot.lane.b32.xlu0 %v1947, 16
        %v1959 = vpop.permute.xlu0 %1958
        %1964 = vst.msk [vmem:[#allocation9 + $0x8] sm:$0xff] %vm902, %v1953
        %1965 = vst.msk [vmem:[#allocation9 + $0x40] sm:$0xff] %vm902, %v1955
        %1966 = vst.msk [vmem:[#allocation9 + $0x78] sm:$0xff] %vm902, %v1957
        %1967 = vst.msk [vmem:[#allocation9 + $0xb0] sm:$0xff] %vm902, %v1959
        %v1968 = vld [vmem:[#allocation8 + $0x16] sm:$0xff]
        %v1969 = vld [vmem:[#allocation8 + $0x1e] sm:$0xff]
        %v1970 = vld [vmem:[#allocation8 + $0x26] sm:$0xff]
        %v1971 = vld [vmem:[#allocation8 + $0x2e] sm:$0xff]
        %1976 = vrot.lane.b32.xlu0 %v1968, 32
        %v1977 = vpop.permute.xlu0 %1976
        %1978 = vrot.lane.b32.xlu0 %v1969, 32
        %v1979 = vpop.permute.xlu0 %1978
        %1980 = vrot.lane.b32.xlu0 %v1970, 32
        %v1981 = vpop.permute.xlu0 %1980
        %1982 = vrot.lane.b32.xlu0 %v1971, 32
        %v1983 = vpop.permute.xlu0 %1982
        %1988 = vst.msk [vmem:[#allocation9 + $0x8] sm:$0xff] %vm927, %v1977
        %1989 = vst.msk [vmem:[#allocation9 + $0x40] sm:$0xff] %vm927, %v1979
        %1990 = vst.msk [vmem:[#allocation9 + $0x78] sm:$0xff] %vm927, %v1981
        %1991 = vst.msk [vmem:[#allocation9 + $0xb0] sm:$0xff] %vm927, %v1983
        %v1992 = vld [vmem:[#allocation8 + $0x17] sm:$0xff]
        %v1993 = vld [vmem:[#allocation8 + $0x1f] sm:$0xff]
        %v1994 = vld [vmem:[#allocation8 + $0x27] sm:$0xff]
        %v1995 = vld [vmem:[#allocation8 + $0x2f] sm:$0xff]
        %2000 = vrot.lane.b32.xlu0 %v1992, 48
        %v2001 = vpop.permute.xlu0 %2000
        %2002 = vrot.lane.b32.xlu0 %v1993, 48
        %v2003 = vpop.permute.xlu0 %2002
        %2004 = vrot.lane.b32.xlu0 %v1994, 48
        %v2005 = vpop.permute.xlu0 %2004
        %2006 = vrot.lane.b32.xlu0 %v1995, 48
        %v2007 = vpop.permute.xlu0 %2006
        %2012 = vst.msk [vmem:[#allocation9 + $0x8] sm:$0xff] %vm952, %v2001
        %2013 = vst.msk [vmem:[#allocation9 + $0x40] sm:$0xff] %vm952, %v2003
        %2014 = vst.msk [vmem:[#allocation9 + $0x78] sm:$0xff] %vm952, %v2005
        %2015 = vst.msk [vmem:[#allocation9 + $0xb0] sm:$0xff] %vm952, %v2007
        %v2016 = vld [vmem:[#allocation8 + $0x18] sm:$0xff]
        %v2017 = vld [vmem:[#allocation8 + $0x20] sm:$0xff]
        %v2018 = vld [vmem:[#allocation8 + $0x28] sm:$0xff]
        %v2019 = vld [vmem:[#allocation8 + $0x30] sm:$0xff]
        %2024 = vrot.lane.b32.xlu0 %v2016, 64
        %v2025 = vpop.permute.xlu0 %2024
        %2026 = vrot.lane.b32.xlu0 %v2017, 64
        %v2027 = vpop.permute.xlu0 %2026
        %2028 = vrot.lane.b32.xlu0 %v2018, 64
        %v2029 = vpop.permute.xlu0 %2028
        %2030 = vrot.lane.b32.xlu0 %v2019, 64
        %v2031 = vpop.permute.xlu0 %2030
        %2036 = vst.msk [vmem:[#allocation9 + $0x8] sm:$0xff] %vm977, %v2025
        %2037 = vst.msk [vmem:[#allocation9 + $0x40] sm:$0xff] %vm977, %v2027
        %2038 = vst.msk [vmem:[#allocation9 + $0x78] sm:$0xff] %vm977, %v2029
        %2039 = vst.msk [vmem:[#allocation9 + $0xb0] sm:$0xff] %vm977, %v2031
        %v2040 = vld [vmem:[#allocation8 + $0x19] sm:$0xff]
        %v2041 = vld [vmem:[#allocation8 + $0x21] sm:$0xff]
        %v2042 = vld [vmem:[#allocation8 + $0x29] sm:$0xff]
        %v2043 = vld [vmem:[#allocation8 + $0x31] sm:$0xff]
        %2048 = vrot.lane.b32.xlu0 %v2040, 80
        %v2049 = vpop.permute.xlu0 %2048
        %2050 = vrot.lane.b32.xlu0 %v2041, 80
        %v2051 = vpop.permute.xlu0 %2050
        %2052 = vrot.lane.b32.xlu0 %v2042, 80
        %v2053 = vpop.permute.xlu0 %2052
        %2054 = vrot.lane.b32.xlu0 %v2043, 80
        %v2055 = vpop.permute.xlu0 %2054
        %2060 = vst.msk [vmem:[#allocation9 + $0x8] sm:$0xff] %vm1002, %v2049
        %2061 = vst.msk [vmem:[#allocation9 + $0x40] sm:$0xff] %vm1002, %v2051
        %2062 = vst.msk [vmem:[#allocation9 + $0x78] sm:$0xff] %vm1002, %v2053
        %2063 = vst.msk [vmem:[#allocation9 + $0xb0] sm:$0xff] %vm1002, %v2055
        %v2064 = vld [vmem:[#allocation8 + $0x1a] sm:$0xff]
        %v2065 = vld [vmem:[#allocation8 + $0x22] sm:$0xff]
        %v2066 = vld [vmem:[#allocation8 + $0x2a] sm:$0xff]
        %v2067 = vld [vmem:[#allocation8 + $0x32] sm:$0xff]
        %2072 = vrot.lane.b32.xlu0 %v2064, 96
        %v2073 = vpop.permute.xlu0 %2072
        %2074 = vrot.lane.b32.xlu0 %v2065, 96
        %v2075 = vpop.permute.xlu0 %2074
        %2076 = vrot.lane.b32.xlu0 %v2066, 96
        %v2077 = vpop.permute.xlu0 %2076
        %2078 = vrot.lane.b32.xlu0 %v2067, 96
        %v2079 = vpop.permute.xlu0 %2078
        %2084 = vst.msk [vmem:[#allocation9 + $0x8] sm:$0xff] %vm1027, %v2073
        %2085 = vst.msk [vmem:[#allocation9 + $0x40] sm:$0xff] %vm1027, %v2075
        %2086 = vst.msk [vmem:[#allocation9 + $0x78] sm:$0xff] %vm1027, %v2077
        %2087 = vst.msk [vmem:[#allocation9 + $0xb0] sm:$0xff] %vm1027, %v2079
        %v2088 = vld [vmem:[#allocation8 + $0x1e] sm:$0xff]
        %v2089 = vld [vmem:[#allocation8 + $0x26] sm:$0xff]
        %v2090 = vld [vmem:[#allocation8 + $0x2e] sm:$0xff]
        %v2091 = vld [vmem:[#allocation8 + $0x36] sm:$0xff]
        %2096 = vrot.lane.b32.xlu0 %v2088, 112
        %v2097 = vpop.permute.xlu0 %2096
        %2098 = vrot.lane.b32.xlu0 %v2089, 112
        %v2099 = vpop.permute.xlu0 %2098
        %2100 = vrot.lane.b32.xlu0 %v2090, 112
        %v2101 = vpop.permute.xlu0 %2100
        %2102 = vrot.lane.b32.xlu0 %v2091, 112
        %v2103 = vpop.permute.xlu0 %2102
        %2108 = vst.msk [vmem:[#allocation9 + $0x8] sm:$0xff] %vm1052, %v2097
        %2109 = vst.msk [vmem:[#allocation9 + $0x40] sm:$0xff] %vm1052, %v2099
        %2110 = vst.msk [vmem:[#allocation9 + $0x78] sm:$0xff] %vm1052, %v2101
        %2111 = vst.msk [vmem:[#allocation9 + $0xb0] sm:$0xff] %vm1052, %v2103
        %v2112 = vld [vmem:[#allocation8 + $0x1f] sm:$0xff]
        %v2113 = vld [vmem:[#allocation8 + $0x27] sm:$0xff]
        %v2114 = vld [vmem:[#allocation8 + $0x2f] sm:$0xff]
        %v2115 = vld [vmem:[#allocation8 + $0x37] sm:$0xff]
        %2116 = vst.msk [vmem:[#allocation9 + $0x10] sm:$0xff] %vm869, %v2112
        %2117 = vst.msk [vmem:[#allocation9 + $0x48] sm:$0xff] %vm869, %v2113
        %2118 = vst.msk [vmem:[#allocation9 + $0x80] sm:$0xff] %vm869, %v2114
        %2119 = vst.msk [vmem:[#allocation9 + $0xb8] sm:$0xff] %vm869, %v2115
        %v2120 = vld [vmem:[#allocation8 + $0x20] sm:$0xff]
        %v2121 = vld [vmem:[#allocation8 + $0x28] sm:$0xff]
        %v2122 = vld [vmem:[#allocation8 + $0x30] sm:$0xff]
        %v2123 = vld [vmem:[#allocation8 + $0x38] sm:$0xff]
        %2128 = vrot.lane.b32.xlu0 %v2120, 16
        %v2129 = vpop.permute.xlu0 %2128
        %2130 = vrot.lane.b32.xlu0 %v2121, 16
        %v2131 = vpop.permute.xlu0 %2130
        %2132 = vrot.lane.b32.xlu0 %v2122, 16
        %v2133 = vpop.permute.xlu0 %2132
        %2134 = vrot.lane.b32.xlu0 %v2123, 16
        %v2135 = vpop.permute.xlu0 %2134
        %2140 = vst.msk [vmem:[#allocation9 + $0x10] sm:$0xff] %vm902, %v2129
        %2141 = vst.msk [vmem:[#allocation9 + $0x48] sm:$0xff] %vm902, %v2131
        %2142 = vst.msk [vmem:[#allocation9 + $0x80] sm:$0xff] %vm902, %v2133
        %2143 = vst.msk [vmem:[#allocation9 + $0xb8] sm:$0xff] %vm902, %v2135
        %v2144 = vld [vmem:[#allocation8 + $0x21] sm:$0xff]
        %v2145 = vld [vmem:[#allocation8 + $0x29] sm:$0xff]
        %v2146 = vld [vmem:[#allocation8 + $0x31] sm:$0xff]
        %v2147 = vld [vmem:[#allocation8 + $0x39] sm:$0xff]
        %2152 = vrot.lane.b32.xlu0 %v2144, 32
        %v2153 = vpop.permute.xlu0 %2152
        %2154 = vrot.lane.b32.xlu0 %v2145, 32
        %v2155 = vpop.permute.xlu0 %2154
        %2156 = vrot.lane.b32.xlu0 %v2146, 32
        %v2157 = vpop.permute.xlu0 %2156
        %2158 = vrot.lane.b32.xlu0 %v2147, 32
        %v2159 = vpop.permute.xlu0 %2158
        %2164 = vst.msk [vmem:[#allocation9 + $0x10] sm:$0xff] %vm927, %v2153
        %2165 = vst.msk [vmem:[#allocation9 + $0x48] sm:$0xff] %vm927, %v2155
        %2166 = vst.msk [vmem:[#allocation9 + $0x80] sm:$0xff] %vm927, %v2157
        %2167 = vst.msk [vmem:[#allocation9 + $0xb8] sm:$0xff] %vm927, %v2159
        %v2168 = vld [vmem:[#allocation8 + $0x22] sm:$0xff]
        %v2169 = vld [vmem:[#allocation8 + $0x2a] sm:$0xff]
        %v2170 = vld [vmem:[#allocation8 + $0x32] sm:$0xff]
        %v2171 = vld [vmem:[#allocation8 + $0x3a] sm:$0xff]
        %2176 = vrot.lane.b32.xlu0 %v2168, 48
        %v2177 = vpop.permute.xlu0 %2176
        %2178 = vrot.lane.b32.xlu0 %v2169, 48
        %v2179 = vpop.permute.xlu0 %2178
        %2180 = vrot.lane.b32.xlu0 %v2170, 48
        %v2181 = vpop.permute.xlu0 %2180
        %2182 = vrot.lane.b32.xlu0 %v2171, 48
        %v2183 = vpop.permute.xlu0 %2182
        %2188 = vst.msk [vmem:[#allocation9 + $0x10] sm:$0xff] %vm952, %v2177
        %2189 = vst.msk [vmem:[#allocation9 + $0x48] sm:$0xff] %vm952, %v2179
        %2190 = vst.msk [vmem:[#allocation9 + $0x80] sm:$0xff] %vm952, %v2181
        %2191 = vst.msk [vmem:[#allocation9 + $0xb8] sm:$0xff] %vm952, %v2183
        %v2192 = vld [vmem:[#allocation8 + $0x26] sm:$0xff]
        %v2193 = vld [vmem:[#allocation8 + $0x2e] sm:$0xff]
        %v2194 = vld [vmem:[#allocation8 + $0x36] sm:$0xff]
        %v2195 = vld [vmem:[#allocation8 + $0x3e] sm:$0xff]
        %2200 = vrot.lane.b32.xlu0 %v2192, 64
        %v2201 = vpop.permute.xlu0 %2200
        %2202 = vrot.lane.b32.xlu0 %v2193, 64
        %v2203 = vpop.permute.xlu0 %2202
        %2204 = vrot.lane.b32.xlu0 %v2194, 64
        %v2205 = vpop.permute.xlu0 %2204
        %2206 = vrot.lane.b32.xlu0 %v2195, 64
        %v2207 = vpop.permute.xlu0 %2206
        %2212 = vst.msk [vmem:[#allocation9 + $0x10] sm:$0xff] %vm977, %v2201
        %2213 = vst.msk [vmem:[#allocation9 + $0x48] sm:$0xff] %vm977, %v2203
        %2214 = vst.msk [vmem:[#allocation9 + $0x80] sm:$0xff] %vm977, %v2205
        %2215 = vst.msk [vmem:[#allocation9 + $0xb8] sm:$0xff] %vm977, %v2207
        %v2216 = vld [vmem:[#allocation8 + $0x27] sm:$0xff]
        %v2217 = vld [vmem:[#allocation8 + $0x2f] sm:$0xff]
        %v2218 = vld [vmem:[#allocation8 + $0x37] sm:$0xff]
        %v2219 = vld [vmem:[#allocation8 + $0x3f] sm:$0xff]
        %2224 = vrot.lane.b32.xlu0 %v2216, 80
        %v2225 = vpop.permute.xlu0 %2224
        %2226 = vrot.lane.b32.xlu0 %v2217, 80
        %v2227 = vpop.permute.xlu0 %2226
        %2228 = vrot.lane.b32.xlu0 %v2218, 80
        %v2229 = vpop.permute.xlu0 %2228
        %2230 = vrot.lane.b32.xlu0 %v2219, 80
        %v2231 = vpop.permute.xlu0 %2230
        %2236 = vst.msk [vmem:[#allocation9 + $0x10] sm:$0xff] %vm1002, %v2225
        %2237 = vst.msk [vmem:[#allocation9 + $0x48] sm:$0xff] %vm1002, %v2227
        %2238 = vst.msk [vmem:[#allocation9 + $0x80] sm:$0xff] %vm1002, %v2229
        %2239 = vst.msk [vmem:[#allocation9 + $0xb8] sm:$0xff] %vm1002, %v2231
        %v2240 = vld [vmem:[#allocation8 + $0x28] sm:$0xff]
        %v2241 = vld [vmem:[#allocation8 + $0x30] sm:$0xff]
        %v2242 = vld [vmem:[#allocation8 + $0x38] sm:$0xff]
        %v2243 = vld [vmem:[#allocation8 + $0x40] sm:$0xff]
        %2248 = vrot.lane.b32.xlu0 %v2240, 96
        %v2249 = vpop.permute.xlu0 %2248
        %2250 = vrot.lane.b32.xlu0 %v2241, 96
        %v2251 = vpop.permute.xlu0 %2250
        %2252 = vrot.lane.b32.xlu0 %v2242, 96
        %v2253 = vpop.permute.xlu0 %2252
        %2254 = vrot.lane.b32.xlu0 %v2243, 96
        %v2255 = vpop.permute.xlu0 %2254
        %2260 = vst.msk [vmem:[#allocation9 + $0x10] sm:$0xff] %vm1027, %v2249
        %2261 = vst.msk [vmem:[#allocation9 + $0x48] sm:$0xff] %vm1027, %v2251
        %2262 = vst.msk [vmem:[#allocation9 + $0x80] sm:$0xff] %vm1027, %v2253
        %2263 = vst.msk [vmem:[#allocation9 + $0xb8] sm:$0xff] %vm1027, %v2255
        %v2264 = vld [vmem:[#allocation8 + $0x29] sm:$0xff]
        %v2265 = vld [vmem:[#allocation8 + $0x31] sm:$0xff]
        %v2266 = vld [vmem:[#allocation8 + $0x39] sm:$0xff]
        %v2267 = vld [vmem:[#allocation8 + $0x41] sm:$0xff]
        %2272 = vrot.lane.b32.xlu0 %v2264, 112
        %v2273 = vpop.permute.xlu0 %2272
        %2274 = vrot.lane.b32.xlu0 %v2265, 112
        %v2275 = vpop.permute.xlu0 %2274
        %2276 = vrot.lane.b32.xlu0 %v2266, 112
        %v2277 = vpop.permute.xlu0 %2276
        %2278 = vrot.lane.b32.xlu0 %v2267, 112
        %v2279 = vpop.permute.xlu0 %2278
        %2284 = vst.msk [vmem:[#allocation9 + $0x10] sm:$0xff] %vm1052, %v2273
        %2285 = vst.msk [vmem:[#allocation9 + $0x48] sm:$0xff] %vm1052, %v2275
        %2286 = vst.msk [vmem:[#allocation9 + $0x80] sm:$0xff] %vm1052, %v2277
        %2287 = vst.msk [vmem:[#allocation9 + $0xb8] sm:$0xff] %vm1052, %v2279
        %v2288 = vld [vmem:[#allocation8 + $0x2a] sm:$0xff]
        %v2289 = vld [vmem:[#allocation8 + $0x32] sm:$0xff]
        %v2290 = vld [vmem:[#allocation8 + $0x3a] sm:$0xff]
        %v2291 = vld [vmem:[#allocation8 + $0x42] sm:$0xff]
        %2292 = vst.msk [vmem:[#allocation9 + $0x18] sm:$0xff] %vm869, %v2288
        %2293 = vst.msk [vmem:[#allocation9 + $0x50] sm:$0xff] %vm869, %v2289
        %2294 = vst.msk [vmem:[#allocation9 + $0x88] sm:$0xff] %vm869, %v2290
        %2295 = vst.msk [vmem:[#allocation9 + $0xc0] sm:$0xff] %vm869, %v2291
        %v2296 = vld [vmem:[#allocation9] sm:$0xff]
        %v2297 = vld [vmem:[#allocation9 + $0x8] sm:$0xff]
        %v2298 = vld [vmem:[#allocation9 + $0x10] sm:$0xff]
        %v2299 = vld [vmem:[#allocation9 + $0x18] sm:$0xff]
        %v2300 = vld [vmem:[#allocation9 + $0x38] sm:$0xff]
        %v2301 = vld [vmem:[#allocation9 + $0x40] sm:$0xff]
        %v2302 = vld [vmem:[#allocation9 + $0x48] sm:$0xff]
        %v2303 = vld [vmem:[#allocation9 + $0x50] sm:$0xff]
        %v2304 = vld [vmem:[#allocation9 + $0x70] sm:$0xff]
        %v2305 = vld [vmem:[#allocation9 + $0x78] sm:$0xff]
        %v2306 = vld [vmem:[#allocation9 + $0x80] sm:$0xff]
        %v2307 = vld [vmem:[#allocation9 + $0x88] sm:$0xff]
        %v2308 = vld [vmem:[#allocation9 + $0xa8] sm:$0xff]
        %v2309 = vld [vmem:[#allocation9 + $0xb0] sm:$0xff]
        %v2310 = vld [vmem:[#allocation9 + $0xb8] sm:$0xff]
        %v2311 = vld [vmem:[#allocation9 + $0xc0] sm:$0xff]
        %v2312 = vpack.c.bf16 %v2300, %v2296
        %v2313 = vpack.c.bf16 %v2301, %v2297
        %v2314 = vpack.c.bf16 %v2302, %v2298
        %v2315 = vpack.c.bf16 %v2303, %v2299
        %v2316 = vpack.c.bf16 %v2308, %v2304
        %v2317 = vpack.c.bf16 %v2309, %v2305
        %v2318 = vpack.c.bf16 %v2310, %v2306
        %v2319 = vpack.c.bf16 %v2311, %v2307
        %v2320 = vld [vmem:[%s9] sm:$0xf]
        %v2321 = vld [vmem:[%s9 + $0x4] sm:$0xf]
        %v2322 = vld [vmem:[%s9 + $0x8] sm:$0xf]
        %v2323 = vld [vmem:[%s9 + $0xc] sm:$0xf]
        %v2324 = vld [vmem:[%s9 + $0x10] sm:$0xf]
        %v2325 = vld [vmem:[%s9 + $0x14] sm:$0xf]
        %v2326 = vld [vmem:[%s9 + $0x18] sm:$0xf]
        %v2327 = vld [vmem:[%s9 + $0x1c] sm:$0xf]
        %v2328 = vld [vmem:[%s9 + $0x20] sm:$0xf]
        %v2329 = vld [vmem:[%s9 + $0x24] sm:$0xf]
        %v2330 = vld [vmem:[%s9 + $0x28] sm:$0xf]
        %v2331 = vld [vmem:[%s9 + $0x2c] sm:$0xf]
        %v2332 = vld [vmem:[%s9 + $0x30] sm:$0xf]
        %v2333 = vld [vmem:[%s9 + $0x34] sm:$0xf]
        %v2334 = vld [vmem:[%s9 + $0x38] sm:$0xf]
        %v2335 = vld [vmem:[%s9 + $0x3c] sm:$0xf]
        %v2336 = vld [vmem:[%s9 + $0x40] sm:$0xf]
        %v2337 = vld [vmem:[%s9 + $0x44] sm:$0xf]
        %v2338 = vld [vmem:[%s9 + $0x48] sm:$0xf]
        %v2339 = vld [vmem:[%s9 + $0x4c] sm:$0xf]
        %v2340 = vld [vmem:[%s9 + $0x50] sm:$0xf]
        %v2341 = vld [vmem:[%s9 + $0x54] sm:$0xf]
        %v2342 = vld [vmem:[%s9 + $0x58] sm:$0xf]
        %v2343 = vld [vmem:[%s9 + $0x5c] sm:$0xf]
        %v2344 = vld [vmem:[%s9 + $0x60] sm:$0xf]
        %v2345 = vld [vmem:[%s9 + $0x64] sm:$0xf]
        %v2346 = vld [vmem:[%s9 + $0x68] sm:$0xf]
        %v2347 = vld [vmem:[%s9 + $0x6c] sm:$0xf]
        %v2348 = vld [vmem:[%s9 + $0x70] sm:$0xf]
        %v2349 = vld [vmem:[%s9 + $0x74] sm:$0xf]
        %v2350 = vld [vmem:[%s9 + $0x78] sm:$0xf]
        %v2351 = vld [vmem:[%s9 + $0x7c] sm:$0xf]
        %v2352 = vld [vmem:[%s9 + $0x80] sm:$0xf]
        %v2353 = vld [vmem:[%s9 + $0x84] sm:$0xf]
        %v2354 = vld [vmem:[%s9 + $0x88] sm:$0xf]
        %v2355 = vld [vmem:[%s9 + $0x8c] sm:$0xf]
        %v2356 = vld [vmem:[%s9 + $0x90] sm:$0xf]
        %v2357 = vld [vmem:[%s9 + $0x94] sm:$0xf]
        %v2358 = vld [vmem:[%s9 + $0x98] sm:$0xf]
        %v2359 = vld [vmem:[%s9 + $0x9c] sm:$0xf]
        %v2360 = vld [vmem:[%s9 + $0xa0] sm:$0xf]
        %v2361 = vld [vmem:[%s9 + $0xa4] sm:$0xf]
        %v2362 = vld [vmem:[%s9 + $0xa8] sm:$0xf]
        %v2363 = vld [vmem:[%s9 + $0xac] sm:$0xf]
        %v2364 = vld [vmem:[%s9 + $0xb0] sm:$0xf]
        %v2365 = vld [vmem:[%s9 + $0xb4] sm:$0xf]
        %v2366 = vld [vmem:[%s9 + $0xb8] sm:$0xf]
        %v2367 = vld [vmem:[%s9 + $0xbc] sm:$0xf]
        %v2368 = vld [vmem:[%s9 + $0xc0] sm:$0xf]
        %v2369 = vld [vmem:[%s9 + $0xc4] sm:$0xf]
        %v2370 = vld [vmem:[%s10] sm:$0x1]
        %v2372 = vlaneseq
        %v2373 = vshrl.u32 %v2372, 7
        %v2374 = vsub.s32 0, %v2373
        %v2375 = vrot.slane %v2370, %v2374
        %v2427 = vunpack.c.l.b16 %v2320
        %v2428 = vunpack.c.l.b16 %v2321
        %v2429 = vunpack.c.l.b16 %v2322
        %v2430 = vunpack.c.l.b16 %v2323
        %v2431 = vunpack.c.l.b16 %v2324
        %v2432 = vunpack.c.l.b16 %v2325
        %v2433 = vunpack.c.l.b16 %v2326
        %v2434 = vunpack.c.l.b16 %v2327
        %v2435 = vunpack.c.l.b16 %v2328
        %v2436 = vunpack.c.l.b16 %v2329
        %v2437 = vunpack.c.l.b16 %v2330
        %v2438 = vunpack.c.l.b16 %v2331
        %v2439 = vunpack.c.l.b16 %v2332
        %v2440 = vunpack.c.l.b16 %v2333
        %v2441 = vunpack.c.l.b16 %v2334
        %v2442 = vunpack.c.l.b16 %v2335
        %v2443 = vunpack.c.l.b16 %v2336
        %v2444 = vunpack.c.l.b16 %v2337
        %v2445 = vunpack.c.l.b16 %v2338
        %v2446 = vunpack.c.l.b16 %v2339
        %v2447 = vunpack.c.l.b16 %v2340
        %v2448 = vunpack.c.l.b16 %v2341
        %v2449 = vunpack.c.l.b16 %v2342
        %v2450 = vunpack.c.l.b16 %v2343
        %v2451 = vunpack.c.l.b16 %v2344
        %v2452 = vunpack.c.l.b16 %v2345
        %v2453 = vunpack.c.l.b16 %v2346
        %v2454 = vunpack.c.l.b16 %v2347
        %v2455 = vunpack.c.l.b16 %v2348
        %v2456 = vunpack.c.l.b16 %v2349
        %v2457 = vunpack.c.l.b16 %v2350
        %v2458 = vunpack.c.l.b16 %v2351
        %v2459 = vunpack.c.l.b16 %v2352
        %v2460 = vunpack.c.l.b16 %v2353
        %v2461 = vunpack.c.l.b16 %v2354
        %v2462 = vunpack.c.l.b16 %v2355
        %v2463 = vunpack.c.l.b16 %v2356
        %v2464 = vunpack.c.l.b16 %v2357
        %v2465 = vunpack.c.l.b16 %v2358
        %v2466 = vunpack.c.l.b16 %v2359
        %v2467 = vunpack.c.l.b16 %v2360
        %v2468 = vunpack.c.l.b16 %v2361
        %v2469 = vunpack.c.l.b16 %v2362
        %v2470 = vunpack.c.l.b16 %v2363
        %v2471 = vunpack.c.l.b16 %v2364
        %v2472 = vunpack.c.l.b16 %v2365
        %v2473 = vunpack.c.l.b16 %v2366
        %v2474 = vunpack.c.l.b16 %v2367
        %v2475 = vunpack.c.l.b16 %v2368
        %v2476 = vunpack.c.l.b16 %v2369
        %v2477 = vpack.c.b16 %v2428, %v2427
        %v2478 = vpack.c.b16 %v2430, %v2429
        %v2479 = vpack.c.b16 %v2432, %v2431
        %v2480 = vpack.c.b16 %v2434, %v2433
        %v2481 = vpack.c.b16 %v2436, %v2435
        %v2482 = vpack.c.b16 %v2438, %v2437
        %v2483 = vpack.c.b16 %v2440, %v2439
        %v2484 = vpack.c.b16 %v2442, %v2441
        %v2485 = vpack.c.b16 %v2444, %v2443
        %v2486 = vpack.c.b16 %v2446, %v2445
        %v2487 = vpack.c.b16 %v2448, %v2447
        %v2488 = vpack.c.b16 %v2450, %v2449
        %v2489 = vpack.c.b16 %v2452, %v2451
        %v2490 = vpack.c.b16 %v2454, %v2453
        %v2491 = vpack.c.b16 %v2456, %v2455
        %v2492 = vpack.c.b16 %v2458, %v2457
        %v2493 = vpack.c.b16 %v2460, %v2459
        %v2494 = vpack.c.b16 %v2462, %v2461
        %v2495 = vpack.c.b16 %v2464, %v2463
        %v2496 = vpack.c.b16 %v2466, %v2465
        %v2497 = vpack.c.b16 %v2468, %v2467
        %v2498 = vpack.c.b16 %v2470, %v2469
        %v2499 = vpack.c.b16 %v2472, %v2471
        %v2500 = vpack.c.b16 %v2474, %v2473
        %v2501 = vpack.c.b16 %v2476, %v2475
        %v2528 = vsel %vm869, %v2315, 0
        %v2531 = vsel %vm869, %v2319, 0
        %2533 = vmatprep.subr.bf16.mxu0 0
        %2534 = vmatpush1.bf16.msra.mxu0 %v2477
        %2535 = vmatprep.subr.bf16.mxu0 0
        %2536 = vmatpush1.bf16.msra.mxu0 %v2478
        %2537 = vmatprep.subr.bf16.mxu0 0
        %2538 = vmatpush1.bf16.msra.mxu0 %v2479
        %2539 = vmatprep.subr.bf16.mxu0 0
        %2540 = vmatpush1.bf16.msra.mxu0 %v2480
        %2541 = vmatprep.subr.bf16.mxu0 0
        %2542 = vmatpush1.bf16.msra.mxu0 %v2481
        %2543 = vmatprep.subr.bf16.mxu0 0
        %2544 = vmatpush1.bf16.msra.mxu0 %v2482
        %2545 = vmatprep.subr.bf16.mxu0 0
        %2546 = vmatpush1.bf16.msra.mxu0 %v2483
        %2547 = vmatprep.subr.bf16.mxu0 0
        %2548 = vmatpush1.bf16.msra.mxu0 %v2484
        %2549 = vmatprep.subr.bf16.mxu0 0
        %2550 = vmatpush1.bf16.msra.mxu0 %v2485
        %2551 = vmatprep.subr.bf16.mxu0 0
        %2552 = vmatpush1.bf16.msra.mxu0 %v2486
        %2553 = vmatprep.subr.bf16.mxu0 0
        %2554 = vmatpush1.bf16.msra.mxu0 %v2487
        %2555 = vmatprep.subr.bf16.mxu0 0
        %2556 = vmatpush1.bf16.msra.mxu0 %v2488
        %2557 = vmatprep.subr.bf16.mxu0 0
        %2558 = vmatpush1.bf16.msra.mxu0 %v2489
        %2559 = vmatprep.subr.bf16.mxu0 0
        %2560 = vmatpush1.bf16.msra.mxu0 %v2490
        %2561 = vmatprep.subr.bf16.mxu0 0
        %2562 = vmatpush1.bf16.msra.mxu0 %v2491
        %2563 = vmatprep.subr.bf16.mxu0 0
        %2564 = vmatpush1.bf16.msra.mxu0 %v2492
        %2565 = vmatprep.mubr.bf16.mxu0 %v2313
        %2566 = vmatmul.mubr.bf16.gmra.mrb[0].mxu0 %v2312
        %v2567 = vpop.f32.mrb[0].mxu0
        %v2568 = vadd.f32 %v2375, %v2567
        %v2569 = vpop.f32.mrb[0].mxu0
        %v2570 = vpop.f32.mrb[0].mxu0
        %v2571 = vadd.f32 %v2375, %v2570
        %v2572 = vpop.f32.mrb[0].mxu0
        %2573 = vmatprep.mubr.bf16.mxu0 %v2317
        %2574 = vmatmul.mubr.bf16.gmra.mrb[0].mxu0 %v2316
        %v2575 = vpop.f32.mrb[0].mxu0
        %v2576 = vadd.f32 %v2375, %v2575
        %v2577 = vpop.f32.mrb[0].mxu0
        %v2578 = vpop.f32.mrb[0].mxu0
        %v2579 = vadd.f32 %v2375, %v2578
        %v2580 = vpop.f32.mrb[0].mxu0
        %2581 = vdwg.mxu0
        %2582 = vmatprep.subr.bf16.mxu0 0
        %2583 = vmatpush1.bf16.msra.mxu0 %v2493
        %2584 = vmatprep.subr.bf16.mxu0 0
        %2585 = vmatpush1.bf16.msra.mxu0 %v2494
        %2586 = vmatprep.subr.bf16.mxu0 0
        %2587 = vmatpush1.bf16.msra.mxu0 %v2495
        %2588 = vmatprep.subr.bf16.mxu0 0
        %2589 = vmatpush1.bf16.msra.mxu0 %v2496
        %2590 = vmatprep.subr.bf16.mxu0 0
        %2591 = vmatpush1.bf16.msra.mxu0 %v2497
        %2592 = vmatprep.subr.bf16.mxu0 0
        %2593 = vmatpush1.bf16.msra.mxu0 %v2498
        %2594 = vmatprep.subr.bf16.mxu0 0
        %2595 = vmatpush1.bf16.msra.mxu0 %v2499
        %2596 = vmatprep.subr.bf16.mxu0 0
        %2597 = vmatpush1.bf16.msra.mxu0 %v2500
        %2598 = vmatprep.subr.bf16.mxu0 0
        %2599 = vmatpush1.bf16.msra.mxu0 %v2501
        %2600 = vmatprep.subr.bf16.mxu0 0
        %2601 = vmatpush1.bf16.msra.mxu0 0
        %2602 = vmatprep.subr.bf16.mxu0 0
        %2603 = vmatpush1.bf16.msra.mxu0 0
        %2604 = vmatprep.subr.bf16.mxu0 0
        %2605 = vmatpush1.bf16.msra.mxu0 0
        %2606 = vmatprep.subr.bf16.mxu0 0
        %2607 = vmatpush1.bf16.msra.mxu0 0
        %2608 = vmatprep.subr.bf16.mxu0 0
        %2609 = vmatpush1.bf16.msra.mxu0 0
        %2610 = vmatprep.subr.bf16.mxu0 0
        %2611 = vmatpush1.bf16.msra.mxu0 0
        %2612 = vmatprep.subr.bf16.mxu0 0
        %2613 = vmatpush1.bf16.msra.mxu0 0
        %2614 = vmatprep.mubr.bf16.mxu0 %v2528
        %2615 = vmatmul.mubr.bf16.gmra.mrb[0].mxu0 %v2314
        %v2616 = vpop.f32.mrb[0].mxu0
        %v2617 = vadd.f32 %v2568, %v2616
        %v2618 = vpop.f32.mrb[0].mxu0
        %v2619 = vpop.f32.mrb[0].mxu0
        %v2620 = vadd.f32 %v2571, %v2619
        %v2621 = vpop.f32.mrb[0].mxu0
        %2622 = vmatprep.mubr.bf16.mxu0 %v2531
        %2623 = vmatmul.mubr.bf16.gmra.mrb[0].mxu0 %v2318
        %v2624 = vpop.f32.mrb[0].mxu0
        %v2625 = vadd.f32 %v2576, %v2624
        %v2626 = vpop.f32.mrb[0].mxu0
        %v2627 = vpop.f32.mrb[0].mxu0
        %v2628 = vadd.f32 %v2579, %v2627
        %v2629 = vpop.f32.mrb[0].mxu0
        %2630 = vdwg.mxu0
        %v2631 = vld [vmem:[%s722] sm:$0xff]
        %v2632 = vld [vmem:[%s722 + $0x8] sm:$0xff]
        %v2633 = vld [vmem:[%s722 + $0x10] sm:$0xff]
        %v2634 = vld [vmem:[%s722 + $0x18] sm:$0xff]
        %v2635 = vpack.c.bf16 %v2632, %v2631
        %v2636 = vpack.c.bf16 %v2634, %v2633
        %v2637 = vld [vmem:[%s4] sm:$0xf]
        %v2638 = vld [vmem:[%s4 + $0x4] sm:$0xf]
        %v2639 = vld [vmem:[%s4 + $0x8] sm:$0xf]
        %v2640 = vld [vmem:[%s4 + $0xc] sm:$0xf]
        %v2641 = vld [vmem:[%s4 + $0x10] sm:$0xf]
        %v2642 = vld [vmem:[%s4 + $0x14] sm:$0xf]
        %v2649 = vunpack.c.l.b16 %v2637
        %v2650 = vunpack.c.l.b16 %v2638
        %v2651 = vunpack.c.l.b16 %v2639
        %v2652 = vunpack.c.l.b16 %v2640
        %v2653 = vunpack.c.l.b16 %v2641
        %v2654 = vunpack.c.l.b16 %v2642
        %v2655 = vpack.c.b16 %v2650, %v2649
        %v2656 = vpack.c.b16 %v2652, %v2651
        %v2657 = vpack.c.b16 %v2654, %v2653
        %vm2661 = vcmask 392192
        %v2663 = vsel %vm2661, %v2635, 0
        %v2666 = vsel %vm2661, %v2636, 0
        %2668 = vmatprep.subr.bf16.mxu0 0
        %2669 = vmatpush1.bf16.msra.mxu0 %v2655
        %2670 = vmatprep.subr.bf16.mxu0 0
        %2671 = vmatpush1.bf16.msra.mxu0 %v2656
        %2672 = vmatprep.subr.bf16.mxu0 0
        %2673 = vmatpush1.bf16.msra.mxu0 %v2657
        %2674 = vmatprep.subr.bf16.mxu0 0
        %2675 = vmatpush1.bf16.msra.mxu0 0
        %2676 = vmatprep.subr.bf16.mxu0 0
        %2677 = vmatpush1.bf16.msra.mxu0 0
        %2678 = vmatprep.subr.bf16.mxu0 0
        %2679 = vmatpush1.bf16.msra.mxu0 0
        %2680 = vmatprep.subr.bf16.mxu0 0
        %2681 = vmatpush1.bf16.msra.mxu0 0
        %2682 = vmatprep.subr.bf16.mxu0 0
        %2683 = vmatpush1.bf16.msra.mxu0 0
        %2684 = vmatprep.subr.bf16.mxu0 0
        %2685 = vmatpush1.bf16.msra.mxu0 0
        %2686 = vmatprep.subr.bf16.mxu0 0
        %2687 = vmatpush1.bf16.msra.mxu0 0
        %2688 = vmatprep.subr.bf16.mxu0 0
        %2689 = vmatpush1.bf16.msra.mxu0 0
        %2690 = vmatprep.subr.bf16.mxu0 0
        %2691 = vmatpush1.bf16.msra.mxu0 0
        %2692 = vmatprep.subr.bf16.mxu0 0
        %2693 = vmatpush1.bf16.msra.mxu0 0
        %2694 = vmatprep.subr.bf16.mxu0 0
        %2695 = vmatpush1.bf16.msra.mxu0 0
        %2696 = vmatprep.subr.bf16.mxu0 0
        %2697 = vmatpush1.bf16.msra.mxu0 0
        %2698 = vmatprep.subr.bf16.mxu0 0
        %2699 = vmatpush1.bf16.msra.mxu0 0
        %2700 = vmatprep.mubr.bf16.mxu0 0
        %2701 = vmatmul.mubr.bf16.gmra.mrb[0].mxu0 %v2663
        %v2702 = vpop.f32.mrb[0].mxu0
        %v2703 = vadd.f32 0.0, %v2702
        %v2704 = vpop.f32.mrb[0].mxu0
        %v2705 = vpop.f32.mrb[0].mxu0
        %v2706 = vadd.f32 0.0, %v2705
        %v2707 = vpop.f32.mrb[0].mxu0
        %2708 = vmatprep.mubr.bf16.mxu0 0
        %2709 = vmatmul.mubr.bf16.gmra.mrb[0].mxu0 %v2666
        %v2710 = vpop.f32.mrb[0].mxu0
        %v2711 = vadd.f32 0.0, %v2710
        %v2712 = vpop.f32.mrb[0].mxu0
        %v2713 = vpop.f32.mrb[0].mxu0
        %v2714 = vadd.f32 0.0, %v2713
        %v2715 = vpop.f32.mrb[0].mxu0
        %2716 = vdwg.mxu0
        %v2717 = vsel %vm869, %v857, 0.0
        %v2718 = vsel %vm869, %v858, 0.0
        %v2719 = vsel %vm869, %v859, 0.0
        %v2720 = vsel %vm869, %v860, 0.0
        %v2721 = vadd.f32 %v2617, %v2703
        %v2722 = vadd.f32 %v2620, %v2706
        %v2723 = vadd.f32 %v2625, %v2711
        %v2724 = vadd.f32 %v2628, %v2714
        %v2725 = vld [vmem:[%s728] sm:$0xff]
        %v2726 = vld [vmem:[%s728 + $0x8] sm:$0xff]
        %v2727 = vld [vmem:[%s728 + $0x10] sm:$0xff]
        %v2728 = vld [vmem:[%s728 + $0x18] sm:$0xff]
        %v2729 = vadd.f32 %v2721, %v2725
        %v2730 = vadd.f32 %v2722, %v2726
        %v2731 = vadd.f32 %v2723, %v2727
        %v2732 = vadd.f32 %v2724, %v2728
        %v2733 = vadd.f32 %v2729, %v2717
        %v2734 = vadd.f32 %v2730, %v2718
        %v2735 = vadd.f32 %v2731, %v2719
        %v2736 = vadd.f32 %v2732, %v2720
        %v2737 = vmul.f32 %v2733, %v853
        %v2738 = vmul.f32 %v2734, %v854
        %v2739 = vmul.f32 %v2735, %v855
        %v2740 = vmul.f32 %v2736, %v856
        %vm2741 = vcmask 261120
        %2742 = vst.msk [vmem:[#allocation8 + $0x18] sm:$0xff] %vm2741, %v2737
        %2743 = vst.msk [vmem:[#allocation8 + $0x20] sm:$0xff] %vm2741, %v2738
        %2744 = vst.msk [vmem:[#allocation8 + $0x28] sm:$0xff] %vm2741, %v2739
        %2745 = vst.msk [vmem:[#allocation8 + $0x30] sm:$0xff] %vm2741, %v2740
        %v2746 = vld [vmem:[#allocation8 + $0x6] sm:$0xff]
        %v2747 = vld [vmem:[#allocation8 + $0xe] sm:$0xff]
        %v2748 = vld [vmem:[#allocation8 + $0x16] sm:$0xff]
        %v2749 = vld [vmem:[#allocation8 + $0x1e] sm:$0xff]
        %2750 = vst.msk [vmem:[#allocation9] sm:$0xff] %vm2741, %v2746
        %2751 = vst.msk [vmem:[#allocation9 + $0x38] sm:$0xff] %vm2741, %v2747
        %2752 = vst.msk [vmem:[#allocation9 + $0x70] sm:$0xff] %vm2741, %v2748
        %2753 = vst.msk [vmem:[#allocation9 + $0xa8] sm:$0xff] %vm2741, %v2749
        %v2754 = vld [vmem:[#allocation8 + $0x7] sm:$0xff]
        %v2755 = vld [vmem:[#allocation8 + $0xf] sm:$0xff]
        %v2756 = vld [vmem:[#allocation8 + $0x17] sm:$0xff]
        %v2757 = vld [vmem:[#allocation8 + $0x1f] sm:$0xff]
        %2762 = vrot.lane.b32.xlu0 %v2754, 32
        %v2763 = vpop.permute.xlu0 %2762
        %2764 = vrot.lane.b32.xlu0 %v2755, 32
        %v2765 = vpop.permute.xlu0 %2764
        %2766 = vrot.lane.b32.xlu0 %v2756, 32
        %v2767 = vpop.permute.xlu0 %2766
        %2768 = vrot.lane.b32.xlu0 %v2757, 32
        %v2769 = vpop.permute.xlu0 %2768
        %vm2774 = vcmask 523520
        %2775 = vst.msk [vmem:[#allocation9] sm:$0xff] %vm2774, %v2763
        %2776 = vst.msk [vmem:[#allocation9 + $0x38] sm:$0xff] %vm2774, %v2765
        %2777 = vst.msk [vmem:[#allocation9 + $0x70] sm:$0xff] %vm2774, %v2767
        %2778 = vst.msk [vmem:[#allocation9 + $0xa8] sm:$0xff] %vm2774, %v2769
        %v2779 = vld [vmem:[#allocation8 + $0x8] sm:$0xff]
        %v2780 = vld [vmem:[#allocation8 + $0x10] sm:$0xff]
        %v2781 = vld [vmem:[#allocation8 + $0x18] sm:$0xff]
        %v2782 = vld [vmem:[#allocation8 + $0x20] sm:$0xff]
        %2787 = vrot.lane.b32.xlu0 %v2779, 64
        %v2788 = vpop.permute.xlu0 %2787
        %2789 = vrot.lane.b32.xlu0 %v2780, 64
        %v2790 = vpop.permute.xlu0 %2789
        %2791 = vrot.lane.b32.xlu0 %v2781, 64
        %v2792 = vpop.permute.xlu0 %2791
        %2793 = vrot.lane.b32.xlu0 %v2782, 64
        %v2794 = vpop.permute.xlu0 %2793
        %vm2799 = vcmask 785920
        %2800 = vst.msk [vmem:[#allocation9] sm:$0xff] %vm2799, %v2788
        %2801 = vst.msk [vmem:[#allocation9 + $0x38] sm:$0xff] %vm2799, %v2790
        %2802 = vst.msk [vmem:[#allocation9 + $0x70] sm:$0xff] %vm2799, %v2792
        %2803 = vst.msk [vmem:[#allocation9 + $0xa8] sm:$0xff] %vm2799, %v2794
        %v2804 = vld [vmem:[#allocation8 + $0x9] sm:$0xff]
        %v2805 = vld [vmem:[#allocation8 + $0x11] sm:$0xff]
        %v2806 = vld [vmem:[#allocation8 + $0x19] sm:$0xff]
        %v2807 = vld [vmem:[#allocation8 + $0x21] sm:$0xff]
        %2812 = vrot.lane.b32.xlu0 %v2804, 96
        %v2813 = vpop.permute.xlu0 %2812
        %2814 = vrot.lane.b32.xlu0 %v2805, 96
        %v2815 = vpop.permute.xlu0 %2814
        %2816 = vrot.lane.b32.xlu0 %v2806, 96
        %v2817 = vpop.permute.xlu0 %2816
        %2818 = vrot.lane.b32.xlu0 %v2807, 96
        %v2819 = vpop.permute.xlu0 %2818
        %vm2824 = vcmask 1048320
        %2825 = vst.msk [vmem:[#allocation9] sm:$0xff] %vm2824, %v2813
        %2826 = vst.msk [vmem:[#allocation9 + $0x38] sm:$0xff] %vm2824, %v2815
        %2827 = vst.msk [vmem:[#allocation9 + $0x70] sm:$0xff] %vm2824, %v2817
        %2828 = vst.msk [vmem:[#allocation9 + $0xa8] sm:$0xff] %vm2824, %v2819
        %v2829 = vld [vmem:[#allocation8 + $0xa] sm:$0xff]
        %v2830 = vld [vmem:[#allocation8 + $0x12] sm:$0xff]
        %v2831 = vld [vmem:[#allocation8 + $0x1a] sm:$0xff]
        %v2832 = vld [vmem:[#allocation8 + $0x22] sm:$0xff]
        %2833 = vst.msk [vmem:[#allocation9 + $0x8] sm:$0xff] %vm2741, %v2829
        %2834 = vst.msk [vmem:[#allocation9 + $0x40] sm:$0xff] %vm2741, %v2830
        %2835 = vst.msk [vmem:[#allocation9 + $0x78] sm:$0xff] %vm2741, %v2831
        %2836 = vst.msk [vmem:[#allocation9 + $0xb0] sm:$0xff] %vm2741, %v2832
        %v2837 = vld [vmem:[#allocation8 + $0xe] sm:$0xff]
        %v2838 = vld [vmem:[#allocation8 + $0x16] sm:$0xff]
        %v2839 = vld [vmem:[#allocation8 + $0x1e] sm:$0xff]
        %v2840 = vld [vmem:[#allocation8 + $0x26] sm:$0xff]
        %2845 = vrot.lane.b32.xlu0 %v2837, 32
        %v2846 = vpop.permute.xlu0 %2845
        %2847 = vrot.lane.b32.xlu0 %v2838, 32
        %v2848 = vpop.permute.xlu0 %2847
        %2849 = vrot.lane.b32.xlu0 %v2839, 32
        %v2850 = vpop.permute.xlu0 %2849
        %2851 = vrot.lane.b32.xlu0 %v2840, 32
        %v2852 = vpop.permute.xlu0 %2851
        %2857 = vst.msk [vmem:[#allocation9 + $0x8] sm:$0xff] %vm2774, %v2846
        %2858 = vst.msk [vmem:[#allocation9 + $0x40] sm:$0xff] %vm2774, %v2848
        %2859 = vst.msk [vmem:[#allocation9 + $0x78] sm:$0xff] %vm2774, %v2850
        %2860 = vst.msk [vmem:[#allocation9 + $0xb0] sm:$0xff] %vm2774, %v2852
        %v2861 = vld [vmem:[#allocation8 + $0xf] sm:$0xff]
        %v2862 = vld [vmem:[#allocation8 + $0x17] sm:$0xff]
        %v2863 = vld [vmem:[#allocation8 + $0x1f] sm:$0xff]
        %v2864 = vld [vmem:[#allocation8 + $0x27] sm:$0xff]
        %2869 = vrot.lane.b32.xlu0 %v2861, 64
        %v2870 = vpop.permute.xlu0 %2869
        %2871 = vrot.lane.b32.xlu0 %v2862, 64
        %v2872 = vpop.permute.xlu0 %2871
        %2873 = vrot.lane.b32.xlu0 %v2863, 64
        %v2874 = vpop.permute.xlu0 %2873
        %2875 = vrot.lane.b32.xlu0 %v2864, 64
        %v2876 = vpop.permute.xlu0 %2875
        %2881 = vst.msk [vmem:[#allocation9 + $0x8] sm:$0xff] %vm2799, %v2870
        %2882 = vst.msk [vmem:[#allocation9 + $0x40] sm:$0xff] %vm2799, %v2872
        %2883 = vst.msk [vmem:[#allocation9 + $0x78] sm:$0xff] %vm2799, %v2874
        %2884 = vst.msk [vmem:[#allocation9 + $0xb0] sm:$0xff] %vm2799, %v2876
        %v2885 = vld [vmem:[#allocation8 + $0x10] sm:$0xff]
        %v2886 = vld [vmem:[#allocation8 + $0x18] sm:$0xff]
        %v2887 = vld [vmem:[#allocation8 + $0x20] sm:$0xff]
        %v2888 = vld [vmem:[#allocation8 + $0x28] sm:$0xff]
        %2893 = vrot.lane.b32.xlu0 %v2885, 96
        %v2894 = vpop.permute.xlu0 %2893
        %2895 = vrot.lane.b32.xlu0 %v2886, 96
        %v2896 = vpop.permute.xlu0 %2895
        %2897 = vrot.lane.b32.xlu0 %v2887, 96
        %v2898 = vpop.permute.xlu0 %2897
        %2899 = vrot.lane.b32.xlu0 %v2888, 96
        %v2900 = vpop.permute.xlu0 %2899
        %2905 = vst.msk [vmem:[#allocation9 + $0x8] sm:$0xff] %vm2824, %v2894
        %2906 = vst.msk [vmem:[#allocation9 + $0x40] sm:$0xff] %vm2824, %v2896
        %2907 = vst.msk [vmem:[#allocation9 + $0x78] sm:$0xff] %vm2824, %v2898
        %2908 = vst.msk [vmem:[#allocation9 + $0xb0] sm:$0xff] %vm2824, %v2900
        %v2909 = vld [vmem:[#allocation8 + $0x11] sm:$0xff]
        %v2910 = vld [vmem:[#allocation8 + $0x19] sm:$0xff]
        %v2911 = vld [vmem:[#allocation8 + $0x21] sm:$0xff]
        %v2912 = vld [vmem:[#allocation8 + $0x29] sm:$0xff]
        %2913 = vst.msk [vmem:[#allocation9 + $0x10] sm:$0xff] %vm2741, %v2909
        %2914 = vst.msk [vmem:[#allocation9 + $0x48] sm:$0xff] %vm2741, %v2910
        %2915 = vst.msk [vmem:[#allocation9 + $0x80] sm:$0xff] %vm2741, %v2911
        %2916 = vst.msk [vmem:[#allocation9 + $0xb8] sm:$0xff] %vm2741, %v2912
        %v2917 = vld [vmem:[#allocation8 + $0x12] sm:$0xff]
        %v2918 = vld [vmem:[#allocation8 + $0x1a] sm:$0xff]
        %v2919 = vld [vmem:[#allocation8 + $0x22] sm:$0xff]
        %v2920 = vld [vmem:[#allocation8 + $0x2a] sm:$0xff]
        %2925 = vrot.lane.b32.xlu0 %v2917, 32
        %v2926 = vpop.permute.xlu0 %2925
        %2927 = vrot.lane.b32.xlu0 %v2918, 32
        %v2928 = vpop.permute.xlu0 %2927
        %2929 = vrot.lane.b32.xlu0 %v2919, 32
        %v2930 = vpop.permute.xlu0 %2929
        %2931 = vrot.lane.b32.xlu0 %v2920, 32
        %v2932 = vpop.permute.xlu0 %2931
        %2937 = vst.msk [vmem:[#allocation9 + $0x10] sm:$0xff] %vm2774, %v2926
        %2938 = vst.msk [vmem:[#allocation9 + $0x48] sm:$0xff] %vm2774, %v2928
        %2939 = vst.msk [vmem:[#allocation9 + $0x80] sm:$0xff] %vm2774, %v2930
        %2940 = vst.msk [vmem:[#allocation9 + $0xb8] sm:$0xff] %vm2774, %v2932
        %v2941 = vld [vmem:[#allocation8 + $0x16] sm:$0xff]
        %v2942 = vld [vmem:[#allocation8 + $0x1e] sm:$0xff]
        %v2943 = vld [vmem:[#allocation8 + $0x26] sm:$0xff]
        %v2944 = vld [vmem:[#allocation8 + $0x2e] sm:$0xff]
        %2949 = vrot.lane.b32.xlu0 %v2941, 64
        %v2950 = vpop.permute.xlu0 %2949
        %2951 = vrot.lane.b32.xlu0 %v2942, 64
        %v2952 = vpop.permute.xlu0 %2951
        %2953 = vrot.lane.b32.xlu0 %v2943, 64
        %v2954 = vpop.permute.xlu0 %2953
        %2955 = vrot.lane.b32.xlu0 %v2944, 64
        %v2956 = vpop.permute.xlu0 %2955
        %2961 = vst.msk [vmem:[#allocation9 + $0x10] sm:$0xff] %vm2799, %v2950
        %2962 = vst.msk [vmem:[#allocation9 + $0x48] sm:$0xff] %vm2799, %v2952
        %2963 = vst.msk [vmem:[#allocation9 + $0x80] sm:$0xff] %vm2799, %v2954
        %2964 = vst.msk [vmem:[#allocation9 + $0xb8] sm:$0xff] %vm2799, %v2956
        %v2965 = vld [vmem:[#allocation8 + $0x17] sm:$0xff]
        %v2966 = vld [vmem:[#allocation8 + $0x1f] sm:$0xff]
        %v2967 = vld [vmem:[#allocation8 + $0x27] sm:$0xff]
        %v2968 = vld [vmem:[#allocation8 + $0x2f] sm:$0xff]
        %2973 = vrot.lane.b32.xlu0 %v2965, 96
        %v2974 = vpop.permute.xlu0 %2973
        %2975 = vrot.lane.b32.xlu0 %v2966, 96
        %v2976 = vpop.permute.xlu0 %2975
        %2977 = vrot.lane.b32.xlu0 %v2967, 96
        %v2978 = vpop.permute.xlu0 %2977
        %2979 = vrot.lane.b32.xlu0 %v2968, 96
        %v2980 = vpop.permute.xlu0 %2979
        %2985 = vst.msk [vmem:[#allocation9 + $0x10] sm:$0xff] %vm2824, %v2974
        %2986 = vst.msk [vmem:[#allocation9 + $0x48] sm:$0xff] %vm2824, %v2976
        %2987 = vst.msk [vmem:[#allocation9 + $0x80] sm:$0xff] %vm2824, %v2978
        %2988 = vst.msk [vmem:[#allocation9 + $0xb8] sm:$0xff] %vm2824, %v2980
        %v2989 = vld [vmem:[#allocation8 + $0x18] sm:$0xff]
        %v2990 = vld [vmem:[#allocation8 + $0x20] sm:$0xff]
        %v2991 = vld [vmem:[#allocation8 + $0x28] sm:$0xff]
        %v2992 = vld [vmem:[#allocation8 + $0x30] sm:$0xff]
        %2993 = vst.msk [vmem:[#allocation9 + $0x18] sm:$0xff] %vm2741, %v2989
        %2994 = vst.msk [vmem:[#allocation9 + $0x50] sm:$0xff] %vm2741, %v2990
        %2995 = vst.msk [vmem:[#allocation9 + $0x88] sm:$0xff] %vm2741, %v2991
        %2996 = vst.msk [vmem:[#allocation9 + $0xc0] sm:$0xff] %vm2741, %v2992
        %v2997 = vld [vmem:[#allocation8 + $0x19] sm:$0xff]
        %v2998 = vld [vmem:[#allocation8 + $0x21] sm:$0xff]
        %v2999 = vld [vmem:[#allocation8 + $0x29] sm:$0xff]
        %v3000 = vld [vmem:[#allocation8 + $0x31] sm:$0xff]
        %3005 = vrot.lane.b32.xlu0 %v2997, 32
        %v3006 = vpop.permute.xlu0 %3005
        %3007 = vrot.lane.b32.xlu0 %v2998, 32
        %v3008 = vpop.permute.xlu0 %3007
        %3009 = vrot.lane.b32.xlu0 %v2999, 32
        %v3010 = vpop.permute.xlu0 %3009
        %3011 = vrot.lane.b32.xlu0 %v3000, 32
        %v3012 = vpop.permute.xlu0 %3011
        %3017 = vst.msk [vmem:[#allocation9 + $0x18] sm:$0xff] %vm2774, %v3006
        %3018 = vst.msk [vmem:[#allocation9 + $0x50] sm:$0xff] %vm2774, %v3008
        %3019 = vst.msk [vmem:[#allocation9 + $0x88] sm:$0xff] %vm2774, %v3010
        %3020 = vst.msk [vmem:[#allocation9 + $0xc0] sm:$0xff] %vm2774, %v3012
        %v3021 = vld [vmem:[#allocation8 + $0x1a] sm:$0xff]
        %v3022 = vld [vmem:[#allocation8 + $0x22] sm:$0xff]
        %v3023 = vld [vmem:[#allocation8 + $0x2a] sm:$0xff]
        %v3024 = vld [vmem:[#allocation8 + $0x32] sm:$0xff]
        %3029 = vrot.lane.b32.xlu0 %v3021, 64
        %v3030 = vpop.permute.xlu0 %3029
        %3031 = vrot.lane.b32.xlu0 %v3022, 64
        %v3032 = vpop.permute.xlu0 %3031
        %3033 = vrot.lane.b32.xlu0 %v3023, 64
        %v3034 = vpop.permute.xlu0 %3033
        %3035 = vrot.lane.b32.xlu0 %v3024, 64
        %v3036 = vpop.permute.xlu0 %3035
        %3041 = vst.msk [vmem:[#allocation9 + $0x18] sm:$0xff] %vm2799, %v3030
        %3042 = vst.msk [vmem:[#allocation9 + $0x50] sm:$0xff] %vm2799, %v3032
        %3043 = vst.msk [vmem:[#allocation9 + $0x88] sm:$0xff] %vm2799, %v3034
        %3044 = vst.msk [vmem:[#allocation9 + $0xc0] sm:$0xff] %vm2799, %v3036
        %v3045 = vld [vmem:[#allocation8 + $0x1e] sm:$0xff]
        %v3046 = vld [vmem:[#allocation8 + $0x26] sm:$0xff]
        %v3047 = vld [vmem:[#allocation8 + $0x2e] sm:$0xff]
        %v3048 = vld [vmem:[#allocation8 + $0x36] sm:$0xff]
        %3053 = vrot.lane.b32.xlu0 %v3045, 96
        %v3054 = vpop.permute.xlu0 %3053
        %3055 = vrot.lane.b32.xlu0 %v3046, 96
        %v3056 = vpop.permute.xlu0 %3055
        %3057 = vrot.lane.b32.xlu0 %v3047, 96
        %v3058 = vpop.permute.xlu0 %3057
        %3059 = vrot.lane.b32.xlu0 %v3048, 96
        %v3060 = vpop.permute.xlu0 %3059
        %3065 = vst.msk [vmem:[#allocation9 + $0x18] sm:$0xff] %vm2824, %v3054
        %3066 = vst.msk [vmem:[#allocation9 + $0x50] sm:$0xff] %vm2824, %v3056
        %3067 = vst.msk [vmem:[#allocation9 + $0x88] sm:$0xff] %vm2824, %v3058
        %3068 = vst.msk [vmem:[#allocation9 + $0xc0] sm:$0xff] %vm2824, %v3060
        %v3069 = vld [vmem:[#allocation8 + $0x1f] sm:$0xff]
        %v3070 = vld [vmem:[#allocation8 + $0x27] sm:$0xff]
        %v3071 = vld [vmem:[#allocation8 + $0x2f] sm:$0xff]
        %v3072 = vld [vmem:[#allocation8 + $0x37] sm:$0xff]
        %3073 = vst.msk [vmem:[#allocation9 + $0x20] sm:$0xff] %vm2741, %v3069
        %3074 = vst.msk [vmem:[#allocation9 + $0x58] sm:$0xff] %vm2741, %v3070
        %3075 = vst.msk [vmem:[#allocation9 + $0x90] sm:$0xff] %vm2741, %v3071
        %3076 = vst.msk [vmem:[#allocation9 + $0xc8] sm:$0xff] %vm2741, %v3072
        %v3077 = vld [vmem:[#allocation8 + $0x20] sm:$0xff]
        %v3078 = vld [vmem:[#allocation8 + $0x28] sm:$0xff]
        %v3079 = vld [vmem:[#allocation8 + $0x30] sm:$0xff]
        %v3080 = vld [vmem:[#allocation8 + $0x38] sm:$0xff]
        %3085 = vrot.lane.b32.xlu0 %v3077, 32
        %v3086 = vpop.permute.xlu0 %3085
        %3087 = vrot.lane.b32.xlu0 %v3078, 32
        %v3088 = vpop.permute.xlu0 %3087
        %3089 = vrot.lane.b32.xlu0 %v3079, 32
        %v3090 = vpop.permute.xlu0 %3089
        %3091 = vrot.lane.b32.xlu0 %v3080, 32
        %v3092 = vpop.permute.xlu0 %3091
        %3097 = vst.msk [vmem:[#allocation9 + $0x20] sm:$0xff] %vm2774, %v3086
        %3098 = vst.msk [vmem:[#allocation9 + $0x58] sm:$0xff] %vm2774, %v3088
        %3099 = vst.msk [vmem:[#allocation9 + $0x90] sm:$0xff] %vm2774, %v3090
        %3100 = vst.msk [vmem:[#allocation9 + $0xc8] sm:$0xff] %vm2774, %v3092
        %v3101 = vld [vmem:[#allocation8 + $0x21] sm:$0xff]
        %v3102 = vld [vmem:[#allocation8 + $0x29] sm:$0xff]
        %v3103 = vld [vmem:[#allocation8 + $0x31] sm:$0xff]
        %v3104 = vld [vmem:[#allocation8 + $0x39] sm:$0xff]
        %3109 = vrot.lane.b32.xlu0 %v3101, 64
        %v3110 = vpop.permute.xlu0 %3109
        %3111 = vrot.lane.b32.xlu0 %v3102, 64
        %v3112 = vpop.permute.xlu0 %3111
        %3113 = vrot.lane.b32.xlu0 %v3103, 64
        %v3114 = vpop.permute.xlu0 %3113
        %3115 = vrot.lane.b32.xlu0 %v3104, 64
        %v3116 = vpop.permute.xlu0 %3115
        %3121 = vst.msk [vmem:[#allocation9 + $0x20] sm:$0xff] %vm2799, %v3110
        %3122 = vst.msk [vmem:[#allocation9 + $0x58] sm:$0xff] %vm2799, %v3112
        %3123 = vst.msk [vmem:[#allocation9 + $0x90] sm:$0xff] %vm2799, %v3114
        %3124 = vst.msk [vmem:[#allocation9 + $0xc8] sm:$0xff] %vm2799, %v3116
        %v3125 = vld [vmem:[#allocation8 + $0x22] sm:$0xff]
        %v3126 = vld [vmem:[#allocation8 + $0x2a] sm:$0xff]
        %v3127 = vld [vmem:[#allocation8 + $0x32] sm:$0xff]
        %v3128 = vld [vmem:[#allocation8 + $0x3a] sm:$0xff]
        %3133 = vrot.lane.b32.xlu0 %v3125, 96
        %v3134 = vpop.permute.xlu0 %3133
        %3135 = vrot.lane.b32.xlu0 %v3126, 96
        %v3136 = vpop.permute.xlu0 %3135
        %3137 = vrot.lane.b32.xlu0 %v3127, 96
        %v3138 = vpop.permute.xlu0 %3137
        %3139 = vrot.lane.b32.xlu0 %v3128, 96
        %v3140 = vpop.permute.xlu0 %3139
        %3145 = vst.msk [vmem:[#allocation9 + $0x20] sm:$0xff] %vm2824, %v3134
        %3146 = vst.msk [vmem:[#allocation9 + $0x58] sm:$0xff] %vm2824, %v3136
        %3147 = vst.msk [vmem:[#allocation9 + $0x90] sm:$0xff] %vm2824, %v3138
        %3148 = vst.msk [vmem:[#allocation9 + $0xc8] sm:$0xff] %vm2824, %v3140
        %v3149 = vld [vmem:[#allocation8 + $0x26] sm:$0xff]
        %v3150 = vld [vmem:[#allocation8 + $0x2e] sm:$0xff]
        %v3151 = vld [vmem:[#allocation8 + $0x36] sm:$0xff]
        %v3152 = vld [vmem:[#allocation8 + $0x3e] sm:$0xff]
        %3153 = vst.msk [vmem:[#allocation9 + $0x28] sm:$0xff] %vm2741, %v3149
        %3154 = vst.msk [vmem:[#allocation9 + $0x60] sm:$0xff] %vm2741, %v3150
        %3155 = vst.msk [vmem:[#allocation9 + $0x98] sm:$0xff] %vm2741, %v3151
        %3156 = vst.msk [vmem:[#allocation9 + $0xd0] sm:$0xff] %vm2741, %v3152
        %v3157 = vld [vmem:[#allocation8 + $0x27] sm:$0xff]
        %v3158 = vld [vmem:[#allocation8 + $0x2f] sm:$0xff]
        %v3159 = vld [vmem:[#allocation8 + $0x37] sm:$0xff]
        %v3160 = vld [vmem:[#allocation8 + $0x3f] sm:$0xff]
        %3165 = vrot.lane.b32.xlu0 %v3157, 32
        %v3166 = vpop.permute.xlu0 %3165
        %3167 = vrot.lane.b32.xlu0 %v3158, 32
        %v3168 = vpop.permute.xlu0 %3167
        %3169 = vrot.lane.b32.xlu0 %v3159, 32
        %v3170 = vpop.permute.xlu0 %3169
        %3171 = vrot.lane.b32.xlu0 %v3160, 32
        %v3172 = vpop.permute.xlu0 %3171
        %3177 = vst.msk [vmem:[#allocation9 + $0x28] sm:$0xff] %vm2774, %v3166
        %3178 = vst.msk [vmem:[#allocation9 + $0x60] sm:$0xff] %vm2774, %v3168
        %3179 = vst.msk [vmem:[#allocation9 + $0x98] sm:$0xff] %vm2774, %v3170
        %3180 = vst.msk [vmem:[#allocation9 + $0xd0] sm:$0xff] %vm2774, %v3172
        %v3181 = vld [vmem:[#allocation8 + $0x28] sm:$0xff]
        %v3182 = vld [vmem:[#allocation8 + $0x30] sm:$0xff]
        %v3183 = vld [vmem:[#allocation8 + $0x38] sm:$0xff]
        %v3184 = vld [vmem:[#allocation8 + $0x40] sm:$0xff]
        %3189 = vrot.lane.b32.xlu0 %v3181, 64
        %v3190 = vpop.permute.xlu0 %3189
        %3191 = vrot.lane.b32.xlu0 %v3182, 64
        %v3192 = vpop.permute.xlu0 %3191
        %3193 = vrot.lane.b32.xlu0 %v3183, 64
        %v3194 = vpop.permute.xlu0 %3193
        %3195 = vrot.lane.b32.xlu0 %v3184, 64
        %v3196 = vpop.permute.xlu0 %3195
        %3201 = vst.msk [vmem:[#allocation9 + $0x28] sm:$0xff] %vm2799, %v3190
        %3202 = vst.msk [vmem:[#allocation9 + $0x60] sm:$0xff] %vm2799, %v3192
        %3203 = vst.msk [vmem:[#allocation9 + $0x98] sm:$0xff] %vm2799, %v3194
        %3204 = vst.msk [vmem:[#allocation9 + $0xd0] sm:$0xff] %vm2799, %v3196
        %v3205 = vld [vmem:[#allocation8 + $0x29] sm:$0xff]
        %v3206 = vld [vmem:[#allocation8 + $0x31] sm:$0xff]
        %v3207 = vld [vmem:[#allocation8 + $0x39] sm:$0xff]
        %v3208 = vld [vmem:[#allocation8 + $0x41] sm:$0xff]
        %3213 = vrot.lane.b32.xlu0 %v3205, 96
        %v3214 = vpop.permute.xlu0 %3213
        %3215 = vrot.lane.b32.xlu0 %v3206, 96
        %v3216 = vpop.permute.xlu0 %3215
        %3217 = vrot.lane.b32.xlu0 %v3207, 96
        %v3218 = vpop.permute.xlu0 %3217
        %3219 = vrot.lane.b32.xlu0 %v3208, 96
        %v3220 = vpop.permute.xlu0 %3219
        %3225 = vst.msk [vmem:[#allocation9 + $0x28] sm:$0xff] %vm2824, %v3214
        %3226 = vst.msk [vmem:[#allocation9 + $0x60] sm:$0xff] %vm2824, %v3216
        %3227 = vst.msk [vmem:[#allocation9 + $0x98] sm:$0xff] %vm2824, %v3218
        %3228 = vst.msk [vmem:[#allocation9 + $0xd0] sm:$0xff] %vm2824, %v3220
        %v3229 = vld [vmem:[#allocation8 + $0x2a] sm:$0xff]
        %v3230 = vld [vmem:[#allocation8 + $0x32] sm:$0xff]
        %v3231 = vld [vmem:[#allocation8 + $0x3a] sm:$0xff]
        %v3232 = vld [vmem:[#allocation8 + $0x42] sm:$0xff]
        %3233 = vst.msk [vmem:[#allocation9 + $0x30] sm:$0xff] %vm2741, %v3229
        %3234 = vst.msk [vmem:[#allocation9 + $0x68] sm:$0xff] %vm2741, %v3230
        %3235 = vst.msk [vmem:[#allocation9 + $0xa0] sm:$0xff] %vm2741, %v3231
        %3236 = vst.msk [vmem:[#allocation9 + $0xd8] sm:$0xff] %vm2741, %v3232
        %v3237 = vld [vmem:[#allocation9] sm:$0xff]
        %v3238 = vld [vmem:[#allocation9 + $0x8] sm:$0xff]
        %v3239 = vld [vmem:[#allocation9 + $0x10] sm:$0xff]
        %v3240 = vld [vmem:[#allocation9 + $0x18] sm:$0xff]
        %v3241 = vld [vmem:[#allocation9 + $0x20] sm:$0xff]
        %v3242 = vld [vmem:[#allocation9 + $0x28] sm:$0xff]
        %v3243 = vld [vmem:[#allocation9 + $0x30] sm:$0xff]
        %v3244 = vld [vmem:[#allocation9 + $0x38] sm:$0xff]
        %v3245 = vld [vmem:[#allocation9 + $0x40] sm:$0xff]
        %v3246 = vld [vmem:[#allocation9 + $0x48] sm:$0xff]
        %v3247 = vld [vmem:[#allocation9 + $0x50] sm:$0xff]
        %v3248 = vld [vmem:[#allocation9 + $0x58] sm:$0xff]
        %v3249 = vld [vmem:[#allocation9 + $0x60] sm:$0xff]
        %v3250 = vld [vmem:[#allocation9 + $0x68] sm:$0xff]
        %v3251 = vld [vmem:[#allocation9 + $0x70] sm:$0xff]
        %v3252 = vld [vmem:[#allocation9 + $0x78] sm:$0xff]
        %v3253 = vld [vmem:[#allocation9 + $0x80] sm:$0xff]
        %v3254 = vld [vmem:[#allocation9 + $0x88] sm:$0xff]
        %v3255 = vld [vmem:[#allocation9 + $0x90] sm:$0xff]
        %v3256 = vld [vmem:[#allocation9 + $0x98] sm:$0xff]
        %v3257 = vld [vmem:[#allocation9 + $0xa0] sm:$0xff]
        %v3258 = vld [vmem:[#allocation9 + $0xa8] sm:$0xff]
        %v3259 = vld [vmem:[#allocation9 + $0xb0] sm:$0xff]
        %v3260 = vld [vmem:[#allocation9 + $0xb8] sm:$0xff]
        %v3261 = vld [vmem:[#allocation9 + $0xc0] sm:$0xff]
        %v3262 = vld [vmem:[#allocation9 + $0xc8] sm:$0xff]
        %v3263 = vld [vmem:[#allocation9 + $0xd0] sm:$0xff]
        %v3264 = vld [vmem:[#allocation9 + $0xd8] sm:$0xff]
        %v3265 = vpack.c.bf16 %v3244, %v3237
        %v3266 = vpack.c.bf16 %v3245, %v3238
        %v3267 = vpack.c.bf16 %v3246, %v3239
        %v3268 = vpack.c.bf16 %v3247, %v3240
        %v3269 = vpack.c.bf16 %v3248, %v3241
        %v3270 = vpack.c.bf16 %v3249, %v3242
        %v3271 = vpack.c.bf16 %v3250, %v3243
        %v3272 = vpack.c.bf16 %v3258, %v3251
        %v3273 = vpack.c.bf16 %v3259, %v3252
        %v3274 = vpack.c.bf16 %v3260, %v3253
        %v3275 = vpack.c.bf16 %v3261, %v3254
        %v3276 = vpack.c.bf16 %v3262, %v3255
        %v3277 = vpack.c.bf16 %v3263, %v3256
        %v3278 = vpack.c.bf16 %v3264, %v3257
        %v3279 = vld [vmem:[%s11] sm:$0xf]
        %v3280 = vld [vmem:[%s11 + $0x4] sm:$0xf]
        %v3281 = vld [vmem:[%s11 + $0x8] sm:$0xf]
        %v3282 = vld [vmem:[%s11 + $0xc] sm:$0xf]
        %v3283 = vld [vmem:[%s11 + $0x10] sm:$0xf]
        %v3284 = vld [vmem:[%s11 + $0x14] sm:$0xf]
        %v3285 = vld [vmem:[%s11 + $0x18] sm:$0xf]
        %v3286 = vld [vmem:[%s11 + $0x1c] sm:$0xf]
        %v3287 = vld [vmem:[%s11 + $0x20] sm:$0xf]
        %v3288 = vld [vmem:[%s11 + $0x24] sm:$0xf]
        %v3289 = vld [vmem:[%s11 + $0x28] sm:$0xf]
        %v3290 = vld [vmem:[%s11 + $0x2c] sm:$0xf]
        %v3291 = vld [vmem:[%s11 + $0x30] sm:$0xf]
        %v3292 = vld [vmem:[%s11 + $0x34] sm:$0xf]
        %v3293 = vld [vmem:[%s11 + $0x38] sm:$0xf]
        %v3294 = vld [vmem:[%s11 + $0x3c] sm:$0xf]
        %v3295 = vld [vmem:[%s11 + $0x40] sm:$0xf]
        %v3296 = vld [vmem:[%s11 + $0x44] sm:$0xf]
        %v3297 = vld [vmem:[%s11 + $0x48] sm:$0xf]
        %v3298 = vld [vmem:[%s11 + $0x4c] sm:$0xf]
        %v3299 = vld [vmem:[%s11 + $0x50] sm:$0xf]
        %v3300 = vld [vmem:[%s11 + $0x54] sm:$0xf]
        %v3301 = vld [vmem:[%s11 + $0x58] sm:$0xf]
        %v3302 = vld [vmem:[%s11 + $0x5c] sm:$0xf]
        %v3303 = vld [vmem:[%s11 + $0x60] sm:$0xf]
        %v3304 = vld [vmem:[%s11 + $0x64] sm:$0xf]
        %v3305 = vld [vmem:[%s11 + $0x68] sm:$0xf]
        %v3306 = vld [vmem:[%s11 + $0x6c] sm:$0xf]
        %v3307 = vld [vmem:[%s11 + $0x70] sm:$0xf]
        %v3308 = vld [vmem:[%s11 + $0x74] sm:$0xf]
        %v3309 = vld [vmem:[%s11 + $0x78] sm:$0xf]
        %v3310 = vld [vmem:[%s11 + $0x7c] sm:$0xf]
        %v3311 = vld [vmem:[%s11 + $0x80] sm:$0xf]
        %v3312 = vld [vmem:[%s11 + $0x84] sm:$0xf]
        %v3313 = vld [vmem:[%s11 + $0x88] sm:$0xf]
        %v3314 = vld [vmem:[%s11 + $0x8c] sm:$0xf]
        %v3315 = vld [vmem:[%s11 + $0x90] sm:$0xf]
        %v3316 = vld [vmem:[%s11 + $0x94] sm:$0xf]
        %v3317 = vld [vmem:[%s11 + $0x98] sm:$0xf]
        %v3318 = vld [vmem:[%s11 + $0x9c] sm:$0xf]
        %v3319 = vld [vmem:[%s11 + $0xa0] sm:$0xf]
        %v3320 = vld [vmem:[%s11 + $0xa4] sm:$0xf]
        %v3321 = vld [vmem:[%s11 + $0xa8] sm:$0xf]
        %v3322 = vld [vmem:[%s11 + $0xac] sm:$0xf]
        %v3323 = vld [vmem:[%s11 + $0xb0] sm:$0xf]
        %v3324 = vld [vmem:[%s11 + $0xb4] sm:$0xf]
        %v3325 = vld [vmem:[%s11 + $0xb8] sm:$0xf]
        %v3326 = vld [vmem:[%s11 + $0xbc] sm:$0xf]
        %v3327 = vld [vmem:[%s11 + $0xc0] sm:$0xf]
        %v3328 = vld [vmem:[%s11 + $0xc4] sm:$0xf]
        %v3329 = vld [vmem:[%s11 + $0xc8] sm:$0xf]
        %v3330 = vld [vmem:[%s11 + $0xcc] sm:$0xf]
        %v3331 = vld [vmem:[%s11 + $0xd0] sm:$0xf]
        %v3332 = vld [vmem:[%s11 + $0xd4] sm:$0xf]
        %v3333 = vld [vmem:[%s11 + $0xd8] sm:$0xf]
        %v3334 = vld [vmem:[%s11 + $0xdc] sm:$0xf]
        %v3335 = vld [vmem:[%s11 + $0xe0] sm:$0xf]
        %v3336 = vld [vmem:[%s11 + $0xe4] sm:$0xf]
        %v3337 = vld [vmem:[%s11 + $0xe8] sm:$0xf]
        %v3338 = vld [vmem:[%s11 + $0xec] sm:$0xf]
        %v3339 = vld [vmem:[%s11 + $0xf0] sm:$0xf]
        %v3340 = vld [vmem:[%s11 + $0xf4] sm:$0xf]
        %v3341 = vld [vmem:[%s11 + $0xf8] sm:$0xf]
        %v3342 = vld [vmem:[%s11 + $0xfc] sm:$0xf]
        %v3343 = vld [vmem:[%s11 + $0x100] sm:$0xf]
        %v3344 = vld [vmem:[%s11 + $0x104] sm:$0xf]
        %v3345 = vld [vmem:[%s11 + $0x108] sm:$0xf]
        %v3346 = vld [vmem:[%s11 + $0x10c] sm:$0xf]
        %v3347 = vld [vmem:[%s11 + $0x110] sm:$0xf]
        %v3348 = vld [vmem:[%s11 + $0x114] sm:$0xf]
        %v3349 = vld [vmem:[%s11 + $0x118] sm:$0xf]
        %v3350 = vld [vmem:[%s11 + $0x11c] sm:$0xf]
        %v3351 = vld [vmem:[%s11 + $0x120] sm:$0xf]
        %v3352 = vld [vmem:[%s11 + $0x124] sm:$0xf]
        %v3353 = vld [vmem:[%s11 + $0x128] sm:$0xf]
        %v3354 = vld [vmem:[%s11 + $0x12c] sm:$0xf]
        %v3355 = vld [vmem:[%s11 + $0x130] sm:$0xf]
        %v3356 = vld [vmem:[%s11 + $0x134] sm:$0xf]
        %v3357 = vld [vmem:[%s11 + $0x138] sm:$0xf]
        %v3358 = vld [vmem:[%s11 + $0x13c] sm:$0xf]
        %v3359 = vld [vmem:[%s11 + $0x140] sm:$0xf]
        %v3360 = vld [vmem:[%s11 + $0x144] sm:$0xf]
        %v3361 = vld [vmem:[%s11 + $0x148] sm:$0xf]
        %v3362 = vld [vmem:[%s11 + $0x14c] sm:$0xf]
        %v3363 = vld [vmem:[%s11 + $0x150] sm:$0xf]
        %v3364 = vld [vmem:[%s11 + $0x154] sm:$0xf]
        %v3365 = vld [vmem:[%s11 + $0x158] sm:$0xf]
        %v3366 = vld [vmem:[%s11 + $0x15c] sm:$0xf]
        %v3367 = vld [vmem:[%s11 + $0x160] sm:$0xf]
        %v3368 = vld [vmem:[%s11 + $0x164] sm:$0xf]
        %v3369 = vld [vmem:[%s11 + $0x168] sm:$0xf]
        %v3370 = vld [vmem:[%s11 + $0x16c] sm:$0xf]
        %v3371 = vld [vmem:[%s11 + $0x170] sm:$0xf]
        %v3372 = vld [vmem:[%s11 + $0x174] sm:$0xf]
        %v3373 = vld [vmem:[%s11 + $0x178] sm:$0xf]
        %v3374 = vld [vmem:[%s11 + $0x17c] sm:$0xf]
        %v3375 = vld [vmem:[%s11 + $0x180] sm:$0xf]
        %v3376 = vld [vmem:[%s11 + $0x184] sm:$0xf]
        %v3377 = vld [vmem:[%s11 + $0x188] sm:$0xf]
        %v3378 = vld [vmem:[%s11 + $0x18c] sm:$0xf]
        %v3379 = vld [vmem:[%s12] sm:$0x1]
        %v3381 = vlaneseq
        %v3382 = vshrl.u32 %v3381, 7
        %v3383 = vsub.s32 0, %v3382
        %v3384 = vrot.slane %v3379, %v3383
        %v3486 = vunpack.c.l.b16 %v3279
        %v3487 = vunpack.c.l.b16 %v3280
        %v3488 = vunpack.c.l.b16 %v3281
        %v3489 = vunpack.c.l.b16 %v3282
        %v3490 = vunpack.c.l.b16 %v3283
        %v3491 = vunpack.c.l.b16 %v3284
        %v3492 = vunpack.c.l.b16 %v3285
        %v3493 = vunpack.c.l.b16 %v3286
        %v3494 = vunpack.c.l.b16 %v3287
        %v3495 = vunpack.c.l.b16 %v3288
        %v3496 = vunpack.c.l.b16 %v3289
        %v3497 = vunpack.c.l.b16 %v3290
        %v3498 = vunpack.c.l.b16 %v3291
        %v3499 = vunpack.c.l.b16 %v3292
        %v3500 = vunpack.c.l.b16 %v3293
        %v3501 = vunpack.c.l.b16 %v3294
        %v3502 = vunpack.c.l.b16 %v3295
        %v3503 = vunpack.c.l.b16 %v3296
        %v3504 = vunpack.c.l.b16 %v3297
        %v3505 = vunpack.c.l.b16 %v3298
        %v3506 = vunpack.c.l.b16 %v3299
        %v3507 = vunpack.c.l.b16 %v3300
        %v3508 = vunpack.c.l.b16 %v3301
        %v3509 = vunpack.c.l.b16 %v3302
        %v3510 = vunpack.c.l.b16 %v3303
        %v3511 = vunpack.c.l.b16 %v3304
        %v3512 = vunpack.c.l.b16 %v3305
        %v3513 = vunpack.c.l.b16 %v3306
        %v3514 = vunpack.c.l.b16 %v3307
        %v3515 = vunpack.c.l.b16 %v3308
        %v3516 = vunpack.c.l.b16 %v3309
        %v3517 = vunpack.c.l.b16 %v3310
        %v3518 = vunpack.c.l.b16 %v3311
        %v3519 = vunpack.c.l.b16 %v3312
        %v3520 = vunpack.c.l.b16 %v3313
        %v3521 = vunpack.c.l.b16 %v3314
        %v3522 = vunpack.c.l.b16 %v3315
        %v3523 = vunpack.c.l.b16 %v3316
        %v3524 = vunpack.c.l.b16 %v3317
        %v3525 = vunpack.c.l.b16 %v3318
        %v3526 = vunpack.c.l.b16 %v3319
        %v3527 = vunpack.c.l.b16 %v3320
        %v3528 = vunpack.c.l.b16 %v3321
        %v3529 = vunpack.c.l.b16 %v3322
        %v3530 = vunpack.c.l.b16 %v3323
        %v3531 = vunpack.c.l.b16 %v3324
        %v3532 = vunpack.c.l.b16 %v3325
        %v3533 = vunpack.c.l.b16 %v3326
        %v3534 = vunpack.c.l.b16 %v3327
        %v3535 = vunpack.c.l.b16 %v3328
        %v3536 = vunpack.c.l.b16 %v3329
        %v3537 = vunpack.c.l.b16 %v3330
        %v3538 = vunpack.c.l.b16 %v3331
        %v3539 = vunpack.c.l.b16 %v3332
        %v3540 = vunpack.c.l.b16 %v3333
        %v3541 = vunpack.c.l.b16 %v3334
        %v3542 = vunpack.c.l.b16 %v3335
        %v3543 = vunpack.c.l.b16 %v3336
        %v3544 = vunpack.c.l.b16 %v3337
        %v3545 = vunpack.c.l.b16 %v3338
        %v3546 = vunpack.c.l.b16 %v3339
        %v3547 = vunpack.c.l.b16 %v3340
        %v3548 = vunpack.c.l.b16 %v3341
        %v3549 = vunpack.c.l.b16 %v3342
        %v3550 = vunpack.c.l.b16 %v3343
        %v3551 = vunpack.c.l.b16 %v3344
        %v3552 = vunpack.c.l.b16 %v3345
        %v3553 = vunpack.c.l.b16 %v3346
        %v3554 = vunpack.c.l.b16 %v3347
        %v3555 = vunpack.c.l.b16 %v3348
        %v3556 = vunpack.c.l.b16 %v3349
        %v3557 = vunpack.c.l.b16 %v3350
        %v3558 = vunpack.c.l.b16 %v3351
        %v3559 = vunpack.c.l.b16 %v3352
        %v3560 = vunpack.c.l.b16 %v3353
        %v3561 = vunpack.c.l.b16 %v3354
        %v3562 = vunpack.c.l.b16 %v3355
        %v3563 = vunpack.c.l.b16 %v3356
        %v3564 = vunpack.c.l.b16 %v3357
        %v3565 = vunpack.c.l.b16 %v3358
        %v3566 = vunpack.c.l.b16 %v3359
        %v3567 = vunpack.c.l.b16 %v3360
        %v3568 = vunpack.c.l.b16 %v3361
        %v3569 = vunpack.c.l.b16 %v3362
        %v3570 = vunpack.c.l.b16 %v3363
        %v3571 = vunpack.c.l.b16 %v3364
        %v3572 = vunpack.c.l.b16 %v3365
        %v3573 = vunpack.c.l.b16 %v3366
        %v3574 = vunpack.c.l.b16 %v3367
        %v3575 = vunpack.c.l.b16 %v3368
        %v3576 = vunpack.c.l.b16 %v3369
        %v3577 = vunpack.c.l.b16 %v3370
        %v3578 = vunpack.c.l.b16 %v3371
        %v3579 = vunpack.c.l.b16 %v3372
        %v3580 = vunpack.c.l.b16 %v3373
        %v3581 = vunpack.c.l.b16 %v3374
        %v3582 = vunpack.c.l.b16 %v3375
        %v3583 = vunpack.c.l.b16 %v3376
        %v3584 = vunpack.c.l.b16 %v3377
        %v3585 = vunpack.c.l.b16 %v3378
        %v3586 = vpack.c.b16 %v3487, %v3486
        %v3587 = vpack.c.b16 %v3489, %v3488
        %v3588 = vpack.c.b16 %v3491, %v3490
        %v3589 = vpack.c.b16 %v3493, %v3492
        %v3590 = vpack.c.b16 %v3495, %v3494
        %v3591 = vpack.c.b16 %v3497, %v3496
        %v3592 = vpack.c.b16 %v3499, %v3498
        %v3593 = vpack.c.b16 %v3501, %v3500
        %v3594 = vpack.c.b16 %v3503, %v3502
        %v3595 = vpack.c.b16 %v3505, %v3504
        %v3596 = vpack.c.b16 %v3507, %v3506
        %v3597 = vpack.c.b16 %v3509, %v3508
        %v3598 = vpack.c.b16 %v3511, %v3510
        %v3599 = vpack.c.b16 %v3513, %v3512
        %v3600 = vpack.c.b16 %v3515, %v3514
        %v3601 = vpack.c.b16 %v3517, %v3516
        %v3602 = vpack.c.b16 %v3519, %v3518
        %v3603 = vpack.c.b16 %v3521, %v3520
        %v3604 = vpack.c.b16 %v3523, %v3522
        %v3605 = vpack.c.b16 %v3525, %v3524
        %v3606 = vpack.c.b16 %v3527, %v3526
        %v3607 = vpack.c.b16 %v3529, %v3528
        %v3608 = vpack.c.b16 %v3531, %v3530
        %v3609 = vpack.c.b16 %v3533, %v3532
        %v3610 = vpack.c.b16 %v3535, %v3534
        %v3611 = vpack.c.b16 %v3537, %v3536
        %v3612 = vpack.c.b16 %v3539, %v3538
        %v3613 = vpack.c.b16 %v3541, %v3540
        %v3614 = vpack.c.b16 %v3543, %v3542
        %v3615 = vpack.c.b16 %v3545, %v3544
        %v3616 = vpack.c.b16 %v3547, %v3546
        %v3617 = vpack.c.b16 %v3549, %v3548
        %v3618 = vpack.c.b16 %v3551, %v3550
        %v3619 = vpack.c.b16 %v3553, %v3552
        %v3620 = vpack.c.b16 %v3555, %v3554
        %v3621 = vpack.c.b16 %v3557, %v3556
        %v3622 = vpack.c.b16 %v3559, %v3558
        %v3623 = vpack.c.b16 %v3561, %v3560
        %v3624 = vpack.c.b16 %v3563, %v3562
        %v3625 = vpack.c.b16 %v3565, %v3564
        %v3626 = vpack.c.b16 %v3567, %v3566
        %v3627 = vpack.c.b16 %v3569, %v3568
        %v3628 = vpack.c.b16 %v3571, %v3570
        %v3629 = vpack.c.b16 %v3573, %v3572
        %v3630 = vpack.c.b16 %v3575, %v3574
        %v3631 = vpack.c.b16 %v3577, %v3576
        %v3632 = vpack.c.b16 %v3579, %v3578
        %v3633 = vpack.c.b16 %v3581, %v3580
        %v3634 = vpack.c.b16 %v3583, %v3582
        %v3635 = vpack.c.b16 %v3585, %v3584
        %v3687 = vsel %vm2741, %v3271, 0
        %v3690 = vsel %vm2741, %v3278, 0
        %3692 = vmatprep.subr.bf16.mxu0 0
        %3693 = vmatpush1.bf16.msra.mxu0 %v3586
        %3694 = vmatprep.subr.bf16.mxu0 0
        %3695 = vmatpush1.bf16.msra.mxu0 %v3587
        %3696 = vmatprep.subr.bf16.mxu0 0
        %3697 = vmatpush1.bf16.msra.mxu0 %v3588
        %3698 = vmatprep.subr.bf16.mxu0 0
        %3699 = vmatpush1.bf16.msra.mxu0 %v3589
        %3700 = vmatprep.subr.bf16.mxu0 0
        %3701 = vmatpush1.bf16.msra.mxu0 %v3590
        %3702 = vmatprep.subr.bf16.mxu0 0
        %3703 = vmatpush1.bf16.msra.mxu0 %v3591
        %3704 = vmatprep.subr.bf16.mxu0 0
        %3705 = vmatpush1.bf16.msra.mxu0 %v3592
        %3706 = vmatprep.subr.bf16.mxu0 0
        %3707 = vmatpush1.bf16.msra.mxu0 %v3593
        %3708 = vmatprep.subr.bf16.mxu0 0
        %3709 = vmatpush1.bf16.msra.mxu0 %v3594
        %3710 = vmatprep.subr.bf16.mxu0 0
        %3711 = vmatpush1.bf16.msra.mxu0 %v3595
        %3712 = vmatprep.subr.bf16.mxu0 0
        %3713 = vmatpush1.bf16.msra.mxu0 %v3596
        %3714 = vmatprep.subr.bf16.mxu0 0
        %3715 = vmatpush1.bf16.msra.mxu0 %v3597
        %3716 = vmatprep.subr.bf16.mxu0 0
        %3717 = vmatpush1.bf16.msra.mxu0 %v3598
        %3718 = vmatprep.subr.bf16.mxu0 0
        %3719 = vmatpush1.bf16.msra.mxu0 %v3599
        %3720 = vmatprep.subr.bf16.mxu0 0
        %3721 = vmatpush1.bf16.msra.mxu0 %v3600
        %3722 = vmatprep.subr.bf16.mxu0 0
        %3723 = vmatpush1.bf16.msra.mxu0 %v3601
        %3724 = vmatprep.mubr.bf16.mxu0 %v3266
        %3725 = vmatmul.mubr.bf16.gmra.mrb[0].mxu0 %v3265
        %v3726 = vpop.f32.mrb[0].mxu0
        %v3727 = vadd.f32 %v3384, %v3726
        %v3728 = vpop.f32.mrb[0].mxu0
        %v3729 = vpop.f32.mrb[0].mxu0
        %v3730 = vadd.f32 %v3384, %v3729
        %v3731 = vpop.f32.mrb[0].mxu0
        %3732 = vmatprep.mubr.bf16.mxu0 %v3273
        %3733 = vmatmul.mubr.bf16.gmra.mrb[0].mxu0 %v3272
        %v3734 = vpop.f32.mrb[0].mxu0
        %v3735 = vadd.f32 %v3384, %v3734
        %v3736 = vpop.f32.mrb[0].mxu0
        %v3737 = vpop.f32.mrb[0].mxu0
        %v3738 = vadd.f32 %v3384, %v3737
        %v3739 = vpop.f32.mrb[0].mxu0
        %3740 = vdwg.mxu0
        %3741 = vmatprep.subr.bf16.mxu0 0
        %3742 = vmatpush1.bf16.msra.mxu0 %v3602
        %3743 = vmatprep.subr.bf16.mxu0 0
        %3744 = vmatpush1.bf16.msra.mxu0 %v3603
        %3745 = vmatprep.subr.bf16.mxu0 0
        %3746 = vmatpush1.bf16.msra.mxu0 %v3604
        %3747 = vmatprep.subr.bf16.mxu0 0
        %3748 = vmatpush1.bf16.msra.mxu0 %v3605
        %3749 = vmatprep.subr.bf16.mxu0 0
        %3750 = vmatpush1.bf16.msra.mxu0 %v3606
        %3751 = vmatprep.subr.bf16.mxu0 0
        %3752 = vmatpush1.bf16.msra.mxu0 %v3607
        %3753 = vmatprep.subr.bf16.mxu0 0
        %3754 = vmatpush1.bf16.msra.mxu0 %v3608
        %3755 = vmatprep.subr.bf16.mxu0 0
        %3756 = vmatpush1.bf16.msra.mxu0 %v3609
        %3757 = vmatprep.subr.bf16.mxu0 0
        %3758 = vmatpush1.bf16.msra.mxu0 %v3610
        %3759 = vmatprep.subr.bf16.mxu0 0
        %3760 = vmatpush1.bf16.msra.mxu0 %v3611
        %3761 = vmatprep.subr.bf16.mxu0 0
        %3762 = vmatpush1.bf16.msra.mxu0 %v3612
        %3763 = vmatprep.subr.bf16.mxu0 0
        %3764 = vmatpush1.bf16.msra.mxu0 %v3613
        %3765 = vmatprep.subr.bf16.mxu0 0
        %3766 = vmatpush1.bf16.msra.mxu0 %v3614
        %3767 = vmatprep.subr.bf16.mxu0 0
        %3768 = vmatpush1.bf16.msra.mxu0 %v3615
        %3769 = vmatprep.subr.bf16.mxu0 0
        %3770 = vmatpush1.bf16.msra.mxu0 %v3616
        %3771 = vmatprep.subr.bf16.mxu0 0
        %3772 = vmatpush1.bf16.msra.mxu0 %v3617
        %3773 = vmatprep.mubr.bf16.mxu0 %v3268
        %3774 = vmatmul.mubr.bf16.gmra.mrb[0].mxu0 %v3267
        %v3775 = vpop.f32.mrb[0].mxu0
        %v3776 = vadd.f32 %v3727, %v3775
        %v3777 = vpop.f32.mrb[0].mxu0
        %v3778 = vpop.f32.mrb[0].mxu0
        %v3779 = vadd.f32 %v3730, %v3778
        %v3780 = vpop.f32.mrb[0].mxu0
        %3781 = vmatprep.mubr.bf16.mxu0 %v3275
        %3782 = vmatmul.mubr.bf16.gmra.mrb[0].mxu0 %v3274
        %v3783 = vpop.f32.mrb[0].mxu0
        %v3784 = vadd.f32 %v3735, %v3783
        %v3785 = vpop.f32.mrb[0].mxu0
        %v3786 = vpop.f32.mrb[0].mxu0
        %v3787 = vadd.f32 %v3738, %v3786
        %v3788 = vpop.f32.mrb[0].mxu0
        %3789 = vdwg.mxu0
        %3790 = vmatprep.subr.bf16.mxu0 0
        %3791 = vmatpush1.bf16.msra.mxu0 %v3618
        %3792 = vmatprep.subr.bf16.mxu0 0
        %3793 = vmatpush1.bf16.msra.mxu0 %v3619
        %3794 = vmatprep.subr.bf16.mxu0 0
        %3795 = vmatpush1.bf16.msra.mxu0 %v3620
        %3796 = vmatprep.subr.bf16.mxu0 0
        %3797 = vmatpush1.bf16.msra.mxu0 %v3621
        %3798 = vmatprep.subr.bf16.mxu0 0
        %3799 = vmatpush1.bf16.msra.mxu0 %v3622
        %3800 = vmatprep.subr.bf16.mxu0 0
        %3801 = vmatpush1.bf16.msra.mxu0 %v3623
        %3802 = vmatprep.subr.bf16.mxu0 0
        %3803 = vmatpush1.bf16.msra.mxu0 %v3624
        %3804 = vmatprep.subr.bf16.mxu0 0
        %3805 = vmatpush1.bf16.msra.mxu0 %v3625
        %3806 = vmatprep.subr.bf16.mxu0 0
        %3807 = vmatpush1.bf16.msra.mxu0 %v3626
        %3808 = vmatprep.subr.bf16.mxu0 0
        %3809 = vmatpush1.bf16.msra.mxu0 %v3627
        %3810 = vmatprep.subr.bf16.mxu0 0
        %3811 = vmatpush1.bf16.msra.mxu0 %v3628
        %3812 = vmatprep.subr.bf16.mxu0 0
        %3813 = vmatpush1.bf16.msra.mxu0 %v3629
        %3814 = vmatprep.subr.bf16.mxu0 0
        %3815 = vmatpush1.bf16.msra.mxu0 %v3630
        %3816 = vmatprep.subr.bf16.mxu0 0
        %3817 = vmatpush1.bf16.msra.mxu0 %v3631
        %3818 = vmatprep.subr.bf16.mxu0 0
        %3819 = vmatpush1.bf16.msra.mxu0 %v3632
        %3820 = vmatprep.subr.bf16.mxu0 0
        %3821 = vmatpush1.bf16.msra.mxu0 %v3633
        %3822 = vmatprep.mubr.bf16.mxu0 %v3270
        %3823 = vmatmul.mubr.bf16.gmra.mrb[0].mxu0 %v3269
        %v3824 = vpop.f32.mrb[0].mxu0
        %v3825 = vadd.f32 %v3776, %v3824
        %v3826 = vpop.f32.mrb[0].mxu0
        %v3827 = vpop.f32.mrb[0].mxu0
        %v3828 = vadd.f32 %v3779, %v3827
        %v3829 = vpop.f32.mrb[0].mxu0
        %3830 = vmatprep.mubr.bf16.mxu0 %v3277
        %3831 = vmatmul.mubr.bf16.gmra.mrb[0].mxu0 %v3276
        %v3832 = vpop.f32.mrb[0].mxu0
        %v3833 = vadd.f32 %v3784, %v3832
        %v3834 = vpop.f32.mrb[0].mxu0
        %v3835 = vpop.f32.mrb[0].mxu0
        %v3836 = vadd.f32 %v3787, %v3835
        %v3837 = vpop.f32.mrb[0].mxu0
        %3838 = vdwg.mxu0
        %3839 = vmatprep.subr.bf16.mxu0 0
        %3840 = vmatpush1.bf16.msra.mxu0 %v3634
        %3841 = vmatprep.subr.bf16.mxu0 0
        %3842 = vmatpush1.bf16.msra.mxu0 %v3635
        %3843 = vmatprep.subr.bf16.mxu0 0
        %3844 = vmatpush1.bf16.msra.mxu0 0
        %3845 = vmatprep.subr.bf16.mxu0 0
        %3846 = vmatpush1.bf16.msra.mxu0 0
        %3847 = vmatprep.subr.bf16.mxu0 0
        %3848 = vmatpush1.bf16.msra.mxu0 0
        %3849 = vmatprep.subr.bf16.mxu0 0
        %3850 = vmatpush1.bf16.msra.mxu0 0
        %3851 = vmatprep.subr.bf16.mxu0 0
        %3852 = vmatpush1.bf16.msra.mxu0 0
        %3853 = vmatprep.subr.bf16.mxu0 0
        %3854 = vmatpush1.bf16.msra.mxu0 0
        %3855 = vmatprep.subr.bf16.mxu0 0
        %3856 = vmatpush1.bf16.msra.mxu0 0
        %3857 = vmatprep.subr.bf16.mxu0 0
        %3858 = vmatpush1.bf16.msra.mxu0 0
        %3859 = vmatprep.subr.bf16.mxu0 0
        %3860 = vmatpush1.bf16.msra.mxu0 0
        %3861 = vmatprep.subr.bf16.mxu0 0
        %3862 = vmatpush1.bf16.msra.mxu0 0
        %3863 = vmatprep.subr.bf16.mxu0 0
        %3864 = vmatpush1.bf16.msra.mxu0 0
        %3865 = vmatprep.subr.bf16.mxu0 0
        %3866 = vmatpush1.bf16.msra.mxu0 0
        %3867 = vmatprep.subr.bf16.mxu0 0
        %3868 = vmatpush1.bf16.msra.mxu0 0
        %3869 = vmatprep.subr.bf16.mxu0 0
        %3870 = vmatpush1.bf16.msra.mxu0 0
        %3871 = vmatprep.mubr.bf16.mxu0 0
        %3872 = vmatmul.mubr.bf16.gmra.mrb[0].mxu0 %v3687
        %v3873 = vpop.f32.mrb[0].mxu0
        %v3874 = vadd.f32 %v3825, %v3873
        %v3875 = vpop.f32.mrb[0].mxu0
        %v3876 = vpop.f32.mrb[0].mxu0
        %v3877 = vadd.f32 %v3828, %v3876
        %v3878 = vpop.f32.mrb[0].mxu0
        %3879 = vmatprep.mubr.bf16.mxu0 0
        %3880 = vmatmul.mubr.bf16.gmra.mrb[0].mxu0 %v3690
        %v3881 = vpop.f32.mrb[0].mxu0
        %v3882 = vadd.f32 %v3833, %v3881
        %v3883 = vpop.f32.mrb[0].mxu0
        %v3884 = vpop.f32.mrb[0].mxu0
        %v3885 = vadd.f32 %v3836, %v3884
        %v3886 = vpop.f32.mrb[0].mxu0
        %3887 = vdwg.mxu0
        %v3888 = vld [vmem:[#allocation3] sm:$0xff]
        %v3889 = vld [vmem:[#allocation3 + $0x8] sm:$0xff]
        %v3890 = vld [vmem:[#allocation3 + $0x10] sm:$0xff]
        %v3891 = vld [vmem:[#allocation3 + $0x18] sm:$0xff]
        %v3892 = vmul.f32 %v3874, 0.5
        %v3893 = vmul.f32 %v3877, 0.5
        %v3894 = vmul.f32 %v3882, 0.5
        %v3895 = vmul.f32 %v3885, 0.5
        %v3896 = vtanh.pop %v3892
        %v3897 = vtanh.pop %v3893
        %v3898 = vtanh.pop %v3894
        %v3899 = vtanh.pop %v3895
        %v3900 = vmul.f32 %v3896, 0.5
        %v3901 = vmul.f32 %v3897, 0.5
        %v3902 = vmul.f32 %v3898, 0.5
        %v3903 = vmul.f32 %v3899, 0.5
        %v3904 = vadd.f32 %v3900, 0.5
        %v3905 = vadd.f32 %v3901, 0.5
        %v3906 = vadd.f32 %v3902, 0.5
        %v3907 = vadd.f32 %v3903, 0.5
        %v3908 = vtanh.pop %v3874
        %v3909 = vtanh.pop %v3877
        %v3910 = vtanh.pop %v3882
        %v3911 = vtanh.pop %v3885
        %v3912 = vmul.f32 %v3904, %v3888
        %v3913 = vmul.f32 %v3905, %v3889
        %v3914 = vmul.f32 %v3906, %v3890
        %v3915 = vmul.f32 %v3907, %v3891
        %3920 = vrot.lane.b32.xlu0 %v3908, 96
        %v3921 = vpop.permute.xlu0 %3920
        %3922 = vrot.lane.b32.xlu0 %v3909, 96
        %v3923 = vpop.permute.xlu0 %3922
        %3924 = vrot.lane.b32.xlu0 %v3910, 96
        %v3925 = vpop.permute.xlu0 %3924
        %3926 = vrot.lane.b32.xlu0 %v3911, 96
        %v3927 = vpop.permute.xlu0 %3926
        %v3932 = vmul.f32 %v3904, %v3921
        %v3933 = vmul.f32 %v3905, %v3923
        %v3934 = vmul.f32 %v3906, %v3925
        %v3935 = vmul.f32 %v3907, %v3927
        %3940 = vrot.lane.b32.xlu0 %v3932, 112
        %v3941 = vpop.permute.xlu0 %3940
        %3942 = vrot.lane.b32.xlu0 %v3933, 112
        %v3943 = vpop.permute.xlu0 %3942
        %3944 = vrot.lane.b32.xlu0 %v3934, 112
        %v3945 = vpop.permute.xlu0 %3944
        %3946 = vrot.lane.b32.xlu0 %v3935, 112
        %v3947 = vpop.permute.xlu0 %3946
        %v3952 = vadd.f32 %v3912, %v3941
        %v3953 = vadd.f32 %v3913, %v3943
        %v3954 = vadd.f32 %v3914, %v3945
        %v3955 = vadd.f32 %v3915, %v3947
        %v3956 = vtanh.pop %v3952
        %v3957 = vtanh.pop %v3953
        %v3958 = vtanh.pop %v3954
        %v3959 = vtanh.pop %v3955
        %3964 = vrot.lane.b32.xlu0 %v3956, 32
        %v3965 = vpop.permute.xlu0 %3964
        %3966 = vrot.lane.b32.xlu0 %v3957, 32
        %v3967 = vpop.permute.xlu0 %3966
        %3968 = vrot.lane.b32.xlu0 %v3958, 32
        %v3969 = vpop.permute.xlu0 %3968
        %3970 = vrot.lane.b32.xlu0 %v3959, 32
        %v3971 = vpop.permute.xlu0 %3970
        %v3976 = vmul.f32 %v3904, %v3965
        %v3977 = vmul.f32 %v3905, %v3967
        %v3978 = vmul.f32 %v3906, %v3969
        %v3979 = vmul.f32 %v3907, %v3971
        %3984 = vrot.lane.b32.xlu0 %v3976, 96
        %v3985 = vpop.permute.xlu0 %3984
        %3986 = vrot.lane.b32.xlu0 %v3977, 96
        %v3987 = vpop.permute.xlu0 %3986
        %3988 = vrot.lane.b32.xlu0 %v3978, 96
        %v3989 = vpop.permute.xlu0 %3988
        %3990 = vrot.lane.b32.xlu0 %v3979, 96
        %v3991 = vpop.permute.xlu0 %3990
        %3996 = vst.msk [vmem:[#allocation2] sm:$0xff] %vm869, %v3985
        %3997 = vst.msk [vmem:[#allocation2 + $0x8] sm:$0xff] %vm869, %v3987
        %3998 = vst.msk [vmem:[#allocation2 + $0x10] sm:$0xff] %vm869, %v3989
        %3999 = vst.msk [vmem:[#allocation2 + $0x18] sm:$0xff] %vm869, %v3991
        %4000 = vst.msk [vmem:[#allocation3] sm:$0xff] %vm869, %v3952
        %4001 = vst.msk [vmem:[#allocation3 + $0x8] sm:$0xff] %vm869, %v3953
        %4002 = vst.msk [vmem:[#allocation3 + $0x10] sm:$0xff] %vm869, %v3954
        %4003 = vst.msk [vmem:[#allocation3 + $0x18] sm:$0xff] %vm869, %v3955
        %v4004 = vmul.f32 %v3976, %v853
        %v4005 = vmul.f32 %v3977, %v854
        %v4006 = vmul.f32 %v3978, %v855
        %v4007 = vmul.f32 %v3979, %v856
        %4012 = vrot.lane.b32.xlu0 %v4004, 96
        %v4013 = vpop.permute.xlu0 %4012
        %4014 = vrot.lane.b32.xlu0 %v4005, 96
        %v4015 = vpop.permute.xlu0 %4014
        %4016 = vrot.lane.b32.xlu0 %v4006, 96
        %v4017 = vpop.permute.xlu0 %4016
        %4018 = vrot.lane.b32.xlu0 %v4007, 96
        %v4019 = vpop.permute.xlu0 %4018
        %4024 = vst.msk [vmem:[#allocation8 + $0x18] sm:$0xff] %vm869, %v4013
        %4025 = vst.msk [vmem:[#allocation8 + $0x20] sm:$0xff] %vm869, %v4015
        %4026 = vst.msk [vmem:[#allocation8 + $0x28] sm:$0xff] %vm869, %v4017
        %4027 = vst.msk [vmem:[#allocation8 + $0x30] sm:$0xff] %vm869, %v4019
        %v4028 = vld [vmem:[#allocation8 + $0x6] sm:$0xff]
        %v4029 = vld [vmem:[#allocation8 + $0xe] sm:$0xff]
        %v4030 = vld [vmem:[#allocation8 + $0x16] sm:$0xff]
        %v4031 = vld [vmem:[#allocation8 + $0x1e] sm:$0xff]
        %4032 = vst.msk [vmem:[#allocation9] sm:$0xff] %vm869, %v4028
        %4033 = vst.msk [vmem:[#allocation9 + $0x38] sm:$0xff] %vm869, %v4029
        %4034 = vst.msk [vmem:[#allocation9 + $0x70] sm:$0xff] %vm869, %v4030
        %4035 = vst.msk [vmem:[#allocation9 + $0xa8] sm:$0xff] %vm869, %v4031
        %v4036 = vld [vmem:[#allocation8 + $0x7] sm:$0xff]
        %v4037 = vld [vmem:[#allocation8 + $0xf] sm:$0xff]
        %v4038 = vld [vmem:[#allocation8 + $0x17] sm:$0xff]
        %v4039 = vld [vmem:[#allocation8 + $0x1f] sm:$0xff]
        %4044 = vrot.lane.b32.xlu0 %v4036, 16
        %v4045 = vpop.permute.xlu0 %4044
        %4046 = vrot.lane.b32.xlu0 %v4037, 16
        %v4047 = vpop.permute.xlu0 %4046
        %4048 = vrot.lane.b32.xlu0 %v4038, 16
        %v4049 = vpop.permute.xlu0 %4048
        %4050 = vrot.lane.b32.xlu0 %v4039, 16
        %v4051 = vpop.permute.xlu0 %4050
        %4056 = vst.msk [vmem:[#allocation9] sm:$0xff] %vm902, %v4045
        %4057 = vst.msk [vmem:[#allocation9 + $0x38] sm:$0xff] %vm902, %v4047
        %4058 = vst.msk [vmem:[#allocation9 + $0x70] sm:$0xff] %vm902, %v4049
        %4059 = vst.msk [vmem:[#allocation9 + $0xa8] sm:$0xff] %vm902, %v4051
        %v4060 = vld [vmem:[#allocation8 + $0x8] sm:$0xff]
        %v4061 = vld [vmem:[#allocation8 + $0x10] sm:$0xff]
        %v4062 = vld [vmem:[#allocation8 + $0x18] sm:$0xff]
        %v4063 = vld [vmem:[#allocation8 + $0x20] sm:$0xff]
        %4068 = vrot.lane.b32.xlu0 %v4060, 32
        %v4069 = vpop.permute.xlu0 %4068
        %4070 = vrot.lane.b32.xlu0 %v4061, 32
        %v4071 = vpop.permute.xlu0 %4070
        %4072 = vrot.lane.b32.xlu0 %v4062, 32
        %v4073 = vpop.permute.xlu0 %4072
        %4074 = vrot.lane.b32.xlu0 %v4063, 32
        %v4075 = vpop.permute.xlu0 %4074
        %4080 = vst.msk [vmem:[#allocation9] sm:$0xff] %vm927, %v4069
        %4081 = vst.msk [vmem:[#allocation9 + $0x38] sm:$0xff] %vm927, %v4071
        %4082 = vst.msk [vmem:[#allocation9 + $0x70] sm:$0xff] %vm927, %v4073
        %4083 = vst.msk [vmem:[#allocation9 + $0xa8] sm:$0xff] %vm927, %v4075
        %v4084 = vld [vmem:[#allocation8 + $0x9] sm:$0xff]
        %v4085 = vld [vmem:[#allocation8 + $0x11] sm:$0xff]
        %v4086 = vld [vmem:[#allocation8 + $0x19] sm:$0xff]
        %v4087 = vld [vmem:[#allocation8 + $0x21] sm:$0xff]
        %4092 = vrot.lane.b32.xlu0 %v4084, 48
        %v4093 = vpop.permute.xlu0 %4092
        %4094 = vrot.lane.b32.xlu0 %v4085, 48
        %v4095 = vpop.permute.xlu0 %4094
        %4096 = vrot.lane.b32.xlu0 %v4086, 48
        %v4097 = vpop.permute.xlu0 %4096
        %4098 = vrot.lane.b32.xlu0 %v4087, 48
        %v4099 = vpop.permute.xlu0 %4098
        %4104 = vst.msk [vmem:[#allocation9] sm:$0xff] %vm952, %v4093
        %4105 = vst.msk [vmem:[#allocation9 + $0x38] sm:$0xff] %vm952, %v4095
        %4106 = vst.msk [vmem:[#allocation9 + $0x70] sm:$0xff] %vm952, %v4097
        %4107 = vst.msk [vmem:[#allocation9 + $0xa8] sm:$0xff] %vm952, %v4099
        %v4108 = vld [vmem:[#allocation8 + $0xa] sm:$0xff]
        %v4109 = vld [vmem:[#allocation8 + $0x12] sm:$0xff]
        %v4110 = vld [vmem:[#allocation8 + $0x1a] sm:$0xff]
        %v4111 = vld [vmem:[#allocation8 + $0x22] sm:$0xff]
        %4116 = vrot.lane.b32.xlu0 %v4108, 64
        %v4117 = vpop.permute.xlu0 %4116
        %4118 = vrot.lane.b32.xlu0 %v4109, 64
        %v4119 = vpop.permute.xlu0 %4118
        %4120 = vrot.lane.b32.xlu0 %v4110, 64
        %v4121 = vpop.permute.xlu0 %4120
        %4122 = vrot.lane.b32.xlu0 %v4111, 64
        %v4123 = vpop.permute.xlu0 %4122
        %4128 = vst.msk [vmem:[#allocation9] sm:$0xff] %vm977, %v4117
        %4129 = vst.msk [vmem:[#allocation9 + $0x38] sm:$0xff] %vm977, %v4119
        %4130 = vst.msk [vmem:[#allocation9 + $0x70] sm:$0xff] %vm977, %v4121
        %4131 = vst.msk [vmem:[#allocation9 + $0xa8] sm:$0xff] %vm977, %v4123
        %v4132 = vld [vmem:[#allocation8 + $0xe] sm:$0xff]
        %v4133 = vld [vmem:[#allocation8 + $0x16] sm:$0xff]
        %v4134 = vld [vmem:[#allocation8 + $0x1e] sm:$0xff]
        %v4135 = vld [vmem:[#allocation8 + $0x26] sm:$0xff]
        %4140 = vrot.lane.b32.xlu0 %v4132, 80
        %v4141 = vpop.permute.xlu0 %4140
        %4142 = vrot.lane.b32.xlu0 %v4133, 80
        %v4143 = vpop.permute.xlu0 %4142
        %4144 = vrot.lane.b32.xlu0 %v4134, 80
        %v4145 = vpop.permute.xlu0 %4144
        %4146 = vrot.lane.b32.xlu0 %v4135, 80
        %v4147 = vpop.permute.xlu0 %4146
        %4152 = vst.msk [vmem:[#allocation9] sm:$0xff] %vm1002, %v4141
        %4153 = vst.msk [vmem:[#allocation9 + $0x38] sm:$0xff] %vm1002, %v4143
        %4154 = vst.msk [vmem:[#allocation9 + $0x70] sm:$0xff] %vm1002, %v4145
        %4155 = vst.msk [vmem:[#allocation9 + $0xa8] sm:$0xff] %vm1002, %v4147
        %v4156 = vld [vmem:[#allocation8 + $0xf] sm:$0xff]
        %v4157 = vld [vmem:[#allocation8 + $0x17] sm:$0xff]
        %v4158 = vld [vmem:[#allocation8 + $0x1f] sm:$0xff]
        %v4159 = vld [vmem:[#allocation8 + $0x27] sm:$0xff]
        %4164 = vrot.lane.b32.xlu0 %v4156, 96
        %v4165 = vpop.permute.xlu0 %4164
        %4166 = vrot.lane.b32.xlu0 %v4157, 96
        %v4167 = vpop.permute.xlu0 %4166
        %4168 = vrot.lane.b32.xlu0 %v4158, 96
        %v4169 = vpop.permute.xlu0 %4168
        %4170 = vrot.lane.b32.xlu0 %v4159, 96
        %v4171 = vpop.permute.xlu0 %4170
        %4176 = vst.msk [vmem:[#allocation9] sm:$0xff] %vm1027, %v4165
        %4177 = vst.msk [vmem:[#allocation9 + $0x38] sm:$0xff] %vm1027, %v4167
        %4178 = vst.msk [vmem:[#allocation9 + $0x70] sm:$0xff] %vm1027, %v4169
        %4179 = vst.msk [vmem:[#allocation9 + $0xa8] sm:$0xff] %vm1027, %v4171
        %v4180 = vld [vmem:[#allocation8 + $0x10] sm:$0xff]
        %v4181 = vld [vmem:[#allocation8 + $0x18] sm:$0xff]
        %v4182 = vld [vmem:[#allocation8 + $0x20] sm:$0xff]
        %v4183 = vld [vmem:[#allocation8 + $0x28] sm:$0xff]
        %4188 = vrot.lane.b32.xlu0 %v4180, 112
        %v4189 = vpop.permute.xlu0 %4188
        %4190 = vrot.lane.b32.xlu0 %v4181, 112
        %v4191 = vpop.permute.xlu0 %4190
        %4192 = vrot.lane.b32.xlu0 %v4182, 112
        %v4193 = vpop.permute.xlu0 %4192
        %4194 = vrot.lane.b32.xlu0 %v4183, 112
        %v4195 = vpop.permute.xlu0 %4194
        %4200 = vst.msk [vmem:[#allocation9] sm:$0xff] %vm1052, %v4189
        %4201 = vst.msk [vmem:[#allocation9 + $0x38] sm:$0xff] %vm1052, %v4191
        %4202 = vst.msk [vmem:[#allocation9 + $0x70] sm:$0xff] %vm1052, %v4193
        %4203 = vst.msk [vmem:[#allocation9 + $0xa8] sm:$0xff] %vm1052, %v4195
        %v4204 = vld [vmem:[#allocation8 + $0x11] sm:$0xff]
        %v4205 = vld [vmem:[#allocation8 + $0x19] sm:$0xff]
        %v4206 = vld [vmem:[#allocation8 + $0x21] sm:$0xff]
        %v4207 = vld [vmem:[#allocation8 + $0x29] sm:$0xff]
        %4208 = vst.msk [vmem:[#allocation9 + $0x8] sm:$0xff] %vm869, %v4204
        %4209 = vst.msk [vmem:[#allocation9 + $0x40] sm:$0xff] %vm869, %v4205
        %4210 = vst.msk [vmem:[#allocation9 + $0x78] sm:$0xff] %vm869, %v4206
        %4211 = vst.msk [vmem:[#allocation9 + $0xb0] sm:$0xff] %vm869, %v4207
        %v4212 = vld [vmem:[#allocation8 + $0x12] sm:$0xff]
        %v4213 = vld [vmem:[#allocation8 + $0x1a] sm:$0xff]
        %v4214 = vld [vmem:[#allocation8 + $0x22] sm:$0xff]
        %v4215 = vld [vmem:[#allocation8 + $0x2a] sm:$0xff]
        %4220 = vrot.lane.b32.xlu0 %v4212, 16
        %v4221 = vpop.permute.xlu0 %4220
        %4222 = vrot.lane.b32.xlu0 %v4213, 16
        %v4223 = vpop.permute.xlu0 %4222
        %4224 = vrot.lane.b32.xlu0 %v4214, 16
        %v4225 = vpop.permute.xlu0 %4224
        %4226 = vrot.lane.b32.xlu0 %v4215, 16
        %v4227 = vpop.permute.xlu0 %4226
        %4232 = vst.msk [vmem:[#allocation9 + $0x8] sm:$0xff] %vm902, %v4221
        %4233 = vst.msk [vmem:[#allocation9 + $0x40] sm:$0xff] %vm902, %v4223
        %4234 = vst.msk [vmem:[#allocation9 + $0x78] sm:$0xff] %vm902, %v4225
        %4235 = vst.msk [vmem:[#allocation9 + $0xb0] sm:$0xff] %vm902, %v4227
        %v4236 = vld [vmem:[#allocation8 + $0x16] sm:$0xff]
        %v4237 = vld [vmem:[#allocation8 + $0x1e] sm:$0xff]
        %v4238 = vld [vmem:[#allocation8 + $0x26] sm:$0xff]
        %v4239 = vld [vmem:[#allocation8 + $0x2e] sm:$0xff]
        %4244 = vrot.lane.b32.xlu0 %v4236, 32
        %v4245 = vpop.permute.xlu0 %4244
        %4246 = vrot.lane.b32.xlu0 %v4237, 32
        %v4247 = vpop.permute.xlu0 %4246
        %4248 = vrot.lane.b32.xlu0 %v4238, 32
        %v4249 = vpop.permute.xlu0 %4248
        %4250 = vrot.lane.b32.xlu0 %v4239, 32
        %v4251 = vpop.permute.xlu0 %4250
        %4256 = vst.msk [vmem:[#allocation9 + $0x8] sm:$0xff] %vm927, %v4245
        %4257 = vst.msk [vmem:[#allocation9 + $0x40] sm:$0xff] %vm927, %v4247
        %4258 = vst.msk [vmem:[#allocation9 + $0x78] sm:$0xff] %vm927, %v4249
        %4259 = vst.msk [vmem:[#allocation9 + $0xb0] sm:$0xff] %vm927, %v4251
        %v4260 = vld [vmem:[#allocation8 + $0x17] sm:$0xff]
        %v4261 = vld [vmem:[#allocation8 + $0x1f] sm:$0xff]
        %v4262 = vld [vmem:[#allocation8 + $0x27] sm:$0xff]
        %v4263 = vld [vmem:[#allocation8 + $0x2f] sm:$0xff]
        %4268 = vrot.lane.b32.xlu0 %v4260, 48
        %v4269 = vpop.permute.xlu0 %4268
        %4270 = vrot.lane.b32.xlu0 %v4261, 48
        %v4271 = vpop.permute.xlu0 %4270
        %4272 = vrot.lane.b32.xlu0 %v4262, 48
        %v4273 = vpop.permute.xlu0 %4272
        %4274 = vrot.lane.b32.xlu0 %v4263, 48
        %v4275 = vpop.permute.xlu0 %4274
        %4280 = vst.msk [vmem:[#allocation9 + $0x8] sm:$0xff] %vm952, %v4269
        %4281 = vst.msk [vmem:[#allocation9 + $0x40] sm:$0xff] %vm952, %v4271
        %4282 = vst.msk [vmem:[#allocation9 + $0x78] sm:$0xff] %vm952, %v4273
        %4283 = vst.msk [vmem:[#allocation9 + $0xb0] sm:$0xff] %vm952, %v4275
        %v4284 = vld [vmem:[#allocation8 + $0x18] sm:$0xff]
        %v4285 = vld [vmem:[#allocation8 + $0x20] sm:$0xff]
        %v4286 = vld [vmem:[#allocation8 + $0x28] sm:$0xff]
        %v4287 = vld [vmem:[#allocation8 + $0x30] sm:$0xff]
        %4292 = vrot.lane.b32.xlu0 %v4284, 64
        %v4293 = vpop.permute.xlu0 %4292
        %4294 = vrot.lane.b32.xlu0 %v4285, 64
        %v4295 = vpop.permute.xlu0 %4294
        %4296 = vrot.lane.b32.xlu0 %v4286, 64
        %v4297 = vpop.permute.xlu0 %4296
        %4298 = vrot.lane.b32.xlu0 %v4287, 64
        %v4299 = vpop.permute.xlu0 %4298
        %4304 = vst.msk [vmem:[#allocation9 + $0x8] sm:$0xff] %vm977, %v4293
        %4305 = vst.msk [vmem:[#allocation9 + $0x40] sm:$0xff] %vm977, %v4295
        %4306 = vst.msk [vmem:[#allocation9 + $0x78] sm:$0xff] %vm977, %v4297
        %4307 = vst.msk [vmem:[#allocation9 + $0xb0] sm:$0xff] %vm977, %v4299
        %v4308 = vld [vmem:[#allocation8 + $0x19] sm:$0xff]
        %v4309 = vld [vmem:[#allocation8 + $0x21] sm:$0xff]
        %v4310 = vld [vmem:[#allocation8 + $0x29] sm:$0xff]
        %v4311 = vld [vmem:[#allocation8 + $0x31] sm:$0xff]
        %4316 = vrot.lane.b32.xlu0 %v4308, 80
        %v4317 = vpop.permute.xlu0 %4316
        %4318 = vrot.lane.b32.xlu0 %v4309, 80
        %v4319 = vpop.permute.xlu0 %4318
        %4320 = vrot.lane.b32.xlu0 %v4310, 80
        %v4321 = vpop.permute.xlu0 %4320
        %4322 = vrot.lane.b32.xlu0 %v4311, 80
        %v4323 = vpop.permute.xlu0 %4322
        %4328 = vst.msk [vmem:[#allocation9 + $0x8] sm:$0xff] %vm1002, %v4317
        %4329 = vst.msk [vmem:[#allocation9 + $0x40] sm:$0xff] %vm1002, %v4319
        %4330 = vst.msk [vmem:[#allocation9 + $0x78] sm:$0xff] %vm1002, %v4321
        %4331 = vst.msk [vmem:[#allocation9 + $0xb0] sm:$0xff] %vm1002, %v4323
        %v4332 = vld [vmem:[#allocation8 + $0x1a] sm:$0xff]
        %v4333 = vld [vmem:[#allocation8 + $0x22] sm:$0xff]
        %v4334 = vld [vmem:[#allocation8 + $0x2a] sm:$0xff]
        %v4335 = vld [vmem:[#allocation8 + $0x32] sm:$0xff]
        %4340 = vrot.lane.b32.xlu0 %v4332, 96
        %v4341 = vpop.permute.xlu0 %4340
        %4342 = vrot.lane.b32.xlu0 %v4333, 96
        %v4343 = vpop.permute.xlu0 %4342
        %4344 = vrot.lane.b32.xlu0 %v4334, 96
        %v4345 = vpop.permute.xlu0 %4344
        %4346 = vrot.lane.b32.xlu0 %v4335, 96
        %v4347 = vpop.permute.xlu0 %4346
        %4352 = vst.msk [vmem:[#allocation9 + $0x8] sm:$0xff] %vm1027, %v4341
        %4353 = vst.msk [vmem:[#allocation9 + $0x40] sm:$0xff] %vm1027, %v4343
        %4354 = vst.msk [vmem:[#allocation9 + $0x78] sm:$0xff] %vm1027, %v4345
        %4355 = vst.msk [vmem:[#allocation9 + $0xb0] sm:$0xff] %vm1027, %v4347
        %v4356 = vld [vmem:[#allocation8 + $0x1e] sm:$0xff]
        %v4357 = vld [vmem:[#allocation8 + $0x26] sm:$0xff]
        %v4358 = vld [vmem:[#allocation8 + $0x2e] sm:$0xff]
        %v4359 = vld [vmem:[#allocation8 + $0x36] sm:$0xff]
        %4364 = vrot.lane.b32.xlu0 %v4356, 112
        %v4365 = vpop.permute.xlu0 %4364
        %4366 = vrot.lane.b32.xlu0 %v4357, 112
        %v4367 = vpop.permute.xlu0 %4366
        %4368 = vrot.lane.b32.xlu0 %v4358, 112
        %v4369 = vpop.permute.xlu0 %4368
        %4370 = vrot.lane.b32.xlu0 %v4359, 112
        %v4371 = vpop.permute.xlu0 %4370
        %4376 = vst.msk [vmem:[#allocation9 + $0x8] sm:$0xff] %vm1052, %v4365
        %4377 = vst.msk [vmem:[#allocation9 + $0x40] sm:$0xff] %vm1052, %v4367
        %4378 = vst.msk [vmem:[#allocation9 + $0x78] sm:$0xff] %vm1052, %v4369
        %4379 = vst.msk [vmem:[#allocation9 + $0xb0] sm:$0xff] %vm1052, %v4371
        %v4380 = vld [vmem:[#allocation8 + $0x1f] sm:$0xff]
        %v4381 = vld [vmem:[#allocation8 + $0x27] sm:$0xff]
        %v4382 = vld [vmem:[#allocation8 + $0x2f] sm:$0xff]
        %v4383 = vld [vmem:[#allocation8 + $0x37] sm:$0xff]
        %4384 = vst.msk [vmem:[#allocation9 + $0x10] sm:$0xff] %vm869, %v4380
        %4385 = vst.msk [vmem:[#allocation9 + $0x48] sm:$0xff] %vm869, %v4381
        %4386 = vst.msk [vmem:[#allocation9 + $0x80] sm:$0xff] %vm869, %v4382
        %4387 = vst.msk [vmem:[#allocation9 + $0xb8] sm:$0xff] %vm869, %v4383
        %v4388 = vld [vmem:[#allocation8 + $0x20] sm:$0xff]
        %v4389 = vld [vmem:[#allocation8 + $0x28] sm:$0xff]
        %v4390 = vld [vmem:[#allocation8 + $0x30] sm:$0xff]
        %v4391 = vld [vmem:[#allocation8 + $0x38] sm:$0xff]
        %4396 = vrot.lane.b32.xlu0 %v4388, 16
        %v4397 = vpop.permute.xlu0 %4396
        %4398 = vrot.lane.b32.xlu0 %v4389, 16
        %v4399 = vpop.permute.xlu0 %4398
        %4400 = vrot.lane.b32.xlu0 %v4390, 16
        %v4401 = vpop.permute.xlu0 %4400
        %4402 = vrot.lane.b32.xlu0 %v4391, 16
        %v4403 = vpop.permute.xlu0 %4402
        %4408 = vst.msk [vmem:[#allocation9 + $0x10] sm:$0xff] %vm902, %v4397
        %4409 = vst.msk [vmem:[#allocation9 + $0x48] sm:$0xff] %vm902, %v4399
        %4410 = vst.msk [vmem:[#allocation9 + $0x80] sm:$0xff] %vm902, %v4401
        %4411 = vst.msk [vmem:[#allocation9 + $0xb8] sm:$0xff] %vm902, %v4403
        %v4412 = vld [vmem:[#allocation8 + $0x21] sm:$0xff]
        %v4413 = vld [vmem:[#allocation8 + $0x29] sm:$0xff]
        %v4414 = vld [vmem:[#allocation8 + $0x31] sm:$0xff]
        %v4415 = vld [vmem:[#allocation8 + $0x39] sm:$0xff]
        %4420 = vrot.lane.b32.xlu0 %v4412, 32
        %v4421 = vpop.permute.xlu0 %4420
        %4422 = vrot.lane.b32.xlu0 %v4413, 32
        %v4423 = vpop.permute.xlu0 %4422
        %4424 = vrot.lane.b32.xlu0 %v4414, 32
        %v4425 = vpop.permute.xlu0 %4424
        %4426 = vrot.lane.b32.xlu0 %v4415, 32
        %v4427 = vpop.permute.xlu0 %4426
        %4432 = vst.msk [vmem:[#allocation9 + $0x10] sm:$0xff] %vm927, %v4421
        %4433 = vst.msk [vmem:[#allocation9 + $0x48] sm:$0xff] %vm927, %v4423
        %4434 = vst.msk [vmem:[#allocation9 + $0x80] sm:$0xff] %vm927, %v4425
        %4435 = vst.msk [vmem:[#allocation9 + $0xb8] sm:$0xff] %vm927, %v4427
        %v4436 = vld [vmem:[#allocation8 + $0x22] sm:$0xff]
        %v4437 = vld [vmem:[#allocation8 + $0x2a] sm:$0xff]
        %v4438 = vld [vmem:[#allocation8 + $0x32] sm:$0xff]
        %v4439 = vld [vmem:[#allocation8 + $0x3a] sm:$0xff]
        %4444 = vrot.lane.b32.xlu0 %v4436, 48
        %v4445 = vpop.permute.xlu0 %4444
        %4446 = vrot.lane.b32.xlu0 %v4437, 48
        %v4447 = vpop.permute.xlu0 %4446
        %4448 = vrot.lane.b32.xlu0 %v4438, 48
        %v4449 = vpop.permute.xlu0 %4448
        %4450 = vrot.lane.b32.xlu0 %v4439, 48
        %v4451 = vpop.permute.xlu0 %4450
        %4456 = vst.msk [vmem:[#allocation9 + $0x10] sm:$0xff] %vm952, %v4445
        %4457 = vst.msk [vmem:[#allocation9 + $0x48] sm:$0xff] %vm952, %v4447
        %4458 = vst.msk [vmem:[#allocation9 + $0x80] sm:$0xff] %vm952, %v4449
        %4459 = vst.msk [vmem:[#allocation9 + $0xb8] sm:$0xff] %vm952, %v4451
        %v4460 = vld [vmem:[#allocation8 + $0x26] sm:$0xff]
        %v4461 = vld [vmem:[#allocation8 + $0x2e] sm:$0xff]
        %v4462 = vld [vmem:[#allocation8 + $0x36] sm:$0xff]
        %v4463 = vld [vmem:[#allocation8 + $0x3e] sm:$0xff]
        %4468 = vrot.lane.b32.xlu0 %v4460, 64
        %v4469 = vpop.permute.xlu0 %4468
        %4470 = vrot.lane.b32.xlu0 %v4461, 64
        %v4471 = vpop.permute.xlu0 %4470
        %4472 = vrot.lane.b32.xlu0 %v4462, 64
        %v4473 = vpop.permute.xlu0 %4472
        %4474 = vrot.lane.b32.xlu0 %v4463, 64
        %v4475 = vpop.permute.xlu0 %4474
        %4480 = vst.msk [vmem:[#allocation9 + $0x10] sm:$0xff] %vm977, %v4469
        %4481 = vst.msk [vmem:[#allocation9 + $0x48] sm:$0xff] %vm977, %v4471
        %4482 = vst.msk [vmem:[#allocation9 + $0x80] sm:$0xff] %vm977, %v4473
        %4483 = vst.msk [vmem:[#allocation9 + $0xb8] sm:$0xff] %vm977, %v4475
        %v4484 = vld [vmem:[#allocation8 + $0x27] sm:$0xff]
        %v4485 = vld [vmem:[#allocation8 + $0x2f] sm:$0xff]
        %v4486 = vld [vmem:[#allocation8 + $0x37] sm:$0xff]
        %v4487 = vld [vmem:[#allocation8 + $0x3f] sm:$0xff]
        %4492 = vrot.lane.b32.xlu0 %v4484, 80
        %v4493 = vpop.permute.xlu0 %4492
        %4494 = vrot.lane.b32.xlu0 %v4485, 80
        %v4495 = vpop.permute.xlu0 %4494
        %4496 = vrot.lane.b32.xlu0 %v4486, 80
        %v4497 = vpop.permute.xlu0 %4496
        %4498 = vrot.lane.b32.xlu0 %v4487, 80
        %v4499 = vpop.permute.xlu0 %4498
        %4504 = vst.msk [vmem:[#allocation9 + $0x10] sm:$0xff] %vm1002, %v4493
        %4505 = vst.msk [vmem:[#allocation9 + $0x48] sm:$0xff] %vm1002, %v4495
        %4506 = vst.msk [vmem:[#allocation9 + $0x80] sm:$0xff] %vm1002, %v4497
        %4507 = vst.msk [vmem:[#allocation9 + $0xb8] sm:$0xff] %vm1002, %v4499
        %v4508 = vld [vmem:[#allocation8 + $0x28] sm:$0xff]
        %v4509 = vld [vmem:[#allocation8 + $0x30] sm:$0xff]
        %v4510 = vld [vmem:[#allocation8 + $0x38] sm:$0xff]
        %v4511 = vld [vmem:[#allocation8 + $0x40] sm:$0xff]
        %4516 = vrot.lane.b32.xlu0 %v4508, 96
        %v4517 = vpop.permute.xlu0 %4516
        %4518 = vrot.lane.b32.xlu0 %v4509, 96
        %v4519 = vpop.permute.xlu0 %4518
        %4520 = vrot.lane.b32.xlu0 %v4510, 96
        %v4521 = vpop.permute.xlu0 %4520
        %4522 = vrot.lane.b32.xlu0 %v4511, 96
        %v4523 = vpop.permute.xlu0 %4522
        %4528 = vst.msk [vmem:[#allocation9 + $0x10] sm:$0xff] %vm1027, %v4517
        %4529 = vst.msk [vmem:[#allocation9 + $0x48] sm:$0xff] %vm1027, %v4519
        %4530 = vst.msk [vmem:[#allocation9 + $0x80] sm:$0xff] %vm1027, %v4521
        %4531 = vst.msk [vmem:[#allocation9 + $0xb8] sm:$0xff] %vm1027, %v4523
        %v4532 = vld [vmem:[#allocation8 + $0x29] sm:$0xff]
        %v4533 = vld [vmem:[#allocation8 + $0x31] sm:$0xff]
        %v4534 = vld [vmem:[#allocation8 + $0x39] sm:$0xff]
        %v4535 = vld [vmem:[#allocation8 + $0x41] sm:$0xff]
        %4540 = vrot.lane.b32.xlu0 %v4532, 112
        %v4541 = vpop.permute.xlu0 %4540
        %4542 = vrot.lane.b32.xlu0 %v4533, 112
        %v4543 = vpop.permute.xlu0 %4542
        %4544 = vrot.lane.b32.xlu0 %v4534, 112
        %v4545 = vpop.permute.xlu0 %4544
        %4546 = vrot.lane.b32.xlu0 %v4535, 112
        %v4547 = vpop.permute.xlu0 %4546
        %4552 = vst.msk [vmem:[#allocation9 + $0x10] sm:$0xff] %vm1052, %v4541
        %4553 = vst.msk [vmem:[#allocation9 + $0x48] sm:$0xff] %vm1052, %v4543
        %4554 = vst.msk [vmem:[#allocation9 + $0x80] sm:$0xff] %vm1052, %v4545
        %4555 = vst.msk [vmem:[#allocation9 + $0xb8] sm:$0xff] %vm1052, %v4547
        %v4556 = vld [vmem:[#allocation8 + $0x2a] sm:$0xff]
        %v4557 = vld [vmem:[#allocation8 + $0x32] sm:$0xff]
        %v4558 = vld [vmem:[#allocation8 + $0x3a] sm:$0xff]
        %v4559 = vld [vmem:[#allocation8 + $0x42] sm:$0xff]
        %4560 = vst.msk [vmem:[#allocation9 + $0x18] sm:$0xff] %vm869, %v4556
        %4561 = vst.msk [vmem:[#allocation9 + $0x50] sm:$0xff] %vm869, %v4557
        %4562 = vst.msk [vmem:[#allocation9 + $0x88] sm:$0xff] %vm869, %v4558
        %4563 = vst.msk [vmem:[#allocation9 + $0xc0] sm:$0xff] %vm869, %v4559
        %v4564 = vld [vmem:[#allocation9] sm:$0xff]
        %v4565 = vld [vmem:[#allocation9 + $0x8] sm:$0xff]
        %v4566 = vld [vmem:[#allocation9 + $0x10] sm:$0xff]
        %v4567 = vld [vmem:[#allocation9 + $0x18] sm:$0xff]
        %v4568 = vld [vmem:[#allocation9 + $0x38] sm:$0xff]
        %v4569 = vld [vmem:[#allocation9 + $0x40] sm:$0xff]
        %v4570 = vld [vmem:[#allocation9 + $0x48] sm:$0xff]
        %v4571 = vld [vmem:[#allocation9 + $0x50] sm:$0xff]
        %v4572 = vld [vmem:[#allocation9 + $0x70] sm:$0xff]
        %v4573 = vld [vmem:[#allocation9 + $0x78] sm:$0xff]
        %v4574 = vld [vmem:[#allocation9 + $0x80] sm:$0xff]
        %v4575 = vld [vmem:[#allocation9 + $0x88] sm:$0xff]
        %v4576 = vld [vmem:[#allocation9 + $0xa8] sm:$0xff]
        %v4577 = vld [vmem:[#allocation9 + $0xb0] sm:$0xff]
        %v4578 = vld [vmem:[#allocation9 + $0xb8] sm:$0xff]
        %v4579 = vld [vmem:[#allocation9 + $0xc0] sm:$0xff]
        %v4580 = vpack.c.bf16 %v4568, %v4564
        %v4581 = vpack.c.bf16 %v4569, %v4565
        %v4582 = vpack.c.bf16 %v4570, %v4566
        %v4583 = vpack.c.bf16 %v4571, %v4567
        %v4584 = vpack.c.bf16 %v4576, %v4572
        %v4585 = vpack.c.bf16 %v4577, %v4573
        %v4586 = vpack.c.bf16 %v4578, %v4574
        %v4587 = vpack.c.bf16 %v4579, %v4575
        %v4588 = vld [vmem:[%s7] sm:$0xf]
        %v4589 = vld [vmem:[%s7 + $0x4] sm:$0xf]
        %v4590 = vld [vmem:[%s7 + $0x8] sm:$0xf]
        %v4591 = vld [vmem:[%s7 + $0xc] sm:$0xf]
        %v4592 = vld [vmem:[%s7 + $0x10] sm:$0xf]
        %v4593 = vld [vmem:[%s7 + $0x14] sm:$0xf]
        %v4594 = vld [vmem:[%s7 + $0x18] sm:$0xf]
        %v4595 = vld [vmem:[%s7 + $0x1c] sm:$0xf]
        %v4596 = vld [vmem:[%s7 + $0x20] sm:$0xf]
        %v4597 = vld [vmem:[%s7 + $0x24] sm:$0xf]
        %v4598 = vld [vmem:[%s7 + $0x28] sm:$0xf]
        %v4599 = vld [vmem:[%s7 + $0x2c] sm:$0xf]
        %v4600 = vld [vmem:[%s7 + $0x30] sm:$0xf]
        %v4601 = vld [vmem:[%s7 + $0x34] sm:$0xf]
        %v4602 = vld [vmem:[%s7 + $0x38] sm:$0xf]
        %v4603 = vld [vmem:[%s7 + $0x3c] sm:$0xf]
        %v4604 = vld [vmem:[%s7 + $0x40] sm:$0xf]
        %v4605 = vld [vmem:[%s7 + $0x44] sm:$0xf]
        %v4606 = vld [vmem:[%s7 + $0x48] sm:$0xf]
        %v4607 = vld [vmem:[%s7 + $0x4c] sm:$0xf]
        %v4608 = vld [vmem:[%s7 + $0x50] sm:$0xf]
        %v4609 = vld [vmem:[%s7 + $0x54] sm:$0xf]
        %v4610 = vld [vmem:[%s7 + $0x58] sm:$0xf]
        %v4611 = vld [vmem:[%s7 + $0x5c] sm:$0xf]
        %v4612 = vld [vmem:[%s7 + $0x60] sm:$0xf]
        %v4613 = vld [vmem:[%s7 + $0x64] sm:$0xf]
        %v4614 = vld [vmem:[%s7 + $0x68] sm:$0xf]
        %v4615 = vld [vmem:[%s7 + $0x6c] sm:$0xf]
        %v4616 = vld [vmem:[%s7 + $0x70] sm:$0xf]
        %v4617 = vld [vmem:[%s7 + $0x74] sm:$0xf]
        %v4618 = vld [vmem:[%s7 + $0x78] sm:$0xf]
        %v4619 = vld [vmem:[%s7 + $0x7c] sm:$0xf]
        %v4620 = vld [vmem:[%s7 + $0x80] sm:$0xf]
        %v4621 = vld [vmem:[%s7 + $0x84] sm:$0xf]
        %v4622 = vld [vmem:[%s7 + $0x88] sm:$0xf]
        %v4623 = vld [vmem:[%s7 + $0x8c] sm:$0xf]
        %v4624 = vld [vmem:[%s7 + $0x90] sm:$0xf]
        %v4625 = vld [vmem:[%s7 + $0x94] sm:$0xf]
        %v4626 = vld [vmem:[%s7 + $0x98] sm:$0xf]
        %v4627 = vld [vmem:[%s7 + $0x9c] sm:$0xf]
        %v4628 = vld [vmem:[%s7 + $0xa0] sm:$0xf]
        %v4629 = vld [vmem:[%s7 + $0xa4] sm:$0xf]
        %v4630 = vld [vmem:[%s7 + $0xa8] sm:$0xf]
        %v4631 = vld [vmem:[%s7 + $0xac] sm:$0xf]
        %v4632 = vld [vmem:[%s7 + $0xb0] sm:$0xf]
        %v4633 = vld [vmem:[%s7 + $0xb4] sm:$0xf]
        %v4634 = vld [vmem:[%s7 + $0xb8] sm:$0xf]
        %v4635 = vld [vmem:[%s7 + $0xbc] sm:$0xf]
        %v4636 = vld [vmem:[%s7 + $0xc0] sm:$0xf]
        %v4637 = vld [vmem:[%s7 + $0xc4] sm:$0xf]
        %v4638 = vld [vmem:[%s8] sm:$0x1]
        %v4640 = vlaneseq
        %v4641 = vshrl.u32 %v4640, 7
        %v4642 = vsub.s32 0, %v4641
        %v4643 = vrot.slane %v4638, %v4642
        %v4695 = vunpack.c.l.b16 %v4588
        %v4696 = vunpack.c.l.b16 %v4589
        %v4697 = vunpack.c.l.b16 %v4590
        %v4698 = vunpack.c.l.b16 %v4591
        %v4699 = vunpack.c.l.b16 %v4592
        %v4700 = vunpack.c.l.b16 %v4593
        %v4701 = vunpack.c.l.b16 %v4594
        %v4702 = vunpack.c.l.b16 %v4595
        %v4703 = vunpack.c.l.b16 %v4596
        %v4704 = vunpack.c.l.b16 %v4597
        %v4705 = vunpack.c.l.b16 %v4598
        %v4706 = vunpack.c.l.b16 %v4599
        %v4707 = vunpack.c.l.b16 %v4600
        %v4708 = vunpack.c.l.b16 %v4601
        %v4709 = vunpack.c.l.b16 %v4602
        %v4710 = vunpack.c.l.b16 %v4603
        %v4711 = vunpack.c.l.b16 %v4604
        %v4712 = vunpack.c.l.b16 %v4605
        %v4713 = vunpack.c.l.b16 %v4606
        %v4714 = vunpack.c.l.b16 %v4607
        %v4715 = vunpack.c.l.b16 %v4608
        %v4716 = vunpack.c.l.b16 %v4609
        %v4717 = vunpack.c.l.b16 %v4610
        %v4718 = vunpack.c.l.b16 %v4611
        %v4719 = vunpack.c.l.b16 %v4612
        %v4720 = vunpack.c.l.b16 %v4613
        %v4721 = vunpack.c.l.b16 %v4614
        %v4722 = vunpack.c.l.b16 %v4615
        %v4723 = vunpack.c.l.b16 %v4616
        %v4724 = vunpack.c.l.b16 %v4617
        %v4725 = vunpack.c.l.b16 %v4618
        %v4726 = vunpack.c.l.b16 %v4619
        %v4727 = vunpack.c.l.b16 %v4620
        %v4728 = vunpack.c.l.b16 %v4621
        %v4729 = vunpack.c.l.b16 %v4622
        %v4730 = vunpack.c.l.b16 %v4623
        %v4731 = vunpack.c.l.b16 %v4624
        %v4732 = vunpack.c.l.b16 %v4625
        %v4733 = vunpack.c.l.b16 %v4626
        %v4734 = vunpack.c.l.b16 %v4627
        %v4735 = vunpack.c.l.b16 %v4628
        %v4736 = vunpack.c.l.b16 %v4629
        %v4737 = vunpack.c.l.b16 %v4630
        %v4738 = vunpack.c.l.b16 %v4631
        %v4739 = vunpack.c.l.b16 %v4632
        %v4740 = vunpack.c.l.b16 %v4633
        %v4741 = vunpack.c.l.b16 %v4634
        %v4742 = vunpack.c.l.b16 %v4635
        %v4743 = vunpack.c.l.b16 %v4636
        %v4744 = vunpack.c.l.b16 %v4637
        %v4745 = vpack.c.b16 %v4696, %v4695
        %v4746 = vpack.c.b16 %v4698, %v4697
        %v4747 = vpack.c.b16 %v4700, %v4699
        %v4748 = vpack.c.b16 %v4702, %v4701
        %v4749 = vpack.c.b16 %v4704, %v4703
        %v4750 = vpack.c.b16 %v4706, %v4705
        %v4751 = vpack.c.b16 %v4708, %v4707
        %v4752 = vpack.c.b16 %v4710, %v4709
        %v4753 = vpack.c.b16 %v4712, %v4711
        %v4754 = vpack.c.b16 %v4714, %v4713
        %v4755 = vpack.c.b16 %v4716, %v4715
        %v4756 = vpack.c.b16 %v4718, %v4717
        %v4757 = vpack.c.b16 %v4720, %v4719
        %v4758 = vpack.c.b16 %v4722, %v4721
        %v4759 = vpack.c.b16 %v4724, %v4723
        %v4760 = vpack.c.b16 %v4726, %v4725
        %v4761 = vpack.c.b16 %v4728, %v4727
        %v4762 = vpack.c.b16 %v4730, %v4729
        %v4763 = vpack.c.b16 %v4732, %v4731
        %v4764 = vpack.c.b16 %v4734, %v4733
        %v4765 = vpack.c.b16 %v4736, %v4735
        %v4766 = vpack.c.b16 %v4738, %v4737
        %v4767 = vpack.c.b16 %v4740, %v4739
        %v4768 = vpack.c.b16 %v4742, %v4741
        %v4769 = vpack.c.b16 %v4744, %v4743
        %v4796 = vsel %vm869, %v4583, 0
        %v4799 = vsel %vm869, %v4587, 0
        %4801 = vmatprep.subr.bf16.mxu0 0
        %4802 = vmatpush1.bf16.msra.mxu0 %v4745
        %4803 = vmatprep.subr.bf16.mxu0 0
        %4804 = vmatpush1.bf16.msra.mxu0 %v4746
        %4805 = vmatprep.subr.bf16.mxu0 0
        %4806 = vmatpush1.bf16.msra.mxu0 %v4747
        %4807 = vmatprep.subr.bf16.mxu0 0
        %4808 = vmatpush1.bf16.msra.mxu0 %v4748
        %4809 = vmatprep.subr.bf16.mxu0 0
        %4810 = vmatpush1.bf16.msra.mxu0 %v4749
        %4811 = vmatprep.subr.bf16.mxu0 0
        %4812 = vmatpush1.bf16.msra.mxu0 %v4750
        %4813 = vmatprep.subr.bf16.mxu0 0
        %4814 = vmatpush1.bf16.msra.mxu0 %v4751
        %4815 = vmatprep.subr.bf16.mxu0 0
        %4816 = vmatpush1.bf16.msra.mxu0 %v4752
        %4817 = vmatprep.subr.bf16.mxu0 0
        %4818 = vmatpush1.bf16.msra.mxu0 %v4753
        %4819 = vmatprep.subr.bf16.mxu0 0
        %4820 = vmatpush1.bf16.msra.mxu0 %v4754
        %4821 = vmatprep.subr.bf16.mxu0 0
        %4822 = vmatpush1.bf16.msra.mxu0 %v4755
        %4823 = vmatprep.subr.bf16.mxu0 0
        %4824 = vmatpush1.bf16.msra.mxu0 %v4756
        %4825 = vmatprep.subr.bf16.mxu0 0
        %4826 = vmatpush1.bf16.msra.mxu0 %v4757
        %4827 = vmatprep.subr.bf16.mxu0 0
        %4828 = vmatpush1.bf16.msra.mxu0 %v4758
        %4829 = vmatprep.subr.bf16.mxu0 0
        %4830 = vmatpush1.bf16.msra.mxu0 %v4759
        %4831 = vmatprep.subr.bf16.mxu0 0
        %4832 = vmatpush1.bf16.msra.mxu0 %v4760
        %4833 = vmatprep.mubr.bf16.mxu0 %v4581
        %4834 = vmatmul.mubr.bf16.gmra.mrb[0].mxu0 %v4580
        %v4835 = vpop.f32.mrb[0].mxu0
        %v4836 = vadd.f32 %v4643, %v4835
        %v4837 = vpop.f32.mrb[0].mxu0
        %v4838 = vpop.f32.mrb[0].mxu0
        %v4839 = vadd.f32 %v4643, %v4838
        %v4840 = vpop.f32.mrb[0].mxu0
        %4841 = vmatprep.mubr.bf16.mxu0 %v4585
        %4842 = vmatmul.mubr.bf16.gmra.mrb[0].mxu0 %v4584
        %v4843 = vpop.f32.mrb[0].mxu0
        %v4844 = vadd.f32 %v4643, %v4843
        %v4845 = vpop.f32.mrb[0].mxu0
        %v4846 = vpop.f32.mrb[0].mxu0
        %v4847 = vadd.f32 %v4643, %v4846
        %v4848 = vpop.f32.mrb[0].mxu0
        %4849 = vdwg.mxu0
        %4850 = vmatprep.subr.bf16.mxu0 0
        %4851 = vmatpush1.bf16.msra.mxu0 %v4761
        %4852 = vmatprep.subr.bf16.mxu0 0
        %4853 = vmatpush1.bf16.msra.mxu0 %v4762
        %4854 = vmatprep.subr.bf16.mxu0 0
        %4855 = vmatpush1.bf16.msra.mxu0 %v4763
        %4856 = vmatprep.subr.bf16.mxu0 0
        %4857 = vmatpush1.bf16.msra.mxu0 %v4764
        %4858 = vmatprep.subr.bf16.mxu0 0
        %4859 = vmatpush1.bf16.msra.mxu0 %v4765
        %4860 = vmatprep.subr.bf16.mxu0 0
        %4861 = vmatpush1.bf16.msra.mxu0 %v4766
        %4862 = vmatprep.subr.bf16.mxu0 0
        %4863 = vmatpush1.bf16.msra.mxu0 %v4767
        %4864 = vmatprep.subr.bf16.mxu0 0
        %4865 = vmatpush1.bf16.msra.mxu0 %v4768
        %4866 = vmatprep.subr.bf16.mxu0 0
        %4867 = vmatpush1.bf16.msra.mxu0 %v4769
        %4868 = vmatprep.subr.bf16.mxu0 0
        %4869 = vmatpush1.bf16.msra.mxu0 0
        %4870 = vmatprep.subr.bf16.mxu0 0
        %4871 = vmatpush1.bf16.msra.mxu0 0
        %4872 = vmatprep.subr.bf16.mxu0 0
        %4873 = vmatpush1.bf16.msra.mxu0 0
        %4874 = vmatprep.subr.bf16.mxu0 0
        %4875 = vmatpush1.bf16.msra.mxu0 0
        %4876 = vmatprep.subr.bf16.mxu0 0
        %4877 = vmatpush1.bf16.msra.mxu0 0
        %4878 = vmatprep.subr.bf16.mxu0 0
        %4879 = vmatpush1.bf16.msra.mxu0 0
        %4880 = vmatprep.subr.bf16.mxu0 0
        %4881 = vmatpush1.bf16.msra.mxu0 0
        %4882 = vmatprep.mubr.bf16.mxu0 %v4796
        %4883 = vmatmul.mubr.bf16.gmra.mrb[0].mxu0 %v4582
        %v4884 = vpop.f32.mrb[0].mxu0
        %v4885 = vadd.f32 %v4836, %v4884
        %v4886 = vpop.f32.mrb[0].mxu0
        %v4887 = vpop.f32.mrb[0].mxu0
        %v4888 = vadd.f32 %v4839, %v4887
        %v4889 = vpop.f32.mrb[0].mxu0
        %4890 = vmatprep.mubr.bf16.mxu0 %v4799
        %4891 = vmatmul.mubr.bf16.gmra.mrb[0].mxu0 %v4586
        %v4892 = vpop.f32.mrb[0].mxu0
        %v4893 = vadd.f32 %v4844, %v4892
        %v4894 = vpop.f32.mrb[0].mxu0
        %v4895 = vpop.f32.mrb[0].mxu0
        %v4896 = vadd.f32 %v4847, %v4895
        %v4897 = vpop.f32.mrb[0].mxu0
        %4898 = vdwg.mxu0
        %v4899 = vmax.f32 %v4885, 0.0
        %v4900 = vmax.f32 %v4888, 0.0
        %v4901 = vmax.f32 %v4893, 0.0
        %v4902 = vmax.f32 %v4896, 0.0
        %v4903 = vand.u32 2147483647, %v4885
        %v4904 = vand.u32 2147483647, %v4888
        %v4905 = vand.u32 2147483647, %v4893
        %v4906 = vand.u32 2147483647, %v4896
        %v4907 = vsub.f32 0.0, %v4903
        %v4908 = vsub.f32 0.0, %v4904
        %v4909 = vsub.f32 0.0, %v4905
        %v4910 = vsub.f32 0.0, %v4906
        %v4911 = vmul.f32 %v4907, 1.442695
        %v4912 = vpow.pop %v4911
        %v4913 = vmul.f32 %v4908, 1.442695
        %v4914 = vpow.pop %v4913
        %v4915 = vmul.f32 %v4909, 1.442695
        %v4916 = vpow.pop %v4915
        %v4917 = vmul.f32 %v4910, 1.442695
        %v4918 = vpow.pop %v4917
        %v4919 = vadd.f32 %v4912, 1.0
        %v4920 = vadd.f32 %v4914, 1.0
        %v4921 = vadd.f32 %v4916, 1.0
        %v4922 = vadd.f32 %v4918, 1.0
        %v4923 = vlog2.pop %v4919
        %v4924 = vmul.f32 %v4923, 0.6931472
        %v4925 = vlog2.pop %v4920
        %v4926 = vmul.f32 %v4925, 0.6931472
        %v4927 = vlog2.pop %v4921
        %v4928 = vmul.f32 %v4927, 0.6931472
        %v4929 = vlog2.pop %v4922
        %v4930 = vmul.f32 %v4929, 0.6931472
        %v4931 = vadd.f32 %v4899, %v4924
        %v4932 = vadd.f32 %v4900, %v4926
        %v4933 = vadd.f32 %v4901, %v4928
        %v4934 = vadd.f32 %v4902, %v4930
        %v4935 = vmax.f32 %v4931, 1e-06
        %v4936 = vmax.f32 %v4932, 1e-06
        %v4937 = vmax.f32 %v4933, 1e-06
        %v4938 = vmax.f32 %v4934, 1e-06
        %v4939 = vmax.f32 %v1738, 0.0
        %v4940 = vmax.f32 %v1741, 0.0
        %v4941 = vmax.f32 %v1746, 0.0
        %v4942 = vmax.f32 %v1749, 0.0
        %v4943 = vand.u32 2147483647, %v1738
        %v4944 = vand.u32 2147483647, %v1741
        %v4945 = vand.u32 2147483647, %v1746
        %v4946 = vand.u32 2147483647, %v1749
        %v4947 = vsub.f32 0.0, %v4943
        %v4948 = vsub.f32 0.0, %v4944
        %v4949 = vsub.f32 0.0, %v4945
        %v4950 = vsub.f32 0.0, %v4946
        %v4951 = vmul.f32 %v4947, 1.442695
        %v4952 = vpow.pop %v4951
        %v4953 = vmul.f32 %v4948, 1.442695
        %v4954 = vpow.pop %v4953
        %v4955 = vmul.f32 %v4949, 1.442695
        %v4956 = vpow.pop %v4955
        %v4957 = vmul.f32 %v4950, 1.442695
        %v4958 = vpow.pop %v4957
        %v4959 = vadd.f32 %v4952, 1.0
        %v4960 = vadd.f32 %v4954, 1.0
        %v4961 = vadd.f32 %v4956, 1.0
        %v4962 = vadd.f32 %v4958, 1.0
        %v4963 = vlog2.pop %v4959
        %v4964 = vmul.f32 %v4963, 0.6931472
        %v4965 = vlog2.pop %v4960
        %v4966 = vmul.f32 %v4965, 0.6931472
        %v4967 = vlog2.pop %v4961
        %v4968 = vmul.f32 %v4967, 0.6931472
        %v4969 = vlog2.pop %v4962
        %v4970 = vmul.f32 %v4969, 0.6931472
        %v4971 = vadd.f32 %v4939, %v4964
        %v4972 = vadd.f32 %v4940, %v4966
        %v4973 = vadd.f32 %v4941, %v4968
        %v4974 = vadd.f32 %v4942, %v4970
        %v4975 = vmax.f32 %v4971, 1e-06
        %v4976 = vmax.f32 %v4972, 1e-06
        %v4977 = vmax.f32 %v4973, 1e-06
        %v4978 = vmax.f32 %v4974, 1e-06
        %s4979 = smul.u32 %s35, 32
        %s4980 = scalar_lea.vmem %s647, %s4979 [#allocation10]
        %v4981 = vld [vmem:[%s4980] sm:$0xff]
        %v4982 = vld [vmem:[%s4980 + $0x8] sm:$0xff]
        %v4983 = vld [vmem:[%s4980 + $0x10] sm:$0xff]
        %v4984 = vld [vmem:[%s4980 + $0x18] sm:$0xff]
        %4989 = vrot.lane.b32.xlu0 %v4981, 4
        %v4990 = vpop.permute.xlu0 %4989
        %4991 = vrot.lane.b32.xlu0 %v4982, 4
        %v4992 = vpop.permute.xlu0 %4991
        %4993 = vrot.lane.b32.xlu0 %v4983, 4
        %v4994 = vpop.permute.xlu0 %4993
        %4995 = vrot.lane.b32.xlu0 %v4984, 4
        %v4996 = vpop.permute.xlu0 %4995
        %v5001 = vmul.f32 %v4935, %v4990
        %v5002 = vmul.f32 %v4936, %v4992
        %v5003 = vmul.f32 %v4937, %v4994
        %v5004 = vmul.f32 %v4938, %v4996
        %5009 = vrot.lane.b32.xlu0 %v5001, 124
        %v5010 = vpop.permute.xlu0 %5009
        %5011 = vrot.lane.b32.xlu0 %v5002, 124
        %v5012 = vpop.permute.xlu0 %5011
        %5013 = vrot.lane.b32.xlu0 %v5003, 124
        %v5014 = vpop.permute.xlu0 %5013
        %5015 = vrot.lane.b32.xlu0 %v5004, 124
        %v5016 = vpop.permute.xlu0 %5015
        %v5021 = vadd.f32 %v4885, %v5010
        %v5022 = vadd.f32 %v4888, %v5012
        %v5023 = vadd.f32 %v4893, %v5014
        %v5024 = vadd.f32 %v4896, %v5016
        %v5025 = vmul.f32 %v4975, 2.0
        %v5026 = vmul.f32 %v4976, 2.0
        %v5027 = vmul.f32 %v4977, 2.0
        %v5028 = vmul.f32 %v4978, 2.0
        %v5029 = vmul.f32 %v5025, %v4975
        %v5030 = vmul.f32 %v5026, %v4976
        %v5031 = vmul.f32 %v5027, %v4977
        %v5032 = vmul.f32 %v5028, %v4978
        %v5033 = vrcp.pop %v5029
        %v5034 = vrcp.pop %v5030
        %v5035 = vrcp.pop %v5031
        %v5036 = vrcp.pop %v5032
        %v5037 = vld [vmem:[#allocation7] sm:$0xff]
        %v5038 = vld [vmem:[#allocation7 + $0x8] sm:$0xff]
        %v5039 = vld [vmem:[#allocation7 + $0x10] sm:$0xff]
        %v5040 = vld [vmem:[#allocation7 + $0x18] sm:$0xff]
        %v5041 = vlog2.pop %v4975
        %v5042 = vmul.f32 %v5041, 0.6931472
        %v5043 = vlog2.pop %v4976
        %v5044 = vmul.f32 %v5043, 0.6931472
        %v5045 = vlog2.pop %v4977
        %v5046 = vmul.f32 %v5045, 0.6931472
        %v5047 = vlog2.pop %v4978
        %v5048 = vmul.f32 %v5047, 0.6931472
        %v5049 = vlog2.pop %v4935
        %v5050 = vmul.f32 %v5049, 0.6931472
        %v5051 = vlog2.pop %v4936
        %v5052 = vmul.f32 %v5051, 0.6931472
        %v5053 = vlog2.pop %v4937
        %v5054 = vmul.f32 %v5053, 0.6931472
        %v5055 = vlog2.pop %v4938
        %v5056 = vmul.f32 %v5055, 0.6931472
        %v5057 = vsub.f32 %v5042, %v5050
        %v5058 = vsub.f32 %v5044, %v5052
        %v5059 = vsub.f32 %v5046, %v5054
        %v5060 = vsub.f32 %v5048, %v5056
        %v5061 = vmul.f32 %v4935, %v4935
        %v5062 = vmul.f32 %v4936, %v4936
        %v5063 = vmul.f32 %v4937, %v4937
        %v5064 = vmul.f32 %v4938, %v4938
        %v5065 = vsub.f32 %v4885, %v1738
        %v5066 = vsub.f32 %v4888, %v1741
        %v5067 = vsub.f32 %v4893, %v1746
        %v5068 = vsub.f32 %v4896, %v1749
        %v5069 = vmul.f32 %v5065, %v5065
        %v5070 = vmul.f32 %v5066, %v5066
        %v5071 = vmul.f32 %v5067, %v5067
        %v5072 = vmul.f32 %v5068, %v5068
        %5077 = vrot.lane.b32.xlu0 %v5069, 4
        %v5078 = vpop.permute.xlu0 %5077
        %5079 = vrot.lane.b32.xlu0 %v5070, 4
        %v5080 = vpop.permute.xlu0 %5079
        %5081 = vrot.lane.b32.xlu0 %v5071, 4
        %v5082 = vpop.permute.xlu0 %5081
        %5083 = vrot.lane.b32.xlu0 %v5072, 4
        %v5084 = vpop.permute.xlu0 %5083
        %v5089 = vadd.f32 %v5061, %v5078
        %v5090 = vadd.f32 %v5062, %v5080
        %v5091 = vadd.f32 %v5063, %v5082
        %v5092 = vadd.f32 %v5064, %v5084
        %v5093 = vmul.f32 %v5089, %v5033
        %v5094 = vmul.f32 %v5090, %v5034
        %v5095 = vmul.f32 %v5091, %v5035
        %v5096 = vmul.f32 %v5092, %v5036
        %v5097 = vadd.f32 %v5057, %v5093
        %v5098 = vadd.f32 %v5058, %v5094
        %v5099 = vadd.f32 %v5059, %v5095
        %v5100 = vadd.f32 %v5060, %v5096
        %v5101 = vsub.f32 %v5097, 0.5
        %v5102 = vsub.f32 %v5098, 0.5
        %v5103 = vsub.f32 %v5099, 0.5
        %v5104 = vsub.f32 %v5100, 0.5
        %5109 = vrot.lane.b32.xlu0 %v5101, 124
        %v5110 = vpop.permute.xlu0 %5109
        %5111 = vrot.lane.b32.xlu0 %v5102, 124
        %v5112 = vpop.permute.xlu0 %5111
        %5113 = vrot.lane.b32.xlu0 %v5103, 124
        %v5114 = vpop.permute.xlu0 %5113
        %5115 = vrot.lane.b32.xlu0 %v5104, 124
        %v5116 = vpop.permute.xlu0 %5115
        %v5121 = vadd.f32 %v5037, %v5110
        %v5122 = vadd.f32 %v5038, %v5112
        %v5123 = vadd.f32 %v5039, %v5114
        %v5124 = vadd.f32 %v5040, %v5116
        %vm5125 = vcmask 31744
        %5126 = vst.msk [vmem:[#allocation7] sm:$0xff] %vm5125, %v5121
        %5127 = vst.msk [vmem:[#allocation7 + $0x8] sm:$0xff] %vm5125, %v5122
        %5128 = vst.msk [vmem:[#allocation7 + $0x10] sm:$0xff] %vm5125, %v5123
        %5129 = vst.msk [vmem:[#allocation7 + $0x18] sm:$0xff] %vm5125, %v5124
        %v5130 = vsel %vm5125, %v5021, 0.0
        %v5131 = vsel %vm5125, %v5022, 0.0
        %v5132 = vsel %vm5125, %v5023, 0.0
        %v5133 = vsel %vm5125, %v5024, 0.0
        %v5134 = vld [vmem:[%s734] sm:$0xff]
        %v5135 = vld [vmem:[%s734 + $0x8] sm:$0xff]
        %v5136 = vld [vmem:[%s734 + $0x10] sm:$0xff]
        %v5137 = vld [vmem:[%s734 + $0x18] sm:$0xff]
        %5142 = vrot.lane.b32.xlu0 %v5134, 8
        %v5143 = vpop.permute.xlu0 %5142
        %5144 = vrot.lane.b32.xlu0 %v5135, 8
        %v5145 = vpop.permute.xlu0 %5144
        %5146 = vrot.lane.b32.xlu0 %v5136, 8
        %v5147 = vpop.permute.xlu0 %5146
        %5148 = vrot.lane.b32.xlu0 %v5137, 8
        %v5149 = vpop.permute.xlu0 %5148
        %v5154 = vadd.f32 %v1738, %v5143
        %v5155 = vadd.f32 %v1741, %v5145
        %v5156 = vadd.f32 %v1746, %v5147
        %v5157 = vadd.f32 %v1749, %v5149
        %5162 = vrot.lane.b32.xlu0 %v5130, 8
        %v5163 = vpop.permute.xlu0 %5162
        %5164 = vrot.lane.b32.xlu0 %v5131, 8
        %v5165 = vpop.permute.xlu0 %5164
        %5166 = vrot.lane.b32.xlu0 %v5132, 8
        %v5167 = vpop.permute.xlu0 %5166
        %5168 = vrot.lane.b32.xlu0 %v5133, 8
        %v5169 = vpop.permute.xlu0 %5168
        %v5174 = vadd.f32 %v5154, %v5163
        %v5175 = vadd.f32 %v5155, %v5165
        %v5176 = vadd.f32 %v5156, %v5167
        %v5177 = vadd.f32 %v5157, %v5169
        %v5178 = vmul.f32 %v5174, %v853
        %v5179 = vmul.f32 %v5175, %v854
        %v5180 = vmul.f32 %v5176, %v855
        %v5181 = vmul.f32 %v5177, %v856
        %5186 = vrot.lane.b32.xlu0 %v5178, 120
        %v5187 = vpop.permute.xlu0 %5186
        %5188 = vrot.lane.b32.xlu0 %v5179, 120
        %v5189 = vpop.permute.xlu0 %5188
        %5190 = vrot.lane.b32.xlu0 %v5180, 120
        %v5191 = vpop.permute.xlu0 %5190
        %5192 = vrot.lane.b32.xlu0 %v5181, 120
        %v5193 = vpop.permute.xlu0 %5192
        %vm5198 = vcmask 138240
        %5199 = vst.msk [vmem:[#allocation8 + $0x18] sm:$0xff] %vm5198, %v5187
        %5200 = vst.msk [vmem:[#allocation8 + $0x20] sm:$0xff] %vm5198, %v5189
        %5201 = vst.msk [vmem:[#allocation8 + $0x28] sm:$0xff] %vm5198, %v5191
        %5202 = vst.msk [vmem:[#allocation8 + $0x30] sm:$0xff] %vm5198, %v5193
        %v5203 = vld [vmem:[#allocation8 + $0x6] sm:$0xff]
        %v5204 = vld [vmem:[#allocation8 + $0xe] sm:$0xff]
        %v5205 = vld [vmem:[#allocation8 + $0x16] sm:$0xff]
        %v5206 = vld [vmem:[#allocation8 + $0x1e] sm:$0xff]
        %5207 = vst.msk [vmem:[#allocation9] sm:$0xff] %vm5198, %v5203
        %5208 = vst.msk [vmem:[#allocation9 + $0x38] sm:$0xff] %vm5198, %v5204
        %5209 = vst.msk [vmem:[#allocation9 + $0x70] sm:$0xff] %vm5198, %v5205
        %5210 = vst.msk [vmem:[#allocation9 + $0xa8] sm:$0xff] %vm5198, %v5206
        %v5211 = vld [vmem:[#allocation8 + $0x7] sm:$0xff]
        %v5212 = vld [vmem:[#allocation8 + $0xf] sm:$0xff]
        %v5213 = vld [vmem:[#allocation8 + $0x17] sm:$0xff]
        %v5214 = vld [vmem:[#allocation8 + $0x1f] sm:$0xff]
        %5219 = vrot.lane.b32.xlu0 %v5211, 17
        %v5220 = vpop.permute.xlu0 %5219
        %5221 = vrot.lane.b32.xlu0 %v5212, 17
        %v5222 = vpop.permute.xlu0 %5221
        %5223 = vrot.lane.b32.xlu0 %v5213, 17
        %v5224 = vpop.permute.xlu0 %5223
        %5225 = vrot.lane.b32.xlu0 %v5214, 17
        %v5226 = vpop.permute.xlu0 %5225
        %vm5231 = vcmask 277640
        %5232 = vst.msk [vmem:[#allocation9] sm:$0xff] %vm5231, %v5220
        %5233 = vst.msk [vmem:[#allocation9 + $0x38] sm:$0xff] %vm5231, %v5222
        %5234 = vst.msk [vmem:[#allocation9 + $0x70] sm:$0xff] %vm5231, %v5224
        %5235 = vst.msk [vmem:[#allocation9 + $0xa8] sm:$0xff] %vm5231, %v5226
        %v5236 = vld [vmem:[#allocation8 + $0x8] sm:$0xff]
        %v5237 = vld [vmem:[#allocation8 + $0x10] sm:$0xff]
        %v5238 = vld [vmem:[#allocation8 + $0x18] sm:$0xff]
        %v5239 = vld [vmem:[#allocation8 + $0x20] sm:$0xff]
        %5244 = vrot.lane.b32.xlu0 %v5236, 34
        %v5245 = vpop.permute.xlu0 %5244
        %5246 = vrot.lane.b32.xlu0 %v5237, 34
        %v5247 = vpop.permute.xlu0 %5246
        %5248 = vrot.lane.b32.xlu0 %v5238, 34
        %v5249 = vpop.permute.xlu0 %5248
        %5250 = vrot.lane.b32.xlu0 %v5239, 34
        %v5251 = vpop.permute.xlu0 %5250
        %vm5256 = vcmask 417040
        %5257 = vst.msk [vmem:[#allocation9] sm:$0xff] %vm5256, %v5245
        %5258 = vst.msk [vmem:[#allocation9 + $0x38] sm:$0xff] %vm5256, %v5247
        %5259 = vst.msk [vmem:[#allocation9 + $0x70] sm:$0xff] %vm5256, %v5249
        %5260 = vst.msk [vmem:[#allocation9 + $0xa8] sm:$0xff] %vm5256, %v5251
        %v5261 = vld [vmem:[#allocation8 + $0x9] sm:$0xff]
        %v5262 = vld [vmem:[#allocation8 + $0x11] sm:$0xff]
        %v5263 = vld [vmem:[#allocation8 + $0x19] sm:$0xff]
        %v5264 = vld [vmem:[#allocation8 + $0x21] sm:$0xff]
        %5269 = vrot.lane.b32.xlu0 %v5261, 51
        %v5270 = vpop.permute.xlu0 %5269
        %5271 = vrot.lane.b32.xlu0 %v5262, 51
        %v5272 = vpop.permute.xlu0 %5271
        %5273 = vrot.lane.b32.xlu0 %v5263, 51
        %v5274 = vpop.permute.xlu0 %5273
        %5275 = vrot.lane.b32.xlu0 %v5264, 51
        %v5276 = vpop.permute.xlu0 %5275
        %vm5281 = vcmask 556440
        %5282 = vst.msk [vmem:[#allocation9] sm:$0xff] %vm5281, %v5270
        %5283 = vst.msk [vmem:[#allocation9 + $0x38] sm:$0xff] %vm5281, %v5272
        %5284 = vst.msk [vmem:[#allocation9 + $0x70] sm:$0xff] %vm5281, %v5274
        %5285 = vst.msk [vmem:[#allocation9 + $0xa8] sm:$0xff] %vm5281, %v5276
        %v5286 = vld [vmem:[#allocation8 + $0xa] sm:$0xff]
        %v5287 = vld [vmem:[#allocation8 + $0x12] sm:$0xff]
        %v5288 = vld [vmem:[#allocation8 + $0x1a] sm:$0xff]
        %v5289 = vld [vmem:[#allocation8 + $0x22] sm:$0xff]
        %5294 = vrot.lane.b32.xlu0 %v5286, 68
        %v5295 = vpop.permute.xlu0 %5294
        %5296 = vrot.lane.b32.xlu0 %v5287, 68
        %v5297 = vpop.permute.xlu0 %5296
        %5298 = vrot.lane.b32.xlu0 %v5288, 68
        %v5299 = vpop.permute.xlu0 %5298
        %5300 = vrot.lane.b32.xlu0 %v5289, 68
        %v5301 = vpop.permute.xlu0 %5300
        %vm5306 = vcmask 695840
        %5307 = vst.msk [vmem:[#allocation9] sm:$0xff] %vm5306, %v5295
        %5308 = vst.msk [vmem:[#allocation9 + $0x38] sm:$0xff] %vm5306, %v5297
        %5309 = vst.msk [vmem:[#allocation9 + $0x70] sm:$0xff] %vm5306, %v5299
        %5310 = vst.msk [vmem:[#allocation9 + $0xa8] sm:$0xff] %vm5306, %v5301
        %v5311 = vld [vmem:[#allocation8 + $0xe] sm:$0xff]
        %v5312 = vld [vmem:[#allocation8 + $0x16] sm:$0xff]
        %v5313 = vld [vmem:[#allocation8 + $0x1e] sm:$0xff]
        %v5314 = vld [vmem:[#allocation8 + $0x26] sm:$0xff]
        %5319 = vrot.lane.b32.xlu0 %v5311, 85
        %v5320 = vpop.permute.xlu0 %5319
        %5321 = vrot.lane.b32.xlu0 %v5312, 85
        %v5322 = vpop.permute.xlu0 %5321
        %5323 = vrot.lane.b32.xlu0 %v5313, 85
        %v5324 = vpop.permute.xlu0 %5323
        %5325 = vrot.lane.b32.xlu0 %v5314, 85
        %v5326 = vpop.permute.xlu0 %5325
        %vm5331 = vcmask 835240
        %5332 = vst.msk [vmem:[#allocation9] sm:$0xff] %vm5331, %v5320
        %5333 = vst.msk [vmem:[#allocation9 + $0x38] sm:$0xff] %vm5331, %v5322
        %5334 = vst.msk [vmem:[#allocation9 + $0x70] sm:$0xff] %vm5331, %v5324
        %5335 = vst.msk [vmem:[#allocation9 + $0xa8] sm:$0xff] %vm5331, %v5326
        %v5336 = vld [vmem:[#allocation8 + $0xf] sm:$0xff]
        %v5337 = vld [vmem:[#allocation8 + $0x17] sm:$0xff]
        %v5338 = vld [vmem:[#allocation8 + $0x1f] sm:$0xff]
        %v5339 = vld [vmem:[#allocation8 + $0x27] sm:$0xff]
        %5344 = vrot.lane.b32.xlu0 %v5336, 102
        %v5345 = vpop.permute.xlu0 %5344
        %5346 = vrot.lane.b32.xlu0 %v5337, 102
        %v5347 = vpop.permute.xlu0 %5346
        %5348 = vrot.lane.b32.xlu0 %v5338, 102
        %v5349 = vpop.permute.xlu0 %5348
        %5350 = vrot.lane.b32.xlu0 %v5339, 102
        %v5351 = vpop.permute.xlu0 %5350
        %vm5356 = vcmask 974640
        %5357 = vst.msk [vmem:[#allocation9] sm:$0xff] %vm5356, %v5345
        %5358 = vst.msk [vmem:[#allocation9 + $0x38] sm:$0xff] %vm5356, %v5347
        %5359 = vst.msk [vmem:[#allocation9 + $0x70] sm:$0xff] %vm5356, %v5349
        %5360 = vst.msk [vmem:[#allocation9 + $0xa8] sm:$0xff] %vm5356, %v5351
        %v5361 = vld [vmem:[#allocation8 + $0x10] sm:$0xff]
        %v5362 = vld [vmem:[#allocation8 + $0x18] sm:$0xff]
        %v5363 = vld [vmem:[#allocation8 + $0x20] sm:$0xff]
        %v5364 = vld [vmem:[#allocation8 + $0x28] sm:$0xff]
        %5369 = vrot.lane.b32.xlu0 %v5361, 119
        %v5370 = vpop.permute.xlu0 %5369
        %5371 = vrot.lane.b32.xlu0 %v5362, 119
        %v5372 = vpop.permute.xlu0 %5371
        %5373 = vrot.lane.b32.xlu0 %v5363, 119
        %v5374 = vpop.permute.xlu0 %5373
        %5375 = vrot.lane.b32.xlu0 %v5364, 119
        %v5376 = vpop.permute.xlu0 %5375
        %vm5381 = vcmask 1048504
        %5382 = vst.msk [vmem:[#allocation9] sm:$0xff] %vm5381, %v5370
        %vm5383 = vcmask 64512
        %5384 = vst.msk [vmem:[#allocation9 + $0x8] sm:$0xff] %vm5383, %v5370
        %5385 = vst.msk [vmem:[#allocation9 + $0x38] sm:$0xff] %vm5381, %v5372
        %5386 = vst.msk [vmem:[#allocation9 + $0x40] sm:$0xff] %vm5383, %v5372
        %5387 = vst.msk [vmem:[#allocation9 + $0x70] sm:$0xff] %vm5381, %v5374
        %5388 = vst.msk [vmem:[#allocation9 + $0x78] sm:$0xff] %vm5383, %v5374
        %5389 = vst.msk [vmem:[#allocation9 + $0xa8] sm:$0xff] %vm5381, %v5376
        %5390 = vst.msk [vmem:[#allocation9 + $0xb0] sm:$0xff] %vm5383, %v5376
        %v5391 = vld [vmem:[#allocation8 + $0x11] sm:$0xff]
        %v5392 = vld [vmem:[#allocation8 + $0x19] sm:$0xff]
        %v5393 = vld [vmem:[#allocation8 + $0x21] sm:$0xff]
        %v5394 = vld [vmem:[#allocation8 + $0x29] sm:$0xff]
        %5399 = vrot.lane.b32.xlu0 %v5391, 8
        %v5400 = vpop.permute.xlu0 %5399
        %5401 = vrot.lane.b32.xlu0 %v5392, 8
        %v5402 = vpop.permute.xlu0 %5401
        %5403 = vrot.lane.b32.xlu0 %v5393, 8
        %v5404 = vpop.permute.xlu0 %5403
        %5405 = vrot.lane.b32.xlu0 %v5394, 8
        %v5406 = vpop.permute.xlu0 %5405
        %vm5411 = vcmask 203840
        %5412 = vst.msk [vmem:[#allocation9 + $0x8] sm:$0xff] %vm5411, %v5400
        %5413 = vst.msk [vmem:[#allocation9 + $0x40] sm:$0xff] %vm5411, %v5402
        %5414 = vst.msk [vmem:[#allocation9 + $0x78] sm:$0xff] %vm5411, %v5404
        %5415 = vst.msk [vmem:[#allocation9 + $0xb0] sm:$0xff] %vm5411, %v5406
        %v5416 = vld [vmem:[#allocation8 + $0x12] sm:$0xff]
        %v5417 = vld [vmem:[#allocation8 + $0x1a] sm:$0xff]
        %v5418 = vld [vmem:[#allocation8 + $0x22] sm:$0xff]
        %v5419 = vld [vmem:[#allocation8 + $0x2a] sm:$0xff]
        %5424 = vrot.lane.b32.xlu0 %v5416, 25
        %v5425 = vpop.permute.xlu0 %5424
        %5426 = vrot.lane.b32.xlu0 %v5417, 25
        %v5427 = vpop.permute.xlu0 %5426
        %5428 = vrot.lane.b32.xlu0 %v5418, 25
        %v5429 = vpop.permute.xlu0 %5428
        %5430 = vrot.lane.b32.xlu0 %v5419, 25
        %v5431 = vpop.permute.xlu0 %5430
        %vm5436 = vcmask 343240
        %5437 = vst.msk [vmem:[#allocation9 + $0x8] sm:$0xff] %vm5436, %v5425
        %5438 = vst.msk [vmem:[#allocation9 + $0x40] sm:$0xff] %vm5436, %v5427
        %5439 = vst.msk [vmem:[#allocation9 + $0x78] sm:$0xff] %vm5436, %v5429
        %5440 = vst.msk [vmem:[#allocation9 + $0xb0] sm:$0xff] %vm5436, %v5431
        %v5441 = vld [vmem:[#allocation8 + $0x16] sm:$0xff]
        %v5442 = vld [vmem:[#allocation8 + $0x1e] sm:$0xff]
        %v5443 = vld [vmem:[#allocation8 + $0x26] sm:$0xff]
        %v5444 = vld [vmem:[#allocation8 + $0x2e] sm:$0xff]
        %5449 = vrot.lane.b32.xlu0 %v5441, 42
        %v5450 = vpop.permute.xlu0 %5449
        %5451 = vrot.lane.b32.xlu0 %v5442, 42
        %v5452 = vpop.permute.xlu0 %5451
        %5453 = vrot.lane.b32.xlu0 %v5443, 42
        %v5454 = vpop.permute.xlu0 %5453
        %5455 = vrot.lane.b32.xlu0 %v5444, 42
        %v5456 = vpop.permute.xlu0 %5455
        %vm5461 = vcmask 482640
        %5462 = vst.msk [vmem:[#allocation9 + $0x8] sm:$0xff] %vm5461, %v5450
        %5463 = vst.msk [vmem:[#allocation9 + $0x40] sm:$0xff] %vm5461, %v5452
        %5464 = vst.msk [vmem:[#allocation9 + $0x78] sm:$0xff] %vm5461, %v5454
        %5465 = vst.msk [vmem:[#allocation9 + $0xb0] sm:$0xff] %vm5461, %v5456
        %v5466 = vld [vmem:[#allocation8 + $0x17] sm:$0xff]
        %v5467 = vld [vmem:[#allocation8 + $0x1f] sm:$0xff]
        %v5468 = vld [vmem:[#allocation8 + $0x27] sm:$0xff]
        %v5469 = vld [vmem:[#allocation8 + $0x2f] sm:$0xff]
        %5474 = vrot.lane.b32.xlu0 %v5466, 59
        %v5475 = vpop.permute.xlu0 %5474
        %5476 = vrot.lane.b32.xlu0 %v5467, 59
        %v5477 = vpop.permute.xlu0 %5476
        %5478 = vrot.lane.b32.xlu0 %v5468, 59
        %v5479 = vpop.permute.xlu0 %5478
        %5480 = vrot.lane.b32.xlu0 %v5469, 59
        %v5481 = vpop.permute.xlu0 %5480
        %vm5486 = vcmask 622040
        %5487 = vst.msk [vmem:[#allocation9 + $0x8] sm:$0xff] %vm5486, %v5475
        %5488 = vst.msk [vmem:[#allocation9 + $0x40] sm:$0xff] %vm5486, %v5477
        %5489 = vst.msk [vmem:[#allocation9 + $0x78] sm:$0xff] %vm5486, %v5479
        %5490 = vst.msk [vmem:[#allocation9 + $0xb0] sm:$0xff] %vm5486, %v5481
        %v5491 = vld [vmem:[#allocation8 + $0x18] sm:$0xff]
        %v5492 = vld [vmem:[#allocation8 + $0x20] sm:$0xff]
        %v5493 = vld [vmem:[#allocation8 + $0x28] sm:$0xff]
        %v5494 = vld [vmem:[#allocation8 + $0x30] sm:$0xff]
        %5499 = vrot.lane.b32.xlu0 %v5491, 76
        %v5500 = vpop.permute.xlu0 %5499
        %5501 = vrot.lane.b32.xlu0 %v5492, 76
        %v5502 = vpop.permute.xlu0 %5501
        %5503 = vrot.lane.b32.xlu0 %v5493, 76
        %v5504 = vpop.permute.xlu0 %5503
        %5505 = vrot.lane.b32.xlu0 %v5494, 76
        %v5506 = vpop.permute.xlu0 %5505
        %vm5511 = vcmask 761440
        %5512 = vst.msk [vmem:[#allocation9 + $0x8] sm:$0xff] %vm5511, %v5500
        %5513 = vst.msk [vmem:[#allocation9 + $0x40] sm:$0xff] %vm5511, %v5502
        %5514 = vst.msk [vmem:[#allocation9 + $0x78] sm:$0xff] %vm5511, %v5504
        %5515 = vst.msk [vmem:[#allocation9 + $0xb0] sm:$0xff] %vm5511, %v5506
        %v5516 = vld [vmem:[#allocation8 + $0x19] sm:$0xff]
        %v5517 = vld [vmem:[#allocation8 + $0x21] sm:$0xff]
        %v5518 = vld [vmem:[#allocation8 + $0x29] sm:$0xff]
        %v5519 = vld [vmem:[#allocation8 + $0x31] sm:$0xff]
        %5524 = vrot.lane.b32.xlu0 %v5516, 93
        %v5525 = vpop.permute.xlu0 %5524
        %5526 = vrot.lane.b32.xlu0 %v5517, 93
        %v5527 = vpop.permute.xlu0 %5526
        %5528 = vrot.lane.b32.xlu0 %v5518, 93
        %v5529 = vpop.permute.xlu0 %5528
        %5530 = vrot.lane.b32.xlu0 %v5519, 93
        %v5531 = vpop.permute.xlu0 %5530
        %vm5536 = vcmask 900840
        %5537 = vst.msk [vmem:[#allocation9 + $0x8] sm:$0xff] %vm5536, %v5525
        %5538 = vst.msk [vmem:[#allocation9 + $0x40] sm:$0xff] %vm5536, %v5527
        %5539 = vst.msk [vmem:[#allocation9 + $0x78] sm:$0xff] %vm5536, %v5529
        %5540 = vst.msk [vmem:[#allocation9 + $0xb0] sm:$0xff] %vm5536, %v5531
        %v5541 = vld [vmem:[#allocation8 + $0x1a] sm:$0xff]
        %v5542 = vld [vmem:[#allocation8 + $0x22] sm:$0xff]
        %v5543 = vld [vmem:[#allocation8 + $0x2a] sm:$0xff]
        %v5544 = vld [vmem:[#allocation8 + $0x32] sm:$0xff]
        %5549 = vrot.lane.b32.xlu0 %v5541, 110
        %v5550 = vpop.permute.xlu0 %5549
        %5551 = vrot.lane.b32.xlu0 %v5542, 110
        %v5552 = vpop.permute.xlu0 %5551
        %5553 = vrot.lane.b32.xlu0 %v5543, 110
        %v5554 = vpop.permute.xlu0 %5553
        %5555 = vrot.lane.b32.xlu0 %v5544, 110
        %v5556 = vpop.permute.xlu0 %5555
        %vm5561 = vcmask 1040240
        %5562 = vst.msk [vmem:[#allocation9 + $0x8] sm:$0xff] %vm5561, %v5550
        %5563 = vst.msk [vmem:[#allocation9 + $0x40] sm:$0xff] %vm5561, %v5552
        %5564 = vst.msk [vmem:[#allocation9 + $0x78] sm:$0xff] %vm5561, %v5554
        %5565 = vst.msk [vmem:[#allocation9 + $0xb0] sm:$0xff] %vm5561, %v5556
        %v5566 = vld [vmem:[#allocation8 + $0x1e] sm:$0xff]
        %v5567 = vld [vmem:[#allocation8 + $0x26] sm:$0xff]
        %v5568 = vld [vmem:[#allocation8 + $0x2e] sm:$0xff]
        %v5569 = vld [vmem:[#allocation8 + $0x36] sm:$0xff]
        %5574 = vrot.lane.b32.xlu0 %v5566, 127
        %v5575 = vpop.permute.xlu0 %5574
        %5576 = vrot.lane.b32.xlu0 %v5567, 127
        %v5577 = vpop.permute.xlu0 %5576
        %5578 = vrot.lane.b32.xlu0 %v5568, 127
        %v5579 = vpop.permute.xlu0 %5578
        %5580 = vrot.lane.b32.xlu0 %v5569, 127
        %v5581 = vpop.permute.xlu0 %5580
        %vm5586 = vcmask 1048568
        %5587 = vst.msk [vmem:[#allocation9 + $0x8] sm:$0xff] %vm5586, %v5575
        %5588 = vst.msk [vmem:[#allocation9 + $0x10] sm:$0xff] %vm869, %v5575
        %5589 = vst.msk [vmem:[#allocation9 + $0x40] sm:$0xff] %vm5586, %v5577
        %5590 = vst.msk [vmem:[#allocation9 + $0x48] sm:$0xff] %vm869, %v5577
        %5591 = vst.msk [vmem:[#allocation9 + $0x78] sm:$0xff] %vm5586, %v5579
        %5592 = vst.msk [vmem:[#allocation9 + $0x80] sm:$0xff] %vm869, %v5579
        %5593 = vst.msk [vmem:[#allocation9 + $0xb0] sm:$0xff] %vm5586, %v5581
        %5594 = vst.msk [vmem:[#allocation9 + $0xb8] sm:$0xff] %vm869, %v5581
        %v5595 = vld [vmem:[#allocation8 + $0x1f] sm:$0xff]
        %v5596 = vld [vmem:[#allocation8 + $0x27] sm:$0xff]
        %v5597 = vld [vmem:[#allocation8 + $0x2f] sm:$0xff]
        %v5598 = vld [vmem:[#allocation8 + $0x37] sm:$0xff]
        %5603 = vrot.lane.b32.xlu0 %v5595, 16
        %v5604 = vpop.permute.xlu0 %5603
        %5605 = vrot.lane.b32.xlu0 %v5596, 16
        %v5606 = vpop.permute.xlu0 %5605
        %5607 = vrot.lane.b32.xlu0 %v5597, 16
        %v5608 = vpop.permute.xlu0 %5607
        %5609 = vrot.lane.b32.xlu0 %v5598, 16
        %v5610 = vpop.permute.xlu0 %5609
        %vm5615 = vcmask 269440
        %5616 = vst.msk [vmem:[#allocation9 + $0x10] sm:$0xff] %vm5615, %v5604
        %5617 = vst.msk [vmem:[#allocation9 + $0x48] sm:$0xff] %vm5615, %v5606
        %5618 = vst.msk [vmem:[#allocation9 + $0x80] sm:$0xff] %vm5615, %v5608
        %5619 = vst.msk [vmem:[#allocation9 + $0xb8] sm:$0xff] %vm5615, %v5610
        %v5620 = vld [vmem:[#allocation8 + $0x20] sm:$0xff]
        %v5621 = vld [vmem:[#allocation8 + $0x28] sm:$0xff]
        %v5622 = vld [vmem:[#allocation8 + $0x30] sm:$0xff]
        %v5623 = vld [vmem:[#allocation8 + $0x38] sm:$0xff]
        %5628 = vrot.lane.b32.xlu0 %v5620, 33
        %v5629 = vpop.permute.xlu0 %5628
        %5630 = vrot.lane.b32.xlu0 %v5621, 33
        %v5631 = vpop.permute.xlu0 %5630
        %5632 = vrot.lane.b32.xlu0 %v5622, 33
        %v5633 = vpop.permute.xlu0 %5632
        %5634 = vrot.lane.b32.xlu0 %v5623, 33
        %v5635 = vpop.permute.xlu0 %5634
        %vm5640 = vcmask 408840
        %5641 = vst.msk [vmem:[#allocation9 + $0x10] sm:$0xff] %vm5640, %v5629
        %5642 = vst.msk [vmem:[#allocation9 + $0x48] sm:$0xff] %vm5640, %v5631
        %5643 = vst.msk [vmem:[#allocation9 + $0x80] sm:$0xff] %vm5640, %v5633
        %5644 = vst.msk [vmem:[#allocation9 + $0xb8] sm:$0xff] %vm5640, %v5635
        %v5645 = vld [vmem:[#allocation8 + $0x21] sm:$0xff]
        %v5646 = vld [vmem:[#allocation8 + $0x29] sm:$0xff]
        %v5647 = vld [vmem:[#allocation8 + $0x31] sm:$0xff]
        %v5648 = vld [vmem:[#allocation8 + $0x39] sm:$0xff]
        %5653 = vrot.lane.b32.xlu0 %v5645, 50
        %v5654 = vpop.permute.xlu0 %5653
        %5655 = vrot.lane.b32.xlu0 %v5646, 50
        %v5656 = vpop.permute.xlu0 %5655
        %5657 = vrot.lane.b32.xlu0 %v5647, 50
        %v5658 = vpop.permute.xlu0 %5657
        %5659 = vrot.lane.b32.xlu0 %v5648, 50
        %v5660 = vpop.permute.xlu0 %5659
        %vm5665 = vcmask 548240
        %5666 = vst.msk [vmem:[#allocation9 + $0x10] sm:$0xff] %vm5665, %v5654
        %5667 = vst.msk [vmem:[#allocation9 + $0x48] sm:$0xff] %vm5665, %v5656
        %5668 = vst.msk [vmem:[#allocation9 + $0x80] sm:$0xff] %vm5665, %v5658
        %5669 = vst.msk [vmem:[#allocation9 + $0xb8] sm:$0xff] %vm5665, %v5660
        %v5670 = vld [vmem:[#allocation8 + $0x22] sm:$0xff]
        %v5671 = vld [vmem:[#allocation8 + $0x2a] sm:$0xff]
        %v5672 = vld [vmem:[#allocation8 + $0x32] sm:$0xff]
        %v5673 = vld [vmem:[#allocation8 + $0x3a] sm:$0xff]
        %5678 = vrot.lane.b32.xlu0 %v5670, 67
        %v5679 = vpop.permute.xlu0 %5678
        %5680 = vrot.lane.b32.xlu0 %v5671, 67
        %v5681 = vpop.permute.xlu0 %5680
        %5682 = vrot.lane.b32.xlu0 %v5672, 67
        %v5683 = vpop.permute.xlu0 %5682
        %5684 = vrot.lane.b32.xlu0 %v5673, 67
        %v5685 = vpop.permute.xlu0 %5684
        %vm5690 = vcmask 687640
        %5691 = vst.msk [vmem:[#allocation9 + $0x10] sm:$0xff] %vm5690, %v5679
        %5692 = vst.msk [vmem:[#allocation9 + $0x48] sm:$0xff] %vm5690, %v5681
        %5693 = vst.msk [vmem:[#allocation9 + $0x80] sm:$0xff] %vm5690, %v5683
        %5694 = vst.msk [vmem:[#allocation9 + $0xb8] sm:$0xff] %vm5690, %v5685
        %v5695 = vld [vmem:[#allocation8 + $0x26] sm:$0xff]
        %v5696 = vld [vmem:[#allocation8 + $0x2e] sm:$0xff]
        %v5697 = vld [vmem:[#allocation8 + $0x36] sm:$0xff]
        %v5698 = vld [vmem:[#allocation8 + $0x3e] sm:$0xff]
        %5703 = vrot.lane.b32.xlu0 %v5695, 84
        %v5704 = vpop.permute.xlu0 %5703
        %5705 = vrot.lane.b32.xlu0 %v5696, 84
        %v5706 = vpop.permute.xlu0 %5705
        %5707 = vrot.lane.b32.xlu0 %v5697, 84
        %v5708 = vpop.permute.xlu0 %5707
        %5709 = vrot.lane.b32.xlu0 %v5698, 84
        %v5710 = vpop.permute.xlu0 %5709
        %vm5715 = vcmask 827040
        %5716 = vst.msk [vmem:[#allocation9 + $0x10] sm:$0xff] %vm5715, %v5704
        %5717 = vst.msk [vmem:[#allocation9 + $0x48] sm:$0xff] %vm5715, %v5706
        %5718 = vst.msk [vmem:[#allocation9 + $0x80] sm:$0xff] %vm5715, %v5708
        %5719 = vst.msk [vmem:[#allocation9 + $0xb8] sm:$0xff] %vm5715, %v5710
        %v5720 = vld [vmem:[#allocation8 + $0x27] sm:$0xff]
        %v5721 = vld [vmem:[#allocation8 + $0x2f] sm:$0xff]
        %v5722 = vld [vmem:[#allocation8 + $0x37] sm:$0xff]
        %v5723 = vld [vmem:[#allocation8 + $0x3f] sm:$0xff]
        %5728 = vrot.lane.b32.xlu0 %v5720, 101
        %v5729 = vpop.permute.xlu0 %5728
        %5730 = vrot.lane.b32.xlu0 %v5721, 101
        %v5731 = vpop.permute.xlu0 %5730
        %5732 = vrot.lane.b32.xlu0 %v5722, 101
        %v5733 = vpop.permute.xlu0 %5732
        %5734 = vrot.lane.b32.xlu0 %v5723, 101
        %v5735 = vpop.permute.xlu0 %5734
        %vm5740 = vcmask 966440
        %5741 = vst.msk [vmem:[#allocation9 + $0x10] sm:$0xff] %vm5740, %v5729
        %5742 = vst.msk [vmem:[#allocation9 + $0x48] sm:$0xff] %vm5740, %v5731
        %5743 = vst.msk [vmem:[#allocation9 + $0x80] sm:$0xff] %vm5740, %v5733
        %5744 = vst.msk [vmem:[#allocation9 + $0xb8] sm:$0xff] %vm5740, %v5735
        %v5745 = vld [vmem:[#allocation8 + $0x28] sm:$0xff]
        %v5746 = vld [vmem:[#allocation8 + $0x30] sm:$0xff]
        %v5747 = vld [vmem:[#allocation8 + $0x38] sm:$0xff]
        %v5748 = vld [vmem:[#allocation8 + $0x40] sm:$0xff]
        %5753 = vrot.lane.b32.xlu0 %v5745, 118
        %v5754 = vpop.permute.xlu0 %5753
        %5755 = vrot.lane.b32.xlu0 %v5746, 118
        %v5756 = vpop.permute.xlu0 %5755
        %5757 = vrot.lane.b32.xlu0 %v5747, 118
        %v5758 = vpop.permute.xlu0 %5757
        %5759 = vrot.lane.b32.xlu0 %v5748, 118
        %v5760 = vpop.permute.xlu0 %5759
        %vm5765 = vcmask 1048496
        %5766 = vst.msk [vmem:[#allocation9 + $0x10] sm:$0xff] %vm5765, %v5754
        %vm5767 = vcmask 56320
        %5768 = vst.msk [vmem:[#allocation9 + $0x18] sm:$0xff] %vm5767, %v5754
        %5769 = vst.msk [vmem:[#allocation9 + $0x48] sm:$0xff] %vm5765, %v5756
        %5770 = vst.msk [vmem:[#allocation9 + $0x50] sm:$0xff] %vm5767, %v5756
        %5771 = vst.msk [vmem:[#allocation9 + $0x80] sm:$0xff] %vm5765, %v5758
        %5772 = vst.msk [vmem:[#allocation9 + $0x88] sm:$0xff] %vm5767, %v5758
        %5773 = vst.msk [vmem:[#allocation9 + $0xb8] sm:$0xff] %vm5765, %v5760
        %5774 = vst.msk [vmem:[#allocation9 + $0xc0] sm:$0xff] %vm5767, %v5760
        %v5775 = vld [vmem:[#allocation8 + $0x29] sm:$0xff]
        %v5776 = vld [vmem:[#allocation8 + $0x31] sm:$0xff]
        %v5777 = vld [vmem:[#allocation8 + $0x39] sm:$0xff]
        %v5778 = vld [vmem:[#allocation8 + $0x41] sm:$0xff]
        %5783 = vrot.lane.b32.xlu0 %v5775, 7
        %v5784 = vpop.permute.xlu0 %5783
        %5785 = vrot.lane.b32.xlu0 %v5776, 7
        %v5786 = vpop.permute.xlu0 %5785
        %5787 = vrot.lane.b32.xlu0 %v5777, 7
        %v5788 = vpop.permute.xlu0 %5787
        %5789 = vrot.lane.b32.xlu0 %v5778, 7
        %v5790 = vpop.permute.xlu0 %5789
        %vm5795 = vcmask 195640
        %5796 = vst.msk [vmem:[#allocation9 + $0x18] sm:$0xff] %vm5795, %v5784
        %5797 = vst.msk [vmem:[#allocation9 + $0x50] sm:$0xff] %vm5795, %v5786
        %5798 = vst.msk [vmem:[#allocation9 + $0x88] sm:$0xff] %vm5795, %v5788
        %5799 = vst.msk [vmem:[#allocation9 + $0xc0] sm:$0xff] %vm5795, %v5790
        %v5800 = vld [vmem:[#allocation8 + $0x2a] sm:$0xff]
        %v5801 = vld [vmem:[#allocation8 + $0x32] sm:$0xff]
        %v5802 = vld [vmem:[#allocation8 + $0x3a] sm:$0xff]
        %v5803 = vld [vmem:[#allocation8 + $0x42] sm:$0xff]
        %5808 = vrot.lane.b32.xlu0 %v5800, 24
        %v5809 = vpop.permute.xlu0 %5808
        %5810 = vrot.lane.b32.xlu0 %v5801, 24
        %v5811 = vpop.permute.xlu0 %5810
        %5812 = vrot.lane.b32.xlu0 %v5802, 24
        %v5813 = vpop.permute.xlu0 %5812
        %5814 = vrot.lane.b32.xlu0 %v5803, 24
        %v5815 = vpop.permute.xlu0 %5814
        %vm5820 = vcmask 335040
        %5821 = vst.msk [vmem:[#allocation9 + $0x18] sm:$0xff] %vm5820, %v5809
        %5822 = vst.msk [vmem:[#allocation9 + $0x50] sm:$0xff] %vm5820, %v5811
        %5823 = vst.msk [vmem:[#allocation9 + $0x88] sm:$0xff] %vm5820, %v5813
        %5824 = vst.msk [vmem:[#allocation9 + $0xc0] sm:$0xff] %vm5820, %v5815
        %v5825 = vld [vmem:[#allocation9] sm:$0xff]
        %v5826 = vld [vmem:[#allocation9 + $0x8] sm:$0xff]
        %v5827 = vld [vmem:[#allocation9 + $0x10] sm:$0xff]
        %v5828 = vld [vmem:[#allocation9 + $0x18] sm:$0xff]
        %v5829 = vld [vmem:[#allocation9 + $0x38] sm:$0xff]
        %v5830 = vld [vmem:[#allocation9 + $0x40] sm:$0xff]
        %v5831 = vld [vmem:[#allocation9 + $0x48] sm:$0xff]
        %v5832 = vld [vmem:[#allocation9 + $0x50] sm:$0xff]
        %v5833 = vld [vmem:[#allocation9 + $0x70] sm:$0xff]
        %v5834 = vld [vmem:[#allocation9 + $0x78] sm:$0xff]
        %v5835 = vld [vmem:[#allocation9 + $0x80] sm:$0xff]
        %v5836 = vld [vmem:[#allocation9 + $0x88] sm:$0xff]
        %v5837 = vld [vmem:[#allocation9 + $0xa8] sm:$0xff]
        %v5838 = vld [vmem:[#allocation9 + $0xb0] sm:$0xff]
        %v5839 = vld [vmem:[#allocation9 + $0xb8] sm:$0xff]
        %v5840 = vld [vmem:[#allocation9 + $0xc0] sm:$0xff]
        %v5841 = vpack.c.bf16 %v5829, %v5825
        %v5842 = vpack.c.bf16 %v5830, %v5826
        %v5843 = vpack.c.bf16 %v5831, %v5827
        %v5844 = vpack.c.bf16 %v5832, %v5828
        %v5845 = vpack.c.bf16 %v5837, %v5833
        %v5846 = vpack.c.bf16 %v5838, %v5834
        %v5847 = vpack.c.bf16 %v5839, %v5835
        %v5848 = vpack.c.bf16 %v5840, %v5836
        %v5849 = vld [vmem:[%s13] sm:$0xf]
        %v5850 = vld [vmem:[%s13 + $0x4] sm:$0xf]
        %v5851 = vld [vmem:[%s13 + $0x8] sm:$0xf]
        %v5852 = vld [vmem:[%s13 + $0xc] sm:$0xf]
        %v5853 = vld [vmem:[%s13 + $0x10] sm:$0xf]
        %v5854 = vld [vmem:[%s13 + $0x14] sm:$0xf]
        %v5855 = vld [vmem:[%s13 + $0x18] sm:$0xf]
        %v5856 = vld [vmem:[%s13 + $0x1c] sm:$0xf]
        %v5857 = vld [vmem:[%s13 + $0x20] sm:$0xf]
        %v5858 = vld [vmem:[%s13 + $0x24] sm:$0xf]
        %v5859 = vld [vmem:[%s13 + $0x28] sm:$0xf]
        %v5860 = vld [vmem:[%s13 + $0x2c] sm:$0xf]
        %v5861 = vld [vmem:[%s13 + $0x30] sm:$0xf]
        %v5862 = vld [vmem:[%s13 + $0x34] sm:$0xf]
        %v5863 = vld [vmem:[%s13 + $0x38] sm:$0xf]
        %v5864 = vld [vmem:[%s13 + $0x3c] sm:$0xf]
        %v5865 = vld [vmem:[%s13 + $0x40] sm:$0xf]
        %v5866 = vld [vmem:[%s13 + $0x44] sm:$0xf]
        %v5867 = vld [vmem:[%s13 + $0x48] sm:$0xf]
        %v5868 = vld [vmem:[%s13 + $0x4c] sm:$0xf]
        %v5869 = vld [vmem:[%s13 + $0x50] sm:$0xf]
        %v5870 = vld [vmem:[%s13 + $0x54] sm:$0xf]
        %v5871 = vld [vmem:[%s13 + $0x58] sm:$0xf]
        %v5872 = vld [vmem:[%s13 + $0x5c] sm:$0xf]
        %v5873 = vld [vmem:[%s13 + $0x60] sm:$0xf]
        %v5874 = vld [vmem:[%s13 + $0x64] sm:$0xf]
        %v5875 = vld [vmem:[%s13 + $0x68] sm:$0xf]
        %v5876 = vld [vmem:[%s13 + $0x6c] sm:$0xf]
        %v5877 = vld [vmem:[%s13 + $0x70] sm:$0xf]
        %v5878 = vld [vmem:[%s13 + $0x74] sm:$0xf]
        %v5879 = vld [vmem:[%s13 + $0x78] sm:$0xf]
        %v5880 = vld [vmem:[%s13 + $0x7c] sm:$0xf]
        %v5881 = vld [vmem:[%s13 + $0x80] sm:$0xf]
        %v5882 = vld [vmem:[%s13 + $0x84] sm:$0xf]
        %v5883 = vld [vmem:[%s13 + $0x88] sm:$0xf]
        %v5884 = vld [vmem:[%s13 + $0x8c] sm:$0xf]
        %v5885 = vld [vmem:[%s13 + $0x90] sm:$0xf]
        %v5886 = vld [vmem:[%s13 + $0x94] sm:$0xf]
        %v5887 = vld [vmem:[%s13 + $0x98] sm:$0xf]
        %v5888 = vld [vmem:[%s13 + $0x9c] sm:$0xf]
        %v5889 = vld [vmem:[%s13 + $0xa0] sm:$0xf]
        %v5890 = vld [vmem:[%s13 + $0xa4] sm:$0xf]
        %v5891 = vld [vmem:[%s13 + $0xa8] sm:$0xf]
        %v5892 = vld [vmem:[%s13 + $0xac] sm:$0xf]
        %v5893 = vld [vmem:[%s13 + $0xb0] sm:$0xf]
        %v5894 = vld [vmem:[%s13 + $0xb4] sm:$0xf]
        %v5895 = vld [vmem:[%s13 + $0xb8] sm:$0xf]
        %v5896 = vld [vmem:[%s13 + $0xbc] sm:$0xf]
        %v5897 = vld [vmem:[%s13 + $0xc0] sm:$0xf]
        %v5898 = vld [vmem:[%s13 + $0xc4] sm:$0xf]
        %v5899 = vld [vmem:[%s13 + $0xc8] sm:$0xf]
        %v5900 = vld [vmem:[%s13 + $0xcc] sm:$0xf]
        %v5901 = vld [vmem:[%s13 + $0xd0] sm:$0xf]
        %v5902 = vld [vmem:[%s13 + $0xd4] sm:$0x1]
        %v5903 = vld [vmem:[%s14] sm:$0x1]
        %v5905 = vlaneseq
        %v5906 = vshrl.u32 %v5905, 7
        %v5907 = vsub.s32 0, %v5906
        %v5908 = vrot.slane %v5903, %v5907
        %v5964 = vunpack.c.l.b16 %v5849
        %v5965 = vunpack.c.l.b16 %v5850
        %v5966 = vunpack.c.l.b16 %v5851
        %v5967 = vunpack.c.l.b16 %v5852
        %v5968 = vunpack.c.l.b16 %v5853
        %v5969 = vunpack.c.l.b16 %v5854
        %v5970 = vunpack.c.l.b16 %v5855
        %v5971 = vunpack.c.l.b16 %v5856
        %v5972 = vunpack.c.l.b16 %v5857
        %v5973 = vunpack.c.l.b16 %v5858
        %v5974 = vunpack.c.l.b16 %v5859
        %v5975 = vunpack.c.l.b16 %v5860
        %v5976 = vunpack.c.l.b16 %v5861
        %v5977 = vunpack.c.l.b16 %v5862
        %v5978 = vunpack.c.l.b16 %v5863
        %v5979 = vunpack.c.l.b16 %v5864
        %v5980 = vunpack.c.l.b16 %v5865
        %v5981 = vunpack.c.l.b16 %v5866
        %v5982 = vunpack.c.l.b16 %v5867
        %v5983 = vunpack.c.l.b16 %v5868
        %v5984 = vunpack.c.l.b16 %v5869
        %v5985 = vunpack.c.l.b16 %v5870
        %v5986 = vunpack.c.l.b16 %v5871
        %v5987 = vunpack.c.l.b16 %v5872
        %v5988 = vunpack.c.l.b16 %v5873
        %v5989 = vunpack.c.l.b16 %v5874
        %v5990 = vunpack.c.l.b16 %v5875
        %v5991 = vunpack.c.l.b16 %v5876
        %v5992 = vunpack.c.l.b16 %v5877
        %v5993 = vunpack.c.l.b16 %v5878
        %v5994 = vunpack.c.l.b16 %v5879
        %v5995 = vunpack.c.l.b16 %v5880
        %v5996 = vunpack.c.l.b16 %v5881
        %v5997 = vunpack.c.l.b16 %v5882
        %v5998 = vunpack.c.l.b16 %v5883
        %v5999 = vunpack.c.l.b16 %v5884
        %v6000 = vunpack.c.l.b16 %v5885
        %v6001 = vunpack.c.l.b16 %v5886
        %v6002 = vunpack.c.l.b16 %v5887
        %v6003 = vunpack.c.l.b16 %v5888
        %v6004 = vunpack.c.l.b16 %v5889
        %v6005 = vunpack.c.l.b16 %v5890
        %v6006 = vunpack.c.l.b16 %v5891
        %v6007 = vunpack.c.l.b16 %v5892
        %v6008 = vunpack.c.l.b16 %v5893
        %v6009 = vunpack.c.l.b16 %v5894
        %v6010 = vunpack.c.l.b16 %v5895
        %v6011 = vunpack.c.l.b16 %v5896
        %v6012 = vunpack.c.l.b16 %v5897
        %v6013 = vunpack.c.l.b16 %v5898
        %v6014 = vunpack.c.l.b16 %v5899
        %v6015 = vunpack.c.l.b16 %v5900
        %v6016 = vunpack.c.l.b16 %v5901
        %v6017 = vunpack.c.l.b16 %v5902
        %v6018 = vpack.c.b16 %v5965, %v5964
        %v6019 = vpack.c.b16 %v5967, %v5966
        %v6020 = vpack.c.b16 %v5969, %v5968
        %v6021 = vpack.c.b16 %v5971, %v5970
        %v6022 = vpack.c.b16 %v5973, %v5972
        %v6023 = vpack.c.b16 %v5975, %v5974
        %v6024 = vpack.c.b16 %v5977, %v5976
        %v6025 = vpack.c.b16 %v5979, %v5978
        %v6026 = vpack.c.b16 %v5981, %v5980
        %v6027 = vpack.c.b16 %v5983, %v5982
        %v6028 = vpack.c.b16 %v5985, %v5984
        %v6029 = vpack.c.b16 %v5987, %v5986
        %v6030 = vpack.c.b16 %v5989, %v5988
        %v6031 = vpack.c.b16 %v5991, %v5990
        %v6032 = vpack.c.b16 %v5993, %v5992
        %v6033 = vpack.c.b16 %v5995, %v5994
        %v6034 = vpack.c.b16 %v5997, %v5996
        %v6035 = vpack.c.b16 %v5999, %v5998
        %v6036 = vpack.c.b16 %v6001, %v6000
        %v6037 = vpack.c.b16 %v6003, %v6002
        %v6038 = vpack.c.b16 %v6005, %v6004
        %v6039 = vpack.c.b16 %v6007, %v6006
        %v6040 = vpack.c.b16 %v6009, %v6008
        %v6041 = vpack.c.b16 %v6011, %v6010
        %v6042 = vpack.c.b16 %v6013, %v6012
        %v6043 = vpack.c.b16 %v6015, %v6014
        %v6044 = vpack.c.b16 %v6017, %v6016
        %vm6071 = vcmask 334848
        %v6073 = vsel %vm6071, %v5844, 0
        %v6076 = vsel %vm6071, %v5848, 0
        %vm6078 = vcmask 1043456
        %vm6079 = vcmask 1044480
        %v6080 = vsel %vm6078, 4294967295, 65535
        %v6081 = vsel %vm6079, %v6080, 0
        %v6083 = vand.u32 %v6044, %v6081
        %6085 = vmatprep.subr.bf16.mxu0 0
        %6086 = vmatpush1.bf16.msra.mxu0 %v6018
        %6087 = vmatprep.subr.bf16.mxu0 0
        %6088 = vmatpush1.bf16.msra.mxu0 %v6019
        %6089 = vmatprep.subr.bf16.mxu0 0
        %6090 = vmatpush1.bf16.msra.mxu0 %v6020
        %6091 = vmatprep.subr.bf16.mxu0 0
        %6092 = vmatpush1.bf16.msra.mxu0 %v6021
        %6093 = vmatprep.subr.bf16.mxu0 0
        %6094 = vmatpush1.bf16.msra.mxu0 %v6022
        %6095 = vmatprep.subr.bf16.mxu0 0
        %6096 = vmatpush1.bf16.msra.mxu0 %v6023
        %6097 = vmatprep.subr.bf16.mxu0 0
        %6098 = vmatpush1.bf16.msra.mxu0 %v6024
        %6099 = vmatprep.subr.bf16.mxu0 0
        %6100 = vmatpush1.bf16.msra.mxu0 %v6025
        %6101 = vmatprep.subr.bf16.mxu0 0
        %6102 = vmatpush1.bf16.msra.mxu0 %v6026
        %6103 = vmatprep.subr.bf16.mxu0 0
        %6104 = vmatpush1.bf16.msra.mxu0 %v6027
        %6105 = vmatprep.subr.bf16.mxu0 0
        %6106 = vmatpush1.bf16.msra.mxu0 %v6028
        %6107 = vmatprep.subr.bf16.mxu0 0
        %6108 = vmatpush1.bf16.msra.mxu0 %v6029
        %6109 = vmatprep.subr.bf16.mxu0 0
        %6110 = vmatpush1.bf16.msra.mxu0 %v6030
        %6111 = vmatprep.subr.bf16.mxu0 0
        %6112 = vmatpush1.bf16.msra.mxu0 %v6031
        %6113 = vmatprep.subr.bf16.mxu0 0
        %6114 = vmatpush1.bf16.msra.mxu0 %v6032
        %6115 = vmatprep.subr.bf16.mxu0 0
        %6116 = vmatpush1.bf16.msra.mxu0 %v6033
        %6117 = vmatprep.mubr.bf16.mxu0 %v5842
        %6118 = vmatmul.mubr.bf16.gmra.mrb[0].mxu0 %v5841
        %v6119 = vpop.f32.mrb[0].mxu0
        %v6120 = vadd.f32 %v5908, %v6119
        %v6121 = vpop.f32.mrb[0].mxu0
        %v6122 = vpop.f32.mrb[0].mxu0
        %v6123 = vadd.f32 %v5908, %v6122
        %v6124 = vpop.f32.mrb[0].mxu0
        %6125 = vmatprep.mubr.bf16.mxu0 %v5846
        %6126 = vmatmul.mubr.bf16.gmra.mrb[0].mxu0 %v5845
        %v6127 = vpop.f32.mrb[0].mxu0
        %v6128 = vadd.f32 %v5908, %v6127
        %v6129 = vpop.f32.mrb[0].mxu0
        %v6130 = vpop.f32.mrb[0].mxu0
        %v6131 = vadd.f32 %v5908, %v6130
        %v6132 = vpop.f32.mrb[0].mxu0
        %6133 = vdwg.mxu0
        %6134 = vmatprep.subr.bf16.mxu0 0
        %6135 = vmatpush1.bf16.msra.mxu0 %v6034
        %6136 = vmatprep.subr.bf16.mxu0 0
        %6137 = vmatpush1.bf16.msra.mxu0 %v6035
        %6138 = vmatprep.subr.bf16.mxu0 0
        %6139 = vmatpush1.bf16.msra.mxu0 %v6036
        %6140 = vmatprep.subr.bf16.mxu0 0
        %6141 = vmatpush1.bf16.msra.mxu0 %v6037
        %6142 = vmatprep.subr.bf16.mxu0 0
        %6143 = vmatpush1.bf16.msra.mxu0 %v6038
        %6144 = vmatprep.subr.bf16.mxu0 0
        %6145 = vmatpush1.bf16.msra.mxu0 %v6039
        %6146 = vmatprep.subr.bf16.mxu0 0
        %6147 = vmatpush1.bf16.msra.mxu0 %v6040
        %6148 = vmatprep.subr.bf16.mxu0 0
        %6149 = vmatpush1.bf16.msra.mxu0 %v6041
        %6150 = vmatprep.subr.bf16.mxu0 0
        %6151 = vmatpush1.bf16.msra.mxu0 %v6042
        %6152 = vmatprep.subr.bf16.mxu0 0
        %6153 = vmatpush1.bf16.msra.mxu0 %v6043
        %6154 = vmatprep.subr.bf16.mxu0 0
        %6155 = vmatpush1.bf16.msra.mxu0 %v6083
        %6156 = vmatprep.subr.bf16.mxu0 0
        %6157 = vmatpush1.bf16.msra.mxu0 0
        %6158 = vmatprep.subr.bf16.mxu0 0
        %6159 = vmatpush1.bf16.msra.mxu0 0
        %6160 = vmatprep.subr.bf16.mxu0 0
        %6161 = vmatpush1.bf16.msra.mxu0 0
        %6162 = vmatprep.subr.bf16.mxu0 0
        %6163 = vmatpush1.bf16.msra.mxu0 0
        %6164 = vmatprep.subr.bf16.mxu0 0
        %6165 = vmatpush1.bf16.msra.mxu0 0
        %6166 = vmatprep.mubr.bf16.mxu0 %v6073
        %6167 = vmatmul.mubr.bf16.gmra.mrb[0].mxu0 %v5843
        %v6168 = vpop.f32.mrb[0].mxu0
        %v6169 = vadd.f32 %v6120, %v6168
        %v6170 = vpop.f32.mrb[0].mxu0
        %v6171 = vpop.f32.mrb[0].mxu0
        %v6172 = vadd.f32 %v6123, %v6171
        %v6173 = vpop.f32.mrb[0].mxu0
        %6174 = vmatprep.mubr.bf16.mxu0 %v6076
        %6175 = vmatmul.mubr.bf16.gmra.mrb[0].mxu0 %v5847
        %v6176 = vpop.f32.mrb[0].mxu0
        %v6177 = vadd.f32 %v6128, %v6176
        %v6178 = vpop.f32.mrb[0].mxu0
        %v6179 = vpop.f32.mrb[0].mxu0
        %v6180 = vadd.f32 %v6131, %v6179
        %v6181 = vpop.f32.mrb[0].mxu0
        %6182 = vdwg.mxu0
        %v6183 = vld [vmem:[#allocation5] sm:$0xff]
        %v6184 = vld [vmem:[#allocation5 + $0x8] sm:$0xff]
        %v6185 = vld [vmem:[#allocation5 + $0x10] sm:$0xff]
        %v6186 = vld [vmem:[#allocation5 + $0x18] sm:$0xff]
        %v6187 = vmul.f32 %v6169, 0.5
        %v6188 = vmul.f32 %v6172, 0.5
        %v6189 = vmul.f32 %v6177, 0.5
        %v6190 = vmul.f32 %v6180, 0.5
        %v6191 = vtanh.pop %v6187
        %v6192 = vtanh.pop %v6188
        %v6193 = vtanh.pop %v6189
        %v6194 = vtanh.pop %v6190
        %v6195 = vmul.f32 %v6191, 0.5
        %v6196 = vmul.f32 %v6192, 0.5
        %v6197 = vmul.f32 %v6193, 0.5
        %v6198 = vmul.f32 %v6194, 0.5
        %v6199 = vadd.f32 %v6195, 0.5
        %v6200 = vadd.f32 %v6196, 0.5
        %v6201 = vadd.f32 %v6197, 0.5
        %v6202 = vadd.f32 %v6198, 0.5
        %v6203 = vtanh.pop %v6169
        %v6204 = vtanh.pop %v6172
        %v6205 = vtanh.pop %v6177
        %v6206 = vtanh.pop %v6180
        %v6207 = vmul.f32 %v6199, %v6183
        %v6208 = vmul.f32 %v6200, %v6184
        %v6209 = vmul.f32 %v6201, %v6185
        %v6210 = vmul.f32 %v6202, %v6186
        %6215 = vrot.lane.b32.xlu0 %v6203, 96
        %v6216 = vpop.permute.xlu0 %6215
        %6217 = vrot.lane.b32.xlu0 %v6204, 96
        %v6218 = vpop.permute.xlu0 %6217
        %6219 = vrot.lane.b32.xlu0 %v6205, 96
        %v6220 = vpop.permute.xlu0 %6219
        %6221 = vrot.lane.b32.xlu0 %v6206, 96
        %v6222 = vpop.permute.xlu0 %6221
        %v6227 = vmul.f32 %v6199, %v6216
        %v6228 = vmul.f32 %v6200, %v6218
        %v6229 = vmul.f32 %v6201, %v6220
        %v6230 = vmul.f32 %v6202, %v6222
        %6235 = vrot.lane.b32.xlu0 %v6227, 112
        %v6236 = vpop.permute.xlu0 %6235
        %6237 = vrot.lane.b32.xlu0 %v6228, 112
        %v6238 = vpop.permute.xlu0 %6237
        %6239 = vrot.lane.b32.xlu0 %v6229, 112
        %v6240 = vpop.permute.xlu0 %6239
        %6241 = vrot.lane.b32.xlu0 %v6230, 112
        %v6242 = vpop.permute.xlu0 %6241
        %v6247 = vadd.f32 %v6207, %v6236
        %v6248 = vadd.f32 %v6208, %v6238
        %v6249 = vadd.f32 %v6209, %v6240
        %v6250 = vadd.f32 %v6210, %v6242
        %v6251 = vtanh.pop %v6247
        %v6252 = vtanh.pop %v6248
        %v6253 = vtanh.pop %v6249
        %v6254 = vtanh.pop %v6250
        %6259 = vrot.lane.b32.xlu0 %v6251, 32
        %v6260 = vpop.permute.xlu0 %6259
        %6261 = vrot.lane.b32.xlu0 %v6252, 32
        %v6262 = vpop.permute.xlu0 %6261
        %6263 = vrot.lane.b32.xlu0 %v6253, 32
        %v6264 = vpop.permute.xlu0 %6263
        %6265 = vrot.lane.b32.xlu0 %v6254, 32
        %v6266 = vpop.permute.xlu0 %6265
        %v6271 = vmul.f32 %v6199, %v6260
        %v6272 = vmul.f32 %v6200, %v6262
        %v6273 = vmul.f32 %v6201, %v6264
        %v6274 = vmul.f32 %v6202, %v6266
        %6279 = vrot.lane.b32.xlu0 %v6271, 96
        %v6280 = vpop.permute.xlu0 %6279
        %6281 = vrot.lane.b32.xlu0 %v6272, 96
        %v6282 = vpop.permute.xlu0 %6281
        %6283 = vrot.lane.b32.xlu0 %v6273, 96
        %v6284 = vpop.permute.xlu0 %6283
        %6285 = vrot.lane.b32.xlu0 %v6274, 96
        %v6286 = vpop.permute.xlu0 %6285
        %6291 = vst.msk [vmem:[#allocation4] sm:$0xff] %vm869, %v6280
        %6292 = vst.msk [vmem:[#allocation4 + $0x8] sm:$0xff] %vm869, %v6282
        %6293 = vst.msk [vmem:[#allocation4 + $0x10] sm:$0xff] %vm869, %v6284
        %6294 = vst.msk [vmem:[#allocation4 + $0x18] sm:$0xff] %vm869, %v6286
        %6295 = vst.msk [vmem:[#allocation5] sm:$0xff] %vm869, %v6247
        %6296 = vst.msk [vmem:[#allocation5 + $0x8] sm:$0xff] %vm869, %v6248
        %6297 = vst.msk [vmem:[#allocation5 + $0x10] sm:$0xff] %vm869, %v6249
        %6298 = vst.msk [vmem:[#allocation5 + $0x18] sm:$0xff] %vm869, %v6250
        %v6299 = vld [vmem:[#allocation6] sm:$0xff]
        %v6300 = vld [vmem:[#allocation6 + $0x8] sm:$0xff]
        %v6301 = vld [vmem:[#allocation6 + $0x10] sm:$0xff]
        %v6302 = vld [vmem:[#allocation6 + $0x18] sm:$0xff]
        %v6303 = vadd.f32 %v6299, %v6280
        %v6304 = vadd.f32 %v6300, %v6282
        %v6305 = vadd.f32 %v6301, %v6284
        %v6306 = vadd.f32 %v6302, %v6286
        %6307 = vst.msk [vmem:[#allocation6] sm:$0xff] %vm869, %v6303
        %6308 = vst.msk [vmem:[#allocation6 + $0x8] sm:$0xff] %vm869, %v6304
        %6309 = vst.msk [vmem:[#allocation6 + $0x10] sm:$0xff] %vm869, %v6305
        %6310 = vst.msk [vmem:[#allocation6 + $0x18] sm:$0xff] %vm869, %v6306
        %p6311 = scmp.eq.s32.totalorder %s35, 2
        // Predicated region
        $region131: #{generator_forward.1} parent=121 // pred_check
          %p6312 = pneg %p6311
        $region132: #{generator_forward.1} parent=121 // pred_check_branch
          %6314 = sbr.rel (%p6312) target = $region134
        $region133: #{generator_forward.1} parent=121 // pred_region
          %v6315 = vld [vmem:[#allocation6] sm:$0xff]
          %v6316 = vld [vmem:[#allocation6 + $0x8] sm:$0xff]
          %v6317 = vld [vmem:[#allocation6 + $0x10] sm:$0xff]
          %v6318 = vld [vmem:[#allocation6 + $0x18] sm:$0xff]
          %v6319 = vpack.c.bf16 %v6316, %v6315
          %v6320 = vpack.c.bf16 %v6318, %v6317
          %v6321 = vld [vmem:[%s15] sm:$0xf]
          %v6322 = vld [vmem:[%s15 + $0x4] sm:$0xf]
          %v6323 = vld [vmem:[%s16] sm:$0x1]
          %v6325 = vlaneseq
          %v6326 = vshrl.u32 %v6325, 7
          %v6327 = vsub.s32 0, %v6326
          %v6328 = vrot.slane %v6323, %v6327
          %v6332 = vunpack.c.l.b16 %v6321
          %v6333 = vunpack.c.l.b16 %v6322
          %v6334 = vpack.c.b16 %v6333, %v6332
          %v6337 = vsel %vm869, %v6319, 0
          %v6340 = vsel %vm869, %v6320, 0
          %6342 = vmatprep.subr.bf16.mxu0 0
          %6343 = vmatpush1.bf16.msra.mxu0 %v6334
          %6344 = vmatprep.subr.bf16.mxu0 0
          %6345 = vmatpush1.bf16.msra.mxu0 0
          %6346 = vmatprep.subr.bf16.mxu0 0
          %6347 = vmatpush1.bf16.msra.mxu0 0
          %6348 = vmatprep.subr.bf16.mxu0 0
          %6349 = vmatpush1.bf16.msra.mxu0 0
          %6350 = vmatprep.subr.bf16.mxu0 0
          %6351 = vmatpush1.bf16.msra.mxu0 0
          %6352 = vmatprep.subr.bf16.mxu0 0
          %6353 = vmatpush1.bf16.msra.mxu0 0
          %6354 = vmatprep.subr.bf16.mxu0 0
          %6355 = vmatpush1.bf16.msra.mxu0 0
          %6356 = vmatprep.subr.bf16.mxu0 0
          %6357 = vmatpush1.bf16.msra.mxu0 0
          %6358 = vmatprep.subr.bf16.mxu0 0
          %6359 = vmatpush1.bf16.msra.mxu0 0
          %6360 = vmatprep.subr.bf16.mxu0 0
          %6361 = vmatpush1.bf16.msra.mxu0 0
          %6362 = vmatprep.subr.bf16.mxu0 0
          %6363 = vmatpush1.bf16.msra.mxu0 0
          %6364 = vmatprep.subr.bf16.mxu0 0
          %6365 = vmatpush1.bf16.msra.mxu0 0
          %6366 = vmatprep.subr.bf16.mxu0 0
          %6367 = vmatpush1.bf16.msra.mxu0 0
          %6368 = vmatprep.subr.bf16.mxu0 0
          %6369 = vmatpush1.bf16.msra.mxu0 0
          %6370 = vmatprep.subr.bf16.mxu0 0
          %6371 = vmatpush1.bf16.msra.mxu0 0
          %6372 = vmatprep.subr.bf16.mxu0 0
          %6373 = vmatpush1.bf16.msra.mxu0 0
          %6374 = vmatprep.mubr.bf16.mxu0 0
          %6375 = vmatmul.mubr.bf16.gmra.mrb[0].mxu0 %v6337
          %v6376 = vpop.f32.mrb[0].mxu0
          %v6377 = vadd.f32 %v6328, %v6376
          %v6378 = vpop.f32.mrb[0].mxu0
          %v6379 = vpop.f32.mrb[0].mxu0
          %v6380 = vadd.f32 %v6328, %v6379
          %v6381 = vpop.f32.mrb[0].mxu0
          %6382 = vmatprep.mubr.bf16.mxu0 0
          %6383 = vmatmul.mubr.bf16.gmra.mrb[0].mxu0 %v6340
          %v6384 = vpop.f32.mrb[0].mxu0
          %v6385 = vadd.f32 %v6328, %v6384
          %v6386 = vpop.f32.mrb[0].mxu0
          %v6387 = vpop.f32.mrb[0].mxu0
          %v6388 = vadd.f32 %v6328, %v6387
          %v6389 = vpop.f32.mrb[0].mxu0
          %6390 = vdwg.mxu0
          %v6391 = vmul.f32 %v6377, 0.5
          %v6392 = vmul.f32 %v6380, 0.5
          %v6393 = vmul.f32 %v6385, 0.5
          %v6394 = vmul.f32 %v6388, 0.5
          %v6395 = vtanh.pop %v6391
          %v6396 = vtanh.pop %v6392
          %v6397 = vtanh.pop %v6393
          %v6398 = vtanh.pop %v6394
          %v6399 = vmul.f32 %v6395, 0.5
          %v6400 = vmul.f32 %v6396, 0.5
          %v6401 = vmul.f32 %v6397, 0.5
          %v6402 = vmul.f32 %v6398, 0.5
          %v6403 = vadd.f32 %v6399, 0.5
          %v6404 = vadd.f32 %v6400, 0.5
          %v6405 = vadd.f32 %v6401, 0.5
          %v6406 = vadd.f32 %v6402, 0.5
          %6407 = vst [vmem:[%s741] sm:$0xff] %v6403
          %6408 = vst [vmem:[%s741 + $0x8] sm:$0xff] %v6404
          %6409 = vst [vmem:[%s741 + $0x10] sm:$0xff] %v6405
          %6410 = vst [vmem:[%s741 + $0x18] sm:$0xff] %v6406
          %v6411 = vld [vmem:[#allocation7] sm:$0xff]
          %v6412 = vld [vmem:[#allocation7 + $0x8] sm:$0xff]
          %v6413 = vld [vmem:[#allocation7 + $0x10] sm:$0xff]
          %v6414 = vld [vmem:[#allocation7 + $0x18] sm:$0xff]
          %v6415 = vsel %vm5125, %v6411, 0.0
          %v6416 = vsel %vm5125, %v6412, 0.0
          %v6417 = vsel %vm5125, %v6413, 0.0
          %v6418 = vsel %vm5125, %v6414, 0.0
          %6419 = vst [vmem:[%s747] sm:$0xff] %v6415
          %6420 = vst [vmem:[%s747 + $0x8] sm:$0xff] %v6416
          %6421 = vst [vmem:[%s747 + $0x10] sm:$0xff] %v6417
          %6422 = vst [vmem:[%s747 + $0x18] sm:$0xff] %v6418
        $region134: #{generator_forward.1} parent=121 // pred_fallthru
          _
        %s6423 = smul.u32 4, %s34
        %p6424 = scmp.lt.s32.totalorder %s6423, 7
        %s6425 = scalar_select %p6424, %s6423, 7
        %s6426 = smul.addr %s6425, 8
        %s6427 = scalar_lea.vmem %s17, %s6426
        %s6428 = smul.u32 4, %s34
        %p6429 = scmp.lt.s32.totalorder %s6428, 7
        %s6430 = scalar_select %p6429, %s6428, 7
        %s6431 = smul.addr %s6430, 8
        %s6432 = scalar_lea.vmem %s18, %s6431
        // Predicated region
        $region135: #{generator_forward.1} parent=121 // pred_check
          %p6433 = pneg %p437
        $region136: #{generator_forward.1} parent=121 // pred_check_branch
          %6435 = sbr.rel (%p6433) target = $region138
        $region137: #{generator_forward.1} parent=121 // pred_region
          %s6436 = smul.u32 4, %s34
        $region138: #{generator_forward.1} parent=121 // pred_fallthru
          _
        // Predicated region
        $region139: #{generator_forward.1} parent=121 // pred_check
          %p6437 = pneg %p463
        $region140: #{generator_forward.1} parent=121 // pred_check_branch
          %6439 = sbr.rel (%p6437) target = $region142
        $region141: #{generator_forward.1} parent=121 // pred_region
          %s6440 = smul.u32 4, %s34
        $region142: #{generator_forward.1} parent=121 // pred_fallthru
          _
      $region122: #{generator_forward.1} parent=5 // pred_fallthru
        _
      %p6441 = scmp.le.s32.totalorder 2, %s25
      // Predicated region
      $region143: #{generator_forward.1} parent=5 // pred_check
        %p6442 = pneg %p6441
      $region144: #{generator_forward.1} parent=5 // pred_check_branch
        %6444 = sbr.rel (%p6442) target = $region146
      $region145: #{generator_forward.1} parent=5 // pred_region
        %s6445 = ssub.s32 %s25, 2
        // Predicated region
        $region147: #{generator_forward.1} parent=145 // pred_check
          %p6446 = pneg %p443
        $region148: #{generator_forward.1} parent=145 // pred_check_branch
          %6448 = sbr.rel (%p6446) target = $region150
        $region149: #{generator_forward.1} parent=145 // pred_region
          %s6449 = smul.u32 4, %s36
          %p6450 = scmp.lt.s32.totalorder %s6449, 7
          %s6451 = scalar_select %p6450, %s6449, 7
          %s6452 = smul.addr %s6451, 8
          %s6453 = scalar_lea.vmem %s17, %s6452
        $region150: #{generator_forward.1} parent=145 // pred_fallthru
          _
        // Predicated region
        $region151: #{generator_forward.1} parent=145 // pred_check
          %p6454 = pneg %p469
        $region152: #{generator_forward.1} parent=145 // pred_check_branch
          %6456 = sbr.rel (%p6454) target = $region154
        $region153: #{generator_forward.1} parent=145 // pred_region
          %s6457 = smul.u32 4, %s36
          %p6458 = scmp.lt.s32.totalorder %s6457, 7
          %s6459 = scalar_select %p6458, %s6457, 7
          %s6460 = smul.addr %s6459, 8
          %s6461 = scalar_lea.vmem %s18, %s6460
        $region154: #{generator_forward.1} parent=145 // pred_fallthru
          _
      $region146: #{generator_forward.1} parent=5 // pred_fallthru
        _
    $region6: #{generator_forward.1} parent=1 // loop_footer
      %s29 = sadd.s32 1, %s25
    $region7: #{generator_forward.1} parent=1 // loop_footer_branch
      %24 = sbr.rel target = $region3
    $region8: #{generator_forward.1} parent=1 // loop_exit
      _

</llo_original>
